<compile_context>
chip_gen: v7x
topology: tpu7x:2x2x1
jax: 0.10.0
libtpu: 0.0.40
codegen_flags: <defaults>
</compile_context>

<pallas_src>
import jax
import jax.numpy as jnp
from jax.experimental import pallas as pl
from jax.experimental.pallas import tpu as pltpu


def _round_up(x: int, m: int) -> int:
    return (x + m - 1) // m * m


def imdb_mlp_kernel(x_ref, w1_ref, b1_ref, w2_ref, b2_ref, o_ref):
    # fc1: (tm, K) @ (K, 1024) on the MXU — bf16 inputs, f32 accumulation.
    h = jnp.dot(x_ref[...], w1_ref[...], preferred_element_type=jnp.float32)
    # bias add + ReLU in f32 on the VPU.
    h = jnp.maximum(h + b1_ref[...], 0.0)
    # fc2: (tm, 1024) @ (1024, 128) on the MXU (output lane-padded to 128).
    o = jnp.dot(h.astype(w2_ref.dtype), w2_ref[...],
                preferred_element_type=jnp.float32)
    o_ref[...] = (o + b2_ref[...]).astype(o_ref.dtype)


def imdb_model_forward(x, w1, b1, w2, b2, *, tm=256):
    """Fused fc1 + ReLU + fc2 forward.

    x: (B, input_size) f32, w1: (input_size, 1024), b1: (1024,) or (1, 1024),
    w2: (1024, class_num), b2: (class_num,) or (1, class_num).
    Returns (B, class_num) f32 logits.
    """
    B, input_size = x.shape
    fc1_size = w1.shape[1]
    class_num = w2.shape[1]

    # ---- batch tiling: MXU-row-aligned tile, pad B instead of asserting ----
    tm_eff = tm
    if B <= tm:
        # Shrink the tile so the parallel grid has >= 2 steps when possible
        # (keeps both v7x TensorCores busy); stays 8-sublane aligned.
        tm_eff = max(8, _round_up(pl.cdiv(B, 2), 8))
    b_pad = _round_up(B, tm_eff)

    # ---- lane-pad the fc2 output dimension to a full 128-lane tile ---------
    n_pad = _round_up(max(class_num, 128), 128)

    x_p = x if b_pad == B else jnp.pad(x, ((0, b_pad - B), (0, 0)))
    x_p = x_p.astype(jnp.bfloat16)
    w1_b = w1.astype(jnp.bfloat16)
    b1_r = jnp.asarray(b1, jnp.float32).reshape(1, fc1_size)
    w2_p = jnp.pad(w2.astype(jnp.bfloat16), ((0, 0), (0, n_pad - class_num)))
    b2_p = jnp.pad(jnp.asarray(b2, jnp.float32).reshape(1, class_num),
                   ((0, 0), (0, n_pad - class_num)))

    grid = (b_pad // tm_eff,)

    # Advisory cost estimate for XLA's scheduler around this custom call.
    flops = 2 * b_pad * input_size * fc1_size + 2 * b_pad * fc1_size * n_pad
    bytes_accessed = (x_p.size * 2 + w1_b.size * 2 + b1_r.size * 4
                      + w2_p.size * 2 + b2_p.size * 4 + b_pad * n_pad * 4)
    cost = pl.CostEstimate(flops=flops, transcendentals=0,
                           bytes_accessed=bytes_accessed)

    def run(single_buffer_weights: bool):
        if single_buffer_weights:
            # Weight/bias block indices never change across the grid: one VMEM
            # buffer is enough (saves the double-buffer copy of w1/w2/biases).
            w_kwargs = dict(pipeline_mode=pl.Buffered(1))
        else:
            w_kwargs = {}
        in_specs = [
            pl.BlockSpec((tm_eff, input_size), lambda i: (i, 0)),       # x tile
            pl.BlockSpec((input_size, fc1_size), lambda i: (0, 0), **w_kwargs),
            pl.BlockSpec((1, fc1_size), lambda i: (0, 0), **w_kwargs),
            pl.BlockSpec((fc1_size, n_pad), lambda i: (0, 0), **w_kwargs),
            pl.BlockSpec((1, n_pad), lambda i: (0, 0), **w_kwargs),
        ]
        return pl.pallas_call(
            imdb_mlp_kernel,
            out_shape=jax.ShapeDtypeStruct((b_pad, n_pad), jnp.float32),
            grid_spec=pltpu.PrefetchScalarGridSpec(
                num_scalar_prefetch=0,
                grid=grid,
                in_specs=in_specs,
                out_specs=pl.BlockSpec((tm_eff, n_pad), lambda i: (i, 0)),
            ),
            compiler_params=pltpu.CompilerParams(
                dimension_semantics=("parallel",),
            ),
            cost_estimate=cost,
        )(x_p, w1_b, b1_r, w2_p, b2_p)

    # VMEM working set at tm=256: x 128 KiB + out 128 KiB (x2 buffers each)
    # + w1 0.5 MiB + w2 0.25 MiB + biases ~5 KiB  => ~1.5 MiB, far below the
    # scoped VMEM default on v5e/v6e and v7x's 64 MiB physical VMEM, so no
    # vmem_limit_bytes override is needed at these shapes.
    try:
        out = run(single_buffer_weights=True)
    except Exception:
        # Fallback for jax versions without BlockSpec(pipeline_mode=...).
        out = run(single_buffer_weights=False)

    return out[:B, :class_num]


def xavier_uniform(key, fan_in, fan_out, dtype=jnp.float32):
    # matches torch.nn.init.xavier_uniform_ for a (fan_out, fan_in) weight;
    # materialized directly as (fan_in, fan_out) since the bound is symmetric.
    bound = float(jnp.sqrt(6.0 / (fan_in + fan_out)))
    return jax.random.uniform(key, (fan_in, fan_out), dtype, -bound, bound)


def linear_bias(key, fan_in, fan_out, dtype=jnp.float32):
    # PyTorch nn.Linear default bias init: U(-1/sqrt(fan_in), 1/sqrt(fan_in))
    bound = 1.0 / float(jnp.sqrt(jnp.float32(fan_in)))
    return jax.random.uniform(key, (1, fan_out), dtype, -bound, bound)


if __name__ == "__main__":
    # Shapes consistent with the module: x (batch, input_size);
    # fc1: input_size -> 1024; fc2: 1024 -> class_num.
    # batch deliberately NOT a multiple of the 256-row tile to exercise the
    # padding path; padded batch = 512 -> 2 parallel grid steps.
    batch = 300
    input_size = 256
    class_num = 2

    key = jax.random.PRNGKey(0)
    kx, kw1, kb1, kw2, kb2 = jax.random.split(key, 5)

    x = jax.random.normal(kx, (batch, input_size), jnp.float32)
    w1 = xavier_uniform(kw1, input_size, 1024)
    b1 = linear_bias(kb1, input_size, 1024)
    w2 = xavier_uniform(kw2, 1024, class_num)
    b2 = linear_bias(kb2, 1024, class_num)

    out = imdb_model_forward(x, w1, b1, w2, b2)
    out = jax.block_until_ready(out)
    assert out.shape == (batch, class_num)

    # Reference 1: bf16-matched precision path (same casts as the kernel).
    xb, w1b, w2b = (a.astype(jnp.bfloat16) for a in (x, w1, w2))
    h_ref = jnp.maximum(
        jnp.dot(xb, w1b, preferred_element_type=jnp.float32) + b1, 0.0)
    ref_bf16 = jnp.dot(h_ref.astype(jnp.bfloat16), w2b,
                       preferred_element_type=jnp.float32) + b2
    assert jnp.allclose(out, ref_bf16, atol=2e-3, rtol=2e-3)

    # Reference 2: full f32 math (loose tolerance covers bf16 rounding).
    ref_f32 = jnp.maximum(x @ w1 + b1, 0.0) @ w2 + b2
    assert jnp.allclose(out, ref_f32, atol=7e-2, rtol=7e-2)

    print("KERNEL_OK")
</pallas_src>

<mosaic_0001>
module attributes {stable_mosaic.version = 11 : i64} {
  func.func @imdb_mlp_kernel(%arg0: i32, %arg1: memref<256x256xbf16, #tpu.memory_space<vmem>>, %arg2: memref<256x1024xbf16, #tpu.memory_space<vmem>>, %arg3: memref<1x1024xf32, #tpu.memory_space<vmem>>, %arg4: memref<1024x128xbf16, #tpu.memory_space<vmem>>, %arg5: memref<1x128xf32, #tpu.memory_space<vmem>>, %arg6: memref<256x128xf32, #tpu.memory_space<vmem>>) attributes {dimension_semantics = [#tpu.dimension_semantics<parallel>], iteration_bounds = array<i64: 2>, scalar_prefetch = 0 : i64, scratch_operands = 0 : i64, tpu.core_type = #tpu.core_type<tc>, window_params = [{transform_indices = @transform_0, window_bounds = array<i64: 256, 256>}, {pipeline_mode = #tpu.pipeline_mode<synchronous>, transform_indices = @transform_1, window_bounds = array<i64: 256, 1024>}, {pipeline_mode = #tpu.pipeline_mode<synchronous>, transform_indices = @transform_2, window_bounds = array<i64: 1, 1024>}, {pipeline_mode = #tpu.pipeline_mode<synchronous>, transform_indices = @transform_3, window_bounds = array<i64: 1024, 128>}, {pipeline_mode = #tpu.pipeline_mode<synchronous>, transform_indices = @transform_4, window_bounds = array<i64: 1, 128>}, {transform_indices = @transform_5, window_bounds = array<i64: 256, 128>}]} {
    %c0 = arith.constant 0 : index
    %c0_0 = arith.constant 0 : index
    %0 = vector.load %arg1[%c0, %c0_0] : memref<256x256xbf16, #tpu.memory_space<vmem>>, vector<256x256xbf16>
    %c0_1 = arith.constant 0 : index
    %c0_2 = arith.constant 0 : index
    %1 = vector.load %arg2[%c0_1, %c0_2] : memref<256x1024xbf16, #tpu.memory_space<vmem>>, vector<256x1024xbf16>
    %cst = arith.constant dense<0.000000e+00> : vector<256x1024xf32>
    %2 = tpu.matmul %0, %1, %cst {dimension_numbers = #tpu.dot_dimension_numbers<[1], [0], [0], [1], [0, 0, 1, 1], [], []>} : vector<256x256xbf16>, vector<256x1024xbf16>, vector<256x1024xf32> -> vector<256x1024xf32>
    %c0_3 = arith.constant 0 : index
    %c0_4 = arith.constant 0 : index
    %3 = vector.load %arg3[%c0_3, %c0_4] : memref<1x1024xf32, #tpu.memory_space<vmem>>, vector<1x1024xf32>
    %4 = vector.broadcast %3 : vector<1x1024xf32> to vector<256x1024xf32>
    %5 = arith.addf %2, %4 : vector<256x1024xf32>
    %cst_5 = arith.constant 0.000000e+00 : f32
    %6 = vector.broadcast %cst_5 : f32 to vector<256x1024xf32>
    %7 = arith.maximumf %5, %6 : vector<256x1024xf32>
    %8 = arith.truncf %7 : vector<256x1024xf32> to vector<256x1024xbf16>
    %c0_6 = arith.constant 0 : index
    %c0_7 = arith.constant 0 : index
    %9 = vector.load %arg4[%c0_6, %c0_7] : memref<1024x128xbf16, #tpu.memory_space<vmem>>, vector<1024x128xbf16>
    %cst_8 = arith.constant dense<0.000000e+00> : vector<256x128xf32>
    %10 = tpu.matmul %8, %9, %cst_8 {dimension_numbers = #tpu.dot_dimension_numbers<[1], [0], [0], [1], [0, 0, 1, 1], [], []>} : vector<256x1024xbf16>, vector<1024x128xbf16>, vector<256x128xf32> -> vector<256x128xf32>
    %c0_9 = arith.constant 0 : index
    %c0_10 = arith.constant 0 : index
    %11 = vector.load %arg5[%c0_9, %c0_10] : memref<1x128xf32, #tpu.memory_space<vmem>>, vector<1x128xf32>
    %12 = vector.broadcast %11 : vector<1x128xf32> to vector<256x128xf32>
    %13 = arith.addf %10, %12 : vector<256x128xf32>
    %c0_11 = arith.constant 0 : index
    %c0_12 = arith.constant 0 : index
    %14 = vector.load %arg6[%c0_11, %c0_12] : memref<256x128xf32, #tpu.memory_space<vmem>>, vector<256x128xf32>
    tpu.vector_store %arg6[%c0_11, %c0_12], %13 {strides = array<i32>} : memref<256x128xf32, #tpu.memory_space<vmem>>, vector<256x128xf32>,
    return
  }
  func.func @transform_0(%arg0: i32) -> (i32, i32) {
    %c0_i32 = arith.constant 0 : i32
    %c0_i32_0 = arith.constant 0 : i32
    return %arg0, %c0_i32 : i32, i32
  }
  func.func @transform_1(%arg0: i32) -> (i32, i32) {
    %c0_i32 = arith.constant 0 : i32
    %c0_i32_0 = arith.constant 0 : i32
    %c0_i32_1 = arith.constant 0 : i32
    return %c0_i32, %c0_i32_0 : i32, i32
  }
  func.func @transform_2(%arg0: i32) -> (i32, i32) {
    %c0_i32 = arith.constant 0 : i32
    %c0_i32_0 = arith.constant 0 : i32
    %c0_i32_1 = arith.constant 0 : i32
    return %c0_i32, %c0_i32_0 : i32, i32
  }
  func.func @transform_3(%arg0: i32) -> (i32, i32) {
    %c0_i32 = arith.constant 0 : i32
    %c0_i32_0 = arith.constant 0 : i32
    %c0_i32_1 = arith.constant 0 : i32
    return %c0_i32, %c0_i32_0 : i32, i32
  }
  func.func @transform_4(%arg0: i32) -> (i32, i32) {
    %c0_i32 = arith.constant 0 : i32
    %c0_i32_0 = arith.constant 0 : i32
    %c0_i32_1 = arith.constant 0 : i32
    return %c0_i32, %c0_i32_0 : i32, i32
  }
  func.func @transform_5(%arg0: i32) -> (i32, i32) {
    %c0_i32 = arith.constant 0 : i32
    %c0_i32_0 = arith.constant 0 : i32
    return %arg0, %c0_i32 : i32, i32
  }
}

module attributes {stable_mosaic.version = 11 : i64} {
  func.func @imdb_mlp_kernel(%arg0: i32, %arg1: memref<256x256xbf16, #tpu.memory_space<vmem>>, %arg2: memref<256x1024xbf16, #tpu.memory_space<vmem>>, %arg3: memref<1x1024xf32, #tpu.memory_space<vmem>>, %arg4: memref<1024x128xbf16, #tpu.memory_space<vmem>>, %arg5: memref<1x128xf32, #tpu.memory_space<vmem>>, %arg6: memref<256x128xf32, #tpu.memory_space<vmem>>) attributes {dimension_semantics = [#tpu.dimension_semantics<parallel>], iteration_bounds = array<i64: 2>, scalar_prefetch = 0 : i64, scratch_operands = 0 : i64, tpu.core_type = #tpu.core_type<tc>, window_params = [{transform_indices = @transform_0, window_bounds = array<i64: 256, 256>}, {pipeline_mode = #tpu.pipeline_mode<synchronous>, transform_indices = @transform_1, window_bounds = array<i64: 256, 1024>}, {pipeline_mode = #tpu.pipeline_mode<synchronous>, transform_indices = @transform_2, window_bounds = array<i64: 1, 1024>}, {pipeline_mode = #tpu.pipeline_mode<synchronous>, transform_indices = @transform_3, window_bounds = array<i64: 1024, 128>}, {pipeline_mode = #tpu.pipeline_mode<synchronous>, transform_indices = @transform_4, window_bounds = array<i64: 1, 128>}, {transform_indices = @transform_5, window_bounds = array<i64: 256, 128>}]} {
    %c0 = arith.constant 0 : index
    %c0_0 = arith.constant 0 : index
    %0 = vector.load %arg1[%c0, %c0_0] : memref<256x256xbf16, #tpu.memory_space<vmem>>, vector<256x256xbf16>
    %c0_1 = arith.constant 0 : index
    %c0_2 = arith.constant 0 : index
    %1 = vector.load %arg2[%c0_1, %c0_2] : memref<256x1024xbf16, #tpu.memory_space<vmem>>, vector<256x1024xbf16>
    %cst = arith.constant dense<0.000000e+00> : vector<256x1024xf32>
    %2 = tpu.matmul %0, %1, %cst {dimension_numbers = #tpu.dot_dimension_numbers<[1], [0], [0], [1], [0, 0, 1, 1], [], []>} : vector<256x256xbf16>, vector<256x1024xbf16>, vector<256x1024xf32> -> vector<256x1024xf32>
    %c0_3 = arith.constant 0 : index
    %c0_4 = arith.constant 0 : index
    %3 = vector.load %arg3[%c0_3, %c0_4] : memref<1x1024xf32, #tpu.memory_space<vmem>>, vector<1x1024xf32>
    %4 = vector.broadcast %3 : vector<1x1024xf32> to vector<256x1024xf32>
    %5 = arith.addf %2, %4 : vector<256x1024xf32>
    %cst_5 = arith.constant 0.000000e+00 : f32
    %6 = vector.broadcast %cst_5 : f32 to vector<256x1024xf32>
    %7 = arith.maximumf %5, %6 : vector<256x1024xf32>
    %8 = arith.truncf %7 : vector<256x1024xf32> to vector<256x1024xbf16>
    %c0_6 = arith.constant 0 : index
    %c0_7 = arith.constant 0 : index
    %9 = vector.load %arg4[%c0_6, %c0_7] : memref<1024x128xbf16, #tpu.memory_space<vmem>>, vector<1024x128xbf16>
    %cst_8 = arith.constant dense<0.000000e+00> : vector<256x128xf32>
    %10 = tpu.matmul %8, %9, %cst_8 {dimension_numbers = #tpu.dot_dimension_numbers<[1], [0], [0], [1], [0, 0, 1, 1], [], []>} : vector<256x1024xbf16>, vector<1024x128xbf16>, vector<256x128xf32> -> vector<256x128xf32>
    %c0_9 = arith.constant 0 : index
    %c0_10 = arith.constant 0 : index
    %11 = vector.load %arg5[%c0_9, %c0_10] : memref<1x128xf32, #tpu.memory_space<vmem>>, vector<1x128xf32>
    %12 = vector.broadcast %11 : vector<1x128xf32> to vector<256x128xf32>
    %13 = arith.addf %10, %12 : vector<256x128xf32>
    %c0_11 = arith.constant 0 : index
    %c0_12 = arith.constant 0 : index
    %14 = vector.load %arg6[%c0_11, %c0_12] : memref<256x128xf32, #tpu.memory_space<vmem>>, vector<256x128xf32>
    tpu.vector_store %arg6[%c0_11, %c0_12], %13 {strides = array<i32>} : memref<256x128xf32, #tpu.memory_space<vmem>>, vector<256x128xf32>,
    return
  }
  func.func @transform_0(%arg0: i32) -> (i32, i32) {
    %c0_i32 = arith.constant 0 : i32
    %c0_i32_0 = arith.constant 0 : i32
    return %arg0, %c0_i32 : i32, i32
  }
  func.func @transform_1(%arg0: i32) -> (i32, i32) {
    %c0_i32 = arith.constant 0 : i32
    %c0_i32_0 = arith.constant 0 : i32
    %c0_i32_1 = arith.constant 0 : i32
    return %c0_i32, %c0_i32_0 : i32, i32
  }
  func.func @transform_2(%arg0: i32) -> (i32, i32) {
    %c0_i32 = arith.constant 0 : i32
    %c0_i32_0 = arith.constant 0 : i32
    %c0_i32_1 = arith.constant 0 : i32
    return %c0_i32, %c0_i32_0 : i32, i32
  }
  func.func @transform_3(%arg0: i32) -> (i32, i32) {
    %c0_i32 = arith.constant 0 : i32
    %c0_i32_0 = arith.constant 0 : i32
    %c0_i32_1 = arith.constant 0 : i32
    return %c0_i32, %c0_i32_0 : i32, i32
  }
  func.func @transform_4(%arg0: i32) -> (i32, i32) {
    %c0_i32 = arith.constant 0 : i32
    %c0_i32_0 = arith.constant 0 : i32
    %c0_i32_1 = arith.constant 0 : i32
    return %c0_i32, %c0_i32_0 : i32, i32
  }
  func.func @transform_5(%arg0: i32) -> (i32, i32) {
    %c0_i32 = arith.constant 0 : i32
    %c0_i32_0 = arith.constant 0 : i32
    return %arg0, %c0_i32 : i32, i32
  }
}

</mosaic_0001>

<llo_original>
// kernel: tpu_custom_call.1
$region0: #{tpu_custom_call.1}
  #allocation0 [shape = 'u32[]', space=smem, size = 0x4, offset = 0x4, fixed_abs, tag = 'smem constant byte address 0x4 - core index']
  #allocation1 [shape = 'u32[144,128]{1,0:T(1,128)}', space=vmem, size = 0x12000, scoped, tag = 'internal scratch']
  %s0 = inlined_call_operand.hbm [shape: bf16[512,256], index: 0, kind: input, shape index: {}]
  %s1 = inlined_call_operand.hbm [shape: bf16[256,1024], index: 1, kind: input, shape index: {}]
  %s2 = inlined_call_operand.hbm [shape: f32[1,1024], index: 2, kind: input, shape index: {}]
  %s3 = inlined_call_operand.hbm [shape: bf16[1024,128], index: 3, kind: input, shape index: {}]
  %s4 = inlined_call_operand.vmem [shape: f32[1,128], index: 4, kind: input, shape index: {}]
  %s5 = inlined_call_operand.hbm [shape: f32[512,128], index: 5, kind: output, shape index: {}]
  %s6 = sld [smem:[#allocation0]]
  $region69: #{tpu_custom_call.1} parent=0
    _
  %s8 = ssub.s32 1, %s6
  %s9 = scalar_select 0, %s8, %s6
  $region1: #{tpu_custom_call.1} parent=0
    #allocation2 [shape = 'u8[262144]{0}', space=vmem, size = 0x40000, scoped, tag = 'input window, operand 0']
    #allocation3 [shape = 's32[2]{0}', space=sflag, size = 0x8, scoped, tag = 'scoped memory for tpu_custom_call.1']
    #allocation4 [shape = 's32[2]{0}', space=sflag, size = 0x8, scoped, tag = 'scoped memory for tpu_custom_call.1']
    #allocation5 [shape = 'u8[524288]{0}', space=vmem, size = 0x80000, scoped, tag = 'input window, operand 1, single buffered']
    #allocation6 [shape = 's32[1]{0}', space=sflag, size = 0x4, scoped, tag = 'scoped memory for tpu_custom_call.1']
    #allocation7 [shape = 'u8[4096]{0}', space=vmem, size = 0x1000, scoped, tag = 'input window, operand 2, single buffered']
    #allocation8 [shape = 'u8[262144]{0}', space=vmem, size = 0x40000, scoped, tag = 'input window, operand 3, single buffered']
    #allocation9 [shape = 's32[1]{0}', space=sflag, size = 0x4, scoped, tag = 'scoped memory for tpu_custom_call.1']
    #allocation10 [shape = 'u8[262144]{0}', space=vmem, size = 0x40000, scoped, tag = 'output window, operand 0']
    %10 = vsyncpa [#allocation3], 0
    %s11 = scalar_lea.sflag [#allocation3], 1
    %12 = vsyncpa %s11, 0
    %13 = vsyncpa [#allocation6], 0
    %14 = vsyncpa [#allocation9], 0
    %15 = vsyncpa [#allocation4], 0
    %s16 = scalar_lea.sflag [#allocation4], 1
    %17 = vsyncpa %s16, 0
    loop: start=0, step=1, limit=4
    $region2: #{tpu_custom_call.1} parent=1 // loop_pre_header
      _
    $region3: #{tpu_custom_call.1} parent=1 // loop_header
      %s19 = sphi 0, %s23
      %p20 = scmp.ge.s32.totalorder %s19, 4
      %s29 = sphi 0, %s31
      %s32 = sphi 0, %s29
      %s33 = sphi 0, %s32
      %s49 = sphi 0, %s33
      %s53 = sphi 0, %s53
      %s55 = sphi 0, %s53
      %s56 = sphi 0, %s55
      %s70 = sphi 0, %s56
      %s74 = sphi 0, %s74
      %s76 = sphi 0, %s74
      %s77 = sphi 0, %s76
      %s91 = sphi 0, %s77
      %s95 = sphi 0, %s95
      %s97 = sphi 0, %s95
      %s98 = sphi 0, %s97
      %s112 = sphi 0, %s98
      %s116 = sphi 0, %s116
      %s118 = sphi 0, %s116
      %s119 = sphi 0, %s118
      %s133 = sphi 0, %s119
      %s139 = sphi 0, %s141
      %s142 = sphi 0, %s139
      %s143 = sphi 0, %s142
      %s159 = sphi 0, %s143
    $region4: #{tpu_custom_call.1} parent=1 // loop_header_branch
      %22 = sbr.rel (%p20) target = $region8
    $region5: #{tpu_custom_call.1} parent=1 // loop_body
      %s24 = ssub.s32 %s19, 1
      %s25 = ssub.s32 %s19, 2
      %s26 = sadd.s32 %s19, 1
      %s27 = ssub.s32 %s19, %s26
      %p28 = scmp.eq.s32.totalorder %s27, 0
      %s30 = sadd.s32 %s29, 1
      %s31 = scalar_select %p28, %s29, %s30
      %p34 = pneg %p28
      %p35 = scmp.eq.s32.totalorder %s19, 1
      %p36 = por %p34, %p35
      %p37 = scmp.ne.s32.totalorder %s29, %s32
      %p38 = scmp.eq.s32.totalorder %s19, 0
      %p39 = por %p37, %p38
      %p40 = scmp.ne.s32.totalorder %s29, %s32
      %p41 = scmp.eq.s32.totalorder %s24, 1
      %p42 = por %p40, %p41
      %p43 = scmp.ne.s32.totalorder %s32, %s33
      %p44 = scmp.eq.s32.totalorder %s24, 0
      %p45 = por %p43, %p44
      %p46 = scmp.ne.s32.totalorder %s32, %s33
      %p47 = scmp.eq.s32.totalorder %s25, 1
      %p48 = por %p46, %p47
      %p50 = scmp.ne.s32.totalorder %s33, %s49
      %p51 = scmp.eq.s32.totalorder %s25, 0
      %p52 = por %p50, %p51
      %s54 = sadd.s32 %s53, 1
      %p57 = scmp.eq.s32.totalorder %s19, 1
      %p58 = scmp.ne.s32.totalorder %s53, %s55
      %p59 = scmp.eq.s32.totalorder %s19, 0
      %p60 = por %p58, %p59
      %p61 = scmp.ne.s32.totalorder %s53, %s55
      %p62 = scmp.eq.s32.totalorder %s24, 1
      %p63 = por %p61, %p62
      %p64 = scmp.ne.s32.totalorder %s55, %s56
      %p65 = scmp.eq.s32.totalorder %s24, 0
      %p66 = por %p64, %p65
      %p67 = scmp.ne.s32.totalorder %s55, %s56
      %p68 = scmp.eq.s32.totalorder %s25, 1
      %p69 = por %p67, %p68
      %p71 = scmp.ne.s32.totalorder %s56, %s70
      %p72 = scmp.eq.s32.totalorder %s25, 0
      %p73 = por %p71, %p72
      %s75 = sadd.s32 %s74, 1
      %p78 = scmp.eq.s32.totalorder %s19, 1
      %p79 = scmp.ne.s32.totalorder %s74, %s76
      %p80 = scmp.eq.s32.totalorder %s19, 0
      %p81 = por %p79, %p80
      %p82 = scmp.ne.s32.totalorder %s74, %s76
      %p83 = scmp.eq.s32.totalorder %s24, 1
      %p84 = por %p82, %p83
      %p85 = scmp.ne.s32.totalorder %s76, %s77
      %p86 = scmp.eq.s32.totalorder %s24, 0
      %p87 = por %p85, %p86
      %p88 = scmp.ne.s32.totalorder %s76, %s77
      %p89 = scmp.eq.s32.totalorder %s25, 1
      %p90 = por %p88, %p89
      %p92 = scmp.ne.s32.totalorder %s77, %s91
      %p93 = scmp.eq.s32.totalorder %s25, 0
      %p94 = por %p92, %p93
      %s96 = sadd.s32 %s95, 1
      %p99 = scmp.eq.s32.totalorder %s19, 1
      %p100 = scmp.ne.s32.totalorder %s95, %s97
      %p101 = scmp.eq.s32.totalorder %s19, 0
      %p102 = por %p100, %p101
      %p103 = scmp.ne.s32.totalorder %s95, %s97
      %p104 = scmp.eq.s32.totalorder %s24, 1
      %p105 = por %p103, %p104
      %p106 = scmp.ne.s32.totalorder %s97, %s98
      %p107 = scmp.eq.s32.totalorder %s24, 0
      %p108 = por %p106, %p107
      %p109 = scmp.ne.s32.totalorder %s97, %s98
      %p110 = scmp.eq.s32.totalorder %s25, 1
      %p111 = por %p109, %p110
      %p113 = scmp.ne.s32.totalorder %s98, %s112
      %p114 = scmp.eq.s32.totalorder %s25, 0
      %p115 = por %p113, %p114
      %s117 = sadd.s32 %s116, 1
      %p120 = scmp.eq.s32.totalorder %s19, 1
      %p121 = scmp.ne.s32.totalorder %s116, %s118
      %p122 = scmp.eq.s32.totalorder %s19, 0
      %p123 = por %p121, %p122
      %p124 = scmp.ne.s32.totalorder %s116, %s118
      %p125 = scmp.eq.s32.totalorder %s24, 1
      %p126 = por %p124, %p125
      %p127 = scmp.ne.s32.totalorder %s118, %s119
      %p128 = scmp.eq.s32.totalorder %s24, 0
      %p129 = por %p127, %p128
      %p130 = scmp.ne.s32.totalorder %s118, %s119
      %p131 = scmp.eq.s32.totalorder %s25, 1
      %p132 = por %p130, %p131
      %p134 = scmp.ne.s32.totalorder %s119, %s133
      %p135 = scmp.eq.s32.totalorder %s25, 0
      %p136 = por %p134, %p135
      %s137 = ssub.s32 %s19, %s26
      %p138 = scmp.eq.s32.totalorder %s137, 0
      %s140 = sadd.s32 %s139, 1
      %s141 = scalar_select %p138, %s139, %s140
      %p144 = pneg %p138
      %p145 = scmp.eq.s32.totalorder %s19, 1
      %p146 = por %p144, %p145
      %p147 = scmp.ne.s32.totalorder %s139, %s142
      %p148 = scmp.eq.s32.totalorder %s19, 0
      %p149 = por %p147, %p148
      %p150 = scmp.ne.s32.totalorder %s139, %s142
      %p151 = scmp.eq.s32.totalorder %s24, 1
      %p152 = por %p150, %p151
      %p153 = scmp.ne.s32.totalorder %s142, %s143
      %p154 = scmp.eq.s32.totalorder %s24, 0
      %p155 = por %p153, %p154
      %p156 = scmp.ne.s32.totalorder %s142, %s143
      %p157 = scmp.eq.s32.totalorder %s25, 1
      %p158 = por %p156, %p157
      %p160 = scmp.ne.s32.totalorder %s143, %s159
      %p161 = scmp.eq.s32.totalorder %s25, 0
      %p162 = por %p160, %p161
      %p163 = scmp.le.s32.totalorder 1, %s19
      %p164 = scmp.lt.s32.totalorder %s19, 3
      %p165 = pnand %p163, %p164
      %p166 = pneg %p165
      // Predicated region
      $region9: #{tpu_custom_call.1} parent=5 // pred_check
        _
      $region10: #{tpu_custom_call.1} parent=5 // pred_check_branch
        %168 = sbr.rel (%p165) target = $region12
      $region11: #{tpu_custom_call.1} parent=5 // pred_region
        %s169 = ssub.s32 %s19, 1
        // Predicated region
        $region13: #{tpu_custom_call.1} parent=11 // pred_check
          %p170 = pneg %p66
        $region14: #{tpu_custom_call.1} parent=11 // pred_check_branch
          %172 = sbr.rel (%p170) target = $region16
        $region15: #{tpu_custom_call.1} parent=11 // pred_region
          %s174 = ssub.s32 16384, 16384
          %175 = vsyncadd [#allocation6], %s174
          %s176 = sshll.u32 [#allocation5], 4
          %s177 = int_to_ptr.vmem [resolvable:$true] %s176
          %182 = dma.hbm_to_vmem [thread:$0]  %s1, 16384, %s177, [#allocation6], 512, 512, 32
        $region16: #{tpu_custom_call.1} parent=11 // pred_fallthru
          _
        // Predicated region
        $region17: #{tpu_custom_call.1} parent=11 // pred_check
          %p183 = pneg %p87
        $region18: #{tpu_custom_call.1} parent=11 // pred_check_branch
          %185 = sbr.rel (%p183) target = $region20
        $region19: #{tpu_custom_call.1} parent=11 // pred_region
          %s187 = ssub.s32 128, 128
          %188 = vsyncadd [#allocation6], %s187
          %s190 = sshll.u32 [#allocation7], 4
          %s191 = int_to_ptr.vmem [resolvable:$true] %s190
          %193 = dma.hbm_to_vmem [thread:$0]  %s2, 128, %s191, [#allocation6]
        $region20: #{tpu_custom_call.1} parent=11 // pred_fallthru
          _
        // Predicated region
        $region21: #{tpu_custom_call.1} parent=11 // pred_check
          %p194 = pneg %p108
        $region22: #{tpu_custom_call.1} parent=11 // pred_check_branch
          %196 = sbr.rel (%p194) target = $region24
        $region23: #{tpu_custom_call.1} parent=11 // pred_region
          %s198 = ssub.s32 8192, 8192
          %199 = vsyncadd [#allocation9], %s198
          %s200 = sshll.u32 [#allocation8], 4
          %s201 = int_to_ptr.vmem [resolvable:$true] %s200
          %206 = dma.hbm_to_vmem [thread:$0]  %s3, 8192, %s201, [#allocation9], 64, 64, 4
        $region24: #{tpu_custom_call.1} parent=11 // pred_fallthru
          _
        // Predicated region
        $region25: #{tpu_custom_call.1} parent=11 // pred_check
          %p207 = pneg %p129
        $region26: #{tpu_custom_call.1} parent=11 // pred_check_branch
          %209 = sbr.rel (%p207) target = $region28
        $region27: #{tpu_custom_call.1} parent=11 // pred_region
          _
        $region28: #{tpu_custom_call.1} parent=11 // pred_fallthru
          _
      $region12: #{tpu_custom_call.1} parent=5 // pred_fallthru
        _
      %p210 = scmp.lt.s32.totalorder %s19, 2
      // Predicated region
      $region29: #{tpu_custom_call.1} parent=5 // pred_check
        %p211 = pneg %p210
      $region30: #{tpu_custom_call.1} parent=5 // pred_check_branch
        %213 = sbr.rel (%p211) target = $region32
      $region31: #{tpu_custom_call.1} parent=5 // pred_region
        // Predicated region
        $region33: #{tpu_custom_call.1} parent=31 // pred_check
          %p214 = pneg %p39
        $region34: #{tpu_custom_call.1} parent=31 // pred_check_branch
          %216 = sbr.rel (%p214) target = $region36
        $region35: #{tpu_custom_call.1} parent=31 // pred_region
          %s217 = sand.u32 %s29, 1
          %s218 = scalar_lea.sflag [#allocation3], %s217
          %s219 = sand.u32 %s29, 1
          %s220 = smul.addr %s219, 256
          %s221 = scalar_lea.vmem [#allocation2], %s220
          %s222 = smul.u32 32, %s19
          %s224 = ssub.s32 4096, 4096
          %225 = vsyncadd %s218, %s224
          %s226 = smul.addr %s222, 2
          %s227 = smul.addr %s226, 64
          %s228 = scalar_lea.hbm %s0, %s227
          %s229 = sshll.u32 %s221, 4
          %s230 = int_to_ptr.vmem [resolvable:$true] %s229
          %235 = dma.hbm_to_vmem [thread:$0]  %s228, 4096, %s230, %s218, 128, 128, 8
        $region36: #{tpu_custom_call.1} parent=31 // pred_fallthru
          _
      $region32: #{tpu_custom_call.1} parent=5 // pred_fallthru
        _
      %p236 = scmp.le.s32.totalorder 1, %s19
      %p237 = scmp.lt.s32.totalorder %s19, 3
      %p238 = pnand %p236, %p237
      %p239 = pneg %p238
      // Predicated region
      $region37: #{tpu_custom_call.1} parent=5 // pred_check
        _
      $region38: #{tpu_custom_call.1} parent=5 // pred_check_branch
        %241 = sbr.rel (%p238) target = $region40
      $region39: #{tpu_custom_call.1} parent=5 // pred_region
        %s242 = ssub.s32 %s19, 1
        %s243 = sand.u32 %s32, 1
        %s244 = scalar_lea.sflag [#allocation3], %s243
        %s245 = sand.u32 %s32, 1
        %s246 = smul.addr %s245, 256
        %s247 = scalar_lea.vmem [#allocation2], %s246
        // Predicated region
        $region41: #{tpu_custom_call.1} parent=39 // pred_check
          %p248 = pneg %p45
        $region42: #{tpu_custom_call.1} parent=39 // pred_check_branch
          %250 = sbr.rel (%p248) target = $region44
        $region43: #{tpu_custom_call.1} parent=39 // pred_region
          %251 = dma.done %s244, 4096
        $region44: #{tpu_custom_call.1} parent=39 // pred_fallthru
          _
        // Predicated region
        $region45: #{tpu_custom_call.1} parent=39 // pred_check
          %p252 = pneg %p66
        $region46: #{tpu_custom_call.1} parent=39 // pred_check_branch
          %254 = sbr.rel (%p252) target = $region48
        $region47: #{tpu_custom_call.1} parent=39 // pred_region
          %255 = dma.done [#allocation6], 16384
        $region48: #{tpu_custom_call.1} parent=39 // pred_fallthru
          _
        // Predicated region
        $region49: #{tpu_custom_call.1} parent=39 // pred_check
          %p256 = pneg %p87
        $region50: #{tpu_custom_call.1} parent=39 // pred_check_branch
          %258 = sbr.rel (%p256) target = $region52
        $region51: #{tpu_custom_call.1} parent=39 // pred_region
          %259 = dma.done [#allocation6], 128
        $region52: #{tpu_custom_call.1} parent=39 // pred_fallthru
          _
        // Predicated region
        $region53: #{tpu_custom_call.1} parent=39 // pred_check
          %p260 = pneg %p108
        $region54: #{tpu_custom_call.1} parent=39 // pred_check_branch
          %262 = sbr.rel (%p260) target = $region56
        $region55: #{tpu_custom_call.1} parent=39 // pred_region
          %263 = dma.done [#allocation9], 8192
        $region56: #{tpu_custom_call.1} parent=39 // pred_fallthru
          _
        %s264 = sand.u32 %s32, 1
        %s265 = scalar_lea.sflag [#allocation3], %s264
        %s266 = sand.u32 %s32, 1
        %s267 = smul.addr %s266, 256
        %s268 = scalar_lea.vmem [#allocation2], %s267
        %p269 = pneg %p45
        %p270 = pneg %p42
        %p271 = pneg %p66
        %p272 = pneg %p63
        %p273 = pneg %p87
        %p274 = pneg %p84
        %p275 = pneg %p108
        %p276 = pneg %p105
        %p277 = pneg %p129
        %p278 = pneg %p126
        %p279 = pneg %p155
        %p280 = pneg %p152
        %s281 = sand.u32 %s142, 1
        %s282 = scalar_lea.sflag [#allocation4], %s281
        %s283 = sand.u32 %s142, 1
        %s284 = smul.addr %s283, 256
        %s285 = scalar_lea.vmem [#allocation10], %s284
        %s286 = smul.u32 32, %s24
        %s287 = smul.u32 32, %s24
        %v289 = vld [vmem:[%s247] sm:$0xff]
        %v290 = vld [vmem:[%s247 + $0x8] sm:$0xff]
        %v291 = vld [vmem:[%s247 + $0x10] sm:$0xff]
        %v292 = vld [vmem:[%s247 + $0x18] sm:$0xff]
        %v293 = vld [vmem:[%s247 + $0x20] sm:$0xff]
        %v294 = vld [vmem:[%s247 + $0x28] sm:$0xff]
        %v295 = vld [vmem:[%s247 + $0x30] sm:$0xff]
        %v296 = vld [vmem:[%s247 + $0x38] sm:$0xff]
        %v297 = vld [vmem:[%s247 + $0x40] sm:$0xff]
        %v298 = vld [vmem:[%s247 + $0x48] sm:$0xff]
        %v299 = vld [vmem:[%s247 + $0x50] sm:$0xff]
        %v300 = vld [vmem:[%s247 + $0x58] sm:$0xff]
        %v301 = vld [vmem:[%s247 + $0x60] sm:$0xff]
        %v302 = vld [vmem:[%s247 + $0x68] sm:$0xff]
        %v303 = vld [vmem:[%s247 + $0x70] sm:$0xff]
        %v304 = vld [vmem:[%s247 + $0x78] sm:$0xff]
        %v305 = vld [vmem:[%s247 + $0x80] sm:$0xff]
        %v306 = vld [vmem:[%s247 + $0x88] sm:$0xff]
        %v307 = vld [vmem:[%s247 + $0x90] sm:$0xff]
        %v308 = vld [vmem:[%s247 + $0x98] sm:$0xff]
        %v309 = vld [vmem:[%s247 + $0xa0] sm:$0xff]
        %v310 = vld [vmem:[%s247 + $0xa8] sm:$0xff]
        %v311 = vld [vmem:[%s247 + $0xb0] sm:$0xff]
        %v312 = vld [vmem:[%s247 + $0xb8] sm:$0xff]
        %v313 = vld [vmem:[%s247 + $0xc0] sm:$0xff]
        %v314 = vld [vmem:[%s247 + $0xc8] sm:$0xff]
        %v315 = vld [vmem:[%s247 + $0xd0] sm:$0xff]
        %v316 = vld [vmem:[%s247 + $0xd8] sm:$0xff]
        %v317 = vld [vmem:[%s247 + $0xe0] sm:$0xff]
        %v318 = vld [vmem:[%s247 + $0xe8] sm:$0xff]
        %v319 = vld [vmem:[%s247 + $0xf0] sm:$0xff]
        %v320 = vld [vmem:[%s247 + $0xf8] sm:$0xff]
        %v321 = vld [vmem:[#allocation5] sm:$0xff]
        %v322 = vld [vmem:[#allocation5 + $0x8] sm:$0xff]
        %v323 = vld [vmem:[#allocation5 + $0x10] sm:$0xff]
        %v324 = vld [vmem:[#allocation5 + $0x18] sm:$0xff]
        %v325 = vld [vmem:[#allocation5 + $0x20] sm:$0xff]
        %v326 = vld [vmem:[#allocation5 + $0x28] sm:$0xff]
        %v327 = vld [vmem:[#allocation5 + $0x30] sm:$0xff]
        %v328 = vld [vmem:[#allocation5 + $0x38] sm:$0xff]
        %v329 = vld [vmem:[#allocation5 + $0x40] sm:$0xff]
        %v330 = vld [vmem:[#allocation5 + $0x48] sm:$0xff]
        %v331 = vld [vmem:[#allocation5 + $0x50] sm:$0xff]
        %v332 = vld [vmem:[#allocation5 + $0x58] sm:$0xff]
        %v333 = vld [vmem:[#allocation5 + $0x60] sm:$0xff]
        %v334 = vld [vmem:[#allocation5 + $0x68] sm:$0xff]
        %v335 = vld [vmem:[#allocation5 + $0x70] sm:$0xff]
        %v336 = vld [vmem:[#allocation5 + $0x78] sm:$0xff]
        %v337 = vld [vmem:[#allocation5 + $0x80] sm:$0xff]
        %v338 = vld [vmem:[#allocation5 + $0x88] sm:$0xff]
        %v339 = vld [vmem:[#allocation5 + $0x90] sm:$0xff]
        %v340 = vld [vmem:[#allocation5 + $0x98] sm:$0xff]
        %v341 = vld [vmem:[#allocation5 + $0xa0] sm:$0xff]
        %v342 = vld [vmem:[#allocation5 + $0xa8] sm:$0xff]
        %v343 = vld [vmem:[#allocation5 + $0xb0] sm:$0xff]
        %v344 = vld [vmem:[#allocation5 + $0xb8] sm:$0xff]
        %v345 = vld [vmem:[#allocation5 + $0xc0] sm:$0xff]
        %v346 = vld [vmem:[#allocation5 + $0xc8] sm:$0xff]
        %v347 = vld [vmem:[#allocation5 + $0xd0] sm:$0xff]
        %v348 = vld [vmem:[#allocation5 + $0xd8] sm:$0xff]
        %v349 = vld [vmem:[#allocation5 + $0xe0] sm:$0xff]
        %v350 = vld [vmem:[#allocation5 + $0xe8] sm:$0xff]
        %v351 = vld [vmem:[#allocation5 + $0xf0] sm:$0xff]
        %v352 = vld [vmem:[#allocation5 + $0xf8] sm:$0xff]
        %v353 = vld [vmem:[#allocation5 + $0x100] sm:$0xff]
        %v354 = vld [vmem:[#allocation5 + $0x108] sm:$0xff]
        %v355 = vld [vmem:[#allocation5 + $0x110] sm:$0xff]
        %v356 = vld [vmem:[#allocation5 + $0x118] sm:$0xff]
        %v357 = vld [vmem:[#allocation5 + $0x120] sm:$0xff]
        %v358 = vld [vmem:[#allocation5 + $0x128] sm:$0xff]
        %v359 = vld [vmem:[#allocation5 + $0x130] sm:$0xff]
        %v360 = vld [vmem:[#allocation5 + $0x138] sm:$0xff]
        %v361 = vld [vmem:[#allocation5 + $0x140] sm:$0xff]
        %v362 = vld [vmem:[#allocation5 + $0x148] sm:$0xff]
        %v363 = vld [vmem:[#allocation5 + $0x150] sm:$0xff]
        %v364 = vld [vmem:[#allocation5 + $0x158] sm:$0xff]
        %v365 = vld [vmem:[#allocation5 + $0x160] sm:$0xff]
        %v366 = vld [vmem:[#allocation5 + $0x168] sm:$0xff]
        %v367 = vld [vmem:[#allocation5 + $0x170] sm:$0xff]
        %v368 = vld [vmem:[#allocation5 + $0x178] sm:$0xff]
        %v369 = vld [vmem:[#allocation5 + $0x180] sm:$0xff]
        %v370 = vld [vmem:[#allocation5 + $0x188] sm:$0xff]
        %v371 = vld [vmem:[#allocation5 + $0x190] sm:$0xff]
        %v372 = vld [vmem:[#allocation5 + $0x198] sm:$0xff]
        %v373 = vld [vmem:[#allocation5 + $0x1a0] sm:$0xff]
        %v374 = vld [vmem:[#allocation5 + $0x1a8] sm:$0xff]
        %v375 = vld [vmem:[#allocation5 + $0x1b0] sm:$0xff]
        %v376 = vld [vmem:[#allocation5 + $0x1b8] sm:$0xff]
        %v377 = vld [vmem:[#allocation5 + $0x1c0] sm:$0xff]
        %v378 = vld [vmem:[#allocation5 + $0x1c8] sm:$0xff]
        %v379 = vld [vmem:[#allocation5 + $0x1d0] sm:$0xff]
        %v380 = vld [vmem:[#allocation5 + $0x1d8] sm:$0xff]
        %v381 = vld [vmem:[#allocation5 + $0x1e0] sm:$0xff]
        %v382 = vld [vmem:[#allocation5 + $0x1e8] sm:$0xff]
        %v383 = vld [vmem:[#allocation5 + $0x1f0] sm:$0xff]
        %v384 = vld [vmem:[#allocation5 + $0x1f8] sm:$0xff]
        %v385 = vld [vmem:[#allocation5 + $0x200] sm:$0xff]
        %v386 = vld [vmem:[#allocation5 + $0x208] sm:$0xff]
        %v387 = vld [vmem:[#allocation5 + $0x210] sm:$0xff]
        %v388 = vld [vmem:[#allocation5 + $0x218] sm:$0xff]
        %v389 = vld [vmem:[#allocation5 + $0x220] sm:$0xff]
        %v390 = vld [vmem:[#allocation5 + $0x228] sm:$0xff]
        %v391 = vld [vmem:[#allocation5 + $0x230] sm:$0xff]
        %v392 = vld [vmem:[#allocation5 + $0x238] sm:$0xff]
        %v393 = vld [vmem:[#allocation5 + $0x240] sm:$0xff]
        %v394 = vld [vmem:[#allocation5 + $0x248] sm:$0xff]
        %v395 = vld [vmem:[#allocation5 + $0x250] sm:$0xff]
        %v396 = vld [vmem:[#allocation5 + $0x258] sm:$0xff]
        %v397 = vld [vmem:[#allocation5 + $0x260] sm:$0xff]
        %v398 = vld [vmem:[#allocation5 + $0x268] sm:$0xff]
        %v399 = vld [vmem:[#allocation5 + $0x270] sm:$0xff]
        %v400 = vld [vmem:[#allocation5 + $0x278] sm:$0xff]
        %v401 = vld [vmem:[#allocation5 + $0x280] sm:$0xff]
        %v402 = vld [vmem:[#allocation5 + $0x288] sm:$0xff]
        %v403 = vld [vmem:[#allocation5 + $0x290] sm:$0xff]
        %v404 = vld [vmem:[#allocation5 + $0x298] sm:$0xff]
        %v405 = vld [vmem:[#allocation5 + $0x2a0] sm:$0xff]
        %v406 = vld [vmem:[#allocation5 + $0x2a8] sm:$0xff]
        %v407 = vld [vmem:[#allocation5 + $0x2b0] sm:$0xff]
        %v408 = vld [vmem:[#allocation5 + $0x2b8] sm:$0xff]
        %v409 = vld [vmem:[#allocation5 + $0x2c0] sm:$0xff]
        %v410 = vld [vmem:[#allocation5 + $0x2c8] sm:$0xff]
        %v411 = vld [vmem:[#allocation5 + $0x2d0] sm:$0xff]
        %v412 = vld [vmem:[#allocation5 + $0x2d8] sm:$0xff]
        %v413 = vld [vmem:[#allocation5 + $0x2e0] sm:$0xff]
        %v414 = vld [vmem:[#allocation5 + $0x2e8] sm:$0xff]
        %v415 = vld [vmem:[#allocation5 + $0x2f0] sm:$0xff]
        %v416 = vld [vmem:[#allocation5 + $0x2f8] sm:$0xff]
        %v417 = vld [vmem:[#allocation5 + $0x300] sm:$0xff]
        %v418 = vld [vmem:[#allocation5 + $0x308] sm:$0xff]
        %v419 = vld [vmem:[#allocation5 + $0x310] sm:$0xff]
        %v420 = vld [vmem:[#allocation5 + $0x318] sm:$0xff]
        %v421 = vld [vmem:[#allocation5 + $0x320] sm:$0xff]
        %v422 = vld [vmem:[#allocation5 + $0x328] sm:$0xff]
        %v423 = vld [vmem:[#allocation5 + $0x330] sm:$0xff]
        %v424 = vld [vmem:[#allocation5 + $0x338] sm:$0xff]
        %v425 = vld [vmem:[#allocation5 + $0x340] sm:$0xff]
        %v426 = vld [vmem:[#allocation5 + $0x348] sm:$0xff]
        %v427 = vld [vmem:[#allocation5 + $0x350] sm:$0xff]
        %v428 = vld [vmem:[#allocation5 + $0x358] sm:$0xff]
        %v429 = vld [vmem:[#allocation5 + $0x360] sm:$0xff]
        %v430 = vld [vmem:[#allocation5 + $0x368] sm:$0xff]
        %v431 = vld [vmem:[#allocation5 + $0x370] sm:$0xff]
        %v432 = vld [vmem:[#allocation5 + $0x378] sm:$0xff]
        %v433 = vld [vmem:[#allocation5 + $0x380] sm:$0xff]
        %v434 = vld [vmem:[#allocation5 + $0x388] sm:$0xff]
        %v435 = vld [vmem:[#allocation5 + $0x390] sm:$0xff]
        %v436 = vld [vmem:[#allocation5 + $0x398] sm:$0xff]
        %v437 = vld [vmem:[#allocation5 + $0x3a0] sm:$0xff]
        %v438 = vld [vmem:[#allocation5 + $0x3a8] sm:$0xff]
        %v439 = vld [vmem:[#allocation5 + $0x3b0] sm:$0xff]
        %v440 = vld [vmem:[#allocation5 + $0x3b8] sm:$0xff]
        %v441 = vld [vmem:[#allocation5 + $0x3c0] sm:$0xff]
        %v442 = vld [vmem:[#allocation5 + $0x3c8] sm:$0xff]
        %v443 = vld [vmem:[#allocation5 + $0x3d0] sm:$0xff]
        %v444 = vld [vmem:[#allocation5 + $0x3d8] sm:$0xff]
        %v445 = vld [vmem:[#allocation5 + $0x3e0] sm:$0xff]
        %v446 = vld [vmem:[#allocation5 + $0x3e8] sm:$0xff]
        %v447 = vld [vmem:[#allocation5 + $0x3f0] sm:$0xff]
        %v448 = vld [vmem:[#allocation5 + $0x3f8] sm:$0xff]
        %v449 = vld [vmem:[#allocation7] sm:$0xff]
        %v451 = vlaneseq
        %v452 = vshrl.u32 %v451, 7
        %v453 = vsub.s32 0, %v452
        %v454 = vrot.slane %v449, %v453
        %v455 = vlaneseq
        %v456 = vshrl.u32 %v455, 7
        %v457 = vsub.s32 1, %v456
        %v458 = vrot.slane %v449, %v457
        %v459 = vlaneseq
        %v460 = vshrl.u32 %v459, 7
        %v461 = vsub.s32 2, %v460
        %v462 = vrot.slane %v449, %v461
        %v463 = vlaneseq
        %v464 = vshrl.u32 %v463, 7
        %v465 = vsub.s32 3, %v464
        %v466 = vrot.slane %v449, %v465
        %v467 = vlaneseq
        %v468 = vshrl.u32 %v467, 7
        %v469 = vsub.s32 4, %v468
        %v470 = vrot.slane %v449, %v469
        %v471 = vlaneseq
        %v472 = vshrl.u32 %v471, 7
        %v473 = vsub.s32 5, %v472
        %v474 = vrot.slane %v449, %v473
        %v475 = vlaneseq
        %v476 = vshrl.u32 %v475, 7
        %v477 = vsub.s32 6, %v476
        %v478 = vrot.slane %v449, %v477
        %v479 = vlaneseq
        %v480 = vshrl.u32 %v479, 7
        %v481 = vsub.s32 7, %v480
        %v482 = vrot.slane %v449, %v481
        %v523 = vunpack.c.l.b16 %v289
        %v524 = vunpack.c.h.b16 %v289
        %v525 = vunpack.c.l.b16 %v290
        %v526 = vunpack.c.h.b16 %v290
        %v527 = vunpack.c.l.b16 %v291
        %v528 = vunpack.c.h.b16 %v291
        %v529 = vunpack.c.l.b16 %v292
        %v530 = vunpack.c.h.b16 %v292
        %v531 = vunpack.c.l.b16 %v293
        %v532 = vunpack.c.h.b16 %v293
        %v533 = vunpack.c.l.b16 %v294
        %v534 = vunpack.c.h.b16 %v294
        %v535 = vunpack.c.l.b16 %v295
        %v536 = vunpack.c.h.b16 %v295
        %v537 = vunpack.c.l.b16 %v296
        %v538 = vunpack.c.h.b16 %v296
        %v539 = vunpack.c.l.b16 %v297
        %v540 = vunpack.c.h.b16 %v297
        %v541 = vunpack.c.l.b16 %v298
        %v542 = vunpack.c.h.b16 %v298
        %v543 = vunpack.c.l.b16 %v299
        %v544 = vunpack.c.h.b16 %v299
        %v545 = vunpack.c.l.b16 %v300
        %v546 = vunpack.c.h.b16 %v300
        %v547 = vunpack.c.l.b16 %v301
        %v548 = vunpack.c.h.b16 %v301
        %v549 = vunpack.c.l.b16 %v302
        %v550 = vunpack.c.h.b16 %v302
        %v551 = vunpack.c.l.b16 %v303
        %v552 = vunpack.c.h.b16 %v303
        %v553 = vunpack.c.l.b16 %v304
        %v554 = vunpack.c.h.b16 %v304
        %v555 = vunpack.c.l.b16 %v305
        %v556 = vunpack.c.h.b16 %v305
        %v557 = vunpack.c.l.b16 %v306
        %v558 = vunpack.c.h.b16 %v306
        %v559 = vunpack.c.l.b16 %v307
        %v560 = vunpack.c.h.b16 %v307
        %v561 = vunpack.c.l.b16 %v308
        %v562 = vunpack.c.h.b16 %v308
        %v563 = vunpack.c.l.b16 %v309
        %v564 = vunpack.c.h.b16 %v309
        %v565 = vunpack.c.l.b16 %v310
        %v566 = vunpack.c.h.b16 %v310
        %v567 = vunpack.c.l.b16 %v311
        %v568 = vunpack.c.h.b16 %v311
        %v569 = vunpack.c.l.b16 %v312
        %v570 = vunpack.c.h.b16 %v312
        %v571 = vunpack.c.l.b16 %v313
        %v572 = vunpack.c.h.b16 %v313
        %v573 = vunpack.c.l.b16 %v314
        %v574 = vunpack.c.h.b16 %v314
        %v575 = vunpack.c.l.b16 %v315
        %v576 = vunpack.c.h.b16 %v315
        %v577 = vunpack.c.l.b16 %v316
        %v578 = vunpack.c.h.b16 %v316
        %v579 = vunpack.c.l.b16 %v317
        %v580 = vunpack.c.h.b16 %v317
        %v581 = vunpack.c.l.b16 %v318
        %v582 = vunpack.c.h.b16 %v318
        %v583 = vunpack.c.l.b16 %v319
        %v584 = vunpack.c.h.b16 %v319
        %v585 = vunpack.c.l.b16 %v320
        %v586 = vunpack.c.h.b16 %v320
        %v587 = vpack.c.b16 %v525, %v523
        %v588 = vpack.c.b16 %v526, %v524
        %v589 = vpack.c.b16 %v529, %v527
        %v590 = vpack.c.b16 %v530, %v528
        %v591 = vpack.c.b16 %v533, %v531
        %v592 = vpack.c.b16 %v534, %v532
        %v593 = vpack.c.b16 %v537, %v535
        %v594 = vpack.c.b16 %v538, %v536
        %v595 = vpack.c.b16 %v541, %v539
        %v596 = vpack.c.b16 %v542, %v540
        %v597 = vpack.c.b16 %v545, %v543
        %v598 = vpack.c.b16 %v546, %v544
        %v599 = vpack.c.b16 %v549, %v547
        %v600 = vpack.c.b16 %v550, %v548
        %v601 = vpack.c.b16 %v553, %v551
        %v602 = vpack.c.b16 %v554, %v552
        %v603 = vpack.c.b16 %v557, %v555
        %v604 = vpack.c.b16 %v558, %v556
        %v605 = vpack.c.b16 %v561, %v559
        %v606 = vpack.c.b16 %v562, %v560
        %v607 = vpack.c.b16 %v565, %v563
        %v608 = vpack.c.b16 %v566, %v564
        %v609 = vpack.c.b16 %v569, %v567
        %v610 = vpack.c.b16 %v570, %v568
        %v611 = vpack.c.b16 %v573, %v571
        %v612 = vpack.c.b16 %v574, %v572
        %v613 = vpack.c.b16 %v577, %v575
        %v614 = vpack.c.b16 %v578, %v576
        %v615 = vpack.c.b16 %v581, %v579
        %v616 = vpack.c.b16 %v582, %v580
        %v617 = vpack.c.b16 %v585, %v583
        %v618 = vpack.c.b16 %v586, %v584
        %v779 = vunpack.c.l.b16 %v321
        %v780 = vunpack.c.h.b16 %v321
        %v781 = vunpack.c.l.b16 %v322
        %v782 = vunpack.c.h.b16 %v322
        %v783 = vunpack.c.l.b16 %v323
        %v784 = vunpack.c.h.b16 %v323
        %v785 = vunpack.c.l.b16 %v324
        %v786 = vunpack.c.h.b16 %v324
        %v787 = vunpack.c.l.b16 %v325
        %v788 = vunpack.c.h.b16 %v325
        %v789 = vunpack.c.l.b16 %v326
        %v790 = vunpack.c.h.b16 %v326
        %v791 = vunpack.c.l.b16 %v327
        %v792 = vunpack.c.h.b16 %v327
        %v793 = vunpack.c.l.b16 %v328
        %v794 = vunpack.c.h.b16 %v328
        %v795 = vunpack.c.l.b16 %v329
        %v796 = vunpack.c.h.b16 %v329
        %v797 = vunpack.c.l.b16 %v330
        %v798 = vunpack.c.h.b16 %v330
        %v799 = vunpack.c.l.b16 %v331
        %v800 = vunpack.c.h.b16 %v331
        %v801 = vunpack.c.l.b16 %v332
        %v802 = vunpack.c.h.b16 %v332
        %v803 = vunpack.c.l.b16 %v333
        %v804 = vunpack.c.h.b16 %v333
        %v805 = vunpack.c.l.b16 %v334
        %v806 = vunpack.c.h.b16 %v334
        %v807 = vunpack.c.l.b16 %v335
        %v808 = vunpack.c.h.b16 %v335
        %v809 = vunpack.c.l.b16 %v336
        %v810 = vunpack.c.h.b16 %v336
        %v811 = vunpack.c.l.b16 %v337
        %v812 = vunpack.c.h.b16 %v337
        %v813 = vunpack.c.l.b16 %v338
        %v814 = vunpack.c.h.b16 %v338
        %v815 = vunpack.c.l.b16 %v339
        %v816 = vunpack.c.h.b16 %v339
        %v817 = vunpack.c.l.b16 %v340
        %v818 = vunpack.c.h.b16 %v340
        %v819 = vunpack.c.l.b16 %v341
        %v820 = vunpack.c.h.b16 %v341
        %v821 = vunpack.c.l.b16 %v342
        %v822 = vunpack.c.h.b16 %v342
        %v823 = vunpack.c.l.b16 %v343
        %v824 = vunpack.c.h.b16 %v343
        %v825 = vunpack.c.l.b16 %v344
        %v826 = vunpack.c.h.b16 %v344
        %v827 = vunpack.c.l.b16 %v345
        %v828 = vunpack.c.h.b16 %v345
        %v829 = vunpack.c.l.b16 %v346
        %v830 = vunpack.c.h.b16 %v346
        %v831 = vunpack.c.l.b16 %v347
        %v832 = vunpack.c.h.b16 %v347
        %v833 = vunpack.c.l.b16 %v348
        %v834 = vunpack.c.h.b16 %v348
        %v835 = vunpack.c.l.b16 %v349
        %v836 = vunpack.c.h.b16 %v349
        %v837 = vunpack.c.l.b16 %v350
        %v838 = vunpack.c.h.b16 %v350
        %v839 = vunpack.c.l.b16 %v351
        %v840 = vunpack.c.h.b16 %v351
        %v841 = vunpack.c.l.b16 %v352
        %v842 = vunpack.c.h.b16 %v352
        %v843 = vunpack.c.l.b16 %v353
        %v844 = vunpack.c.h.b16 %v353
        %v845 = vunpack.c.l.b16 %v354
        %v846 = vunpack.c.h.b16 %v354
        %v847 = vunpack.c.l.b16 %v355
        %v848 = vunpack.c.h.b16 %v355
        %v849 = vunpack.c.l.b16 %v356
        %v850 = vunpack.c.h.b16 %v356
        %v851 = vunpack.c.l.b16 %v357
        %v852 = vunpack.c.h.b16 %v357
        %v853 = vunpack.c.l.b16 %v358
        %v854 = vunpack.c.h.b16 %v358
        %v855 = vunpack.c.l.b16 %v359
        %v856 = vunpack.c.h.b16 %v359
        %v857 = vunpack.c.l.b16 %v360
        %v858 = vunpack.c.h.b16 %v360
        %v859 = vunpack.c.l.b16 %v361
        %v860 = vunpack.c.h.b16 %v361
        %v861 = vunpack.c.l.b16 %v362
        %v862 = vunpack.c.h.b16 %v362
        %v863 = vunpack.c.l.b16 %v363
        %v864 = vunpack.c.h.b16 %v363
        %v865 = vunpack.c.l.b16 %v364
        %v866 = vunpack.c.h.b16 %v364
        %v867 = vunpack.c.l.b16 %v365
        %v868 = vunpack.c.h.b16 %v365
        %v869 = vunpack.c.l.b16 %v366
        %v870 = vunpack.c.h.b16 %v366
        %v871 = vunpack.c.l.b16 %v367
        %v872 = vunpack.c.h.b16 %v367
        %v873 = vunpack.c.l.b16 %v368
        %v874 = vunpack.c.h.b16 %v368
        %v875 = vunpack.c.l.b16 %v369
        %v876 = vunpack.c.h.b16 %v369
        %v877 = vunpack.c.l.b16 %v370
        %v878 = vunpack.c.h.b16 %v370
        %v879 = vunpack.c.l.b16 %v371
        %v880 = vunpack.c.h.b16 %v371
        %v881 = vunpack.c.l.b16 %v372
        %v882 = vunpack.c.h.b16 %v372
        %v883 = vunpack.c.l.b16 %v373
        %v884 = vunpack.c.h.b16 %v373
        %v885 = vunpack.c.l.b16 %v374
        %v886 = vunpack.c.h.b16 %v374
        %v887 = vunpack.c.l.b16 %v375
        %v888 = vunpack.c.h.b16 %v375
        %v889 = vunpack.c.l.b16 %v376
        %v890 = vunpack.c.h.b16 %v376
        %v891 = vunpack.c.l.b16 %v377
        %v892 = vunpack.c.h.b16 %v377
        %v893 = vunpack.c.l.b16 %v378
        %v894 = vunpack.c.h.b16 %v378
        %v895 = vunpack.c.l.b16 %v379
        %v896 = vunpack.c.h.b16 %v379
        %v897 = vunpack.c.l.b16 %v380
        %v898 = vunpack.c.h.b16 %v380
        %v899 = vunpack.c.l.b16 %v381
        %v900 = vunpack.c.h.b16 %v381
        %v901 = vunpack.c.l.b16 %v382
        %v902 = vunpack.c.h.b16 %v382
        %v903 = vunpack.c.l.b16 %v383
        %v904 = vunpack.c.h.b16 %v383
        %v905 = vunpack.c.l.b16 %v384
        %v906 = vunpack.c.h.b16 %v384
        %v907 = vunpack.c.l.b16 %v385
        %v908 = vunpack.c.h.b16 %v385
        %v909 = vunpack.c.l.b16 %v386
        %v910 = vunpack.c.h.b16 %v386
        %v911 = vunpack.c.l.b16 %v387
        %v912 = vunpack.c.h.b16 %v387
        %v913 = vunpack.c.l.b16 %v388
        %v914 = vunpack.c.h.b16 %v388
        %v915 = vunpack.c.l.b16 %v389
        %v916 = vunpack.c.h.b16 %v389
        %v917 = vunpack.c.l.b16 %v390
        %v918 = vunpack.c.h.b16 %v390
        %v919 = vunpack.c.l.b16 %v391
        %v920 = vunpack.c.h.b16 %v391
        %v921 = vunpack.c.l.b16 %v392
        %v922 = vunpack.c.h.b16 %v392
        %v923 = vunpack.c.l.b16 %v393
        %v924 = vunpack.c.h.b16 %v393
        %v925 = vunpack.c.l.b16 %v394
        %v926 = vunpack.c.h.b16 %v394
        %v927 = vunpack.c.l.b16 %v395
        %v928 = vunpack.c.h.b16 %v395
        %v929 = vunpack.c.l.b16 %v396
        %v930 = vunpack.c.h.b16 %v396
        %v931 = vunpack.c.l.b16 %v397
        %v932 = vunpack.c.h.b16 %v397
        %v933 = vunpack.c.l.b16 %v398
        %v934 = vunpack.c.h.b16 %v398
        %v935 = vunpack.c.l.b16 %v399
        %v936 = vunpack.c.h.b16 %v399
        %v937 = vunpack.c.l.b16 %v400
        %v938 = vunpack.c.h.b16 %v400
        %v939 = vunpack.c.l.b16 %v401
        %v940 = vunpack.c.h.b16 %v401
        %v941 = vunpack.c.l.b16 %v402
        %v942 = vunpack.c.h.b16 %v402
        %v943 = vunpack.c.l.b16 %v403
        %v944 = vunpack.c.h.b16 %v403
        %v945 = vunpack.c.l.b16 %v404
        %v946 = vunpack.c.h.b16 %v404
        %v947 = vunpack.c.l.b16 %v405
        %v948 = vunpack.c.h.b16 %v405
        %v949 = vunpack.c.l.b16 %v406
        %v950 = vunpack.c.h.b16 %v406
        %v951 = vunpack.c.l.b16 %v407
        %v952 = vunpack.c.h.b16 %v407
        %v953 = vunpack.c.l.b16 %v408
        %v954 = vunpack.c.h.b16 %v408
        %v955 = vunpack.c.l.b16 %v409
        %v956 = vunpack.c.h.b16 %v409
        %v957 = vunpack.c.l.b16 %v410
        %v958 = vunpack.c.h.b16 %v410
        %v959 = vunpack.c.l.b16 %v411
        %v960 = vunpack.c.h.b16 %v411
        %v961 = vunpack.c.l.b16 %v412
        %v962 = vunpack.c.h.b16 %v412
        %v963 = vunpack.c.l.b16 %v413
        %v964 = vunpack.c.h.b16 %v413
        %v965 = vunpack.c.l.b16 %v414
        %v966 = vunpack.c.h.b16 %v414
        %v967 = vunpack.c.l.b16 %v415
        %v968 = vunpack.c.h.b16 %v415
        %v969 = vunpack.c.l.b16 %v416
        %v970 = vunpack.c.h.b16 %v416
        %v971 = vunpack.c.l.b16 %v417
        %v972 = vunpack.c.h.b16 %v417
        %v973 = vunpack.c.l.b16 %v418
        %v974 = vunpack.c.h.b16 %v418
        %v975 = vunpack.c.l.b16 %v419
        %v976 = vunpack.c.h.b16 %v419
        %v977 = vunpack.c.l.b16 %v420
        %v978 = vunpack.c.h.b16 %v420
        %v979 = vunpack.c.l.b16 %v421
        %v980 = vunpack.c.h.b16 %v421
        %v981 = vunpack.c.l.b16 %v422
        %v982 = vunpack.c.h.b16 %v422
        %v983 = vunpack.c.l.b16 %v423
        %v984 = vunpack.c.h.b16 %v423
        %v985 = vunpack.c.l.b16 %v424
        %v986 = vunpack.c.h.b16 %v424
        %v987 = vunpack.c.l.b16 %v425
        %v988 = vunpack.c.h.b16 %v425
        %v989 = vunpack.c.l.b16 %v426
        %v990 = vunpack.c.h.b16 %v426
        %v991 = vunpack.c.l.b16 %v427
        %v992 = vunpack.c.h.b16 %v427
        %v993 = vunpack.c.l.b16 %v428
        %v994 = vunpack.c.h.b16 %v428
        %v995 = vunpack.c.l.b16 %v429
        %v996 = vunpack.c.h.b16 %v429
        %v997 = vunpack.c.l.b16 %v430
        %v998 = vunpack.c.h.b16 %v430
        %v999 = vunpack.c.l.b16 %v431
        %v1000 = vunpack.c.h.b16 %v431
        %v1001 = vunpack.c.l.b16 %v432
        %v1002 = vunpack.c.h.b16 %v432
        %v1003 = vunpack.c.l.b16 %v433
        %v1004 = vunpack.c.h.b16 %v433
        %v1005 = vunpack.c.l.b16 %v434
        %v1006 = vunpack.c.h.b16 %v434
        %v1007 = vunpack.c.l.b16 %v435
        %v1008 = vunpack.c.h.b16 %v435
        %v1009 = vunpack.c.l.b16 %v436
        %v1010 = vunpack.c.h.b16 %v436
        %v1011 = vunpack.c.l.b16 %v437
        %v1012 = vunpack.c.h.b16 %v437
        %v1013 = vunpack.c.l.b16 %v438
        %v1014 = vunpack.c.h.b16 %v438
        %v1015 = vunpack.c.l.b16 %v439
        %v1016 = vunpack.c.h.b16 %v439
        %v1017 = vunpack.c.l.b16 %v440
        %v1018 = vunpack.c.h.b16 %v440
        %v1019 = vunpack.c.l.b16 %v441
        %v1020 = vunpack.c.h.b16 %v441
        %v1021 = vunpack.c.l.b16 %v442
        %v1022 = vunpack.c.h.b16 %v442
        %v1023 = vunpack.c.l.b16 %v443
        %v1024 = vunpack.c.h.b16 %v443
        %v1025 = vunpack.c.l.b16 %v444
        %v1026 = vunpack.c.h.b16 %v444
        %v1027 = vunpack.c.l.b16 %v445
        %v1028 = vunpack.c.h.b16 %v445
        %v1029 = vunpack.c.l.b16 %v446
        %v1030 = vunpack.c.h.b16 %v446
        %v1031 = vunpack.c.l.b16 %v447
        %v1032 = vunpack.c.h.b16 %v447
        %v1033 = vunpack.c.l.b16 %v448
        %v1034 = vunpack.c.h.b16 %v448
        %v1035 = vpack.c.b16 %v787, %v779
        %v1036 = vpack.c.b16 %v788, %v780
        %v1037 = vpack.c.b16 %v789, %v781
        %v1038 = vpack.c.b16 %v790, %v782
        %v1039 = vpack.c.b16 %v791, %v783
        %v1040 = vpack.c.b16 %v792, %v784
        %v1041 = vpack.c.b16 %v793, %v785
        %v1042 = vpack.c.b16 %v794, %v786
        %v1043 = vpack.c.b16 %v803, %v795
        %v1044 = vpack.c.b16 %v804, %v796
        %v1045 = vpack.c.b16 %v805, %v797
        %v1046 = vpack.c.b16 %v806, %v798
        %v1047 = vpack.c.b16 %v807, %v799
        %v1048 = vpack.c.b16 %v808, %v800
        %v1049 = vpack.c.b16 %v809, %v801
        %v1050 = vpack.c.b16 %v810, %v802
        %v1051 = vpack.c.b16 %v819, %v811
        %v1052 = vpack.c.b16 %v820, %v812
        %v1053 = vpack.c.b16 %v821, %v813
        %v1054 = vpack.c.b16 %v822, %v814
        %v1055 = vpack.c.b16 %v823, %v815
        %v1056 = vpack.c.b16 %v824, %v816
        %v1057 = vpack.c.b16 %v825, %v817
        %v1058 = vpack.c.b16 %v826, %v818
        %v1059 = vpack.c.b16 %v835, %v827
        %v1060 = vpack.c.b16 %v836, %v828
        %v1061 = vpack.c.b16 %v837, %v829
        %v1062 = vpack.c.b16 %v838, %v830
        %v1063 = vpack.c.b16 %v839, %v831
        %v1064 = vpack.c.b16 %v840, %v832
        %v1065 = vpack.c.b16 %v841, %v833
        %v1066 = vpack.c.b16 %v842, %v834
        %v1067 = vpack.c.b16 %v851, %v843
        %v1068 = vpack.c.b16 %v852, %v844
        %v1069 = vpack.c.b16 %v853, %v845
        %v1070 = vpack.c.b16 %v854, %v846
        %v1071 = vpack.c.b16 %v855, %v847
        %v1072 = vpack.c.b16 %v856, %v848
        %v1073 = vpack.c.b16 %v857, %v849
        %v1074 = vpack.c.b16 %v858, %v850
        %v1075 = vpack.c.b16 %v867, %v859
        %v1076 = vpack.c.b16 %v868, %v860
        %v1077 = vpack.c.b16 %v869, %v861
        %v1078 = vpack.c.b16 %v870, %v862
        %v1079 = vpack.c.b16 %v871, %v863
        %v1080 = vpack.c.b16 %v872, %v864
        %v1081 = vpack.c.b16 %v873, %v865
        %v1082 = vpack.c.b16 %v874, %v866
        %v1083 = vpack.c.b16 %v883, %v875
        %v1084 = vpack.c.b16 %v884, %v876
        %v1085 = vpack.c.b16 %v885, %v877
        %v1086 = vpack.c.b16 %v886, %v878
        %v1087 = vpack.c.b16 %v887, %v879
        %v1088 = vpack.c.b16 %v888, %v880
        %v1089 = vpack.c.b16 %v889, %v881
        %v1090 = vpack.c.b16 %v890, %v882
        %v1091 = vpack.c.b16 %v899, %v891
        %v1092 = vpack.c.b16 %v900, %v892
        %v1093 = vpack.c.b16 %v901, %v893
        %v1094 = vpack.c.b16 %v902, %v894
        %v1095 = vpack.c.b16 %v903, %v895
        %v1096 = vpack.c.b16 %v904, %v896
        %v1097 = vpack.c.b16 %v905, %v897
        %v1098 = vpack.c.b16 %v906, %v898
        %v1099 = vpack.c.b16 %v915, %v907
        %v1100 = vpack.c.b16 %v916, %v908
        %v1101 = vpack.c.b16 %v917, %v909
        %v1102 = vpack.c.b16 %v918, %v910
        %v1103 = vpack.c.b16 %v919, %v911
        %v1104 = vpack.c.b16 %v920, %v912
        %v1105 = vpack.c.b16 %v921, %v913
        %v1106 = vpack.c.b16 %v922, %v914
        %v1107 = vpack.c.b16 %v931, %v923
        %v1108 = vpack.c.b16 %v932, %v924
        %v1109 = vpack.c.b16 %v933, %v925
        %v1110 = vpack.c.b16 %v934, %v926
        %v1111 = vpack.c.b16 %v935, %v927
        %v1112 = vpack.c.b16 %v936, %v928
        %v1113 = vpack.c.b16 %v937, %v929
        %v1114 = vpack.c.b16 %v938, %v930
        %v1115 = vpack.c.b16 %v947, %v939
        %v1116 = vpack.c.b16 %v948, %v940
        %v1117 = vpack.c.b16 %v949, %v941
        %v1118 = vpack.c.b16 %v950, %v942
        %v1119 = vpack.c.b16 %v951, %v943
        %v1120 = vpack.c.b16 %v952, %v944
        %v1121 = vpack.c.b16 %v953, %v945
        %v1122 = vpack.c.b16 %v954, %v946
        %v1123 = vpack.c.b16 %v963, %v955
        %v1124 = vpack.c.b16 %v964, %v956
        %v1125 = vpack.c.b16 %v965, %v957
        %v1126 = vpack.c.b16 %v966, %v958
        %v1127 = vpack.c.b16 %v967, %v959
        %v1128 = vpack.c.b16 %v968, %v960
        %v1129 = vpack.c.b16 %v969, %v961
        %v1130 = vpack.c.b16 %v970, %v962
        %v1131 = vpack.c.b16 %v979, %v971
        %v1132 = vpack.c.b16 %v980, %v972
        %v1133 = vpack.c.b16 %v981, %v973
        %v1134 = vpack.c.b16 %v982, %v974
        %v1135 = vpack.c.b16 %v983, %v975
        %v1136 = vpack.c.b16 %v984, %v976
        %v1137 = vpack.c.b16 %v985, %v977
        %v1138 = vpack.c.b16 %v986, %v978
        %v1139 = vpack.c.b16 %v995, %v987
        %v1140 = vpack.c.b16 %v996, %v988
        %v1141 = vpack.c.b16 %v997, %v989
        %v1142 = vpack.c.b16 %v998, %v990
        %v1143 = vpack.c.b16 %v999, %v991
        %v1144 = vpack.c.b16 %v1000, %v992
        %v1145 = vpack.c.b16 %v1001, %v993
        %v1146 = vpack.c.b16 %v1002, %v994
        %v1147 = vpack.c.b16 %v1011, %v1003
        %v1148 = vpack.c.b16 %v1012, %v1004
        %v1149 = vpack.c.b16 %v1013, %v1005
        %v1150 = vpack.c.b16 %v1014, %v1006
        %v1151 = vpack.c.b16 %v1015, %v1007
        %v1152 = vpack.c.b16 %v1016, %v1008
        %v1153 = vpack.c.b16 %v1017, %v1009
        %v1154 = vpack.c.b16 %v1018, %v1010
        %v1155 = vpack.c.b16 %v1027, %v1019
        %v1156 = vpack.c.b16 %v1028, %v1020
        %v1157 = vpack.c.b16 %v1029, %v1021
        %v1158 = vpack.c.b16 %v1030, %v1022
        %v1159 = vpack.c.b16 %v1031, %v1023
        %v1160 = vpack.c.b16 %v1032, %v1024
        %v1161 = vpack.c.b16 %v1033, %v1025
        %v1162 = vpack.c.b16 %v1034, %v1026
        %1291 = vmatprep.subr.bf16.mxu0 %v1036
        %1292 = vmatpush1.bf16.msra.mxu0 %v1035
        %1293 = vmatprep.subr.bf16.mxu0 %v1044
        %1294 = vmatpush1.bf16.msra.mxu0 %v1043
        %1295 = vmatprep.subr.bf16.mxu0 %v1052
        %1296 = vmatpush1.bf16.msra.mxu0 %v1051
        %1297 = vmatprep.subr.bf16.mxu0 %v1060
        %1298 = vmatpush1.bf16.msra.mxu0 %v1059
        %1299 = vmatprep.subr.bf16.mxu0 %v1068
        %1300 = vmatpush1.bf16.msra.mxu0 %v1067
        %1301 = vmatprep.subr.bf16.mxu0 %v1076
        %1302 = vmatpush1.bf16.msra.mxu0 %v1075
        %1303 = vmatprep.subr.bf16.mxu0 %v1084
        %1304 = vmatpush1.bf16.msra.mxu0 %v1083
        %1305 = vmatprep.subr.bf16.mxu0 %v1092
        %1306 = vmatpush1.bf16.msra.mxu0 %v1091
        %1307 = vmatprep.subr.bf16.mxu0 %v1100
        %1308 = vmatpush1.bf16.msra.mxu0 %v1099
        %1309 = vmatprep.subr.bf16.mxu0 %v1108
        %1310 = vmatpush1.bf16.msra.mxu0 %v1107
        %1311 = vmatprep.subr.bf16.mxu0 %v1116
        %1312 = vmatpush1.bf16.msra.mxu0 %v1115
        %1313 = vmatprep.subr.bf16.mxu0 %v1124
        %1314 = vmatpush1.bf16.msra.mxu0 %v1123
        %1315 = vmatprep.subr.bf16.mxu0 %v1132
        %1316 = vmatpush1.bf16.msra.mxu0 %v1131
        %1317 = vmatprep.subr.bf16.mxu0 %v1140
        %1318 = vmatpush1.bf16.msra.mxu0 %v1139
        %1319 = vmatprep.subr.bf16.mxu0 %v1148
        %1320 = vmatpush1.bf16.msra.mxu0 %v1147
        %1321 = vmatprep.subr.bf16.mxu0 %v1156
        %1322 = vmatpush1.bf16.msra.mxu0 %v1155
        %1323 = vmatprep.mubr.bf16.mxu0 %v588
        %1324 = vmatmul.mubr.bf16.gmra.mrb[0].mxu0 %v587
        %v1325 = vpop.f32.mrb[0].mxu0
        %v1326 = vadd.f32 %v454, %v1325
        %v1327 = vpop.f32.mrb[0].mxu0
        %v1328 = vadd.f32 %v458, %v1327
        %v1329 = vpop.f32.mrb[0].mxu0
        %v1330 = vadd.f32 %v454, %v1329
        %v1331 = vpop.f32.mrb[0].mxu0
        %v1332 = vadd.f32 %v458, %v1331
        %1333 = vmatprep.mubr.bf16.mxu0 %v590
        %1334 = vmatmul.mubr.bf16.gmra.mrb[0].mxu0 %v589
        %v1335 = vpop.f32.mrb[0].mxu0
        %v1336 = vadd.f32 %v454, %v1335
        %v1337 = vpop.f32.mrb[0].mxu0
        %v1338 = vadd.f32 %v458, %v1337
        %v1339 = vpop.f32.mrb[0].mxu0
        %v1340 = vadd.f32 %v454, %v1339
        %v1341 = vpop.f32.mrb[0].mxu0
        %v1342 = vadd.f32 %v458, %v1341
        %1343 = vmatprep.mubr.bf16.mxu0 %v592
        %1344 = vmatmul.mubr.bf16.gmra.mrb[0].mxu0 %v591
        %v1345 = vpop.f32.mrb[0].mxu0
        %v1346 = vadd.f32 %v454, %v1345
        %v1347 = vpop.f32.mrb[0].mxu0
        %v1348 = vadd.f32 %v458, %v1347
        %v1349 = vpop.f32.mrb[0].mxu0
        %v1350 = vadd.f32 %v454, %v1349
        %v1351 = vpop.f32.mrb[0].mxu0
        %v1352 = vadd.f32 %v458, %v1351
        %1353 = vmatprep.mubr.bf16.mxu0 %v594
        %1354 = vmatmul.mubr.bf16.gmra.mrb[0].mxu0 %v593
        %v1355 = vpop.f32.mrb[0].mxu0
        %v1356 = vadd.f32 %v454, %v1355
        %v1357 = vpop.f32.mrb[0].mxu0
        %v1358 = vadd.f32 %v458, %v1357
        %v1359 = vpop.f32.mrb[0].mxu0
        %v1360 = vadd.f32 %v454, %v1359
        %v1361 = vpop.f32.mrb[0].mxu0
        %v1362 = vadd.f32 %v458, %v1361
        %1363 = vmatprep.mubr.bf16.mxu0 %v596
        %1364 = vmatmul.mubr.bf16.gmra.mrb[0].mxu0 %v595
        %v1365 = vpop.f32.mrb[0].mxu0
        %v1366 = vadd.f32 %v454, %v1365
        %v1367 = vpop.f32.mrb[0].mxu0
        %v1368 = vadd.f32 %v458, %v1367
        %v1369 = vpop.f32.mrb[0].mxu0
        %v1370 = vadd.f32 %v454, %v1369
        %v1371 = vpop.f32.mrb[0].mxu0
        %v1372 = vadd.f32 %v458, %v1371
        %1373 = vmatprep.mubr.bf16.mxu0 %v598
        %1374 = vmatmul.mubr.bf16.gmra.mrb[0].mxu0 %v597
        %v1375 = vpop.f32.mrb[0].mxu0
        %v1376 = vadd.f32 %v454, %v1375
        %v1377 = vpop.f32.mrb[0].mxu0
        %v1378 = vadd.f32 %v458, %v1377
        %v1379 = vpop.f32.mrb[0].mxu0
        %v1380 = vadd.f32 %v454, %v1379
        %v1381 = vpop.f32.mrb[0].mxu0
        %v1382 = vadd.f32 %v458, %v1381
        %1383 = vmatprep.mubr.bf16.mxu0 %v600
        %1384 = vmatmul.mubr.bf16.gmra.mrb[0].mxu0 %v599
        %v1385 = vpop.f32.mrb[0].mxu0
        %v1386 = vadd.f32 %v454, %v1385
        %v1387 = vpop.f32.mrb[0].mxu0
        %v1388 = vadd.f32 %v458, %v1387
        %v1389 = vpop.f32.mrb[0].mxu0
        %v1390 = vadd.f32 %v454, %v1389
        %v1391 = vpop.f32.mrb[0].mxu0
        %v1392 = vadd.f32 %v458, %v1391
        %1393 = vmatprep.mubr.bf16.mxu0 %v602
        %1394 = vmatmul.mubr.bf16.gmra.mrb[0].mxu0 %v601
        %v1395 = vpop.f32.mrb[0].mxu0
        %v1396 = vadd.f32 %v454, %v1395
        %v1397 = vpop.f32.mrb[0].mxu0
        %v1398 = vadd.f32 %v458, %v1397
        %v1399 = vpop.f32.mrb[0].mxu0
        %v1400 = vadd.f32 %v454, %v1399
        %v1401 = vpop.f32.mrb[0].mxu0
        %v1402 = vadd.f32 %v458, %v1401
        %1403 = vmatprep.mubr.bf16.mxu0 %v604
        %1404 = vmatmul.mubr.bf16.gmra.mrb[0].mxu0 %v603
        %v1405 = vpop.f32.mrb[0].mxu0
        %v1406 = vadd.f32 %v454, %v1405
        %v1407 = vpop.f32.mrb[0].mxu0
        %v1408 = vadd.f32 %v458, %v1407
        %v1409 = vpop.f32.mrb[0].mxu0
        %v1410 = vadd.f32 %v454, %v1409
        %v1411 = vpop.f32.mrb[0].mxu0
        %v1412 = vadd.f32 %v458, %v1411
        %1413 = vmatprep.mubr.bf16.mxu0 %v606
        %1414 = vmatmul.mubr.bf16.gmra.mrb[0].mxu0 %v605
        %v1415 = vpop.f32.mrb[0].mxu0
        %v1416 = vadd.f32 %v454, %v1415
        %v1417 = vpop.f32.mrb[0].mxu0
        %v1418 = vadd.f32 %v458, %v1417
        %v1419 = vpop.f32.mrb[0].mxu0
        %v1420 = vadd.f32 %v454, %v1419
        %v1421 = vpop.f32.mrb[0].mxu0
        %v1422 = vadd.f32 %v458, %v1421
        %1423 = vmatprep.mubr.bf16.mxu0 %v608
        %1424 = vmatmul.mubr.bf16.gmra.mrb[0].mxu0 %v607
        %v1425 = vpop.f32.mrb[0].mxu0
        %v1426 = vadd.f32 %v454, %v1425
        %v1427 = vpop.f32.mrb[0].mxu0
        %v1428 = vadd.f32 %v458, %v1427
        %v1429 = vpop.f32.mrb[0].mxu0
        %v1430 = vadd.f32 %v454, %v1429
        %v1431 = vpop.f32.mrb[0].mxu0
        %v1432 = vadd.f32 %v458, %v1431
        %1433 = vmatprep.mubr.bf16.mxu0 %v610
        %1434 = vmatmul.mubr.bf16.gmra.mrb[0].mxu0 %v609
        %v1435 = vpop.f32.mrb[0].mxu0
        %v1436 = vadd.f32 %v454, %v1435
        %v1437 = vpop.f32.mrb[0].mxu0
        %v1438 = vadd.f32 %v458, %v1437
        %v1439 = vpop.f32.mrb[0].mxu0
        %v1440 = vadd.f32 %v454, %v1439
        %v1441 = vpop.f32.mrb[0].mxu0
        %v1442 = vadd.f32 %v458, %v1441
        %1443 = vmatprep.mubr.bf16.mxu0 %v612
        %1444 = vmatmul.mubr.bf16.gmra.mrb[0].mxu0 %v611
        %v1445 = vpop.f32.mrb[0].mxu0
        %v1446 = vadd.f32 %v454, %v1445
        %v1447 = vpop.f32.mrb[0].mxu0
        %v1448 = vadd.f32 %v458, %v1447
        %v1449 = vpop.f32.mrb[0].mxu0
        %v1450 = vadd.f32 %v454, %v1449
        %v1451 = vpop.f32.mrb[0].mxu0
        %v1452 = vadd.f32 %v458, %v1451
        %1453 = vmatprep.mubr.bf16.mxu0 %v614
        %1454 = vmatmul.mubr.bf16.gmra.mrb[0].mxu0 %v613
        %v1455 = vpop.f32.mrb[0].mxu0
        %v1456 = vadd.f32 %v454, %v1455
        %v1457 = vpop.f32.mrb[0].mxu0
        %v1458 = vadd.f32 %v458, %v1457
        %v1459 = vpop.f32.mrb[0].mxu0
        %v1460 = vadd.f32 %v454, %v1459
        %v1461 = vpop.f32.mrb[0].mxu0
        %v1462 = vadd.f32 %v458, %v1461
        %1463 = vmatprep.mubr.bf16.mxu0 %v616
        %1464 = vmatmul.mubr.bf16.gmra.mrb[0].mxu0 %v615
        %v1465 = vpop.f32.mrb[0].mxu0
        %v1466 = vadd.f32 %v454, %v1465
        %v1467 = vpop.f32.mrb[0].mxu0
        %v1468 = vadd.f32 %v458, %v1467
        %v1469 = vpop.f32.mrb[0].mxu0
        %v1470 = vadd.f32 %v454, %v1469
        %v1471 = vpop.f32.mrb[0].mxu0
        %v1472 = vadd.f32 %v458, %v1471
        %1473 = vmatprep.mubr.bf16.mxu0 %v618
        %1474 = vmatmul.mubr.bf16.gmra.mrb[0].mxu0 %v617
        %v1475 = vpop.f32.mrb[0].mxu0
        %v1476 = vadd.f32 %v454, %v1475
        %v1477 = vpop.f32.mrb[0].mxu0
        %v1478 = vadd.f32 %v458, %v1477
        %v1479 = vpop.f32.mrb[0].mxu0
        %v1480 = vadd.f32 %v454, %v1479
        %v1481 = vpop.f32.mrb[0].mxu0
        %v1482 = vadd.f32 %v458, %v1481
        %1483 = vdwg.mxu0
        %1484 = vmatprep.subr.bf16.mxu0 %v1038
        %1485 = vmatpush1.bf16.msra.mxu0 %v1037
        %1486 = vmatprep.subr.bf16.mxu0 %v1046
        %1487 = vmatpush1.bf16.msra.mxu0 %v1045
        %1488 = vmatprep.subr.bf16.mxu0 %v1054
        %1489 = vmatpush1.bf16.msra.mxu0 %v1053
        %1490 = vmatprep.subr.bf16.mxu0 %v1062
        %1491 = vmatpush1.bf16.msra.mxu0 %v1061
        %1492 = vmatprep.subr.bf16.mxu0 %v1070
        %1493 = vmatpush1.bf16.msra.mxu0 %v1069
        %1494 = vmatprep.subr.bf16.mxu0 %v1078
        %1495 = vmatpush1.bf16.msra.mxu0 %v1077
        %1496 = vmatprep.subr.bf16.mxu0 %v1086
        %1497 = vmatpush1.bf16.msra.mxu0 %v1085
        %1498 = vmatprep.subr.bf16.mxu0 %v1094
        %1499 = vmatpush1.bf16.msra.mxu0 %v1093
        %1500 = vmatprep.subr.bf16.mxu0 %v1102
        %1501 = vmatpush1.bf16.msra.mxu0 %v1101
        %1502 = vmatprep.subr.bf16.mxu0 %v1110
        %1503 = vmatpush1.bf16.msra.mxu0 %v1109
        %1504 = vmatprep.subr.bf16.mxu0 %v1118
        %1505 = vmatpush1.bf16.msra.mxu0 %v1117
        %1506 = vmatprep.subr.bf16.mxu0 %v1126
        %1507 = vmatpush1.bf16.msra.mxu0 %v1125
        %1508 = vmatprep.subr.bf16.mxu0 %v1134
        %1509 = vmatpush1.bf16.msra.mxu0 %v1133
        %1510 = vmatprep.subr.bf16.mxu0 %v1142
        %1511 = vmatpush1.bf16.msra.mxu0 %v1141
        %1512 = vmatprep.subr.bf16.mxu0 %v1150
        %1513 = vmatpush1.bf16.msra.mxu0 %v1149
        %1514 = vmatprep.subr.bf16.mxu0 %v1158
        %1515 = vmatpush1.bf16.msra.mxu0 %v1157
        %1516 = vmatprep.mubr.bf16.mxu0 %v588
        %1517 = vmatmul.mubr.bf16.gmra.mrb[0].mxu0 %v587
        %v1518 = vpop.f32.mrb[0].mxu0
        %v1519 = vadd.f32 %v462, %v1518
        %v1520 = vpop.f32.mrb[0].mxu0
        %v1521 = vadd.f32 %v466, %v1520
        %v1522 = vpop.f32.mrb[0].mxu0
        %v1523 = vadd.f32 %v462, %v1522
        %v1524 = vpop.f32.mrb[0].mxu0
        %v1525 = vadd.f32 %v466, %v1524
        %1526 = vmatprep.mubr.bf16.mxu0 %v590
        %1527 = vmatmul.mubr.bf16.gmra.mrb[0].mxu0 %v589
        %v1528 = vpop.f32.mrb[0].mxu0
        %v1529 = vadd.f32 %v462, %v1528
        %v1530 = vpop.f32.mrb[0].mxu0
        %v1531 = vadd.f32 %v466, %v1530
        %v1532 = vpop.f32.mrb[0].mxu0
        %v1533 = vadd.f32 %v462, %v1532
        %v1534 = vpop.f32.mrb[0].mxu0
        %v1535 = vadd.f32 %v466, %v1534
        %1536 = vmatprep.mubr.bf16.mxu0 %v592
        %1537 = vmatmul.mubr.bf16.gmra.mrb[0].mxu0 %v591
        %v1538 = vpop.f32.mrb[0].mxu0
        %v1539 = vadd.f32 %v462, %v1538
        %v1540 = vpop.f32.mrb[0].mxu0
        %v1541 = vadd.f32 %v466, %v1540
        %v1542 = vpop.f32.mrb[0].mxu0
        %v1543 = vadd.f32 %v462, %v1542
        %v1544 = vpop.f32.mrb[0].mxu0
        %v1545 = vadd.f32 %v466, %v1544
        %1546 = vmatprep.mubr.bf16.mxu0 %v594
        %1547 = vmatmul.mubr.bf16.gmra.mrb[0].mxu0 %v593
        %v1548 = vpop.f32.mrb[0].mxu0
        %v1549 = vadd.f32 %v462, %v1548
        %v1550 = vpop.f32.mrb[0].mxu0
        %v1551 = vadd.f32 %v466, %v1550
        %v1552 = vpop.f32.mrb[0].mxu0
        %v1553 = vadd.f32 %v462, %v1552
        %v1554 = vpop.f32.mrb[0].mxu0
        %v1555 = vadd.f32 %v466, %v1554
        %1556 = vmatprep.mubr.bf16.mxu0 %v596
        %1557 = vmatmul.mubr.bf16.gmra.mrb[0].mxu0 %v595
        %v1558 = vpop.f32.mrb[0].mxu0
        %v1559 = vadd.f32 %v462, %v1558
        %v1560 = vpop.f32.mrb[0].mxu0
        %v1561 = vadd.f32 %v466, %v1560
        %v1562 = vpop.f32.mrb[0].mxu0
        %v1563 = vadd.f32 %v462, %v1562
        %v1564 = vpop.f32.mrb[0].mxu0
        %v1565 = vadd.f32 %v466, %v1564
        %1566 = vmatprep.mubr.bf16.mxu0 %v598
        %1567 = vmatmul.mubr.bf16.gmra.mrb[0].mxu0 %v597
        %v1568 = vpop.f32.mrb[0].mxu0
        %v1569 = vadd.f32 %v462, %v1568
        %v1570 = vpop.f32.mrb[0].mxu0
        %v1571 = vadd.f32 %v466, %v1570
        %v1572 = vpop.f32.mrb[0].mxu0
        %v1573 = vadd.f32 %v462, %v1572
        %v1574 = vpop.f32.mrb[0].mxu0
        %v1575 = vadd.f32 %v466, %v1574
        %1576 = vmatprep.mubr.bf16.mxu0 %v600
        %1577 = vmatmul.mubr.bf16.gmra.mrb[0].mxu0 %v599
        %v1578 = vpop.f32.mrb[0].mxu0
        %v1579 = vadd.f32 %v462, %v1578
        %v1580 = vpop.f32.mrb[0].mxu0
        %v1581 = vadd.f32 %v466, %v1580
        %v1582 = vpop.f32.mrb[0].mxu0
        %v1583 = vadd.f32 %v462, %v1582
        %v1584 = vpop.f32.mrb[0].mxu0
        %v1585 = vadd.f32 %v466, %v1584
        %1586 = vmatprep.mubr.bf16.mxu0 %v602
        %1587 = vmatmul.mubr.bf16.gmra.mrb[0].mxu0 %v601
        %v1588 = vpop.f32.mrb[0].mxu0
        %v1589 = vadd.f32 %v462, %v1588
        %v1590 = vpop.f32.mrb[0].mxu0
        %v1591 = vadd.f32 %v466, %v1590
        %v1592 = vpop.f32.mrb[0].mxu0
        %v1593 = vadd.f32 %v462, %v1592
        %v1594 = vpop.f32.mrb[0].mxu0
        %v1595 = vadd.f32 %v466, %v1594
        %1596 = vmatprep.mubr.bf16.mxu0 %v604
        %1597 = vmatmul.mubr.bf16.gmra.mrb[0].mxu0 %v603
        %v1598 = vpop.f32.mrb[0].mxu0
        %v1599 = vadd.f32 %v462, %v1598
        %v1600 = vpop.f32.mrb[0].mxu0
        %v1601 = vadd.f32 %v466, %v1600
        %v1602 = vpop.f32.mrb[0].mxu0
        %v1603 = vadd.f32 %v462, %v1602
        %v1604 = vpop.f32.mrb[0].mxu0
        %v1605 = vadd.f32 %v466, %v1604
        %1606 = vmatprep.mubr.bf16.mxu0 %v606
        %1607 = vmatmul.mubr.bf16.gmra.mrb[0].mxu0 %v605
        %v1608 = vpop.f32.mrb[0].mxu0
        %v1609 = vadd.f32 %v462, %v1608
        %v1610 = vpop.f32.mrb[0].mxu0
        %v1611 = vadd.f32 %v466, %v1610
        %v1612 = vpop.f32.mrb[0].mxu0
        %v1613 = vadd.f32 %v462, %v1612
        %v1614 = vpop.f32.mrb[0].mxu0
        %v1615 = vadd.f32 %v466, %v1614
        %1616 = vmatprep.mubr.bf16.mxu0 %v608
        %1617 = vmatmul.mubr.bf16.gmra.mrb[0].mxu0 %v607
        %v1618 = vpop.f32.mrb[0].mxu0
        %v1619 = vadd.f32 %v462, %v1618
        %v1620 = vpop.f32.mrb[0].mxu0
        %v1621 = vadd.f32 %v466, %v1620
        %v1622 = vpop.f32.mrb[0].mxu0
        %v1623 = vadd.f32 %v462, %v1622
        %v1624 = vpop.f32.mrb[0].mxu0
        %v1625 = vadd.f32 %v466, %v1624
        %1626 = vmatprep.mubr.bf16.mxu0 %v610
        %1627 = vmatmul.mubr.bf16.gmra.mrb[0].mxu0 %v609
        %v1628 = vpop.f32.mrb[0].mxu0
        %v1629 = vadd.f32 %v462, %v1628
        %v1630 = vpop.f32.mrb[0].mxu0
        %v1631 = vadd.f32 %v466, %v1630
        %v1632 = vpop.f32.mrb[0].mxu0
        %v1633 = vadd.f32 %v462, %v1632
        %v1634 = vpop.f32.mrb[0].mxu0
        %v1635 = vadd.f32 %v466, %v1634
        %1636 = vmatprep.mubr.bf16.mxu0 %v612
        %1637 = vmatmul.mubr.bf16.gmra.mrb[0].mxu0 %v611
        %v1638 = vpop.f32.mrb[0].mxu0
        %v1639 = vadd.f32 %v462, %v1638
        %v1640 = vpop.f32.mrb[0].mxu0
        %v1641 = vadd.f32 %v466, %v1640
        %v1642 = vpop.f32.mrb[0].mxu0
        %v1643 = vadd.f32 %v462, %v1642
        %v1644 = vpop.f32.mrb[0].mxu0
        %v1645 = vadd.f32 %v466, %v1644
        %1646 = vmatprep.mubr.bf16.mxu0 %v614
        %1647 = vmatmul.mubr.bf16.gmra.mrb[0].mxu0 %v613
        %v1648 = vpop.f32.mrb[0].mxu0
        %v1649 = vadd.f32 %v462, %v1648
        %v1650 = vpop.f32.mrb[0].mxu0
        %v1651 = vadd.f32 %v466, %v1650
        %v1652 = vpop.f32.mrb[0].mxu0
        %v1653 = vadd.f32 %v462, %v1652
        %v1654 = vpop.f32.mrb[0].mxu0
        %v1655 = vadd.f32 %v466, %v1654
        %1656 = vmatprep.mubr.bf16.mxu0 %v616
        %1657 = vmatmul.mubr.bf16.gmra.mrb[0].mxu0 %v615
        %v1658 = vpop.f32.mrb[0].mxu0
        %v1659 = vadd.f32 %v462, %v1658
        %v1660 = vpop.f32.mrb[0].mxu0
        %v1661 = vadd.f32 %v466, %v1660
        %v1662 = vpop.f32.mrb[0].mxu0
        %v1663 = vadd.f32 %v462, %v1662
        %v1664 = vpop.f32.mrb[0].mxu0
        %v1665 = vadd.f32 %v466, %v1664
        %1666 = vmatprep.mubr.bf16.mxu0 %v618
        %1667 = vmatmul.mubr.bf16.gmra.mrb[0].mxu0 %v617
        %v1668 = vpop.f32.mrb[0].mxu0
        %v1669 = vadd.f32 %v462, %v1668
        %v1670 = vpop.f32.mrb[0].mxu0
        %v1671 = vadd.f32 %v466, %v1670
        %v1672 = vpop.f32.mrb[0].mxu0
        %v1673 = vadd.f32 %v462, %v1672
        %v1674 = vpop.f32.mrb[0].mxu0
        %v1675 = vadd.f32 %v466, %v1674
        %1676 = vdwg.mxu0
        %1677 = vmatprep.subr.bf16.mxu0 %v1040
        %1678 = vmatpush1.bf16.msra.mxu0 %v1039
        %1679 = vmatprep.subr.bf16.mxu0 %v1048
        %1680 = vmatpush1.bf16.msra.mxu0 %v1047
        %1681 = vmatprep.subr.bf16.mxu0 %v1056
        %1682 = vmatpush1.bf16.msra.mxu0 %v1055
        %1683 = vmatprep.subr.bf16.mxu0 %v1064
        %1684 = vmatpush1.bf16.msra.mxu0 %v1063
        %1685 = vmatprep.subr.bf16.mxu0 %v1072
        %1686 = vmatpush1.bf16.msra.mxu0 %v1071
        %1687 = vmatprep.subr.bf16.mxu0 %v1080
        %1688 = vmatpush1.bf16.msra.mxu0 %v1079
        %1689 = vmatprep.subr.bf16.mxu0 %v1088
        %1690 = vmatpush1.bf16.msra.mxu0 %v1087
        %1691 = vmatprep.subr.bf16.mxu0 %v1096
        %1692 = vmatpush1.bf16.msra.mxu0 %v1095
        %1693 = vmatprep.subr.bf16.mxu0 %v1104
        %1694 = vmatpush1.bf16.msra.mxu0 %v1103
        %1695 = vmatprep.subr.bf16.mxu0 %v1112
        %1696 = vmatpush1.bf16.msra.mxu0 %v1111
        %1697 = vmatprep.subr.bf16.mxu0 %v1120
        %1698 = vmatpush1.bf16.msra.mxu0 %v1119
        %1699 = vmatprep.subr.bf16.mxu0 %v1128
        %1700 = vmatpush1.bf16.msra.mxu0 %v1127
        %1701 = vmatprep.subr.bf16.mxu0 %v1136
        %1702 = vmatpush1.bf16.msra.mxu0 %v1135
        %1703 = vmatprep.subr.bf16.mxu0 %v1144
        %1704 = vmatpush1.bf16.msra.mxu0 %v1143
        %1705 = vmatprep.subr.bf16.mxu0 %v1152
        %1706 = vmatpush1.bf16.msra.mxu0 %v1151
        %1707 = vmatprep.subr.bf16.mxu0 %v1160
        %1708 = vmatpush1.bf16.msra.mxu0 %v1159
        %1709 = vmatprep.mubr.bf16.mxu0 %v588
        %1710 = vmatmul.mubr.bf16.gmra.mrb[0].mxu0 %v587
        %v1711 = vpop.f32.mrb[0].mxu0
        %v1712 = vadd.f32 %v470, %v1711
        %v1713 = vpop.f32.mrb[0].mxu0
        %v1714 = vadd.f32 %v474, %v1713
        %v1715 = vpop.f32.mrb[0].mxu0
        %v1716 = vadd.f32 %v470, %v1715
        %v1717 = vpop.f32.mrb[0].mxu0
        %v1718 = vadd.f32 %v474, %v1717
        %1719 = vmatprep.mubr.bf16.mxu0 %v590
        %1720 = vmatmul.mubr.bf16.gmra.mrb[0].mxu0 %v589
        %v1721 = vpop.f32.mrb[0].mxu0
        %v1722 = vadd.f32 %v470, %v1721
        %v1723 = vpop.f32.mrb[0].mxu0
        %v1724 = vadd.f32 %v474, %v1723
        %v1725 = vpop.f32.mrb[0].mxu0
        %v1726 = vadd.f32 %v470, %v1725
        %v1727 = vpop.f32.mrb[0].mxu0
        %v1728 = vadd.f32 %v474, %v1727
        %1729 = vmatprep.mubr.bf16.mxu0 %v592
        %1730 = vmatmul.mubr.bf16.gmra.mrb[0].mxu0 %v591
        %v1731 = vpop.f32.mrb[0].mxu0
        %v1732 = vadd.f32 %v470, %v1731
        %v1733 = vpop.f32.mrb[0].mxu0
        %v1734 = vadd.f32 %v474, %v1733
        %v1735 = vpop.f32.mrb[0].mxu0
        %v1736 = vadd.f32 %v470, %v1735
        %v1737 = vpop.f32.mrb[0].mxu0
        %v1738 = vadd.f32 %v474, %v1737
        %1739 = vmatprep.mubr.bf16.mxu0 %v594
        %1740 = vmatmul.mubr.bf16.gmra.mrb[0].mxu0 %v593
        %v1741 = vpop.f32.mrb[0].mxu0
        %v1742 = vadd.f32 %v470, %v1741
        %v1743 = vpop.f32.mrb[0].mxu0
        %v1744 = vadd.f32 %v474, %v1743
        %v1745 = vpop.f32.mrb[0].mxu0
        %v1746 = vadd.f32 %v470, %v1745
        %v1747 = vpop.f32.mrb[0].mxu0
        %v1748 = vadd.f32 %v474, %v1747
        %1749 = vmatprep.mubr.bf16.mxu0 %v596
        %1750 = vmatmul.mubr.bf16.gmra.mrb[0].mxu0 %v595
        %v1751 = vpop.f32.mrb[0].mxu0
        %v1752 = vadd.f32 %v470, %v1751
        %v1753 = vpop.f32.mrb[0].mxu0
        %v1754 = vadd.f32 %v474, %v1753
        %v1755 = vpop.f32.mrb[0].mxu0
        %v1756 = vadd.f32 %v470, %v1755
        %v1757 = vpop.f32.mrb[0].mxu0
        %v1758 = vadd.f32 %v474, %v1757
        %1759 = vmatprep.mubr.bf16.mxu0 %v598
        %1760 = vmatmul.mubr.bf16.gmra.mrb[0].mxu0 %v597
        %v1761 = vpop.f32.mrb[0].mxu0
        %v1762 = vadd.f32 %v470, %v1761
        %v1763 = vpop.f32.mrb[0].mxu0
        %v1764 = vadd.f32 %v474, %v1763
        %v1765 = vpop.f32.mrb[0].mxu0
        %v1766 = vadd.f32 %v470, %v1765
        %v1767 = vpop.f32.mrb[0].mxu0
        %v1768 = vadd.f32 %v474, %v1767
        %1769 = vmatprep.mubr.bf16.mxu0 %v600
        %1770 = vmatmul.mubr.bf16.gmra.mrb[0].mxu0 %v599
        %v1771 = vpop.f32.mrb[0].mxu0
        %v1772 = vadd.f32 %v470, %v1771
        %v1773 = vpop.f32.mrb[0].mxu0
        %v1774 = vadd.f32 %v474, %v1773
        %v1775 = vpop.f32.mrb[0].mxu0
        %v1776 = vadd.f32 %v470, %v1775
        %v1777 = vpop.f32.mrb[0].mxu0
        %v1778 = vadd.f32 %v474, %v1777
        %1779 = vmatprep.mubr.bf16.mxu0 %v602
        %1780 = vmatmul.mubr.bf16.gmra.mrb[0].mxu0 %v601
        %v1781 = vpop.f32.mrb[0].mxu0
        %v1782 = vadd.f32 %v470, %v1781
        %v1783 = vpop.f32.mrb[0].mxu0
        %v1784 = vadd.f32 %v474, %v1783
        %v1785 = vpop.f32.mrb[0].mxu0
        %v1786 = vadd.f32 %v470, %v1785
        %v1787 = vpop.f32.mrb[0].mxu0
        %v1788 = vadd.f32 %v474, %v1787
        %1789 = vmatprep.mubr.bf16.mxu0 %v604
        %1790 = vmatmul.mubr.bf16.gmra.mrb[0].mxu0 %v603
        %v1791 = vpop.f32.mrb[0].mxu0
        %v1792 = vadd.f32 %v470, %v1791
        %v1793 = vpop.f32.mrb[0].mxu0
        %v1794 = vadd.f32 %v474, %v1793
        %v1795 = vpop.f32.mrb[0].mxu0
        %v1796 = vadd.f32 %v470, %v1795
        %v1797 = vpop.f32.mrb[0].mxu0
        %v1798 = vadd.f32 %v474, %v1797
        %1799 = vmatprep.mubr.bf16.mxu0 %v606
        %1800 = vmatmul.mubr.bf16.gmra.mrb[0].mxu0 %v605
        %v1801 = vpop.f32.mrb[0].mxu0
        %v1802 = vadd.f32 %v470, %v1801
        %v1803 = vpop.f32.mrb[0].mxu0
        %v1804 = vadd.f32 %v474, %v1803
        %v1805 = vpop.f32.mrb[0].mxu0
        %v1806 = vadd.f32 %v470, %v1805
        %v1807 = vpop.f32.mrb[0].mxu0
        %v1808 = vadd.f32 %v474, %v1807
        %1809 = vmatprep.mubr.bf16.mxu0 %v608
        %1810 = vmatmul.mubr.bf16.gmra.mrb[0].mxu0 %v607
        %v1811 = vpop.f32.mrb[0].mxu0
        %v1812 = vadd.f32 %v470, %v1811
        %v1813 = vpop.f32.mrb[0].mxu0
        %v1814 = vadd.f32 %v474, %v1813
        %v1815 = vpop.f32.mrb[0].mxu0
        %v1816 = vadd.f32 %v470, %v1815
        %v1817 = vpop.f32.mrb[0].mxu0
        %v1818 = vadd.f32 %v474, %v1817
        %1819 = vmatprep.mubr.bf16.mxu0 %v610
        %1820 = vmatmul.mubr.bf16.gmra.mrb[0].mxu0 %v609
        %v1821 = vpop.f32.mrb[0].mxu0
        %v1822 = vadd.f32 %v470, %v1821
        %v1823 = vpop.f32.mrb[0].mxu0
        %v1824 = vadd.f32 %v474, %v1823
        %v1825 = vpop.f32.mrb[0].mxu0
        %v1826 = vadd.f32 %v470, %v1825
        %v1827 = vpop.f32.mrb[0].mxu0
        %v1828 = vadd.f32 %v474, %v1827
        %1829 = vmatprep.mubr.bf16.mxu0 %v612
        %1830 = vmatmul.mubr.bf16.gmra.mrb[0].mxu0 %v611
        %v1831 = vpop.f32.mrb[0].mxu0
        %v1832 = vadd.f32 %v470, %v1831
        %v1833 = vpop.f32.mrb[0].mxu0
        %v1834 = vadd.f32 %v474, %v1833
        %v1835 = vpop.f32.mrb[0].mxu0
        %v1836 = vadd.f32 %v470, %v1835
        %v1837 = vpop.f32.mrb[0].mxu0
        %v1838 = vadd.f32 %v474, %v1837
        %1839 = vmatprep.mubr.bf16.mxu0 %v614
        %1840 = vmatmul.mubr.bf16.gmra.mrb[0].mxu0 %v613
        %v1841 = vpop.f32.mrb[0].mxu0
        %v1842 = vadd.f32 %v470, %v1841
        %v1843 = vpop.f32.mrb[0].mxu0
        %v1844 = vadd.f32 %v474, %v1843
        %v1845 = vpop.f32.mrb[0].mxu0
        %v1846 = vadd.f32 %v470, %v1845
        %v1847 = vpop.f32.mrb[0].mxu0
        %v1848 = vadd.f32 %v474, %v1847
        %1849 = vmatprep.mubr.bf16.mxu0 %v616
        %1850 = vmatmul.mubr.bf16.gmra.mrb[0].mxu0 %v615
        %v1851 = vpop.f32.mrb[0].mxu0
        %v1852 = vadd.f32 %v470, %v1851
        %v1853 = vpop.f32.mrb[0].mxu0
        %v1854 = vadd.f32 %v474, %v1853
        %v1855 = vpop.f32.mrb[0].mxu0
        %v1856 = vadd.f32 %v470, %v1855
        %v1857 = vpop.f32.mrb[0].mxu0
        %v1858 = vadd.f32 %v474, %v1857
        %1859 = vmatprep.mubr.bf16.mxu0 %v618
        %1860 = vmatmul.mubr.bf16.gmra.mrb[0].mxu0 %v617
        %v1861 = vpop.f32.mrb[0].mxu0
        %v1862 = vadd.f32 %v470, %v1861
        %v1863 = vpop.f32.mrb[0].mxu0
        %v1864 = vadd.f32 %v474, %v1863
        %v1865 = vpop.f32.mrb[0].mxu0
        %v1866 = vadd.f32 %v470, %v1865
        %v1867 = vpop.f32.mrb[0].mxu0
        %v1868 = vadd.f32 %v474, %v1867
        %1869 = vdwg.mxu0
        %1870 = vmatprep.subr.bf16.mxu0 %v1042
        %1871 = vmatpush1.bf16.msra.mxu0 %v1041
        %1872 = vmatprep.subr.bf16.mxu0 %v1050
        %1873 = vmatpush1.bf16.msra.mxu0 %v1049
        %1874 = vmatprep.subr.bf16.mxu0 %v1058
        %1875 = vmatpush1.bf16.msra.mxu0 %v1057
        %1876 = vmatprep.subr.bf16.mxu0 %v1066
        %1877 = vmatpush1.bf16.msra.mxu0 %v1065
        %1878 = vmatprep.subr.bf16.mxu0 %v1074
        %1879 = vmatpush1.bf16.msra.mxu0 %v1073
        %1880 = vmatprep.subr.bf16.mxu0 %v1082
        %1881 = vmatpush1.bf16.msra.mxu0 %v1081
        %1882 = vmatprep.subr.bf16.mxu0 %v1090
        %1883 = vmatpush1.bf16.msra.mxu0 %v1089
        %1884 = vmatprep.subr.bf16.mxu0 %v1098
        %1885 = vmatpush1.bf16.msra.mxu0 %v1097
        %1886 = vmatprep.subr.bf16.mxu0 %v1106
        %1887 = vmatpush1.bf16.msra.mxu0 %v1105
        %1888 = vmatprep.subr.bf16.mxu0 %v1114
        %1889 = vmatpush1.bf16.msra.mxu0 %v1113
        %1890 = vmatprep.subr.bf16.mxu0 %v1122
        %1891 = vmatpush1.bf16.msra.mxu0 %v1121
        %1892 = vmatprep.subr.bf16.mxu0 %v1130
        %1893 = vmatpush1.bf16.msra.mxu0 %v1129
        %1894 = vmatprep.subr.bf16.mxu0 %v1138
        %1895 = vmatpush1.bf16.msra.mxu0 %v1137
        %1896 = vmatprep.subr.bf16.mxu0 %v1146
        %1897 = vmatpush1.bf16.msra.mxu0 %v1145
        %1898 = vmatprep.subr.bf16.mxu0 %v1154
        %1899 = vmatpush1.bf16.msra.mxu0 %v1153
        %1900 = vmatprep.subr.bf16.mxu0 %v1162
        %1901 = vmatpush1.bf16.msra.mxu0 %v1161
        %1902 = vmatprep.mubr.bf16.mxu0 %v588
        %1903 = vmatmul.mubr.bf16.gmra.mrb[0].mxu0 %v587
        %v1904 = vpop.f32.mrb[0].mxu0
        %v1905 = vadd.f32 %v478, %v1904
        %v1906 = vpop.f32.mrb[0].mxu0
        %v1907 = vadd.f32 %v482, %v1906
        %v1908 = vpop.f32.mrb[0].mxu0
        %v1909 = vadd.f32 %v478, %v1908
        %v1910 = vpop.f32.mrb[0].mxu0
        %v1911 = vadd.f32 %v482, %v1910
        %1912 = vmatprep.mubr.bf16.mxu0 %v590
        %1913 = vmatmul.mubr.bf16.gmra.mrb[0].mxu0 %v589
        %v1914 = vpop.f32.mrb[0].mxu0
        %v1915 = vadd.f32 %v478, %v1914
        %v1916 = vpop.f32.mrb[0].mxu0
        %v1917 = vadd.f32 %v482, %v1916
        %v1918 = vpop.f32.mrb[0].mxu0
        %v1919 = vadd.f32 %v478, %v1918
        %v1920 = vpop.f32.mrb[0].mxu0
        %v1921 = vadd.f32 %v482, %v1920
        %1922 = vmatprep.mubr.bf16.mxu0 %v592
        %1923 = vmatmul.mubr.bf16.gmra.mrb[0].mxu0 %v591
        %v1924 = vpop.f32.mrb[0].mxu0
        %v1925 = vadd.f32 %v478, %v1924
        %v1926 = vpop.f32.mrb[0].mxu0
        %v1927 = vadd.f32 %v482, %v1926
        %v1928 = vpop.f32.mrb[0].mxu0
        %v1929 = vadd.f32 %v478, %v1928
        %v1930 = vpop.f32.mrb[0].mxu0
        %v1931 = vadd.f32 %v482, %v1930
        %1932 = vmatprep.mubr.bf16.mxu0 %v594
        %1933 = vmatmul.mubr.bf16.gmra.mrb[0].mxu0 %v593
        %v1934 = vpop.f32.mrb[0].mxu0
        %v1935 = vadd.f32 %v478, %v1934
        %v1936 = vpop.f32.mrb[0].mxu0
        %v1937 = vadd.f32 %v482, %v1936
        %v1938 = vpop.f32.mrb[0].mxu0
        %v1939 = vadd.f32 %v478, %v1938
        %v1940 = vpop.f32.mrb[0].mxu0
        %v1941 = vadd.f32 %v482, %v1940
        %1942 = vmatprep.mubr.bf16.mxu0 %v596
        %1943 = vmatmul.mubr.bf16.gmra.mrb[0].mxu0 %v595
        %v1944 = vpop.f32.mrb[0].mxu0
        %v1945 = vadd.f32 %v478, %v1944
        %v1946 = vpop.f32.mrb[0].mxu0
        %v1947 = vadd.f32 %v482, %v1946
        %v1948 = vpop.f32.mrb[0].mxu0
        %v1949 = vadd.f32 %v478, %v1948
        %v1950 = vpop.f32.mrb[0].mxu0
        %v1951 = vadd.f32 %v482, %v1950
        %1952 = vmatprep.mubr.bf16.mxu0 %v598
        %1953 = vmatmul.mubr.bf16.gmra.mrb[0].mxu0 %v597
        %v1954 = vpop.f32.mrb[0].mxu0
        %v1955 = vadd.f32 %v478, %v1954
        %v1956 = vpop.f32.mrb[0].mxu0
        %v1957 = vadd.f32 %v482, %v1956
        %v1958 = vpop.f32.mrb[0].mxu0
        %v1959 = vadd.f32 %v478, %v1958
        %v1960 = vpop.f32.mrb[0].mxu0
        %v1961 = vadd.f32 %v482, %v1960
        %1962 = vmatprep.mubr.bf16.mxu0 %v600
        %1963 = vmatmul.mubr.bf16.gmra.mrb[0].mxu0 %v599
        %v1964 = vpop.f32.mrb[0].mxu0
        %v1965 = vadd.f32 %v478, %v1964
        %v1966 = vpop.f32.mrb[0].mxu0
        %v1967 = vadd.f32 %v482, %v1966
        %v1968 = vpop.f32.mrb[0].mxu0
        %v1969 = vadd.f32 %v478, %v1968
        %v1970 = vpop.f32.mrb[0].mxu0
        %v1971 = vadd.f32 %v482, %v1970
        %1972 = vmatprep.mubr.bf16.mxu0 %v602
        %1973 = vmatmul.mubr.bf16.gmra.mrb[0].mxu0 %v601
        %v1974 = vpop.f32.mrb[0].mxu0
        %v1975 = vadd.f32 %v478, %v1974
        %v1976 = vpop.f32.mrb[0].mxu0
        %v1977 = vadd.f32 %v482, %v1976
        %v1978 = vpop.f32.mrb[0].mxu0
        %v1979 = vadd.f32 %v478, %v1978
        %v1980 = vpop.f32.mrb[0].mxu0
        %v1981 = vadd.f32 %v482, %v1980
        %1982 = vmatprep.mubr.bf16.mxu0 %v604
        %1983 = vmatmul.mubr.bf16.gmra.mrb[0].mxu0 %v603
        %v1984 = vpop.f32.mrb[0].mxu0
        %v1985 = vadd.f32 %v478, %v1984
        %v1986 = vpop.f32.mrb[0].mxu0
        %v1987 = vadd.f32 %v482, %v1986
        %v1988 = vpop.f32.mrb[0].mxu0
        %v1989 = vadd.f32 %v478, %v1988
        %v1990 = vpop.f32.mrb[0].mxu0
        %v1991 = vadd.f32 %v482, %v1990
        %1992 = vmatprep.mubr.bf16.mxu0 %v606
        %1993 = vmatmul.mubr.bf16.gmra.mrb[0].mxu0 %v605
        %v1994 = vpop.f32.mrb[0].mxu0
        %v1995 = vadd.f32 %v478, %v1994
        %v1996 = vpop.f32.mrb[0].mxu0
        %v1997 = vadd.f32 %v482, %v1996
        %v1998 = vpop.f32.mrb[0].mxu0
        %v1999 = vadd.f32 %v478, %v1998
        %v2000 = vpop.f32.mrb[0].mxu0
        %v2001 = vadd.f32 %v482, %v2000
        %2002 = vmatprep.mubr.bf16.mxu0 %v608
        %2003 = vmatmul.mubr.bf16.gmra.mrb[0].mxu0 %v607
        %v2004 = vpop.f32.mrb[0].mxu0
        %v2005 = vadd.f32 %v478, %v2004
        %v2006 = vpop.f32.mrb[0].mxu0
        %v2007 = vadd.f32 %v482, %v2006
        %v2008 = vpop.f32.mrb[0].mxu0
        %v2009 = vadd.f32 %v478, %v2008
        %v2010 = vpop.f32.mrb[0].mxu0
        %v2011 = vadd.f32 %v482, %v2010
        %2012 = vmatprep.mubr.bf16.mxu0 %v610
        %2013 = vmatmul.mubr.bf16.gmra.mrb[0].mxu0 %v609
        %v2014 = vpop.f32.mrb[0].mxu0
        %v2015 = vadd.f32 %v478, %v2014
        %v2016 = vpop.f32.mrb[0].mxu0
        %v2017 = vadd.f32 %v482, %v2016
        %v2018 = vpop.f32.mrb[0].mxu0
        %v2019 = vadd.f32 %v478, %v2018
        %v2020 = vpop.f32.mrb[0].mxu0
        %v2021 = vadd.f32 %v482, %v2020
        %2022 = vmatprep.mubr.bf16.mxu0 %v612
        %2023 = vmatmul.mubr.bf16.gmra.mrb[0].mxu0 %v611
        %v2024 = vpop.f32.mrb[0].mxu0
        %v2025 = vadd.f32 %v478, %v2024
        %v2026 = vpop.f32.mrb[0].mxu0
        %v2027 = vadd.f32 %v482, %v2026
        %v2028 = vpop.f32.mrb[0].mxu0
        %v2029 = vadd.f32 %v478, %v2028
        %v2030 = vpop.f32.mrb[0].mxu0
        %v2031 = vadd.f32 %v482, %v2030
        %2032 = vmatprep.mubr.bf16.mxu0 %v614
        %2033 = vmatmul.mubr.bf16.gmra.mrb[0].mxu0 %v613
        %v2034 = vpop.f32.mrb[0].mxu0
        %v2035 = vadd.f32 %v478, %v2034
        %v2036 = vpop.f32.mrb[0].mxu0
        %v2037 = vadd.f32 %v482, %v2036
        %v2038 = vpop.f32.mrb[0].mxu0
        %v2039 = vadd.f32 %v478, %v2038
        %v2040 = vpop.f32.mrb[0].mxu0
        %v2041 = vadd.f32 %v482, %v2040
        %2042 = vmatprep.mubr.bf16.mxu0 %v616
        %2043 = vmatmul.mubr.bf16.gmra.mrb[0].mxu0 %v615
        %v2044 = vpop.f32.mrb[0].mxu0
        %v2045 = vadd.f32 %v478, %v2044
        %v2046 = vpop.f32.mrb[0].mxu0
        %v2047 = vadd.f32 %v482, %v2046
        %v2048 = vpop.f32.mrb[0].mxu0
        %v2049 = vadd.f32 %v478, %v2048
        %v2050 = vpop.f32.mrb[0].mxu0
        %v2051 = vadd.f32 %v482, %v2050
        %2052 = vmatprep.mubr.bf16.mxu0 %v618
        %2053 = vmatmul.mubr.bf16.gmra.mrb[0].mxu0 %v617
        %v2054 = vpop.f32.mrb[0].mxu0
        %v2055 = vadd.f32 %v478, %v2054
        %v2056 = vpop.f32.mrb[0].mxu0
        %v2057 = vadd.f32 %v482, %v2056
        %v2058 = vpop.f32.mrb[0].mxu0
        %v2059 = vadd.f32 %v478, %v2058
        %v2060 = vpop.f32.mrb[0].mxu0
        %v2061 = vadd.f32 %v482, %v2060
        %2062 = vdwg.mxu0
        %v2063 = vmax.f32 %v1326, 0.0
        %v2064 = vmax.f32 %v1328, 0.0
        %v2065 = vmax.f32 %v1519, 0.0
        %v2066 = vmax.f32 %v1521, 0.0
        %v2067 = vmax.f32 %v1712, 0.0
        %v2068 = vmax.f32 %v1714, 0.0
        %v2069 = vmax.f32 %v1905, 0.0
        %v2070 = vmax.f32 %v1907, 0.0
        %v2071 = vmax.f32 %v1330, 0.0
        %v2072 = vmax.f32 %v1332, 0.0
        %v2073 = vmax.f32 %v1523, 0.0
        %v2074 = vmax.f32 %v1525, 0.0
        %v2075 = vmax.f32 %v1716, 0.0
        %v2076 = vmax.f32 %v1718, 0.0
        %v2077 = vmax.f32 %v1909, 0.0
        %v2078 = vmax.f32 %v1911, 0.0
        %v2079 = vmax.f32 %v1336, 0.0
        %v2080 = vmax.f32 %v1338, 0.0
        %v2081 = vmax.f32 %v1529, 0.0
        %v2082 = vmax.f32 %v1531, 0.0
        %v2083 = vmax.f32 %v1722, 0.0
        %v2084 = vmax.f32 %v1724, 0.0
        %v2085 = vmax.f32 %v1915, 0.0
        %v2086 = vmax.f32 %v1917, 0.0
        %v2087 = vmax.f32 %v1340, 0.0
        %v2088 = vmax.f32 %v1342, 0.0
        %v2089 = vmax.f32 %v1533, 0.0
        %v2090 = vmax.f32 %v1535, 0.0
        %v2091 = vmax.f32 %v1726, 0.0
        %v2092 = vmax.f32 %v1728, 0.0
        %v2093 = vmax.f32 %v1919, 0.0
        %v2094 = vmax.f32 %v1921, 0.0
        %v2095 = vmax.f32 %v1346, 0.0
        %v2096 = vmax.f32 %v1348, 0.0
        %v2097 = vmax.f32 %v1539, 0.0
        %v2098 = vmax.f32 %v1541, 0.0
        %v2099 = vmax.f32 %v1732, 0.0
        %v2100 = vmax.f32 %v1734, 0.0
        %v2101 = vmax.f32 %v1925, 0.0
        %v2102 = vmax.f32 %v1927, 0.0
        %v2103 = vmax.f32 %v1350, 0.0
        %v2104 = vmax.f32 %v1352, 0.0
        %v2105 = vmax.f32 %v1543, 0.0
        %v2106 = vmax.f32 %v1545, 0.0
        %v2107 = vmax.f32 %v1736, 0.0
        %v2108 = vmax.f32 %v1738, 0.0
        %v2109 = vmax.f32 %v1929, 0.0
        %v2110 = vmax.f32 %v1931, 0.0
        %v2111 = vmax.f32 %v1356, 0.0
        %v2112 = vmax.f32 %v1358, 0.0
        %v2113 = vmax.f32 %v1549, 0.0
        %v2114 = vmax.f32 %v1551, 0.0
        %v2115 = vmax.f32 %v1742, 0.0
        %v2116 = vmax.f32 %v1744, 0.0
        %v2117 = vmax.f32 %v1935, 0.0
        %v2118 = vmax.f32 %v1937, 0.0
        %v2119 = vmax.f32 %v1360, 0.0
        %v2120 = vmax.f32 %v1362, 0.0
        %v2121 = vmax.f32 %v1553, 0.0
        %v2122 = vmax.f32 %v1555, 0.0
        %v2123 = vmax.f32 %v1746, 0.0
        %v2124 = vmax.f32 %v1748, 0.0
        %v2125 = vmax.f32 %v1939, 0.0
        %v2126 = vmax.f32 %v1941, 0.0
        %v2127 = vmax.f32 %v1366, 0.0
        %v2128 = vmax.f32 %v1368, 0.0
        %v2129 = vmax.f32 %v1559, 0.0
        %v2130 = vmax.f32 %v1561, 0.0
        %v2131 = vmax.f32 %v1752, 0.0
        %v2132 = vmax.f32 %v1754, 0.0
        %v2133 = vmax.f32 %v1945, 0.0
        %v2134 = vmax.f32 %v1947, 0.0
        %v2135 = vmax.f32 %v1370, 0.0
        %v2136 = vmax.f32 %v1372, 0.0
        %v2137 = vmax.f32 %v1563, 0.0
        %v2138 = vmax.f32 %v1565, 0.0
        %v2139 = vmax.f32 %v1756, 0.0
        %v2140 = vmax.f32 %v1758, 0.0
        %v2141 = vmax.f32 %v1949, 0.0
        %v2142 = vmax.f32 %v1951, 0.0
        %v2143 = vmax.f32 %v1376, 0.0
        %v2144 = vmax.f32 %v1378, 0.0
        %v2145 = vmax.f32 %v1569, 0.0
        %v2146 = vmax.f32 %v1571, 0.0
        %v2147 = vmax.f32 %v1762, 0.0
        %v2148 = vmax.f32 %v1764, 0.0
        %v2149 = vmax.f32 %v1955, 0.0
        %v2150 = vmax.f32 %v1957, 0.0
        %v2151 = vmax.f32 %v1380, 0.0
        %v2152 = vmax.f32 %v1382, 0.0
        %v2153 = vmax.f32 %v1573, 0.0
        %v2154 = vmax.f32 %v1575, 0.0
        %v2155 = vmax.f32 %v1766, 0.0
        %v2156 = vmax.f32 %v1768, 0.0
        %v2157 = vmax.f32 %v1959, 0.0
        %v2158 = vmax.f32 %v1961, 0.0
        %v2159 = vmax.f32 %v1386, 0.0
        %v2160 = vmax.f32 %v1388, 0.0
        %v2161 = vmax.f32 %v1579, 0.0
        %v2162 = vmax.f32 %v1581, 0.0
        %v2163 = vmax.f32 %v1772, 0.0
        %v2164 = vmax.f32 %v1774, 0.0
        %v2165 = vmax.f32 %v1965, 0.0
        %v2166 = vmax.f32 %v1967, 0.0
        %v2167 = vmax.f32 %v1390, 0.0
        %v2168 = vmax.f32 %v1392, 0.0
        %v2169 = vmax.f32 %v1583, 0.0
        %v2170 = vmax.f32 %v1585, 0.0
        %v2171 = vmax.f32 %v1776, 0.0
        %v2172 = vmax.f32 %v1778, 0.0
        %v2173 = vmax.f32 %v1969, 0.0
        %v2174 = vmax.f32 %v1971, 0.0
        %v2175 = vmax.f32 %v1396, 0.0
        %v2176 = vmax.f32 %v1398, 0.0
        %v2177 = vmax.f32 %v1589, 0.0
        %v2178 = vmax.f32 %v1591, 0.0
        %v2179 = vmax.f32 %v1782, 0.0
        %v2180 = vmax.f32 %v1784, 0.0
        %v2181 = vmax.f32 %v1975, 0.0
        %v2182 = vmax.f32 %v1977, 0.0
        %v2183 = vmax.f32 %v1400, 0.0
        %v2184 = vmax.f32 %v1402, 0.0
        %v2185 = vmax.f32 %v1593, 0.0
        %v2186 = vmax.f32 %v1595, 0.0
        %v2187 = vmax.f32 %v1786, 0.0
        %v2188 = vmax.f32 %v1788, 0.0
        %v2189 = vmax.f32 %v1979, 0.0
        %v2190 = vmax.f32 %v1981, 0.0
        %v2191 = vmax.f32 %v1406, 0.0
        %v2192 = vmax.f32 %v1408, 0.0
        %v2193 = vmax.f32 %v1599, 0.0
        %v2194 = vmax.f32 %v1601, 0.0
        %v2195 = vmax.f32 %v1792, 0.0
        %v2196 = vmax.f32 %v1794, 0.0
        %v2197 = vmax.f32 %v1985, 0.0
        %v2198 = vmax.f32 %v1987, 0.0
        %v2199 = vmax.f32 %v1410, 0.0
        %v2200 = vmax.f32 %v1412, 0.0
        %v2201 = vmax.f32 %v1603, 0.0
        %v2202 = vmax.f32 %v1605, 0.0
        %v2203 = vmax.f32 %v1796, 0.0
        %v2204 = vmax.f32 %v1798, 0.0
        %v2205 = vmax.f32 %v1989, 0.0
        %v2206 = vmax.f32 %v1991, 0.0
        %v2207 = vmax.f32 %v1416, 0.0
        %v2208 = vmax.f32 %v1418, 0.0
        %v2209 = vmax.f32 %v1609, 0.0
        %v2210 = vmax.f32 %v1611, 0.0
        %v2211 = vmax.f32 %v1802, 0.0
        %v2212 = vmax.f32 %v1804, 0.0
        %v2213 = vmax.f32 %v1995, 0.0
        %v2214 = vmax.f32 %v1997, 0.0
        %v2215 = vmax.f32 %v1420, 0.0
        %v2216 = vmax.f32 %v1422, 0.0
        %v2217 = vmax.f32 %v1613, 0.0
        %v2218 = vmax.f32 %v1615, 0.0
        %v2219 = vmax.f32 %v1806, 0.0
        %v2220 = vmax.f32 %v1808, 0.0
        %v2221 = vmax.f32 %v1999, 0.0
        %v2222 = vmax.f32 %v2001, 0.0
        %v2223 = vmax.f32 %v1426, 0.0
        %v2224 = vmax.f32 %v1428, 0.0
        %v2225 = vmax.f32 %v1619, 0.0
        %v2226 = vmax.f32 %v1621, 0.0
        %v2227 = vmax.f32 %v1812, 0.0
        %v2228 = vmax.f32 %v1814, 0.0
        %v2229 = vmax.f32 %v2005, 0.0
        %v2230 = vmax.f32 %v2007, 0.0
        %v2231 = vmax.f32 %v1430, 0.0
        %v2232 = vmax.f32 %v1432, 0.0
        %v2233 = vmax.f32 %v1623, 0.0
        %v2234 = vmax.f32 %v1625, 0.0
        %v2235 = vmax.f32 %v1816, 0.0
        %v2236 = vmax.f32 %v1818, 0.0
        %v2237 = vmax.f32 %v2009, 0.0
        %v2238 = vmax.f32 %v2011, 0.0
        %v2239 = vmax.f32 %v1436, 0.0
        %v2240 = vmax.f32 %v1438, 0.0
        %v2241 = vmax.f32 %v1629, 0.0
        %v2242 = vmax.f32 %v1631, 0.0
        %v2243 = vmax.f32 %v1822, 0.0
        %v2244 = vmax.f32 %v1824, 0.0
        %v2245 = vmax.f32 %v2015, 0.0
        %v2246 = vmax.f32 %v2017, 0.0
        %v2247 = vmax.f32 %v1440, 0.0
        %v2248 = vmax.f32 %v1442, 0.0
        %v2249 = vmax.f32 %v1633, 0.0
        %v2250 = vmax.f32 %v1635, 0.0
        %v2251 = vmax.f32 %v1826, 0.0
        %v2252 = vmax.f32 %v1828, 0.0
        %v2253 = vmax.f32 %v2019, 0.0
        %v2254 = vmax.f32 %v2021, 0.0
        %v2255 = vmax.f32 %v1446, 0.0
        %v2256 = vmax.f32 %v1448, 0.0
        %v2257 = vmax.f32 %v1639, 0.0
        %v2258 = vmax.f32 %v1641, 0.0
        %v2259 = vmax.f32 %v1832, 0.0
        %v2260 = vmax.f32 %v1834, 0.0
        %v2261 = vmax.f32 %v2025, 0.0
        %v2262 = vmax.f32 %v2027, 0.0
        %v2263 = vmax.f32 %v1450, 0.0
        %v2264 = vmax.f32 %v1452, 0.0
        %v2265 = vmax.f32 %v1643, 0.0
        %v2266 = vmax.f32 %v1645, 0.0
        %v2267 = vmax.f32 %v1836, 0.0
        %v2268 = vmax.f32 %v1838, 0.0
        %v2269 = vmax.f32 %v2029, 0.0
        %v2270 = vmax.f32 %v2031, 0.0
        %v2271 = vmax.f32 %v1456, 0.0
        %v2272 = vmax.f32 %v1458, 0.0
        %v2273 = vmax.f32 %v1649, 0.0
        %v2274 = vmax.f32 %v1651, 0.0
        %v2275 = vmax.f32 %v1842, 0.0
        %v2276 = vmax.f32 %v1844, 0.0
        %v2277 = vmax.f32 %v2035, 0.0
        %v2278 = vmax.f32 %v2037, 0.0
        %v2279 = vmax.f32 %v1460, 0.0
        %v2280 = vmax.f32 %v1462, 0.0
        %v2281 = vmax.f32 %v1653, 0.0
        %v2282 = vmax.f32 %v1655, 0.0
        %v2283 = vmax.f32 %v1846, 0.0
        %v2284 = vmax.f32 %v1848, 0.0
        %v2285 = vmax.f32 %v2039, 0.0
        %v2286 = vmax.f32 %v2041, 0.0
        %v2287 = vmax.f32 %v1466, 0.0
        %v2288 = vmax.f32 %v1468, 0.0
        %v2289 = vmax.f32 %v1659, 0.0
        %v2290 = vmax.f32 %v1661, 0.0
        %v2291 = vmax.f32 %v1852, 0.0
        %v2292 = vmax.f32 %v1854, 0.0
        %v2293 = vmax.f32 %v2045, 0.0
        %v2294 = vmax.f32 %v2047, 0.0
        %v2295 = vmax.f32 %v1470, 0.0
        %v2296 = vmax.f32 %v1472, 0.0
        %v2297 = vmax.f32 %v1663, 0.0
        %v2298 = vmax.f32 %v1665, 0.0
        %v2299 = vmax.f32 %v1856, 0.0
        %v2300 = vmax.f32 %v1858, 0.0
        %v2301 = vmax.f32 %v2049, 0.0
        %v2302 = vmax.f32 %v2051, 0.0
        %v2303 = vmax.f32 %v1476, 0.0
        %v2304 = vmax.f32 %v1478, 0.0
        %v2305 = vmax.f32 %v1669, 0.0
        %v2306 = vmax.f32 %v1671, 0.0
        %v2307 = vmax.f32 %v1862, 0.0
        %v2308 = vmax.f32 %v1864, 0.0
        %v2309 = vmax.f32 %v2055, 0.0
        %v2310 = vmax.f32 %v2057, 0.0
        %v2311 = vmax.f32 %v1480, 0.0
        %v2312 = vmax.f32 %v1482, 0.0
        %v2313 = vmax.f32 %v1673, 0.0
        %v2314 = vmax.f32 %v1675, 0.0
        %v2315 = vmax.f32 %v1866, 0.0
        %v2316 = vmax.f32 %v1868, 0.0
        %v2317 = vmax.f32 %v2059, 0.0
        %v2318 = vmax.f32 %v2061, 0.0
        %v2319 = vpack.c.bf16 %v2071, %v2063
        %v2320 = vpack.c.bf16 %v2072, %v2064
        %v2321 = vpack.c.bf16 %v2073, %v2065
        %v2322 = vpack.c.bf16 %v2074, %v2066
        %v2323 = vpack.c.bf16 %v2075, %v2067
        %v2324 = vpack.c.bf16 %v2076, %v2068
        %v2325 = vpack.c.bf16 %v2077, %v2069
        %v2326 = vpack.c.bf16 %v2078, %v2070
        %v2327 = vpack.c.bf16 %v2087, %v2079
        %v2328 = vpack.c.bf16 %v2088, %v2080
        %v2329 = vpack.c.bf16 %v2089, %v2081
        %v2330 = vpack.c.bf16 %v2090, %v2082
        %v2331 = vpack.c.bf16 %v2091, %v2083
        %v2332 = vpack.c.bf16 %v2092, %v2084
        %v2333 = vpack.c.bf16 %v2093, %v2085
        %v2334 = vpack.c.bf16 %v2094, %v2086
        %v2335 = vpack.c.bf16 %v2103, %v2095
        %v2336 = vpack.c.bf16 %v2104, %v2096
        %v2337 = vpack.c.bf16 %v2105, %v2097
        %v2338 = vpack.c.bf16 %v2106, %v2098
        %v2339 = vpack.c.bf16 %v2107, %v2099
        %v2340 = vpack.c.bf16 %v2108, %v2100
        %v2341 = vpack.c.bf16 %v2109, %v2101
        %v2342 = vpack.c.bf16 %v2110, %v2102
        %v2343 = vpack.c.bf16 %v2119, %v2111
        %v2344 = vpack.c.bf16 %v2120, %v2112
        %v2345 = vpack.c.bf16 %v2121, %v2113
        %v2346 = vpack.c.bf16 %v2122, %v2114
        %v2347 = vpack.c.bf16 %v2123, %v2115
        %v2348 = vpack.c.bf16 %v2124, %v2116
        %v2349 = vpack.c.bf16 %v2125, %v2117
        %v2350 = vpack.c.bf16 %v2126, %v2118
        %v2351 = vpack.c.bf16 %v2135, %v2127
        %v2352 = vpack.c.bf16 %v2136, %v2128
        %v2353 = vpack.c.bf16 %v2137, %v2129
        %v2354 = vpack.c.bf16 %v2138, %v2130
        %v2355 = vpack.c.bf16 %v2139, %v2131
        %v2356 = vpack.c.bf16 %v2140, %v2132
        %v2357 = vpack.c.bf16 %v2141, %v2133
        %v2358 = vpack.c.bf16 %v2142, %v2134
        %v2359 = vpack.c.bf16 %v2151, %v2143
        %v2360 = vpack.c.bf16 %v2152, %v2144
        %v2361 = vpack.c.bf16 %v2153, %v2145
        %v2362 = vpack.c.bf16 %v2154, %v2146
        %v2363 = vpack.c.bf16 %v2155, %v2147
        %v2364 = vpack.c.bf16 %v2156, %v2148
        %v2365 = vpack.c.bf16 %v2157, %v2149
        %v2366 = vpack.c.bf16 %v2158, %v2150
        %v2367 = vpack.c.bf16 %v2167, %v2159
        %v2368 = vpack.c.bf16 %v2168, %v2160
        %v2369 = vpack.c.bf16 %v2169, %v2161
        %v2370 = vpack.c.bf16 %v2170, %v2162
        %v2371 = vpack.c.bf16 %v2171, %v2163
        %v2372 = vpack.c.bf16 %v2172, %v2164
        %v2373 = vpack.c.bf16 %v2173, %v2165
        %v2374 = vpack.c.bf16 %v2174, %v2166
        %v2375 = vpack.c.bf16 %v2183, %v2175
        %v2376 = vpack.c.bf16 %v2184, %v2176
        %v2377 = vpack.c.bf16 %v2185, %v2177
        %v2378 = vpack.c.bf16 %v2186, %v2178
        %v2379 = vpack.c.bf16 %v2187, %v2179
        %v2380 = vpack.c.bf16 %v2188, %v2180
        %v2381 = vpack.c.bf16 %v2189, %v2181
        %v2382 = vpack.c.bf16 %v2190, %v2182
        %v2383 = vpack.c.bf16 %v2199, %v2191
        %v2384 = vpack.c.bf16 %v2200, %v2192
        %v2385 = vpack.c.bf16 %v2201, %v2193
        %v2386 = vpack.c.bf16 %v2202, %v2194
        %v2387 = vpack.c.bf16 %v2203, %v2195
        %v2388 = vpack.c.bf16 %v2204, %v2196
        %v2389 = vpack.c.bf16 %v2205, %v2197
        %v2390 = vpack.c.bf16 %v2206, %v2198
        %v2391 = vpack.c.bf16 %v2215, %v2207
        %v2392 = vpack.c.bf16 %v2216, %v2208
        %v2393 = vpack.c.bf16 %v2217, %v2209
        %v2394 = vpack.c.bf16 %v2218, %v2210
        %v2395 = vpack.c.bf16 %v2219, %v2211
        %v2396 = vpack.c.bf16 %v2220, %v2212
        %v2397 = vpack.c.bf16 %v2221, %v2213
        %v2398 = vpack.c.bf16 %v2222, %v2214
        %v2399 = vpack.c.bf16 %v2231, %v2223
        %v2400 = vpack.c.bf16 %v2232, %v2224
        %v2401 = vpack.c.bf16 %v2233, %v2225
        %v2402 = vpack.c.bf16 %v2234, %v2226
        %v2403 = vpack.c.bf16 %v2235, %v2227
        %v2404 = vpack.c.bf16 %v2236, %v2228
        %v2405 = vpack.c.bf16 %v2237, %v2229
        %v2406 = vpack.c.bf16 %v2238, %v2230
        %v2407 = vpack.c.bf16 %v2247, %v2239
        %v2408 = vpack.c.bf16 %v2248, %v2240
        %v2409 = vpack.c.bf16 %v2249, %v2241
        %v2410 = vpack.c.bf16 %v2250, %v2242
        %v2411 = vpack.c.bf16 %v2251, %v2243
        %v2412 = vpack.c.bf16 %v2252, %v2244
        %v2413 = vpack.c.bf16 %v2253, %v2245
        %v2414 = vpack.c.bf16 %v2254, %v2246
        %v2415 = vpack.c.bf16 %v2263, %v2255
        %v2416 = vpack.c.bf16 %v2264, %v2256
        %v2417 = vpack.c.bf16 %v2265, %v2257
        %v2418 = vpack.c.bf16 %v2266, %v2258
        %v2419 = vpack.c.bf16 %v2267, %v2259
        %v2420 = vpack.c.bf16 %v2268, %v2260
        %v2421 = vpack.c.bf16 %v2269, %v2261
        %v2422 = vpack.c.bf16 %v2270, %v2262
        %v2423 = vpack.c.bf16 %v2279, %v2271
        %v2424 = vpack.c.bf16 %v2280, %v2272
        %v2425 = vpack.c.bf16 %v2281, %v2273
        %v2426 = vpack.c.bf16 %v2282, %v2274
        %v2427 = vpack.c.bf16 %v2283, %v2275
        %v2428 = vpack.c.bf16 %v2284, %v2276
        %v2429 = vpack.c.bf16 %v2285, %v2277
        %v2430 = vpack.c.bf16 %v2286, %v2278
        %v2431 = vpack.c.bf16 %v2295, %v2287
        %v2432 = vpack.c.bf16 %v2296, %v2288
        %v2433 = vpack.c.bf16 %v2297, %v2289
        %v2434 = vpack.c.bf16 %v2298, %v2290
        %v2435 = vpack.c.bf16 %v2299, %v2291
        %v2436 = vpack.c.bf16 %v2300, %v2292
        %v2437 = vpack.c.bf16 %v2301, %v2293
        %v2438 = vpack.c.bf16 %v2302, %v2294
        %v2439 = vpack.c.bf16 %v2311, %v2303
        %v2440 = vpack.c.bf16 %v2312, %v2304
        %v2441 = vpack.c.bf16 %v2313, %v2305
        %v2442 = vpack.c.bf16 %v2314, %v2306
        %v2443 = vpack.c.bf16 %v2315, %v2307
        %v2444 = vpack.c.bf16 %v2316, %v2308
        %v2445 = vpack.c.bf16 %v2317, %v2309
        %v2446 = vpack.c.bf16 %v2318, %v2310
        %v2447 = vld [vmem:[#allocation8] sm:$0xf]
        %v2448 = vld [vmem:[#allocation8 + $0x4] sm:$0xf]
        %v2449 = vld [vmem:[#allocation8 + $0x8] sm:$0xf]
        %v2450 = vld [vmem:[#allocation8 + $0xc] sm:$0xf]
        %v2451 = vld [vmem:[#allocation8 + $0x10] sm:$0xf]
        %v2452 = vld [vmem:[#allocation8 + $0x14] sm:$0xf]
        %v2453 = vld [vmem:[#allocation8 + $0x18] sm:$0xf]
        %v2454 = vld [vmem:[#allocation8 + $0x1c] sm:$0xf]
        %v2455 = vld [vmem:[#allocation8 + $0x20] sm:$0xf]
        %v2456 = vld [vmem:[#allocation8 + $0x24] sm:$0xf]
        %v2457 = vld [vmem:[#allocation8 + $0x28] sm:$0xf]
        %v2458 = vld [vmem:[#allocation8 + $0x2c] sm:$0xf]
        %v2459 = vld [vmem:[#allocation8 + $0x30] sm:$0xf]
        %v2460 = vld [vmem:[#allocation8 + $0x34] sm:$0xf]
        %v2461 = vld [vmem:[#allocation8 + $0x38] sm:$0xf]
        %v2462 = vld [vmem:[#allocation8 + $0x3c] sm:$0xf]
        %v2463 = vld [vmem:[#allocation8 + $0x40] sm:$0xf]
        %v2464 = vld [vmem:[#allocation8 + $0x44] sm:$0xf]
        %v2465 = vld [vmem:[#allocation8 + $0x48] sm:$0xf]
        %v2466 = vld [vmem:[#allocation8 + $0x4c] sm:$0xf]
        %v2467 = vld [vmem:[#allocation8 + $0x50] sm:$0xf]
        %v2468 = vld [vmem:[#allocation8 + $0x54] sm:$0xf]
        %v2469 = vld [vmem:[#allocation8 + $0x58] sm:$0xf]
        %v2470 = vld [vmem:[#allocation8 + $0x5c] sm:$0xf]
        %v2471 = vld [vmem:[#allocation8 + $0x60] sm:$0xf]
        %v2472 = vld [vmem:[#allocation8 + $0x64] sm:$0xf]
        %v2473 = vld [vmem:[#allocation8 + $0x68] sm:$0xf]
        %v2474 = vld [vmem:[#allocation8 + $0x6c] sm:$0xf]
        %v2475 = vld [vmem:[#allocation8 + $0x70] sm:$0xf]
        %v2476 = vld [vmem:[#allocation8 + $0x74] sm:$0xf]
        %v2477 = vld [vmem:[#allocation8 + $0x78] sm:$0xf]
        %v2478 = vld [vmem:[#allocation8 + $0x7c] sm:$0xf]
        %v2479 = vld [vmem:[#allocation8 + $0x80] sm:$0xf]
        %v2480 = vld [vmem:[#allocation8 + $0x84] sm:$0xf]
        %v2481 = vld [vmem:[#allocation8 + $0x88] sm:$0xf]
        %v2482 = vld [vmem:[#allocation8 + $0x8c] sm:$0xf]
        %v2483 = vld [vmem:[#allocation8 + $0x90] sm:$0xf]
        %v2484 = vld [vmem:[#allocation8 + $0x94] sm:$0xf]
        %v2485 = vld [vmem:[#allocation8 + $0x98] sm:$0xf]
        %v2486 = vld [vmem:[#allocation8 + $0x9c] sm:$0xf]
        %v2487 = vld [vmem:[#allocation8 + $0xa0] sm:$0xf]
        %v2488 = vld [vmem:[#allocation8 + $0xa4] sm:$0xf]
        %v2489 = vld [vmem:[#allocation8 + $0xa8] sm:$0xf]
        %v2490 = vld [vmem:[#allocation8 + $0xac] sm:$0xf]
        %v2491 = vld [vmem:[#allocation8 + $0xb0] sm:$0xf]
        %v2492 = vld [vmem:[#allocation8 + $0xb4] sm:$0xf]
        %v2493 = vld [vmem:[#allocation8 + $0xb8] sm:$0xf]
        %v2494 = vld [vmem:[#allocation8 + $0xbc] sm:$0xf]
        %v2495 = vld [vmem:[#allocation8 + $0xc0] sm:$0xf]
        %v2496 = vld [vmem:[#allocation8 + $0xc4] sm:$0xf]
        %v2497 = vld [vmem:[#allocation8 + $0xc8] sm:$0xf]
        %v2498 = vld [vmem:[#allocation8 + $0xcc] sm:$0xf]
        %v2499 = vld [vmem:[#allocation8 + $0xd0] sm:$0xf]
        %v2500 = vld [vmem:[#allocation8 + $0xd4] sm:$0xf]
        %v2501 = vld [vmem:[#allocation8 + $0xd8] sm:$0xf]
        %v2502 = vld [vmem:[#allocation8 + $0xdc] sm:$0xf]
        %v2503 = vld [vmem:[#allocation8 + $0xe0] sm:$0xf]
        %v2504 = vld [vmem:[#allocation8 + $0xe4] sm:$0xf]
        %v2505 = vld [vmem:[#allocation8 + $0xe8] sm:$0xf]
        %v2506 = vld [vmem:[#allocation8 + $0xec] sm:$0xf]
        %v2507 = vld [vmem:[#allocation8 + $0xf0] sm:$0xf]
        %v2508 = vld [vmem:[#allocation8 + $0xf4] sm:$0xf]
        %v2509 = vld [vmem:[#allocation8 + $0xf8] sm:$0xf]
        %v2510 = vld [vmem:[#allocation8 + $0xfc] sm:$0xf]
        %v2511 = vld [vmem:[#allocation8 + $0x100] sm:$0xf]
        %v2512 = vld [vmem:[#allocation8 + $0x104] sm:$0xf]
        %v2513 = vld [vmem:[#allocation8 + $0x108] sm:$0xf]
        %v2514 = vld [vmem:[#allocation8 + $0x10c] sm:$0xf]
        %v2515 = vld [vmem:[#allocation8 + $0x110] sm:$0xf]
        %v2516 = vld [vmem:[#allocation8 + $0x114] sm:$0xf]
        %v2517 = vld [vmem:[#allocation8 + $0x118] sm:$0xf]
        %v2518 = vld [vmem:[#allocation8 + $0x11c] sm:$0xf]
        %v2519 = vld [vmem:[#allocation8 + $0x120] sm:$0xf]
        %v2520 = vld [vmem:[#allocation8 + $0x124] sm:$0xf]
        %v2521 = vld [vmem:[#allocation8 + $0x128] sm:$0xf]
        %v2522 = vld [vmem:[#allocation8 + $0x12c] sm:$0xf]
        %v2523 = vld [vmem:[#allocation8 + $0x130] sm:$0xf]
        %v2524 = vld [vmem:[#allocation8 + $0x134] sm:$0xf]
        %v2525 = vld [vmem:[#allocation8 + $0x138] sm:$0xf]
        %v2526 = vld [vmem:[#allocation8 + $0x13c] sm:$0xf]
        %v2527 = vld [vmem:[#allocation8 + $0x140] sm:$0xf]
        %v2528 = vld [vmem:[#allocation8 + $0x144] sm:$0xf]
        %v2529 = vld [vmem:[#allocation8 + $0x148] sm:$0xf]
        %v2530 = vld [vmem:[#allocation8 + $0x14c] sm:$0xf]
        %v2531 = vld [vmem:[#allocation8 + $0x150] sm:$0xf]
        %v2532 = vld [vmem:[#allocation8 + $0x154] sm:$0xf]
        %v2533 = vld [vmem:[#allocation8 + $0x158] sm:$0xf]
        %v2534 = vld [vmem:[#allocation8 + $0x15c] sm:$0xf]
        %v2535 = vld [vmem:[#allocation8 + $0x160] sm:$0xf]
        %v2536 = vld [vmem:[#allocation8 + $0x164] sm:$0xf]
        %v2537 = vld [vmem:[#allocation8 + $0x168] sm:$0xf]
        %v2538 = vld [vmem:[#allocation8 + $0x16c] sm:$0xf]
        %v2539 = vld [vmem:[#allocation8 + $0x170] sm:$0xf]
        %v2540 = vld [vmem:[#allocation8 + $0x174] sm:$0xf]
        %v2541 = vld [vmem:[#allocation8 + $0x178] sm:$0xf]
        %v2542 = vld [vmem:[#allocation8 + $0x17c] sm:$0xf]
        %v2543 = vld [vmem:[#allocation8 + $0x180] sm:$0xf]
        %v2544 = vld [vmem:[#allocation8 + $0x184] sm:$0xf]
        %v2545 = vld [vmem:[#allocation8 + $0x188] sm:$0xf]
        %v2546 = vld [vmem:[#allocation8 + $0x18c] sm:$0xf]
        %v2547 = vld [vmem:[#allocation8 + $0x190] sm:$0xf]
        %v2548 = vld [vmem:[#allocation8 + $0x194] sm:$0xf]
        %v2549 = vld [vmem:[#allocation8 + $0x198] sm:$0xf]
        %v2550 = vld [vmem:[#allocation8 + $0x19c] sm:$0xf]
        %v2551 = vld [vmem:[#allocation8 + $0x1a0] sm:$0xf]
        %v2552 = vld [vmem:[#allocation8 + $0x1a4] sm:$0xf]
        %v2553 = vld [vmem:[#allocation8 + $0x1a8] sm:$0xf]
        %v2554 = vld [vmem:[#allocation8 + $0x1ac] sm:$0xf]
        %v2555 = vld [vmem:[#allocation8 + $0x1b0] sm:$0xf]
        %v2556 = vld [vmem:[#allocation8 + $0x1b4] sm:$0xf]
        %v2557 = vld [vmem:[#allocation8 + $0x1b8] sm:$0xf]
        %v2558 = vld [vmem:[#allocation8 + $0x1bc] sm:$0xf]
        %v2559 = vld [vmem:[#allocation8 + $0x1c0] sm:$0xf]
        %v2560 = vld [vmem:[#allocation8 + $0x1c4] sm:$0xf]
        %v2561 = vld [vmem:[#allocation8 + $0x1c8] sm:$0xf]
        %v2562 = vld [vmem:[#allocation8 + $0x1cc] sm:$0xf]
        %v2563 = vld [vmem:[#allocation8 + $0x1d0] sm:$0xf]
        %v2564 = vld [vmem:[#allocation8 + $0x1d4] sm:$0xf]
        %v2565 = vld [vmem:[#allocation8 + $0x1d8] sm:$0xf]
        %v2566 = vld [vmem:[#allocation8 + $0x1dc] sm:$0xf]
        %v2567 = vld [vmem:[#allocation8 + $0x1e0] sm:$0xf]
        %v2568 = vld [vmem:[#allocation8 + $0x1e4] sm:$0xf]
        %v2569 = vld [vmem:[#allocation8 + $0x1e8] sm:$0xf]
        %v2570 = vld [vmem:[#allocation8 + $0x1ec] sm:$0xf]
        %v2571 = vld [vmem:[#allocation8 + $0x1f0] sm:$0xf]
        %v2572 = vld [vmem:[#allocation8 + $0x1f4] sm:$0xf]
        %v2573 = vld [vmem:[#allocation8 + $0x1f8] sm:$0xf]
        %v2574 = vld [vmem:[#allocation8 + $0x1fc] sm:$0xf]
        %v2575 = vld [vmem:[%s4] sm:$0x1]
        %v2577 = vlaneseq
        %v2578 = vshrl.u32 %v2577, 7
        %v2579 = vsub.s32 0, %v2578
        %v2580 = vrot.slane %v2575, %v2579
        %v2710 = vunpack.c.l.b16 %v2447
        %v2711 = vunpack.c.l.b16 %v2448
        %v2712 = vunpack.c.l.b16 %v2449
        %v2713 = vunpack.c.l.b16 %v2450
        %v2714 = vunpack.c.l.b16 %v2451
        %v2715 = vunpack.c.l.b16 %v2452
        %v2716 = vunpack.c.l.b16 %v2453
        %v2717 = vunpack.c.l.b16 %v2454
        %v2718 = vunpack.c.l.b16 %v2455
        %v2719 = vunpack.c.l.b16 %v2456
        %v2720 = vunpack.c.l.b16 %v2457
        %v2721 = vunpack.c.l.b16 %v2458
        %v2722 = vunpack.c.l.b16 %v2459
        %v2723 = vunpack.c.l.b16 %v2460
        %v2724 = vunpack.c.l.b16 %v2461
        %v2725 = vunpack.c.l.b16 %v2462
        %v2726 = vunpack.c.l.b16 %v2463
        %v2727 = vunpack.c.l.b16 %v2464
        %v2728 = vunpack.c.l.b16 %v2465
        %v2729 = vunpack.c.l.b16 %v2466
        %v2730 = vunpack.c.l.b16 %v2467
        %v2731 = vunpack.c.l.b16 %v2468
        %v2732 = vunpack.c.l.b16 %v2469
        %v2733 = vunpack.c.l.b16 %v2470
        %v2734 = vunpack.c.l.b16 %v2471
        %v2735 = vunpack.c.l.b16 %v2472
        %v2736 = vunpack.c.l.b16 %v2473
        %v2737 = vunpack.c.l.b16 %v2474
        %v2738 = vunpack.c.l.b16 %v2475
        %v2739 = vunpack.c.l.b16 %v2476
        %v2740 = vunpack.c.l.b16 %v2477
        %v2741 = vunpack.c.l.b16 %v2478
        %v2742 = vunpack.c.l.b16 %v2479
        %v2743 = vunpack.c.l.b16 %v2480
        %v2744 = vunpack.c.l.b16 %v2481
        %v2745 = vunpack.c.l.b16 %v2482
        %v2746 = vunpack.c.l.b16 %v2483
        %v2747 = vunpack.c.l.b16 %v2484
        %v2748 = vunpack.c.l.b16 %v2485
        %v2749 = vunpack.c.l.b16 %v2486
        %v2750 = vunpack.c.l.b16 %v2487
        %v2751 = vunpack.c.l.b16 %v2488
        %v2752 = vunpack.c.l.b16 %v2489
        %v2753 = vunpack.c.l.b16 %v2490
        %v2754 = vunpack.c.l.b16 %v2491
        %v2755 = vunpack.c.l.b16 %v2492
        %v2756 = vunpack.c.l.b16 %v2493
        %v2757 = vunpack.c.l.b16 %v2494
        %v2758 = vunpack.c.l.b16 %v2495
        %v2759 = vunpack.c.l.b16 %v2496
        %v2760 = vunpack.c.l.b16 %v2497
        %v2761 = vunpack.c.l.b16 %v2498
        %v2762 = vunpack.c.l.b16 %v2499
        %v2763 = vunpack.c.l.b16 %v2500
        %v2764 = vunpack.c.l.b16 %v2501
        %v2765 = vunpack.c.l.b16 %v2502
        %v2766 = vunpack.c.l.b16 %v2503
        %v2767 = vunpack.c.l.b16 %v2504
        %v2768 = vunpack.c.l.b16 %v2505
        %v2769 = vunpack.c.l.b16 %v2506
        %v2770 = vunpack.c.l.b16 %v2507
        %v2771 = vunpack.c.l.b16 %v2508
        %v2772 = vunpack.c.l.b16 %v2509
        %v2773 = vunpack.c.l.b16 %v2510
        %v2774 = vunpack.c.l.b16 %v2511
        %v2775 = vunpack.c.l.b16 %v2512
        %v2776 = vunpack.c.l.b16 %v2513
        %v2777 = vunpack.c.l.b16 %v2514
        %v2778 = vunpack.c.l.b16 %v2515
        %v2779 = vunpack.c.l.b16 %v2516
        %v2780 = vunpack.c.l.b16 %v2517
        %v2781 = vunpack.c.l.b16 %v2518
        %v2782 = vunpack.c.l.b16 %v2519
        %v2783 = vunpack.c.l.b16 %v2520
        %v2784 = vunpack.c.l.b16 %v2521
        %v2785 = vunpack.c.l.b16 %v2522
        %v2786 = vunpack.c.l.b16 %v2523
        %v2787 = vunpack.c.l.b16 %v2524
        %v2788 = vunpack.c.l.b16 %v2525
        %v2789 = vunpack.c.l.b16 %v2526
        %v2790 = vunpack.c.l.b16 %v2527
        %v2791 = vunpack.c.l.b16 %v2528
        %v2792 = vunpack.c.l.b16 %v2529
        %v2793 = vunpack.c.l.b16 %v2530
        %v2794 = vunpack.c.l.b16 %v2531
        %v2795 = vunpack.c.l.b16 %v2532
        %v2796 = vunpack.c.l.b16 %v2533
        %v2797 = vunpack.c.l.b16 %v2534
        %v2798 = vunpack.c.l.b16 %v2535
        %v2799 = vunpack.c.l.b16 %v2536
        %v2800 = vunpack.c.l.b16 %v2537
        %v2801 = vunpack.c.l.b16 %v2538
        %v2802 = vunpack.c.l.b16 %v2539
        %v2803 = vunpack.c.l.b16 %v2540
        %v2804 = vunpack.c.l.b16 %v2541
        %v2805 = vunpack.c.l.b16 %v2542
        %v2806 = vunpack.c.l.b16 %v2543
        %v2807 = vunpack.c.l.b16 %v2544
        %v2808 = vunpack.c.l.b16 %v2545
        %v2809 = vunpack.c.l.b16 %v2546
        %v2810 = vunpack.c.l.b16 %v2547
        %v2811 = vunpack.c.l.b16 %v2548
        %v2812 = vunpack.c.l.b16 %v2549
        %v2813 = vunpack.c.l.b16 %v2550
        %v2814 = vunpack.c.l.b16 %v2551
        %v2815 = vunpack.c.l.b16 %v2552
        %v2816 = vunpack.c.l.b16 %v2553
        %v2817 = vunpack.c.l.b16 %v2554
        %v2818 = vunpack.c.l.b16 %v2555
        %v2819 = vunpack.c.l.b16 %v2556
        %v2820 = vunpack.c.l.b16 %v2557
        %v2821 = vunpack.c.l.b16 %v2558
        %v2822 = vunpack.c.l.b16 %v2559
        %v2823 = vunpack.c.l.b16 %v2560
        %v2824 = vunpack.c.l.b16 %v2561
        %v2825 = vunpack.c.l.b16 %v2562
        %v2826 = vunpack.c.l.b16 %v2563
        %v2827 = vunpack.c.l.b16 %v2564
        %v2828 = vunpack.c.l.b16 %v2565
        %v2829 = vunpack.c.l.b16 %v2566
        %v2830 = vunpack.c.l.b16 %v2567
        %v2831 = vunpack.c.l.b16 %v2568
        %v2832 = vunpack.c.l.b16 %v2569
        %v2833 = vunpack.c.l.b16 %v2570
        %v2834 = vunpack.c.l.b16 %v2571
        %v2835 = vunpack.c.l.b16 %v2572
        %v2836 = vunpack.c.l.b16 %v2573
        %v2837 = vunpack.c.l.b16 %v2574
        %v2838 = vpack.c.b16 %v2711, %v2710
        %v2839 = vpack.c.b16 %v2713, %v2712
        %v2840 = vpack.c.b16 %v2715, %v2714
        %v2841 = vpack.c.b16 %v2717, %v2716
        %v2842 = vpack.c.b16 %v2719, %v2718
        %v2843 = vpack.c.b16 %v2721, %v2720
        %v2844 = vpack.c.b16 %v2723, %v2722
        %v2845 = vpack.c.b16 %v2725, %v2724
        %v2846 = vpack.c.b16 %v2727, %v2726
        %v2847 = vpack.c.b16 %v2729, %v2728
        %v2848 = vpack.c.b16 %v2731, %v2730
        %v2849 = vpack.c.b16 %v2733, %v2732
        %v2850 = vpack.c.b16 %v2735, %v2734
        %v2851 = vpack.c.b16 %v2737, %v2736
        %v2852 = vpack.c.b16 %v2739, %v2738
        %v2853 = vpack.c.b16 %v2741, %v2740
        %v2854 = vpack.c.b16 %v2743, %v2742
        %v2855 = vpack.c.b16 %v2745, %v2744
        %v2856 = vpack.c.b16 %v2747, %v2746
        %v2857 = vpack.c.b16 %v2749, %v2748
        %v2858 = vpack.c.b16 %v2751, %v2750
        %v2859 = vpack.c.b16 %v2753, %v2752
        %v2860 = vpack.c.b16 %v2755, %v2754
        %v2861 = vpack.c.b16 %v2757, %v2756
        %v2862 = vpack.c.b16 %v2759, %v2758
        %v2863 = vpack.c.b16 %v2761, %v2760
        %v2864 = vpack.c.b16 %v2763, %v2762
        %v2865 = vpack.c.b16 %v2765, %v2764
        %v2866 = vpack.c.b16 %v2767, %v2766
        %v2867 = vpack.c.b16 %v2769, %v2768
        %v2868 = vpack.c.b16 %v2771, %v2770
        %v2869 = vpack.c.b16 %v2773, %v2772
        %v2870 = vpack.c.b16 %v2775, %v2774
        %v2871 = vpack.c.b16 %v2777, %v2776
        %v2872 = vpack.c.b16 %v2779, %v2778
        %v2873 = vpack.c.b16 %v2781, %v2780
        %v2874 = vpack.c.b16 %v2783, %v2782
        %v2875 = vpack.c.b16 %v2785, %v2784
        %v2876 = vpack.c.b16 %v2787, %v2786
        %v2877 = vpack.c.b16 %v2789, %v2788
        %v2878 = vpack.c.b16 %v2791, %v2790
        %v2879 = vpack.c.b16 %v2793, %v2792
        %v2880 = vpack.c.b16 %v2795, %v2794
        %v2881 = vpack.c.b16 %v2797, %v2796
        %v2882 = vpack.c.b16 %v2799, %v2798
        %v2883 = vpack.c.b16 %v2801, %v2800
        %v2884 = vpack.c.b16 %v2803, %v2802
        %v2885 = vpack.c.b16 %v2805, %v2804
        %v2886 = vpack.c.b16 %v2807, %v2806
        %v2887 = vpack.c.b16 %v2809, %v2808
        %v2888 = vpack.c.b16 %v2811, %v2810
        %v2889 = vpack.c.b16 %v2813, %v2812
        %v2890 = vpack.c.b16 %v2815, %v2814
        %v2891 = vpack.c.b16 %v2817, %v2816
        %v2892 = vpack.c.b16 %v2819, %v2818
        %v2893 = vpack.c.b16 %v2821, %v2820
        %v2894 = vpack.c.b16 %v2823, %v2822
        %v2895 = vpack.c.b16 %v2825, %v2824
        %v2896 = vpack.c.b16 %v2827, %v2826
        %v2897 = vpack.c.b16 %v2829, %v2828
        %v2898 = vpack.c.b16 %v2831, %v2830
        %v2899 = vpack.c.b16 %v2833, %v2832
        %v2900 = vpack.c.b16 %v2835, %v2834
        %v2901 = vpack.c.b16 %v2837, %v2836
        %2966 = vmatprep.subr.bf16.mxu0 0
        %2967 = vmatpush1.bf16.msra.mxu0 %v2838
        %2968 = vmatprep.subr.bf16.mxu0 0
        %2969 = vmatpush1.bf16.msra.mxu0 %v2839
        %2970 = vmatprep.subr.bf16.mxu0 0
        %2971 = vmatpush1.bf16.msra.mxu0 %v2840
        %2972 = vmatprep.subr.bf16.mxu0 0
        %2973 = vmatpush1.bf16.msra.mxu0 %v2841
        %2974 = vmatprep.subr.bf16.mxu0 0
        %2975 = vmatpush1.bf16.msra.mxu0 %v2842
        %2976 = vmatprep.subr.bf16.mxu0 0
        %2977 = vmatpush1.bf16.msra.mxu0 %v2843
        %2978 = vmatprep.subr.bf16.mxu0 0
        %2979 = vmatpush1.bf16.msra.mxu0 %v2844
        %2980 = vmatprep.subr.bf16.mxu0 0
        %2981 = vmatpush1.bf16.msra.mxu0 %v2845
        %2982 = vmatprep.subr.bf16.mxu0 0
        %2983 = vmatpush1.bf16.msra.mxu0 %v2846
        %2984 = vmatprep.subr.bf16.mxu0 0
        %2985 = vmatpush1.bf16.msra.mxu0 %v2847
        %2986 = vmatprep.subr.bf16.mxu0 0
        %2987 = vmatpush1.bf16.msra.mxu0 %v2848
        %2988 = vmatprep.subr.bf16.mxu0 0
        %2989 = vmatpush1.bf16.msra.mxu0 %v2849
        %2990 = vmatprep.subr.bf16.mxu0 0
        %2991 = vmatpush1.bf16.msra.mxu0 %v2850
        %2992 = vmatprep.subr.bf16.mxu0 0
        %2993 = vmatpush1.bf16.msra.mxu0 %v2851
        %2994 = vmatprep.subr.bf16.mxu0 0
        %2995 = vmatpush1.bf16.msra.mxu0 %v2852
        %2996 = vmatprep.subr.bf16.mxu0 0
        %2997 = vmatpush1.bf16.msra.mxu0 %v2853
        %2998 = vmatprep.mubr.bf16.mxu0 %v2320
        %2999 = vmatmul.mubr.bf16.gmra.mrb[0].mxu0 %v2319
        %v3000 = vpop.f32.mrb[0].mxu0
        %v3001 = vadd.f32 %v2580, %v3000
        %v3002 = vpop.f32.mrb[0].mxu0
        %v3003 = vpop.f32.mrb[0].mxu0
        %v3004 = vadd.f32 %v2580, %v3003
        %v3005 = vpop.f32.mrb[0].mxu0
        %3006 = vmatprep.mubr.bf16.mxu0 %v2328
        %3007 = vmatmul.mubr.bf16.gmra.mrb[0].mxu0 %v2327
        %v3008 = vpop.f32.mrb[0].mxu0
        %v3009 = vadd.f32 %v2580, %v3008
        %v3010 = vpop.f32.mrb[0].mxu0
        %v3011 = vpop.f32.mrb[0].mxu0
        %v3012 = vadd.f32 %v2580, %v3011
        %v3013 = vpop.f32.mrb[0].mxu0
        %3014 = vmatprep.mubr.bf16.mxu0 %v2336
        %3015 = vmatmul.mubr.bf16.gmra.mrb[0].mxu0 %v2335
        %v3016 = vpop.f32.mrb[0].mxu0
        %v3017 = vadd.f32 %v2580, %v3016
        %v3018 = vpop.f32.mrb[0].mxu0
        %v3019 = vpop.f32.mrb[0].mxu0
        %v3020 = vadd.f32 %v2580, %v3019
        %v3021 = vpop.f32.mrb[0].mxu0
        %3022 = vmatprep.mubr.bf16.mxu0 %v2344
        %3023 = vmatmul.mubr.bf16.gmra.mrb[0].mxu0 %v2343
        %v3024 = vpop.f32.mrb[0].mxu0
        %v3025 = vadd.f32 %v2580, %v3024
        %v3026 = vpop.f32.mrb[0].mxu0
        %v3027 = vpop.f32.mrb[0].mxu0
        %v3028 = vadd.f32 %v2580, %v3027
        %v3029 = vpop.f32.mrb[0].mxu0
        %3030 = vmatprep.mubr.bf16.mxu0 %v2352
        %3031 = vmatmul.mubr.bf16.gmra.mrb[0].mxu0 %v2351
        %v3032 = vpop.f32.mrb[0].mxu0
        %v3033 = vadd.f32 %v2580, %v3032
        %v3034 = vpop.f32.mrb[0].mxu0
        %v3035 = vpop.f32.mrb[0].mxu0
        %v3036 = vadd.f32 %v2580, %v3035
        %v3037 = vpop.f32.mrb[0].mxu0
        %3038 = vmatprep.mubr.bf16.mxu0 %v2360
        %3039 = vmatmul.mubr.bf16.gmra.mrb[0].mxu0 %v2359
        %v3040 = vpop.f32.mrb[0].mxu0
        %v3041 = vadd.f32 %v2580, %v3040
        %v3042 = vpop.f32.mrb[0].mxu0
        %v3043 = vpop.f32.mrb[0].mxu0
        %v3044 = vadd.f32 %v2580, %v3043
        %v3045 = vpop.f32.mrb[0].mxu0
        %3046 = vmatprep.mubr.bf16.mxu0 %v2368
        %3047 = vmatmul.mubr.bf16.gmra.mrb[0].mxu0 %v2367
        %v3048 = vpop.f32.mrb[0].mxu0
        %v3049 = vadd.f32 %v2580, %v3048
        %v3050 = vpop.f32.mrb[0].mxu0
        %v3051 = vpop.f32.mrb[0].mxu0
        %v3052 = vadd.f32 %v2580, %v3051
        %v3053 = vpop.f32.mrb[0].mxu0
        %3054 = vmatprep.mubr.bf16.mxu0 %v2376
        %3055 = vmatmul.mubr.bf16.gmra.mrb[0].mxu0 %v2375
        %v3056 = vpop.f32.mrb[0].mxu0
        %v3057 = vadd.f32 %v2580, %v3056
        %v3058 = vpop.f32.mrb[0].mxu0
        %v3059 = vpop.f32.mrb[0].mxu0
        %v3060 = vadd.f32 %v2580, %v3059
        %v3061 = vpop.f32.mrb[0].mxu0
        %3062 = vmatprep.mubr.bf16.mxu0 %v2384
        %3063 = vmatmul.mubr.bf16.gmra.mrb[0].mxu0 %v2383
        %v3064 = vpop.f32.mrb[0].mxu0
        %v3065 = vadd.f32 %v2580, %v3064
        %v3066 = vpop.f32.mrb[0].mxu0
        %v3067 = vpop.f32.mrb[0].mxu0
        %v3068 = vadd.f32 %v2580, %v3067
        %v3069 = vpop.f32.mrb[0].mxu0
        %3070 = vmatprep.mubr.bf16.mxu0 %v2392
        %3071 = vmatmul.mubr.bf16.gmra.mrb[0].mxu0 %v2391
        %v3072 = vpop.f32.mrb[0].mxu0
        %v3073 = vadd.f32 %v2580, %v3072
        %v3074 = vpop.f32.mrb[0].mxu0
        %v3075 = vpop.f32.mrb[0].mxu0
        %v3076 = vadd.f32 %v2580, %v3075
        %v3077 = vpop.f32.mrb[0].mxu0
        %3078 = vmatprep.mubr.bf16.mxu0 %v2400
        %3079 = vmatmul.mubr.bf16.gmra.mrb[0].mxu0 %v2399
        %v3080 = vpop.f32.mrb[0].mxu0
        %v3081 = vadd.f32 %v2580, %v3080
        %v3082 = vpop.f32.mrb[0].mxu0
        %v3083 = vpop.f32.mrb[0].mxu0
        %v3084 = vadd.f32 %v2580, %v3083
        %v3085 = vpop.f32.mrb[0].mxu0
        %3086 = vmatprep.mubr.bf16.mxu0 %v2408
        %3087 = vmatmul.mubr.bf16.gmra.mrb[0].mxu0 %v2407
        %v3088 = vpop.f32.mrb[0].mxu0
        %v3089 = vadd.f32 %v2580, %v3088
        %v3090 = vpop.f32.mrb[0].mxu0
        %v3091 = vpop.f32.mrb[0].mxu0
        %v3092 = vadd.f32 %v2580, %v3091
        %v3093 = vpop.f32.mrb[0].mxu0
        %3094 = vmatprep.mubr.bf16.mxu0 %v2416
        %3095 = vmatmul.mubr.bf16.gmra.mrb[0].mxu0 %v2415
        %v3096 = vpop.f32.mrb[0].mxu0
        %v3097 = vadd.f32 %v2580, %v3096
        %v3098 = vpop.f32.mrb[0].mxu0
        %v3099 = vpop.f32.mrb[0].mxu0
        %v3100 = vadd.f32 %v2580, %v3099
        %v3101 = vpop.f32.mrb[0].mxu0
        %3102 = vmatprep.mubr.bf16.mxu0 %v2424
        %3103 = vmatmul.mubr.bf16.gmra.mrb[0].mxu0 %v2423
        %v3104 = vpop.f32.mrb[0].mxu0
        %v3105 = vadd.f32 %v2580, %v3104
        %v3106 = vpop.f32.mrb[0].mxu0
        %v3107 = vpop.f32.mrb[0].mxu0
        %v3108 = vadd.f32 %v2580, %v3107
        %v3109 = vpop.f32.mrb[0].mxu0
        %3110 = vmatprep.mubr.bf16.mxu0 %v2432
        %3111 = vmatmul.mubr.bf16.gmra.mrb[0].mxu0 %v2431
        %v3112 = vpop.f32.mrb[0].mxu0
        %v3113 = vadd.f32 %v2580, %v3112
        %v3114 = vpop.f32.mrb[0].mxu0
        %v3115 = vpop.f32.mrb[0].mxu0
        %v3116 = vadd.f32 %v2580, %v3115
        %v3117 = vpop.f32.mrb[0].mxu0
        %3118 = vmatprep.mubr.bf16.mxu0 %v2440
        %3119 = vmatmul.mubr.bf16.gmra.mrb[0].mxu0 %v2439
        %v3120 = vpop.f32.mrb[0].mxu0
        %v3121 = vadd.f32 %v2580, %v3120
        %v3122 = vpop.f32.mrb[0].mxu0
        %v3123 = vpop.f32.mrb[0].mxu0
        %v3124 = vadd.f32 %v2580, %v3123
        %v3125 = vpop.f32.mrb[0].mxu0
        %3126 = vdwg.mxu0
        %3127 = vmatprep.subr.bf16.mxu0 0
        %3128 = vmatpush1.bf16.msra.mxu0 %v2854
        %3129 = vmatprep.subr.bf16.mxu0 0
        %3130 = vmatpush1.bf16.msra.mxu0 %v2855
        %3131 = vmatprep.subr.bf16.mxu0 0
        %3132 = vmatpush1.bf16.msra.mxu0 %v2856
        %3133 = vmatprep.subr.bf16.mxu0 0
        %3134 = vmatpush1.bf16.msra.mxu0 %v2857
        %3135 = vmatprep.subr.bf16.mxu0 0
        %3136 = vmatpush1.bf16.msra.mxu0 %v2858
        %3137 = vmatprep.subr.bf16.mxu0 0
        %3138 = vmatpush1.bf16.msra.mxu0 %v2859
        %3139 = vmatprep.subr.bf16.mxu0 0
        %3140 = vmatpush1.bf16.msra.mxu0 %v2860
        %3141 = vmatprep.subr.bf16.mxu0 0
        %3142 = vmatpush1.bf16.msra.mxu0 %v2861
        %3143 = vmatprep.subr.bf16.mxu0 0
        %3144 = vmatpush1.bf16.msra.mxu0 %v2862
        %3145 = vmatprep.subr.bf16.mxu0 0
        %3146 = vmatpush1.bf16.msra.mxu0 %v2863
        %3147 = vmatprep.subr.bf16.mxu0 0
        %3148 = vmatpush1.bf16.msra.mxu0 %v2864
        %3149 = vmatprep.subr.bf16.mxu0 0
        %3150 = vmatpush1.bf16.msra.mxu0 %v2865
        %3151 = vmatprep.subr.bf16.mxu0 0
        %3152 = vmatpush1.bf16.msra.mxu0 %v2866
        %3153 = vmatprep.subr.bf16.mxu0 0
        %3154 = vmatpush1.bf16.msra.mxu0 %v2867
        %3155 = vmatprep.subr.bf16.mxu0 0
        %3156 = vmatpush1.bf16.msra.mxu0 %v2868
        %3157 = vmatprep.subr.bf16.mxu0 0
        %3158 = vmatpush1.bf16.msra.mxu0 %v2869
        %3159 = vmatprep.mubr.bf16.mxu0 %v2322
        %3160 = vmatmul.mubr.bf16.gmra.mrb[0].mxu0 %v2321
        %v3161 = vpop.f32.mrb[0].mxu0
        %v3162 = vadd.f32 %v3001, %v3161
        %v3163 = vpop.f32.mrb[0].mxu0
        %v3164 = vpop.f32.mrb[0].mxu0
        %v3165 = vadd.f32 %v3004, %v3164
        %v3166 = vpop.f32.mrb[0].mxu0
        %3167 = vmatprep.mubr.bf16.mxu0 %v2330
        %3168 = vmatmul.mubr.bf16.gmra.mrb[0].mxu0 %v2329
        %v3169 = vpop.f32.mrb[0].mxu0
        %v3170 = vadd.f32 %v3009, %v3169
        %v3171 = vpop.f32.mrb[0].mxu0
        %v3172 = vpop.f32.mrb[0].mxu0
        %v3173 = vadd.f32 %v3012, %v3172
        %v3174 = vpop.f32.mrb[0].mxu0
        %3175 = vmatprep.mubr.bf16.mxu0 %v2338
        %3176 = vmatmul.mubr.bf16.gmra.mrb[0].mxu0 %v2337
        %v3177 = vpop.f32.mrb[0].mxu0
        %v3178 = vadd.f32 %v3017, %v3177
        %v3179 = vpop.f32.mrb[0].mxu0
        %v3180 = vpop.f32.mrb[0].mxu0
        %v3181 = vadd.f32 %v3020, %v3180
        %v3182 = vpop.f32.mrb[0].mxu0
        %3183 = vmatprep.mubr.bf16.mxu0 %v2346
        %3184 = vmatmul.mubr.bf16.gmra.mrb[0].mxu0 %v2345
        %v3185 = vpop.f32.mrb[0].mxu0
        %v3186 = vadd.f32 %v3025, %v3185
        %v3187 = vpop.f32.mrb[0].mxu0
        %v3188 = vpop.f32.mrb[0].mxu0
        %v3189 = vadd.f32 %v3028, %v3188
        %v3190 = vpop.f32.mrb[0].mxu0
        %3191 = vmatprep.mubr.bf16.mxu0 %v2354
        %3192 = vmatmul.mubr.bf16.gmra.mrb[0].mxu0 %v2353
        %v3193 = vpop.f32.mrb[0].mxu0
        %v3194 = vadd.f32 %v3033, %v3193
        %v3195 = vpop.f32.mrb[0].mxu0
        %v3196 = vpop.f32.mrb[0].mxu0
        %v3197 = vadd.f32 %v3036, %v3196
        %v3198 = vpop.f32.mrb[0].mxu0
        %3199 = vmatprep.mubr.bf16.mxu0 %v2362
        %3200 = vmatmul.mubr.bf16.gmra.mrb[0].mxu0 %v2361
        %v3201 = vpop.f32.mrb[0].mxu0
        %v3202 = vadd.f32 %v3041, %v3201
        %v3203 = vpop.f32.mrb[0].mxu0
        %v3204 = vpop.f32.mrb[0].mxu0
        %v3205 = vadd.f32 %v3044, %v3204
        %v3206 = vpop.f32.mrb[0].mxu0
        %3207 = vmatprep.mubr.bf16.mxu0 %v2370
        %3208 = vmatmul.mubr.bf16.gmra.mrb[0].mxu0 %v2369
        %v3209 = vpop.f32.mrb[0].mxu0
        %v3210 = vadd.f32 %v3049, %v3209
        %v3211 = vpop.f32.mrb[0].mxu0
        %v3212 = vpop.f32.mrb[0].mxu0
        %v3213 = vadd.f32 %v3052, %v3212
        %v3214 = vpop.f32.mrb[0].mxu0
        %3215 = vmatprep.mubr.bf16.mxu0 %v2378
        %3216 = vmatmul.mubr.bf16.gmra.mrb[0].mxu0 %v2377
        %v3217 = vpop.f32.mrb[0].mxu0
        %v3218 = vadd.f32 %v3057, %v3217
        %v3219 = vpop.f32.mrb[0].mxu0
        %v3220 = vpop.f32.mrb[0].mxu0
        %v3221 = vadd.f32 %v3060, %v3220
        %v3222 = vpop.f32.mrb[0].mxu0
        %3223 = vmatprep.mubr.bf16.mxu0 %v2386
        %3224 = vmatmul.mubr.bf16.gmra.mrb[0].mxu0 %v2385
        %v3225 = vpop.f32.mrb[0].mxu0
        %v3226 = vadd.f32 %v3065, %v3225
        %v3227 = vpop.f32.mrb[0].mxu0
        %v3228 = vpop.f32.mrb[0].mxu0
        %v3229 = vadd.f32 %v3068, %v3228
        %v3230 = vpop.f32.mrb[0].mxu0
        %3231 = vmatprep.mubr.bf16.mxu0 %v2394
        %3232 = vmatmul.mubr.bf16.gmra.mrb[0].mxu0 %v2393
        %v3233 = vpop.f32.mrb[0].mxu0
        %v3234 = vadd.f32 %v3073, %v3233
        %v3235 = vpop.f32.mrb[0].mxu0
        %v3236 = vpop.f32.mrb[0].mxu0
        %v3237 = vadd.f32 %v3076, %v3236
        %v3238 = vpop.f32.mrb[0].mxu0
        %3239 = vmatprep.mubr.bf16.mxu0 %v2402
        %3240 = vmatmul.mubr.bf16.gmra.mrb[0].mxu0 %v2401
        %v3241 = vpop.f32.mrb[0].mxu0
        %v3242 = vadd.f32 %v3081, %v3241
        %v3243 = vpop.f32.mrb[0].mxu0
        %v3244 = vpop.f32.mrb[0].mxu0
        %v3245 = vadd.f32 %v3084, %v3244
        %v3246 = vpop.f32.mrb[0].mxu0
        %3247 = vmatprep.mubr.bf16.mxu0 %v2410
        %3248 = vmatmul.mubr.bf16.gmra.mrb[0].mxu0 %v2409
        %v3249 = vpop.f32.mrb[0].mxu0
        %v3250 = vadd.f32 %v3089, %v3249
        %v3251 = vpop.f32.mrb[0].mxu0
        %v3252 = vpop.f32.mrb[0].mxu0
        %v3253 = vadd.f32 %v3092, %v3252
        %v3254 = vpop.f32.mrb[0].mxu0
        %3255 = vmatprep.mubr.bf16.mxu0 %v2418
        %3256 = vmatmul.mubr.bf16.gmra.mrb[0].mxu0 %v2417
        %v3257 = vpop.f32.mrb[0].mxu0
        %v3258 = vadd.f32 %v3097, %v3257
        %v3259 = vpop.f32.mrb[0].mxu0
        %v3260 = vpop.f32.mrb[0].mxu0
        %v3261 = vadd.f32 %v3100, %v3260
        %v3262 = vpop.f32.mrb[0].mxu0
        %3263 = vmatprep.mubr.bf16.mxu0 %v2426
        %3264 = vmatmul.mubr.bf16.gmra.mrb[0].mxu0 %v2425
        %v3265 = vpop.f32.mrb[0].mxu0
        %v3266 = vadd.f32 %v3105, %v3265
        %v3267 = vpop.f32.mrb[0].mxu0
        %v3268 = vpop.f32.mrb[0].mxu0
        %v3269 = vadd.f32 %v3108, %v3268
        %v3270 = vpop.f32.mrb[0].mxu0
        %3271 = vmatprep.mubr.bf16.mxu0 %v2434
        %3272 = vmatmul.mubr.bf16.gmra.mrb[0].mxu0 %v2433
        %v3273 = vpop.f32.mrb[0].mxu0
        %v3274 = vadd.f32 %v3113, %v3273
        %v3275 = vpop.f32.mrb[0].mxu0
        %v3276 = vpop.f32.mrb[0].mxu0
        %v3277 = vadd.f32 %v3116, %v3276
        %v3278 = vpop.f32.mrb[0].mxu0
        %3279 = vmatprep.mubr.bf16.mxu0 %v2442
        %3280 = vmatmul.mubr.bf16.gmra.mrb[0].mxu0 %v2441
        %v3281 = vpop.f32.mrb[0].mxu0
        %v3282 = vadd.f32 %v3121, %v3281
        %v3283 = vpop.f32.mrb[0].mxu0
        %v3284 = vpop.f32.mrb[0].mxu0
        %v3285 = vadd.f32 %v3124, %v3284
        %v3286 = vpop.f32.mrb[0].mxu0
        %3287 = vdwg.mxu0
        %3288 = vmatprep.subr.bf16.mxu0 0
        %3289 = vmatpush1.bf16.msra.mxu0 %v2870
        %3290 = vmatprep.subr.bf16.mxu0 0
        %3291 = vmatpush1.bf16.msra.mxu0 %v2871
        %3292 = vmatprep.subr.bf16.mxu0 0
        %3293 = vmatpush1.bf16.msra.mxu0 %v2872
        %3294 = vmatprep.subr.bf16.mxu0 0
        %3295 = vmatpush1.bf16.msra.mxu0 %v2873
        %3296 = vmatprep.subr.bf16.mxu0 0
        %3297 = vmatpush1.bf16.msra.mxu0 %v2874
        %3298 = vmatprep.subr.bf16.mxu0 0
        %3299 = vmatpush1.bf16.msra.mxu0 %v2875
        %3300 = vmatprep.subr.bf16.mxu0 0
        %3301 = vmatpush1.bf16.msra.mxu0 %v2876
        %3302 = vmatprep.subr.bf16.mxu0 0
        %3303 = vmatpush1.bf16.msra.mxu0 %v2877
        %3304 = vmatprep.subr.bf16.mxu0 0
        %3305 = vmatpush1.bf16.msra.mxu0 %v2878
        %3306 = vmatprep.subr.bf16.mxu0 0
        %3307 = vmatpush1.bf16.msra.mxu0 %v2879
        %3308 = vmatprep.subr.bf16.mxu0 0
        %3309 = vmatpush1.bf16.msra.mxu0 %v2880
        %3310 = vmatprep.subr.bf16.mxu0 0
        %3311 = vmatpush1.bf16.msra.mxu0 %v2881
        %3312 = vmatprep.subr.bf16.mxu0 0
        %3313 = vmatpush1.bf16.msra.mxu0 %v2882
        %3314 = vmatprep.subr.bf16.mxu0 0
        %3315 = vmatpush1.bf16.msra.mxu0 %v2883
        %3316 = vmatprep.subr.bf16.mxu0 0
        %3317 = vmatpush1.bf16.msra.mxu0 %v2884
        %3318 = vmatprep.subr.bf16.mxu0 0
        %3319 = vmatpush1.bf16.msra.mxu0 %v2885
        %3320 = vmatprep.mubr.bf16.mxu0 %v2324
        %3321 = vmatmul.mubr.bf16.gmra.mrb[0].mxu0 %v2323
        %v3322 = vpop.f32.mrb[0].mxu0
        %v3323 = vadd.f32 %v3162, %v3322
        %v3324 = vpop.f32.mrb[0].mxu0
        %v3325 = vpop.f32.mrb[0].mxu0
        %v3326 = vadd.f32 %v3165, %v3325
        %v3327 = vpop.f32.mrb[0].mxu0
        %3328 = vmatprep.mubr.bf16.mxu0 %v2332
        %3329 = vmatmul.mubr.bf16.gmra.mrb[0].mxu0 %v2331
        %v3330 = vpop.f32.mrb[0].mxu0
        %v3331 = vadd.f32 %v3170, %v3330
        %v3332 = vpop.f32.mrb[0].mxu0
        %v3333 = vpop.f32.mrb[0].mxu0
        %v3334 = vadd.f32 %v3173, %v3333
        %v3335 = vpop.f32.mrb[0].mxu0
        %3336 = vmatprep.mubr.bf16.mxu0 %v2340
        %3337 = vmatmul.mubr.bf16.gmra.mrb[0].mxu0 %v2339
        %v3338 = vpop.f32.mrb[0].mxu0
        %v3339 = vadd.f32 %v3178, %v3338
        %v3340 = vpop.f32.mrb[0].mxu0
        %v3341 = vpop.f32.mrb[0].mxu0
        %v3342 = vadd.f32 %v3181, %v3341
        %v3343 = vpop.f32.mrb[0].mxu0
        %3344 = vmatprep.mubr.bf16.mxu0 %v2348
        %3345 = vmatmul.mubr.bf16.gmra.mrb[0].mxu0 %v2347
        %v3346 = vpop.f32.mrb[0].mxu0
        %v3347 = vadd.f32 %v3186, %v3346
        %v3348 = vpop.f32.mrb[0].mxu0
        %v3349 = vpop.f32.mrb[0].mxu0
        %v3350 = vadd.f32 %v3189, %v3349
        %v3351 = vpop.f32.mrb[0].mxu0
        %3352 = vmatprep.mubr.bf16.mxu0 %v2356
        %3353 = vmatmul.mubr.bf16.gmra.mrb[0].mxu0 %v2355
        %v3354 = vpop.f32.mrb[0].mxu0
        %v3355 = vadd.f32 %v3194, %v3354
        %v3356 = vpop.f32.mrb[0].mxu0
        %v3357 = vpop.f32.mrb[0].mxu0
        %v3358 = vadd.f32 %v3197, %v3357
        %v3359 = vpop.f32.mrb[0].mxu0
        %3360 = vmatprep.mubr.bf16.mxu0 %v2364
        %3361 = vmatmul.mubr.bf16.gmra.mrb[0].mxu0 %v2363
        %v3362 = vpop.f32.mrb[0].mxu0
        %v3363 = vadd.f32 %v3202, %v3362
        %v3364 = vpop.f32.mrb[0].mxu0
        %v3365 = vpop.f32.mrb[0].mxu0
        %v3366 = vadd.f32 %v3205, %v3365
        %v3367 = vpop.f32.mrb[0].mxu0
        %3368 = vmatprep.mubr.bf16.mxu0 %v2372
        %3369 = vmatmul.mubr.bf16.gmra.mrb[0].mxu0 %v2371
        %v3370 = vpop.f32.mrb[0].mxu0
        %v3371 = vadd.f32 %v3210, %v3370
        %v3372 = vpop.f32.mrb[0].mxu0
        %v3373 = vpop.f32.mrb[0].mxu0
        %v3374 = vadd.f32 %v3213, %v3373
        %v3375 = vpop.f32.mrb[0].mxu0
        %3376 = vmatprep.mubr.bf16.mxu0 %v2380
        %3377 = vmatmul.mubr.bf16.gmra.mrb[0].mxu0 %v2379
        %v3378 = vpop.f32.mrb[0].mxu0
        %v3379 = vadd.f32 %v3218, %v3378
        %v3380 = vpop.f32.mrb[0].mxu0
        %v3381 = vpop.f32.mrb[0].mxu0
        %v3382 = vadd.f32 %v3221, %v3381
        %v3383 = vpop.f32.mrb[0].mxu0
        %3384 = vmatprep.mubr.bf16.mxu0 %v2388
        %3385 = vmatmul.mubr.bf16.gmra.mrb[0].mxu0 %v2387
        %v3386 = vpop.f32.mrb[0].mxu0
        %v3387 = vadd.f32 %v3226, %v3386
        %v3388 = vpop.f32.mrb[0].mxu0
        %v3389 = vpop.f32.mrb[0].mxu0
        %v3390 = vadd.f32 %v3229, %v3389
        %v3391 = vpop.f32.mrb[0].mxu0
        %3392 = vmatprep.mubr.bf16.mxu0 %v2396
        %3393 = vmatmul.mubr.bf16.gmra.mrb[0].mxu0 %v2395
        %v3394 = vpop.f32.mrb[0].mxu0
        %v3395 = vadd.f32 %v3234, %v3394
        %v3396 = vpop.f32.mrb[0].mxu0
        %v3397 = vpop.f32.mrb[0].mxu0
        %v3398 = vadd.f32 %v3237, %v3397
        %v3399 = vpop.f32.mrb[0].mxu0
        %3400 = vmatprep.mubr.bf16.mxu0 %v2404
        %3401 = vmatmul.mubr.bf16.gmra.mrb[0].mxu0 %v2403
        %v3402 = vpop.f32.mrb[0].mxu0
        %v3403 = vadd.f32 %v3242, %v3402
        %v3404 = vpop.f32.mrb[0].mxu0
        %v3405 = vpop.f32.mrb[0].mxu0
        %v3406 = vadd.f32 %v3245, %v3405
        %v3407 = vpop.f32.mrb[0].mxu0
        %3408 = vmatprep.mubr.bf16.mxu0 %v2412
        %3409 = vmatmul.mubr.bf16.gmra.mrb[0].mxu0 %v2411
        %v3410 = vpop.f32.mrb[0].mxu0
        %v3411 = vadd.f32 %v3250, %v3410
        %v3412 = vpop.f32.mrb[0].mxu0
        %v3413 = vpop.f32.mrb[0].mxu0
        %v3414 = vadd.f32 %v3253, %v3413
        %v3415 = vpop.f32.mrb[0].mxu0
        %3416 = vmatprep.mubr.bf16.mxu0 %v2420
        %3417 = vmatmul.mubr.bf16.gmra.mrb[0].mxu0 %v2419
        %v3418 = vpop.f32.mrb[0].mxu0
        %v3419 = vadd.f32 %v3258, %v3418
        %v3420 = vpop.f32.mrb[0].mxu0
        %v3421 = vpop.f32.mrb[0].mxu0
        %v3422 = vadd.f32 %v3261, %v3421
        %v3423 = vpop.f32.mrb[0].mxu0
        %3424 = vmatprep.mubr.bf16.mxu0 %v2428
        %3425 = vmatmul.mubr.bf16.gmra.mrb[0].mxu0 %v2427
        %v3426 = vpop.f32.mrb[0].mxu0
        %v3427 = vadd.f32 %v3266, %v3426
        %v3428 = vpop.f32.mrb[0].mxu0
        %v3429 = vpop.f32.mrb[0].mxu0
        %v3430 = vadd.f32 %v3269, %v3429
        %v3431 = vpop.f32.mrb[0].mxu0
        %3432 = vmatprep.mubr.bf16.mxu0 %v2436
        %3433 = vmatmul.mubr.bf16.gmra.mrb[0].mxu0 %v2435
        %v3434 = vpop.f32.mrb[0].mxu0
        %v3435 = vadd.f32 %v3274, %v3434
        %v3436 = vpop.f32.mrb[0].mxu0
        %v3437 = vpop.f32.mrb[0].mxu0
        %v3438 = vadd.f32 %v3277, %v3437
        %v3439 = vpop.f32.mrb[0].mxu0
        %3440 = vmatprep.mubr.bf16.mxu0 %v2444
        %3441 = vmatmul.mubr.bf16.gmra.mrb[0].mxu0 %v2443
        %v3442 = vpop.f32.mrb[0].mxu0
        %v3443 = vadd.f32 %v3282, %v3442
        %v3444 = vpop.f32.mrb[0].mxu0
        %v3445 = vpop.f32.mrb[0].mxu0
        %v3446 = vadd.f32 %v3285, %v3445
        %v3447 = vpop.f32.mrb[0].mxu0
        %3448 = vdwg.mxu0
        %3449 = vmatprep.subr.bf16.mxu0 0
        %3450 = vmatpush1.bf16.msra.mxu0 %v2886
        %3451 = vmatprep.subr.bf16.mxu0 0
        %3452 = vmatpush1.bf16.msra.mxu0 %v2887
        %3453 = vmatprep.subr.bf16.mxu0 0
        %3454 = vmatpush1.bf16.msra.mxu0 %v2888
        %3455 = vmatprep.subr.bf16.mxu0 0
        %3456 = vmatpush1.bf16.msra.mxu0 %v2889
        %3457 = vmatprep.subr.bf16.mxu0 0
        %3458 = vmatpush1.bf16.msra.mxu0 %v2890
        %3459 = vmatprep.subr.bf16.mxu0 0
        %3460 = vmatpush1.bf16.msra.mxu0 %v2891
        %3461 = vmatprep.subr.bf16.mxu0 0
        %3462 = vmatpush1.bf16.msra.mxu0 %v2892
        %3463 = vmatprep.subr.bf16.mxu0 0
        %3464 = vmatpush1.bf16.msra.mxu0 %v2893
        %3465 = vmatprep.subr.bf16.mxu0 0
        %3466 = vmatpush1.bf16.msra.mxu0 %v2894
        %3467 = vmatprep.subr.bf16.mxu0 0
        %3468 = vmatpush1.bf16.msra.mxu0 %v2895
        %3469 = vmatprep.subr.bf16.mxu0 0
        %3470 = vmatpush1.bf16.msra.mxu0 %v2896
        %3471 = vmatprep.subr.bf16.mxu0 0
        %3472 = vmatpush1.bf16.msra.mxu0 %v2897
        %3473 = vmatprep.subr.bf16.mxu0 0
        %3474 = vmatpush1.bf16.msra.mxu0 %v2898
        %3475 = vmatprep.subr.bf16.mxu0 0
        %3476 = vmatpush1.bf16.msra.mxu0 %v2899
        %3477 = vmatprep.subr.bf16.mxu0 0
        %3478 = vmatpush1.bf16.msra.mxu0 %v2900
        %3479 = vmatprep.subr.bf16.mxu0 0
        %3480 = vmatpush1.bf16.msra.mxu0 %v2901
        %3481 = vmatprep.mubr.bf16.mxu0 %v2326
        %3482 = vmatmul.mubr.bf16.gmra.mrb[0].mxu0 %v2325
        %v3483 = vpop.f32.mrb[0].mxu0
        %v3484 = vadd.f32 %v3323, %v3483
        %v3485 = vpop.f32.mrb[0].mxu0
        %v3486 = vpop.f32.mrb[0].mxu0
        %v3487 = vadd.f32 %v3326, %v3486
        %v3488 = vpop.f32.mrb[0].mxu0
        %3489 = vmatprep.mubr.bf16.mxu0 %v2334
        %3490 = vmatmul.mubr.bf16.gmra.mrb[0].mxu0 %v2333
        %v3491 = vpop.f32.mrb[0].mxu0
        %v3492 = vadd.f32 %v3331, %v3491
        %v3493 = vpop.f32.mrb[0].mxu0
        %v3494 = vpop.f32.mrb[0].mxu0
        %v3495 = vadd.f32 %v3334, %v3494
        %v3496 = vpop.f32.mrb[0].mxu0
        %3497 = vmatprep.mubr.bf16.mxu0 %v2342
        %3498 = vmatmul.mubr.bf16.gmra.mrb[0].mxu0 %v2341
        %v3499 = vpop.f32.mrb[0].mxu0
        %v3500 = vadd.f32 %v3339, %v3499
        %v3501 = vpop.f32.mrb[0].mxu0
        %v3502 = vpop.f32.mrb[0].mxu0
        %v3503 = vadd.f32 %v3342, %v3502
        %v3504 = vpop.f32.mrb[0].mxu0
        %3505 = vmatprep.mubr.bf16.mxu0 %v2350
        %3506 = vmatmul.mubr.bf16.gmra.mrb[0].mxu0 %v2349
        %v3507 = vpop.f32.mrb[0].mxu0
        %v3508 = vadd.f32 %v3347, %v3507
        %v3509 = vpop.f32.mrb[0].mxu0
        %v3510 = vpop.f32.mrb[0].mxu0
        %v3511 = vadd.f32 %v3350, %v3510
        %v3512 = vpop.f32.mrb[0].mxu0
        %3513 = vmatprep.mubr.bf16.mxu0 %v2358
        %3514 = vmatmul.mubr.bf16.gmra.mrb[0].mxu0 %v2357
        %v3515 = vpop.f32.mrb[0].mxu0
        %v3516 = vadd.f32 %v3355, %v3515
        %v3517 = vpop.f32.mrb[0].mxu0
        %v3518 = vpop.f32.mrb[0].mxu0
        %v3519 = vadd.f32 %v3358, %v3518
        %v3520 = vpop.f32.mrb[0].mxu0
        %3521 = vmatprep.mubr.bf16.mxu0 %v2366
        %3522 = vmatmul.mubr.bf16.gmra.mrb[0].mxu0 %v2365
        %v3523 = vpop.f32.mrb[0].mxu0
        %v3524 = vadd.f32 %v3363, %v3523
        %v3525 = vpop.f32.mrb[0].mxu0
        %v3526 = vpop.f32.mrb[0].mxu0
        %v3527 = vadd.f32 %v3366, %v3526
        %v3528 = vpop.f32.mrb[0].mxu0
        %3529 = vmatprep.mubr.bf16.mxu0 %v2374
        %3530 = vmatmul.mubr.bf16.gmra.mrb[0].mxu0 %v2373
        %v3531 = vpop.f32.mrb[0].mxu0
        %v3532 = vadd.f32 %v3371, %v3531
        %v3533 = vpop.f32.mrb[0].mxu0
        %v3534 = vpop.f32.mrb[0].mxu0
        %v3535 = vadd.f32 %v3374, %v3534
        %v3536 = vpop.f32.mrb[0].mxu0
        %3537 = vmatprep.mubr.bf16.mxu0 %v2382
        %3538 = vmatmul.mubr.bf16.gmra.mrb[0].mxu0 %v2381
        %v3539 = vpop.f32.mrb[0].mxu0
        %v3540 = vadd.f32 %v3379, %v3539
        %v3541 = vpop.f32.mrb[0].mxu0
        %v3542 = vpop.f32.mrb[0].mxu0
        %v3543 = vadd.f32 %v3382, %v3542
        %v3544 = vpop.f32.mrb[0].mxu0
        %3545 = vmatprep.mubr.bf16.mxu0 %v2390
        %3546 = vmatmul.mubr.bf16.gmra.mrb[0].mxu0 %v2389
        %v3547 = vpop.f32.mrb[0].mxu0
        %v3548 = vadd.f32 %v3387, %v3547
        %v3549 = vpop.f32.mrb[0].mxu0
        %v3550 = vpop.f32.mrb[0].mxu0
        %v3551 = vadd.f32 %v3390, %v3550
        %v3552 = vpop.f32.mrb[0].mxu0
        %3553 = vmatprep.mubr.bf16.mxu0 %v2398
        %3554 = vmatmul.mubr.bf16.gmra.mrb[0].mxu0 %v2397
        %v3555 = vpop.f32.mrb[0].mxu0
        %v3556 = vadd.f32 %v3395, %v3555
        %v3557 = vpop.f32.mrb[0].mxu0
        %v3558 = vpop.f32.mrb[0].mxu0
        %v3559 = vadd.f32 %v3398, %v3558
        %v3560 = vpop.f32.mrb[0].mxu0
        %3561 = vmatprep.mubr.bf16.mxu0 %v2406
        %3562 = vmatmul.mubr.bf16.gmra.mrb[0].mxu0 %v2405
        %v3563 = vpop.f32.mrb[0].mxu0
        %v3564 = vadd.f32 %v3403, %v3563
        %v3565 = vpop.f32.mrb[0].mxu0
        %v3566 = vpop.f32.mrb[0].mxu0
        %v3567 = vadd.f32 %v3406, %v3566
        %v3568 = vpop.f32.mrb[0].mxu0
        %3569 = vmatprep.mubr.bf16.mxu0 %v2414
        %3570 = vmatmul.mubr.bf16.gmra.mrb[0].mxu0 %v2413
        %v3571 = vpop.f32.mrb[0].mxu0
        %v3572 = vadd.f32 %v3411, %v3571
        %v3573 = vpop.f32.mrb[0].mxu0
        %v3574 = vpop.f32.mrb[0].mxu0
        %v3575 = vadd.f32 %v3414, %v3574
        %v3576 = vpop.f32.mrb[0].mxu0
        %3577 = vmatprep.mubr.bf16.mxu0 %v2422
        %3578 = vmatmul.mubr.bf16.gmra.mrb[0].mxu0 %v2421
        %v3579 = vpop.f32.mrb[0].mxu0
        %v3580 = vadd.f32 %v3419, %v3579
        %v3581 = vpop.f32.mrb[0].mxu0
        %v3582 = vpop.f32.mrb[0].mxu0
        %v3583 = vadd.f32 %v3422, %v3582
        %v3584 = vpop.f32.mrb[0].mxu0
        %3585 = vmatprep.mubr.bf16.mxu0 %v2430
        %3586 = vmatmul.mubr.bf16.gmra.mrb[0].mxu0 %v2429
        %v3587 = vpop.f32.mrb[0].mxu0
        %v3588 = vadd.f32 %v3427, %v3587
        %v3589 = vpop.f32.mrb[0].mxu0
        %v3590 = vpop.f32.mrb[0].mxu0
        %v3591 = vadd.f32 %v3430, %v3590
        %v3592 = vpop.f32.mrb[0].mxu0
        %3593 = vmatprep.mubr.bf16.mxu0 %v2438
        %3594 = vmatmul.mubr.bf16.gmra.mrb[0].mxu0 %v2437
        %v3595 = vpop.f32.mrb[0].mxu0
        %v3596 = vadd.f32 %v3435, %v3595
        %v3597 = vpop.f32.mrb[0].mxu0
        %v3598 = vpop.f32.mrb[0].mxu0
        %v3599 = vadd.f32 %v3438, %v3598
        %v3600 = vpop.f32.mrb[0].mxu0
        %3601 = vmatprep.mubr.bf16.mxu0 %v2446
        %3602 = vmatmul.mubr.bf16.gmra.mrb[0].mxu0 %v2445
        %v3603 = vpop.f32.mrb[0].mxu0
        %v3604 = vadd.f32 %v3443, %v3603
        %v3605 = vpop.f32.mrb[0].mxu0
        %v3606 = vpop.f32.mrb[0].mxu0
        %v3607 = vadd.f32 %v3446, %v3606
        %v3608 = vpop.f32.mrb[0].mxu0
        %3609 = vdwg.mxu0
        %3610 = vst [vmem:[%s285] sm:$0xff] %v3484
        %3611 = vst [vmem:[%s285 + $0x8] sm:$0xff] %v3487
        %3612 = vst [vmem:[%s285 + $0x10] sm:$0xff] %v3492
        %3613 = vst [vmem:[%s285 + $0x18] sm:$0xff] %v3495
        %3614 = vst [vmem:[%s285 + $0x20] sm:$0xff] %v3500
        %3615 = vst [vmem:[%s285 + $0x28] sm:$0xff] %v3503
        %3616 = vst [vmem:[%s285 + $0x30] sm:$0xff] %v3508
        %3617 = vst [vmem:[%s285 + $0x38] sm:$0xff] %v3511
        %3618 = vst [vmem:[%s285 + $0x40] sm:$0xff] %v3516
        %3619 = vst [vmem:[%s285 + $0x48] sm:$0xff] %v3519
        %3620 = vst [vmem:[%s285 + $0x50] sm:$0xff] %v3524
        %3621 = vst [vmem:[%s285 + $0x58] sm:$0xff] %v3527
        %3622 = vst [vmem:[%s285 + $0x60] sm:$0xff] %v3532
        %3623 = vst [vmem:[%s285 + $0x68] sm:$0xff] %v3535
        %3624 = vst [vmem:[%s285 + $0x70] sm:$0xff] %v3540
        %3625 = vst [vmem:[%s285 + $0x78] sm:$0xff] %v3543
        %3626 = vst [vmem:[%s285 + $0x80] sm:$0xff] %v3548
        %3627 = vst [vmem:[%s285 + $0x88] sm:$0xff] %v3551
        %3628 = vst [vmem:[%s285 + $0x90] sm:$0xff] %v3556
        %3629 = vst [vmem:[%s285 + $0x98] sm:$0xff] %v3559
        %3630 = vst [vmem:[%s285 + $0xa0] sm:$0xff] %v3564
        %3631 = vst [vmem:[%s285 + $0xa8] sm:$0xff] %v3567
        %3632 = vst [vmem:[%s285 + $0xb0] sm:$0xff] %v3572
        %3633 = vst [vmem:[%s285 + $0xb8] sm:$0xff] %v3575
        %3634 = vst [vmem:[%s285 + $0xc0] sm:$0xff] %v3580
        %3635 = vst [vmem:[%s285 + $0xc8] sm:$0xff] %v3583
        %3636 = vst [vmem:[%s285 + $0xd0] sm:$0xff] %v3588
        %3637 = vst [vmem:[%s285 + $0xd8] sm:$0xff] %v3591
        %3638 = vst [vmem:[%s285 + $0xe0] sm:$0xff] %v3596
        %3639 = vst [vmem:[%s285 + $0xe8] sm:$0xff] %v3599
        %3640 = vst [vmem:[%s285 + $0xf0] sm:$0xff] %v3604
        %3641 = vst [vmem:[%s285 + $0xf8] sm:$0xff] %v3607
        %s3642 = sand.u32 %s142, 1
        %s3643 = scalar_lea.sflag [#allocation4], %s3642
        %s3644 = sand.u32 %s142, 1
        %s3645 = smul.addr %s3644, 256
        %s3646 = scalar_lea.vmem [#allocation10], %s3645
        // Predicated region
        $region57: #{tpu_custom_call.1} parent=39 // pred_check
          %p3647 = pneg %p152
        $region58: #{tpu_custom_call.1} parent=39 // pred_check_branch
          %3649 = sbr.rel (%p3647) target = $region60
        $region59: #{tpu_custom_call.1} parent=39 // pred_region
          %s3650 = smul.u32 32, %s24
          %s3652 = ssub.s32 4096, 4096
          %3653 = vsyncadd %s3643, %s3652
          %s3654 = smul.addr %s3650, 128
          %s3655 = scalar_lea.hbm %s5, %s3654
          %s3656 = sshll.u32 %s3646, 4
          %s3657 = int_to_ptr.vmem [resolvable:$true] %s3656
          %3662 = dma.vmem_to_hbm [thread:$0]  %s3657, 4096, %s3655, %s3643, 128, 128, 8
        $region60: #{tpu_custom_call.1} parent=39 // pred_fallthru
          _
      $region40: #{tpu_custom_call.1} parent=5 // pred_fallthru
        _
      %p3663 = scmp.le.s32.totalorder 2, %s19
      // Predicated region
      $region61: #{tpu_custom_call.1} parent=5 // pred_check
        %p3664 = pneg %p3663
      $region62: #{tpu_custom_call.1} parent=5 // pred_check_branch
        %3666 = sbr.rel (%p3664) target = $region64
      $region63: #{tpu_custom_call.1} parent=5 // pred_region
        %s3667 = ssub.s32 %s19, 2
        // Predicated region
        $region65: #{tpu_custom_call.1} parent=63 // pred_check
          %p3668 = pneg %p158
        $region66: #{tpu_custom_call.1} parent=63 // pred_check_branch
          %3670 = sbr.rel (%p3668) target = $region68
        $region67: #{tpu_custom_call.1} parent=63 // pred_region
          %s3671 = sand.u32 %s143, 1
          %s3672 = scalar_lea.sflag [#allocation4], %s3671
          %s3673 = sand.u32 %s143, 1
          %s3674 = smul.addr %s3673, 256
          %s3675 = scalar_lea.vmem [#allocation10], %s3674
          %3676 = dma.done %s3672, 4096
        $region68: #{tpu_custom_call.1} parent=63 // pred_fallthru
          _
      $region64: #{tpu_custom_call.1} parent=5 // pred_fallthru
        _
    $region6: #{tpu_custom_call.1} parent=1 // loop_footer
      %s23 = sadd.s32 1, %s19
    $region7: #{tpu_custom_call.1} parent=1 // loop_footer_branch
      %18 = sbr.rel target = $region3
    $region8: #{tpu_custom_call.1} parent=1 // loop_exit
      _
    %3677 = vsyncpa [#allocation3], 1
    %s3678 = scalar_lea.sflag [#allocation3], 1
    %3679 = vsyncpa %s3678, 1
    %3680 = vsyncpa [#allocation6], 1
    %3681 = vsyncpa [#allocation9], 1
    %3682 = vsyncpa [#allocation4], 1
    %s3683 = scalar_lea.sflag [#allocation4], 1
    %3684 = vsyncpa %s3683, 1

// kernel: tpu_custom_call.1
$region0: #{tpu_custom_call.1}
  #allocation0 [shape = 'u32[]', space=smem, size = 0x4, offset = 0x4, fixed_abs, tag = 'smem constant byte address 0x4 - core index']
  #allocation1 [shape = 'u32[144,128]{1,0:T(1,128)}', space=vmem, size = 0x12000, scoped, tag = 'internal scratch']
  %s0 = inlined_call_operand.hbm [shape: bf16[512,256], index: 0, kind: input, shape index: {}]
  %s1 = inlined_call_operand.hbm [shape: bf16[256,1024], index: 1, kind: input, shape index: {}]
  %s2 = inlined_call_operand.hbm [shape: f32[1,1024], index: 2, kind: input, shape index: {}]
  %s3 = inlined_call_operand.hbm [shape: bf16[1024,128], index: 3, kind: input, shape index: {}]
  %s4 = inlined_call_operand.vmem [shape: f32[1,128], index: 4, kind: input, shape index: {}]
  %s5 = inlined_call_operand.hbm [shape: f32[512,128], index: 5, kind: output, shape index: {}]
  %s6 = sld [smem:[#allocation0]]
  $region69: #{tpu_custom_call.1} parent=0
    _
  %s8 = ssub.s32 1, %s6
  %s9 = scalar_select 0, %s8, %s6
  $region1: #{tpu_custom_call.1} parent=0
    #allocation2 [shape = 'u8[262144]{0}', space=vmem, size = 0x40000, scoped, tag = 'input window, operand 0']
    #allocation3 [shape = 's32[2]{0}', space=sflag, size = 0x8, scoped, tag = 'scoped memory for tpu_custom_call.1']
    #allocation4 [shape = 's32[2]{0}', space=sflag, size = 0x8, scoped, tag = 'scoped memory for tpu_custom_call.1']
    #allocation5 [shape = 'u8[524288]{0}', space=vmem, size = 0x80000, scoped, tag = 'input window, operand 1, single buffered']
    #allocation6 [shape = 's32[1]{0}', space=sflag, size = 0x4, scoped, tag = 'scoped memory for tpu_custom_call.1']
    #allocation7 [shape = 'u8[4096]{0}', space=vmem, size = 0x1000, scoped, tag = 'input window, operand 2, single buffered']
    #allocation8 [shape = 'u8[262144]{0}', space=vmem, size = 0x40000, scoped, tag = 'input window, operand 3, single buffered']
    #allocation9 [shape = 's32[1]{0}', space=sflag, size = 0x4, scoped, tag = 'scoped memory for tpu_custom_call.1']
    #allocation10 [shape = 'u8[262144]{0}', space=vmem, size = 0x40000, scoped, tag = 'output window, operand 0']
    %10 = vsyncpa [#allocation3], 0
    %s11 = scalar_lea.sflag [#allocation3], 1
    %12 = vsyncpa %s11, 0
    %13 = vsyncpa [#allocation6], 0
    %14 = vsyncpa [#allocation9], 0
    %15 = vsyncpa [#allocation4], 0
    %s16 = scalar_lea.sflag [#allocation4], 1
    %17 = vsyncpa %s16, 0
    loop: start=0, step=1, limit=4
    $region2: #{tpu_custom_call.1} parent=1 // loop_pre_header
      _
    $region3: #{tpu_custom_call.1} parent=1 // loop_header
      %s19 = sphi 0, %s23
      %p20 = scmp.ge.s32.totalorder %s19, 4
      %s29 = sphi 0, %s31
      %s32 = sphi 0, %s29
      %s33 = sphi 0, %s32
      %s49 = sphi 0, %s33
      %s53 = sphi 0, %s53
      %s55 = sphi 0, %s53
      %s56 = sphi 0, %s55
      %s70 = sphi 0, %s56
      %s74 = sphi 0, %s74
      %s76 = sphi 0, %s74
      %s77 = sphi 0, %s76
      %s91 = sphi 0, %s77
      %s95 = sphi 0, %s95
      %s97 = sphi 0, %s95
      %s98 = sphi 0, %s97
      %s112 = sphi 0, %s98
      %s116 = sphi 0, %s116
      %s118 = sphi 0, %s116
      %s119 = sphi 0, %s118
      %s133 = sphi 0, %s119
      %s139 = sphi 0, %s141
      %s142 = sphi 0, %s139
      %s143 = sphi 0, %s142
      %s159 = sphi 0, %s143
    $region4: #{tpu_custom_call.1} parent=1 // loop_header_branch
      %22 = sbr.rel (%p20) target = $region8
    $region5: #{tpu_custom_call.1} parent=1 // loop_body
      %s24 = ssub.s32 %s19, 1
      %s25 = ssub.s32 %s19, 2
      %s26 = sadd.s32 %s19, 1
      %s27 = ssub.s32 %s19, %s26
      %p28 = scmp.eq.s32.totalorder %s27, 0
      %s30 = sadd.s32 %s29, 1
      %s31 = scalar_select %p28, %s29, %s30
      %p34 = pneg %p28
      %p35 = scmp.eq.s32.totalorder %s19, 1
      %p36 = por %p34, %p35
      %p37 = scmp.ne.s32.totalorder %s29, %s32
      %p38 = scmp.eq.s32.totalorder %s19, 0
      %p39 = por %p37, %p38
      %p40 = scmp.ne.s32.totalorder %s29, %s32
      %p41 = scmp.eq.s32.totalorder %s24, 1
      %p42 = por %p40, %p41
      %p43 = scmp.ne.s32.totalorder %s32, %s33
      %p44 = scmp.eq.s32.totalorder %s24, 0
      %p45 = por %p43, %p44
      %p46 = scmp.ne.s32.totalorder %s32, %s33
      %p47 = scmp.eq.s32.totalorder %s25, 1
      %p48 = por %p46, %p47
      %p50 = scmp.ne.s32.totalorder %s33, %s49
      %p51 = scmp.eq.s32.totalorder %s25, 0
      %p52 = por %p50, %p51
      %s54 = sadd.s32 %s53, 1
      %p57 = scmp.eq.s32.totalorder %s19, 1
      %p58 = scmp.ne.s32.totalorder %s53, %s55
      %p59 = scmp.eq.s32.totalorder %s19, 0
      %p60 = por %p58, %p59
      %p61 = scmp.ne.s32.totalorder %s53, %s55
      %p62 = scmp.eq.s32.totalorder %s24, 1
      %p63 = por %p61, %p62
      %p64 = scmp.ne.s32.totalorder %s55, %s56
      %p65 = scmp.eq.s32.totalorder %s24, 0
      %p66 = por %p64, %p65
      %p67 = scmp.ne.s32.totalorder %s55, %s56
      %p68 = scmp.eq.s32.totalorder %s25, 1
      %p69 = por %p67, %p68
      %p71 = scmp.ne.s32.totalorder %s56, %s70
      %p72 = scmp.eq.s32.totalorder %s25, 0
      %p73 = por %p71, %p72
      %s75 = sadd.s32 %s74, 1
      %p78 = scmp.eq.s32.totalorder %s19, 1
      %p79 = scmp.ne.s32.totalorder %s74, %s76
      %p80 = scmp.eq.s32.totalorder %s19, 0
      %p81 = por %p79, %p80
      %p82 = scmp.ne.s32.totalorder %s74, %s76
      %p83 = scmp.eq.s32.totalorder %s24, 1
      %p84 = por %p82, %p83
      %p85 = scmp.ne.s32.totalorder %s76, %s77
      %p86 = scmp.eq.s32.totalorder %s24, 0
      %p87 = por %p85, %p86
      %p88 = scmp.ne.s32.totalorder %s76, %s77
      %p89 = scmp.eq.s32.totalorder %s25, 1
      %p90 = por %p88, %p89
      %p92 = scmp.ne.s32.totalorder %s77, %s91
      %p93 = scmp.eq.s32.totalorder %s25, 0
      %p94 = por %p92, %p93
      %s96 = sadd.s32 %s95, 1
      %p99 = scmp.eq.s32.totalorder %s19, 1
      %p100 = scmp.ne.s32.totalorder %s95, %s97
      %p101 = scmp.eq.s32.totalorder %s19, 0
      %p102 = por %p100, %p101
      %p103 = scmp.ne.s32.totalorder %s95, %s97
      %p104 = scmp.eq.s32.totalorder %s24, 1
      %p105 = por %p103, %p104
      %p106 = scmp.ne.s32.totalorder %s97, %s98
      %p107 = scmp.eq.s32.totalorder %s24, 0
      %p108 = por %p106, %p107
      %p109 = scmp.ne.s32.totalorder %s97, %s98
      %p110 = scmp.eq.s32.totalorder %s25, 1
      %p111 = por %p109, %p110
      %p113 = scmp.ne.s32.totalorder %s98, %s112
      %p114 = scmp.eq.s32.totalorder %s25, 0
      %p115 = por %p113, %p114
      %s117 = sadd.s32 %s116, 1
      %p120 = scmp.eq.s32.totalorder %s19, 1
      %p121 = scmp.ne.s32.totalorder %s116, %s118
      %p122 = scmp.eq.s32.totalorder %s19, 0
      %p123 = por %p121, %p122
      %p124 = scmp.ne.s32.totalorder %s116, %s118
      %p125 = scmp.eq.s32.totalorder %s24, 1
      %p126 = por %p124, %p125
      %p127 = scmp.ne.s32.totalorder %s118, %s119
      %p128 = scmp.eq.s32.totalorder %s24, 0
      %p129 = por %p127, %p128
      %p130 = scmp.ne.s32.totalorder %s118, %s119
      %p131 = scmp.eq.s32.totalorder %s25, 1
      %p132 = por %p130, %p131
      %p134 = scmp.ne.s32.totalorder %s119, %s133
      %p135 = scmp.eq.s32.totalorder %s25, 0
      %p136 = por %p134, %p135
      %s137 = ssub.s32 %s19, %s26
      %p138 = scmp.eq.s32.totalorder %s137, 0
      %s140 = sadd.s32 %s139, 1
      %s141 = scalar_select %p138, %s139, %s140
      %p144 = pneg %p138
      %p145 = scmp.eq.s32.totalorder %s19, 1
      %p146 = por %p144, %p145
      %p147 = scmp.ne.s32.totalorder %s139, %s142
      %p148 = scmp.eq.s32.totalorder %s19, 0
      %p149 = por %p147, %p148
      %p150 = scmp.ne.s32.totalorder %s139, %s142
      %p151 = scmp.eq.s32.totalorder %s24, 1
      %p152 = por %p150, %p151
      %p153 = scmp.ne.s32.totalorder %s142, %s143
      %p154 = scmp.eq.s32.totalorder %s24, 0
      %p155 = por %p153, %p154
      %p156 = scmp.ne.s32.totalorder %s142, %s143
      %p157 = scmp.eq.s32.totalorder %s25, 1
      %p158 = por %p156, %p157
      %p160 = scmp.ne.s32.totalorder %s143, %s159
      %p161 = scmp.eq.s32.totalorder %s25, 0
      %p162 = por %p160, %p161
      %p163 = scmp.le.s32.totalorder 1, %s19
      %p164 = scmp.lt.s32.totalorder %s19, 3
      %p165 = pnand %p163, %p164
      %p166 = pneg %p165
      // Predicated region
      $region9: #{tpu_custom_call.1} parent=5 // pred_check
        _
      $region10: #{tpu_custom_call.1} parent=5 // pred_check_branch
        %168 = sbr.rel (%p165) target = $region12
      $region11: #{tpu_custom_call.1} parent=5 // pred_region
        %s169 = ssub.s32 %s19, 1
        // Predicated region
        $region13: #{tpu_custom_call.1} parent=11 // pred_check
          %p170 = pneg %p66
        $region14: #{tpu_custom_call.1} parent=11 // pred_check_branch
          %172 = sbr.rel (%p170) target = $region16
        $region15: #{tpu_custom_call.1} parent=11 // pred_region
          %s174 = ssub.s32 16384, 16384
          %175 = vsyncadd [#allocation6], %s174
          %s176 = sshll.u32 [#allocation5], 4
          %s177 = int_to_ptr.vmem [resolvable:$true] %s176
          %182 = dma.hbm_to_vmem [thread:$0]  %s1, 16384, %s177, [#allocation6], 512, 512, 32
        $region16: #{tpu_custom_call.1} parent=11 // pred_fallthru
          _
        // Predicated region
        $region17: #{tpu_custom_call.1} parent=11 // pred_check
          %p183 = pneg %p87
        $region18: #{tpu_custom_call.1} parent=11 // pred_check_branch
          %185 = sbr.rel (%p183) target = $region20
        $region19: #{tpu_custom_call.1} parent=11 // pred_region
          %s187 = ssub.s32 128, 128
          %188 = vsyncadd [#allocation6], %s187
          %s190 = sshll.u32 [#allocation7], 4
          %s191 = int_to_ptr.vmem [resolvable:$true] %s190
          %193 = dma.hbm_to_vmem [thread:$0]  %s2, 128, %s191, [#allocation6]
        $region20: #{tpu_custom_call.1} parent=11 // pred_fallthru
          _
        // Predicated region
        $region21: #{tpu_custom_call.1} parent=11 // pred_check
          %p194 = pneg %p108
        $region22: #{tpu_custom_call.1} parent=11 // pred_check_branch
          %196 = sbr.rel (%p194) target = $region24
        $region23: #{tpu_custom_call.1} parent=11 // pred_region
          %s198 = ssub.s32 8192, 8192
          %199 = vsyncadd [#allocation9], %s198
          %s200 = sshll.u32 [#allocation8], 4
          %s201 = int_to_ptr.vmem [resolvable:$true] %s200
          %206 = dma.hbm_to_vmem [thread:$0]  %s3, 8192, %s201, [#allocation9], 64, 64, 4
        $region24: #{tpu_custom_call.1} parent=11 // pred_fallthru
          _
        // Predicated region
        $region25: #{tpu_custom_call.1} parent=11 // pred_check
          %p207 = pneg %p129
        $region26: #{tpu_custom_call.1} parent=11 // pred_check_branch
          %209 = sbr.rel (%p207) target = $region28
        $region27: #{tpu_custom_call.1} parent=11 // pred_region
          _
        $region28: #{tpu_custom_call.1} parent=11 // pred_fallthru
          _
      $region12: #{tpu_custom_call.1} parent=5 // pred_fallthru
        _
      %p210 = scmp.lt.s32.totalorder %s19, 2
      // Predicated region
      $region29: #{tpu_custom_call.1} parent=5 // pred_check
        %p211 = pneg %p210
      $region30: #{tpu_custom_call.1} parent=5 // pred_check_branch
        %213 = sbr.rel (%p211) target = $region32
      $region31: #{tpu_custom_call.1} parent=5 // pred_region
        // Predicated region
        $region33: #{tpu_custom_call.1} parent=31 // pred_check
          %p214 = pneg %p39
        $region34: #{tpu_custom_call.1} parent=31 // pred_check_branch
          %216 = sbr.rel (%p214) target = $region36
        $region35: #{tpu_custom_call.1} parent=31 // pred_region
          %s217 = sand.u32 %s29, 1
          %s218 = scalar_lea.sflag [#allocation3], %s217
          %s219 = sand.u32 %s29, 1
          %s220 = smul.addr %s219, 256
          %s221 = scalar_lea.vmem [#allocation2], %s220
          %s222 = smul.u32 32, %s19
          %s224 = ssub.s32 4096, 4096
          %225 = vsyncadd %s218, %s224
          %s226 = smul.addr %s222, 2
          %s227 = smul.addr %s226, 64
          %s228 = scalar_lea.hbm %s0, %s227
          %s229 = sshll.u32 %s221, 4
          %s230 = int_to_ptr.vmem [resolvable:$true] %s229
          %235 = dma.hbm_to_vmem [thread:$0]  %s228, 4096, %s230, %s218, 128, 128, 8
        $region36: #{tpu_custom_call.1} parent=31 // pred_fallthru
          _
      $region32: #{tpu_custom_call.1} parent=5 // pred_fallthru
        _
      %p236 = scmp.le.s32.totalorder 1, %s19
      %p237 = scmp.lt.s32.totalorder %s19, 3
      %p238 = pnand %p236, %p237
      %p239 = pneg %p238
      // Predicated region
      $region37: #{tpu_custom_call.1} parent=5 // pred_check
        _
      $region38: #{tpu_custom_call.1} parent=5 // pred_check_branch
        %241 = sbr.rel (%p238) target = $region40
      $region39: #{tpu_custom_call.1} parent=5 // pred_region
        %s242 = ssub.s32 %s19, 1
        %s243 = sand.u32 %s32, 1
        %s244 = scalar_lea.sflag [#allocation3], %s243
        %s245 = sand.u32 %s32, 1
        %s246 = smul.addr %s245, 256
        %s247 = scalar_lea.vmem [#allocation2], %s246
        // Predicated region
        $region41: #{tpu_custom_call.1} parent=39 // pred_check
          %p248 = pneg %p45
        $region42: #{tpu_custom_call.1} parent=39 // pred_check_branch
          %250 = sbr.rel (%p248) target = $region44
        $region43: #{tpu_custom_call.1} parent=39 // pred_region
          %251 = dma.done %s244, 4096
        $region44: #{tpu_custom_call.1} parent=39 // pred_fallthru
          _
        // Predicated region
        $region45: #{tpu_custom_call.1} parent=39 // pred_check
          %p252 = pneg %p66
        $region46: #{tpu_custom_call.1} parent=39 // pred_check_branch
          %254 = sbr.rel (%p252) target = $region48
        $region47: #{tpu_custom_call.1} parent=39 // pred_region
          %255 = dma.done [#allocation6], 16384
        $region48: #{tpu_custom_call.1} parent=39 // pred_fallthru
          _
        // Predicated region
        $region49: #{tpu_custom_call.1} parent=39 // pred_check
          %p256 = pneg %p87
        $region50: #{tpu_custom_call.1} parent=39 // pred_check_branch
          %258 = sbr.rel (%p256) target = $region52
        $region51: #{tpu_custom_call.1} parent=39 // pred_region
          %259 = dma.done [#allocation6], 128
        $region52: #{tpu_custom_call.1} parent=39 // pred_fallthru
          _
        // Predicated region
        $region53: #{tpu_custom_call.1} parent=39 // pred_check
          %p260 = pneg %p108
        $region54: #{tpu_custom_call.1} parent=39 // pred_check_branch
          %262 = sbr.rel (%p260) target = $region56
        $region55: #{tpu_custom_call.1} parent=39 // pred_region
          %263 = dma.done [#allocation9], 8192
        $region56: #{tpu_custom_call.1} parent=39 // pred_fallthru
          _
        %s264 = sand.u32 %s32, 1
        %s265 = scalar_lea.sflag [#allocation3], %s264
        %s266 = sand.u32 %s32, 1
        %s267 = smul.addr %s266, 256
        %s268 = scalar_lea.vmem [#allocation2], %s267
        %p269 = pneg %p45
        %p270 = pneg %p42
        %p271 = pneg %p66
        %p272 = pneg %p63
        %p273 = pneg %p87
        %p274 = pneg %p84
        %p275 = pneg %p108
        %p276 = pneg %p105
        %p277 = pneg %p129
        %p278 = pneg %p126
        %p279 = pneg %p155
        %p280 = pneg %p152
        %s281 = sand.u32 %s142, 1
        %s282 = scalar_lea.sflag [#allocation4], %s281
        %s283 = sand.u32 %s142, 1
        %s284 = smul.addr %s283, 256
        %s285 = scalar_lea.vmem [#allocation10], %s284
        %s286 = smul.u32 32, %s24
        %s287 = smul.u32 32, %s24
        %v289 = vld [vmem:[%s247] sm:$0xff]
        %v290 = vld [vmem:[%s247 + $0x8] sm:$0xff]
        %v291 = vld [vmem:[%s247 + $0x10] sm:$0xff]
        %v292 = vld [vmem:[%s247 + $0x18] sm:$0xff]
        %v293 = vld [vmem:[%s247 + $0x20] sm:$0xff]
        %v294 = vld [vmem:[%s247 + $0x28] sm:$0xff]
        %v295 = vld [vmem:[%s247 + $0x30] sm:$0xff]
        %v296 = vld [vmem:[%s247 + $0x38] sm:$0xff]
        %v297 = vld [vmem:[%s247 + $0x40] sm:$0xff]
        %v298 = vld [vmem:[%s247 + $0x48] sm:$0xff]
        %v299 = vld [vmem:[%s247 + $0x50] sm:$0xff]
        %v300 = vld [vmem:[%s247 + $0x58] sm:$0xff]
        %v301 = vld [vmem:[%s247 + $0x60] sm:$0xff]
        %v302 = vld [vmem:[%s247 + $0x68] sm:$0xff]
        %v303 = vld [vmem:[%s247 + $0x70] sm:$0xff]
        %v304 = vld [vmem:[%s247 + $0x78] sm:$0xff]
        %v305 = vld [vmem:[%s247 + $0x80] sm:$0xff]
        %v306 = vld [vmem:[%s247 + $0x88] sm:$0xff]
        %v307 = vld [vmem:[%s247 + $0x90] sm:$0xff]
        %v308 = vld [vmem:[%s247 + $0x98] sm:$0xff]
        %v309 = vld [vmem:[%s247 + $0xa0] sm:$0xff]
        %v310 = vld [vmem:[%s247 + $0xa8] sm:$0xff]
        %v311 = vld [vmem:[%s247 + $0xb0] sm:$0xff]
        %v312 = vld [vmem:[%s247 + $0xb8] sm:$0xff]
        %v313 = vld [vmem:[%s247 + $0xc0] sm:$0xff]
        %v314 = vld [vmem:[%s247 + $0xc8] sm:$0xff]
        %v315 = vld [vmem:[%s247 + $0xd0] sm:$0xff]
        %v316 = vld [vmem:[%s247 + $0xd8] sm:$0xff]
        %v317 = vld [vmem:[%s247 + $0xe0] sm:$0xff]
        %v318 = vld [vmem:[%s247 + $0xe8] sm:$0xff]
        %v319 = vld [vmem:[%s247 + $0xf0] sm:$0xff]
        %v320 = vld [vmem:[%s247 + $0xf8] sm:$0xff]
        %v321 = vld [vmem:[#allocation5] sm:$0xff]
        %v322 = vld [vmem:[#allocation5 + $0x8] sm:$0xff]
        %v323 = vld [vmem:[#allocation5 + $0x10] sm:$0xff]
        %v324 = vld [vmem:[#allocation5 + $0x18] sm:$0xff]
        %v325 = vld [vmem:[#allocation5 + $0x20] sm:$0xff]
        %v326 = vld [vmem:[#allocation5 + $0x28] sm:$0xff]
        %v327 = vld [vmem:[#allocation5 + $0x30] sm:$0xff]
        %v328 = vld [vmem:[#allocation5 + $0x38] sm:$0xff]
        %v329 = vld [vmem:[#allocation5 + $0x40] sm:$0xff]
        %v330 = vld [vmem:[#allocation5 + $0x48] sm:$0xff]
        %v331 = vld [vmem:[#allocation5 + $0x50] sm:$0xff]
        %v332 = vld [vmem:[#allocation5 + $0x58] sm:$0xff]
        %v333 = vld [vmem:[#allocation5 + $0x60] sm:$0xff]
        %v334 = vld [vmem:[#allocation5 + $0x68] sm:$0xff]
        %v335 = vld [vmem:[#allocation5 + $0x70] sm:$0xff]
        %v336 = vld [vmem:[#allocation5 + $0x78] sm:$0xff]
        %v337 = vld [vmem:[#allocation5 + $0x80] sm:$0xff]
        %v338 = vld [vmem:[#allocation5 + $0x88] sm:$0xff]
        %v339 = vld [vmem:[#allocation5 + $0x90] sm:$0xff]
        %v340 = vld [vmem:[#allocation5 + $0x98] sm:$0xff]
        %v341 = vld [vmem:[#allocation5 + $0xa0] sm:$0xff]
        %v342 = vld [vmem:[#allocation5 + $0xa8] sm:$0xff]
        %v343 = vld [vmem:[#allocation5 + $0xb0] sm:$0xff]
        %v344 = vld [vmem:[#allocation5 + $0xb8] sm:$0xff]
        %v345 = vld [vmem:[#allocation5 + $0xc0] sm:$0xff]
        %v346 = vld [vmem:[#allocation5 + $0xc8] sm:$0xff]
        %v347 = vld [vmem:[#allocation5 + $0xd0] sm:$0xff]
        %v348 = vld [vmem:[#allocation5 + $0xd8] sm:$0xff]
        %v349 = vld [vmem:[#allocation5 + $0xe0] sm:$0xff]
        %v350 = vld [vmem:[#allocation5 + $0xe8] sm:$0xff]
        %v351 = vld [vmem:[#allocation5 + $0xf0] sm:$0xff]
        %v352 = vld [vmem:[#allocation5 + $0xf8] sm:$0xff]
        %v353 = vld [vmem:[#allocation5 + $0x100] sm:$0xff]
        %v354 = vld [vmem:[#allocation5 + $0x108] sm:$0xff]
        %v355 = vld [vmem:[#allocation5 + $0x110] sm:$0xff]
        %v356 = vld [vmem:[#allocation5 + $0x118] sm:$0xff]
        %v357 = vld [vmem:[#allocation5 + $0x120] sm:$0xff]
        %v358 = vld [vmem:[#allocation5 + $0x128] sm:$0xff]
        %v359 = vld [vmem:[#allocation5 + $0x130] sm:$0xff]
        %v360 = vld [vmem:[#allocation5 + $0x138] sm:$0xff]
        %v361 = vld [vmem:[#allocation5 + $0x140] sm:$0xff]
        %v362 = vld [vmem:[#allocation5 + $0x148] sm:$0xff]
        %v363 = vld [vmem:[#allocation5 + $0x150] sm:$0xff]
        %v364 = vld [vmem:[#allocation5 + $0x158] sm:$0xff]
        %v365 = vld [vmem:[#allocation5 + $0x160] sm:$0xff]
        %v366 = vld [vmem:[#allocation5 + $0x168] sm:$0xff]
        %v367 = vld [vmem:[#allocation5 + $0x170] sm:$0xff]
        %v368 = vld [vmem:[#allocation5 + $0x178] sm:$0xff]
        %v369 = vld [vmem:[#allocation5 + $0x180] sm:$0xff]
        %v370 = vld [vmem:[#allocation5 + $0x188] sm:$0xff]
        %v371 = vld [vmem:[#allocation5 + $0x190] sm:$0xff]
        %v372 = vld [vmem:[#allocation5 + $0x198] sm:$0xff]
        %v373 = vld [vmem:[#allocation5 + $0x1a0] sm:$0xff]
        %v374 = vld [vmem:[#allocation5 + $0x1a8] sm:$0xff]
        %v375 = vld [vmem:[#allocation5 + $0x1b0] sm:$0xff]
        %v376 = vld [vmem:[#allocation5 + $0x1b8] sm:$0xff]
        %v377 = vld [vmem:[#allocation5 + $0x1c0] sm:$0xff]
        %v378 = vld [vmem:[#allocation5 + $0x1c8] sm:$0xff]
        %v379 = vld [vmem:[#allocation5 + $0x1d0] sm:$0xff]
        %v380 = vld [vmem:[#allocation5 + $0x1d8] sm:$0xff]
        %v381 = vld [vmem:[#allocation5 + $0x1e0] sm:$0xff]
        %v382 = vld [vmem:[#allocation5 + $0x1e8] sm:$0xff]
        %v383 = vld [vmem:[#allocation5 + $0x1f0] sm:$0xff]
        %v384 = vld [vmem:[#allocation5 + $0x1f8] sm:$0xff]
        %v385 = vld [vmem:[#allocation5 + $0x200] sm:$0xff]
        %v386 = vld [vmem:[#allocation5 + $0x208] sm:$0xff]
        %v387 = vld [vmem:[#allocation5 + $0x210] sm:$0xff]
        %v388 = vld [vmem:[#allocation5 + $0x218] sm:$0xff]
        %v389 = vld [vmem:[#allocation5 + $0x220] sm:$0xff]
        %v390 = vld [vmem:[#allocation5 + $0x228] sm:$0xff]
        %v391 = vld [vmem:[#allocation5 + $0x230] sm:$0xff]
        %v392 = vld [vmem:[#allocation5 + $0x238] sm:$0xff]
        %v393 = vld [vmem:[#allocation5 + $0x240] sm:$0xff]
        %v394 = vld [vmem:[#allocation5 + $0x248] sm:$0xff]
        %v395 = vld [vmem:[#allocation5 + $0x250] sm:$0xff]
        %v396 = vld [vmem:[#allocation5 + $0x258] sm:$0xff]
        %v397 = vld [vmem:[#allocation5 + $0x260] sm:$0xff]
        %v398 = vld [vmem:[#allocation5 + $0x268] sm:$0xff]
        %v399 = vld [vmem:[#allocation5 + $0x270] sm:$0xff]
        %v400 = vld [vmem:[#allocation5 + $0x278] sm:$0xff]
        %v401 = vld [vmem:[#allocation5 + $0x280] sm:$0xff]
        %v402 = vld [vmem:[#allocation5 + $0x288] sm:$0xff]
        %v403 = vld [vmem:[#allocation5 + $0x290] sm:$0xff]
        %v404 = vld [vmem:[#allocation5 + $0x298] sm:$0xff]
        %v405 = vld [vmem:[#allocation5 + $0x2a0] sm:$0xff]
        %v406 = vld [vmem:[#allocation5 + $0x2a8] sm:$0xff]
        %v407 = vld [vmem:[#allocation5 + $0x2b0] sm:$0xff]
        %v408 = vld [vmem:[#allocation5 + $0x2b8] sm:$0xff]
        %v409 = vld [vmem:[#allocation5 + $0x2c0] sm:$0xff]
        %v410 = vld [vmem:[#allocation5 + $0x2c8] sm:$0xff]
        %v411 = vld [vmem:[#allocation5 + $0x2d0] sm:$0xff]
        %v412 = vld [vmem:[#allocation5 + $0x2d8] sm:$0xff]
        %v413 = vld [vmem:[#allocation5 + $0x2e0] sm:$0xff]
        %v414 = vld [vmem:[#allocation5 + $0x2e8] sm:$0xff]
        %v415 = vld [vmem:[#allocation5 + $0x2f0] sm:$0xff]
        %v416 = vld [vmem:[#allocation5 + $0x2f8] sm:$0xff]
        %v417 = vld [vmem:[#allocation5 + $0x300] sm:$0xff]
        %v418 = vld [vmem:[#allocation5 + $0x308] sm:$0xff]
        %v419 = vld [vmem:[#allocation5 + $0x310] sm:$0xff]
        %v420 = vld [vmem:[#allocation5 + $0x318] sm:$0xff]
        %v421 = vld [vmem:[#allocation5 + $0x320] sm:$0xff]
        %v422 = vld [vmem:[#allocation5 + $0x328] sm:$0xff]
        %v423 = vld [vmem:[#allocation5 + $0x330] sm:$0xff]
        %v424 = vld [vmem:[#allocation5 + $0x338] sm:$0xff]
        %v425 = vld [vmem:[#allocation5 + $0x340] sm:$0xff]
        %v426 = vld [vmem:[#allocation5 + $0x348] sm:$0xff]
        %v427 = vld [vmem:[#allocation5 + $0x350] sm:$0xff]
        %v428 = vld [vmem:[#allocation5 + $0x358] sm:$0xff]
        %v429 = vld [vmem:[#allocation5 + $0x360] sm:$0xff]
        %v430 = vld [vmem:[#allocation5 + $0x368] sm:$0xff]
        %v431 = vld [vmem:[#allocation5 + $0x370] sm:$0xff]
        %v432 = vld [vmem:[#allocation5 + $0x378] sm:$0xff]
        %v433 = vld [vmem:[#allocation5 + $0x380] sm:$0xff]
        %v434 = vld [vmem:[#allocation5 + $0x388] sm:$0xff]
        %v435 = vld [vmem:[#allocation5 + $0x390] sm:$0xff]
        %v436 = vld [vmem:[#allocation5 + $0x398] sm:$0xff]
        %v437 = vld [vmem:[#allocation5 + $0x3a0] sm:$0xff]
        %v438 = vld [vmem:[#allocation5 + $0x3a8] sm:$0xff]
        %v439 = vld [vmem:[#allocation5 + $0x3b0] sm:$0xff]
        %v440 = vld [vmem:[#allocation5 + $0x3b8] sm:$0xff]
        %v441 = vld [vmem:[#allocation5 + $0x3c0] sm:$0xff]
        %v442 = vld [vmem:[#allocation5 + $0x3c8] sm:$0xff]
        %v443 = vld [vmem:[#allocation5 + $0x3d0] sm:$0xff]
        %v444 = vld [vmem:[#allocation5 + $0x3d8] sm:$0xff]
        %v445 = vld [vmem:[#allocation5 + $0x3e0] sm:$0xff]
        %v446 = vld [vmem:[#allocation5 + $0x3e8] sm:$0xff]
        %v447 = vld [vmem:[#allocation5 + $0x3f0] sm:$0xff]
        %v448 = vld [vmem:[#allocation5 + $0x3f8] sm:$0xff]
        %v449 = vld [vmem:[#allocation7] sm:$0xff]
        %v451 = vlaneseq
        %v452 = vshrl.u32 %v451, 7
        %v453 = vsub.s32 0, %v452
        %v454 = vrot.slane %v449, %v453
        %v455 = vlaneseq
        %v456 = vshrl.u32 %v455, 7
        %v457 = vsub.s32 1, %v456
        %v458 = vrot.slane %v449, %v457
        %v459 = vlaneseq
        %v460 = vshrl.u32 %v459, 7
        %v461 = vsub.s32 2, %v460
        %v462 = vrot.slane %v449, %v461
        %v463 = vlaneseq
        %v464 = vshrl.u32 %v463, 7
        %v465 = vsub.s32 3, %v464
        %v466 = vrot.slane %v449, %v465
        %v467 = vlaneseq
        %v468 = vshrl.u32 %v467, 7
        %v469 = vsub.s32 4, %v468
        %v470 = vrot.slane %v449, %v469
        %v471 = vlaneseq
        %v472 = vshrl.u32 %v471, 7
        %v473 = vsub.s32 5, %v472
        %v474 = vrot.slane %v449, %v473
        %v475 = vlaneseq
        %v476 = vshrl.u32 %v475, 7
        %v477 = vsub.s32 6, %v476
        %v478 = vrot.slane %v449, %v477
        %v479 = vlaneseq
        %v480 = vshrl.u32 %v479, 7
        %v481 = vsub.s32 7, %v480
        %v482 = vrot.slane %v449, %v481
        %v523 = vunpack.c.l.b16 %v289
        %v524 = vunpack.c.h.b16 %v289
        %v525 = vunpack.c.l.b16 %v290
        %v526 = vunpack.c.h.b16 %v290
        %v527 = vunpack.c.l.b16 %v291
        %v528 = vunpack.c.h.b16 %v291
        %v529 = vunpack.c.l.b16 %v292
        %v530 = vunpack.c.h.b16 %v292
        %v531 = vunpack.c.l.b16 %v293
        %v532 = vunpack.c.h.b16 %v293
        %v533 = vunpack.c.l.b16 %v294
        %v534 = vunpack.c.h.b16 %v294
        %v535 = vunpack.c.l.b16 %v295
        %v536 = vunpack.c.h.b16 %v295
        %v537 = vunpack.c.l.b16 %v296
        %v538 = vunpack.c.h.b16 %v296
        %v539 = vunpack.c.l.b16 %v297
        %v540 = vunpack.c.h.b16 %v297
        %v541 = vunpack.c.l.b16 %v298
        %v542 = vunpack.c.h.b16 %v298
        %v543 = vunpack.c.l.b16 %v299
        %v544 = vunpack.c.h.b16 %v299
        %v545 = vunpack.c.l.b16 %v300
        %v546 = vunpack.c.h.b16 %v300
        %v547 = vunpack.c.l.b16 %v301
        %v548 = vunpack.c.h.b16 %v301
        %v549 = vunpack.c.l.b16 %v302
        %v550 = vunpack.c.h.b16 %v302
        %v551 = vunpack.c.l.b16 %v303
        %v552 = vunpack.c.h.b16 %v303
        %v553 = vunpack.c.l.b16 %v304
        %v554 = vunpack.c.h.b16 %v304
        %v555 = vunpack.c.l.b16 %v305
        %v556 = vunpack.c.h.b16 %v305
        %v557 = vunpack.c.l.b16 %v306
        %v558 = vunpack.c.h.b16 %v306
        %v559 = vunpack.c.l.b16 %v307
        %v560 = vunpack.c.h.b16 %v307
        %v561 = vunpack.c.l.b16 %v308
        %v562 = vunpack.c.h.b16 %v308
        %v563 = vunpack.c.l.b16 %v309
        %v564 = vunpack.c.h.b16 %v309
        %v565 = vunpack.c.l.b16 %v310
        %v566 = vunpack.c.h.b16 %v310
        %v567 = vunpack.c.l.b16 %v311
        %v568 = vunpack.c.h.b16 %v311
        %v569 = vunpack.c.l.b16 %v312
        %v570 = vunpack.c.h.b16 %v312
        %v571 = vunpack.c.l.b16 %v313
        %v572 = vunpack.c.h.b16 %v313
        %v573 = vunpack.c.l.b16 %v314
        %v574 = vunpack.c.h.b16 %v314
        %v575 = vunpack.c.l.b16 %v315
        %v576 = vunpack.c.h.b16 %v315
        %v577 = vunpack.c.l.b16 %v316
        %v578 = vunpack.c.h.b16 %v316
        %v579 = vunpack.c.l.b16 %v317
        %v580 = vunpack.c.h.b16 %v317
        %v581 = vunpack.c.l.b16 %v318
        %v582 = vunpack.c.h.b16 %v318
        %v583 = vunpack.c.l.b16 %v319
        %v584 = vunpack.c.h.b16 %v319
        %v585 = vunpack.c.l.b16 %v320
        %v586 = vunpack.c.h.b16 %v320
        %v587 = vpack.c.b16 %v525, %v523
        %v588 = vpack.c.b16 %v526, %v524
        %v589 = vpack.c.b16 %v529, %v527
        %v590 = vpack.c.b16 %v530, %v528
        %v591 = vpack.c.b16 %v533, %v531
        %v592 = vpack.c.b16 %v534, %v532
        %v593 = vpack.c.b16 %v537, %v535
        %v594 = vpack.c.b16 %v538, %v536
        %v595 = vpack.c.b16 %v541, %v539
        %v596 = vpack.c.b16 %v542, %v540
        %v597 = vpack.c.b16 %v545, %v543
        %v598 = vpack.c.b16 %v546, %v544
        %v599 = vpack.c.b16 %v549, %v547
        %v600 = vpack.c.b16 %v550, %v548
        %v601 = vpack.c.b16 %v553, %v551
        %v602 = vpack.c.b16 %v554, %v552
        %v603 = vpack.c.b16 %v557, %v555
        %v604 = vpack.c.b16 %v558, %v556
        %v605 = vpack.c.b16 %v561, %v559
        %v606 = vpack.c.b16 %v562, %v560
        %v607 = vpack.c.b16 %v565, %v563
        %v608 = vpack.c.b16 %v566, %v564
        %v609 = vpack.c.b16 %v569, %v567
        %v610 = vpack.c.b16 %v570, %v568
        %v611 = vpack.c.b16 %v573, %v571
        %v612 = vpack.c.b16 %v574, %v572
        %v613 = vpack.c.b16 %v577, %v575
        %v614 = vpack.c.b16 %v578, %v576
        %v615 = vpack.c.b16 %v581, %v579
        %v616 = vpack.c.b16 %v582, %v580
        %v617 = vpack.c.b16 %v585, %v583
        %v618 = vpack.c.b16 %v586, %v584
        %v779 = vunpack.c.l.b16 %v321
        %v780 = vunpack.c.h.b16 %v321
        %v781 = vunpack.c.l.b16 %v322
        %v782 = vunpack.c.h.b16 %v322
        %v783 = vunpack.c.l.b16 %v323
        %v784 = vunpack.c.h.b16 %v323
        %v785 = vunpack.c.l.b16 %v324
        %v786 = vunpack.c.h.b16 %v324
        %v787 = vunpack.c.l.b16 %v325
        %v788 = vunpack.c.h.b16 %v325
        %v789 = vunpack.c.l.b16 %v326
        %v790 = vunpack.c.h.b16 %v326
        %v791 = vunpack.c.l.b16 %v327
        %v792 = vunpack.c.h.b16 %v327
        %v793 = vunpack.c.l.b16 %v328
        %v794 = vunpack.c.h.b16 %v328
        %v795 = vunpack.c.l.b16 %v329
        %v796 = vunpack.c.h.b16 %v329
        %v797 = vunpack.c.l.b16 %v330
        %v798 = vunpack.c.h.b16 %v330
        %v799 = vunpack.c.l.b16 %v331
        %v800 = vunpack.c.h.b16 %v331
        %v801 = vunpack.c.l.b16 %v332
        %v802 = vunpack.c.h.b16 %v332
        %v803 = vunpack.c.l.b16 %v333
        %v804 = vunpack.c.h.b16 %v333
        %v805 = vunpack.c.l.b16 %v334
        %v806 = vunpack.c.h.b16 %v334
        %v807 = vunpack.c.l.b16 %v335
        %v808 = vunpack.c.h.b16 %v335
        %v809 = vunpack.c.l.b16 %v336
        %v810 = vunpack.c.h.b16 %v336
        %v811 = vunpack.c.l.b16 %v337
        %v812 = vunpack.c.h.b16 %v337
        %v813 = vunpack.c.l.b16 %v338
        %v814 = vunpack.c.h.b16 %v338
        %v815 = vunpack.c.l.b16 %v339
        %v816 = vunpack.c.h.b16 %v339
        %v817 = vunpack.c.l.b16 %v340
        %v818 = vunpack.c.h.b16 %v340
        %v819 = vunpack.c.l.b16 %v341
        %v820 = vunpack.c.h.b16 %v341
        %v821 = vunpack.c.l.b16 %v342
        %v822 = vunpack.c.h.b16 %v342
        %v823 = vunpack.c.l.b16 %v343
        %v824 = vunpack.c.h.b16 %v343
        %v825 = vunpack.c.l.b16 %v344
        %v826 = vunpack.c.h.b16 %v344
        %v827 = vunpack.c.l.b16 %v345
        %v828 = vunpack.c.h.b16 %v345
        %v829 = vunpack.c.l.b16 %v346
        %v830 = vunpack.c.h.b16 %v346
        %v831 = vunpack.c.l.b16 %v347
        %v832 = vunpack.c.h.b16 %v347
        %v833 = vunpack.c.l.b16 %v348
        %v834 = vunpack.c.h.b16 %v348
        %v835 = vunpack.c.l.b16 %v349
        %v836 = vunpack.c.h.b16 %v349
        %v837 = vunpack.c.l.b16 %v350
        %v838 = vunpack.c.h.b16 %v350
        %v839 = vunpack.c.l.b16 %v351
        %v840 = vunpack.c.h.b16 %v351
        %v841 = vunpack.c.l.b16 %v352
        %v842 = vunpack.c.h.b16 %v352
        %v843 = vunpack.c.l.b16 %v353
        %v844 = vunpack.c.h.b16 %v353
        %v845 = vunpack.c.l.b16 %v354
        %v846 = vunpack.c.h.b16 %v354
        %v847 = vunpack.c.l.b16 %v355
        %v848 = vunpack.c.h.b16 %v355
        %v849 = vunpack.c.l.b16 %v356
        %v850 = vunpack.c.h.b16 %v356
        %v851 = vunpack.c.l.b16 %v357
        %v852 = vunpack.c.h.b16 %v357
        %v853 = vunpack.c.l.b16 %v358
        %v854 = vunpack.c.h.b16 %v358
        %v855 = vunpack.c.l.b16 %v359
        %v856 = vunpack.c.h.b16 %v359
        %v857 = vunpack.c.l.b16 %v360
        %v858 = vunpack.c.h.b16 %v360
        %v859 = vunpack.c.l.b16 %v361
        %v860 = vunpack.c.h.b16 %v361
        %v861 = vunpack.c.l.b16 %v362
        %v862 = vunpack.c.h.b16 %v362
        %v863 = vunpack.c.l.b16 %v363
        %v864 = vunpack.c.h.b16 %v363
        %v865 = vunpack.c.l.b16 %v364
        %v866 = vunpack.c.h.b16 %v364
        %v867 = vunpack.c.l.b16 %v365
        %v868 = vunpack.c.h.b16 %v365
        %v869 = vunpack.c.l.b16 %v366
        %v870 = vunpack.c.h.b16 %v366
        %v871 = vunpack.c.l.b16 %v367
        %v872 = vunpack.c.h.b16 %v367
        %v873 = vunpack.c.l.b16 %v368
        %v874 = vunpack.c.h.b16 %v368
        %v875 = vunpack.c.l.b16 %v369
        %v876 = vunpack.c.h.b16 %v369
        %v877 = vunpack.c.l.b16 %v370
        %v878 = vunpack.c.h.b16 %v370
        %v879 = vunpack.c.l.b16 %v371
        %v880 = vunpack.c.h.b16 %v371
        %v881 = vunpack.c.l.b16 %v372
        %v882 = vunpack.c.h.b16 %v372
        %v883 = vunpack.c.l.b16 %v373
        %v884 = vunpack.c.h.b16 %v373
        %v885 = vunpack.c.l.b16 %v374
        %v886 = vunpack.c.h.b16 %v374
        %v887 = vunpack.c.l.b16 %v375
        %v888 = vunpack.c.h.b16 %v375
        %v889 = vunpack.c.l.b16 %v376
        %v890 = vunpack.c.h.b16 %v376
        %v891 = vunpack.c.l.b16 %v377
        %v892 = vunpack.c.h.b16 %v377
        %v893 = vunpack.c.l.b16 %v378
        %v894 = vunpack.c.h.b16 %v378
        %v895 = vunpack.c.l.b16 %v379
        %v896 = vunpack.c.h.b16 %v379
        %v897 = vunpack.c.l.b16 %v380
        %v898 = vunpack.c.h.b16 %v380
        %v899 = vunpack.c.l.b16 %v381
        %v900 = vunpack.c.h.b16 %v381
        %v901 = vunpack.c.l.b16 %v382
        %v902 = vunpack.c.h.b16 %v382
        %v903 = vunpack.c.l.b16 %v383
        %v904 = vunpack.c.h.b16 %v383
        %v905 = vunpack.c.l.b16 %v384
        %v906 = vunpack.c.h.b16 %v384
        %v907 = vunpack.c.l.b16 %v385
        %v908 = vunpack.c.h.b16 %v385
        %v909 = vunpack.c.l.b16 %v386
        %v910 = vunpack.c.h.b16 %v386
        %v911 = vunpack.c.l.b16 %v387
        %v912 = vunpack.c.h.b16 %v387
        %v913 = vunpack.c.l.b16 %v388
        %v914 = vunpack.c.h.b16 %v388
        %v915 = vunpack.c.l.b16 %v389
        %v916 = vunpack.c.h.b16 %v389
        %v917 = vunpack.c.l.b16 %v390
        %v918 = vunpack.c.h.b16 %v390
        %v919 = vunpack.c.l.b16 %v391
        %v920 = vunpack.c.h.b16 %v391
        %v921 = vunpack.c.l.b16 %v392
        %v922 = vunpack.c.h.b16 %v392
        %v923 = vunpack.c.l.b16 %v393
        %v924 = vunpack.c.h.b16 %v393
        %v925 = vunpack.c.l.b16 %v394
        %v926 = vunpack.c.h.b16 %v394
        %v927 = vunpack.c.l.b16 %v395
        %v928 = vunpack.c.h.b16 %v395
        %v929 = vunpack.c.l.b16 %v396
        %v930 = vunpack.c.h.b16 %v396
        %v931 = vunpack.c.l.b16 %v397
        %v932 = vunpack.c.h.b16 %v397
        %v933 = vunpack.c.l.b16 %v398
        %v934 = vunpack.c.h.b16 %v398
        %v935 = vunpack.c.l.b16 %v399
        %v936 = vunpack.c.h.b16 %v399
        %v937 = vunpack.c.l.b16 %v400
        %v938 = vunpack.c.h.b16 %v400
        %v939 = vunpack.c.l.b16 %v401
        %v940 = vunpack.c.h.b16 %v401
        %v941 = vunpack.c.l.b16 %v402
        %v942 = vunpack.c.h.b16 %v402
        %v943 = vunpack.c.l.b16 %v403
        %v944 = vunpack.c.h.b16 %v403
        %v945 = vunpack.c.l.b16 %v404
        %v946 = vunpack.c.h.b16 %v404
        %v947 = vunpack.c.l.b16 %v405
        %v948 = vunpack.c.h.b16 %v405
        %v949 = vunpack.c.l.b16 %v406
        %v950 = vunpack.c.h.b16 %v406
        %v951 = vunpack.c.l.b16 %v407
        %v952 = vunpack.c.h.b16 %v407
        %v953 = vunpack.c.l.b16 %v408
        %v954 = vunpack.c.h.b16 %v408
        %v955 = vunpack.c.l.b16 %v409
        %v956 = vunpack.c.h.b16 %v409
        %v957 = vunpack.c.l.b16 %v410
        %v958 = vunpack.c.h.b16 %v410
        %v959 = vunpack.c.l.b16 %v411
        %v960 = vunpack.c.h.b16 %v411
        %v961 = vunpack.c.l.b16 %v412
        %v962 = vunpack.c.h.b16 %v412
        %v963 = vunpack.c.l.b16 %v413
        %v964 = vunpack.c.h.b16 %v413
        %v965 = vunpack.c.l.b16 %v414
        %v966 = vunpack.c.h.b16 %v414
        %v967 = vunpack.c.l.b16 %v415
        %v968 = vunpack.c.h.b16 %v415
        %v969 = vunpack.c.l.b16 %v416
        %v970 = vunpack.c.h.b16 %v416
        %v971 = vunpack.c.l.b16 %v417
        %v972 = vunpack.c.h.b16 %v417
        %v973 = vunpack.c.l.b16 %v418
        %v974 = vunpack.c.h.b16 %v418
        %v975 = vunpack.c.l.b16 %v419
        %v976 = vunpack.c.h.b16 %v419
        %v977 = vunpack.c.l.b16 %v420
        %v978 = vunpack.c.h.b16 %v420
        %v979 = vunpack.c.l.b16 %v421
        %v980 = vunpack.c.h.b16 %v421
        %v981 = vunpack.c.l.b16 %v422
        %v982 = vunpack.c.h.b16 %v422
        %v983 = vunpack.c.l.b16 %v423
        %v984 = vunpack.c.h.b16 %v423
        %v985 = vunpack.c.l.b16 %v424
        %v986 = vunpack.c.h.b16 %v424
        %v987 = vunpack.c.l.b16 %v425
        %v988 = vunpack.c.h.b16 %v425
        %v989 = vunpack.c.l.b16 %v426
        %v990 = vunpack.c.h.b16 %v426
        %v991 = vunpack.c.l.b16 %v427
        %v992 = vunpack.c.h.b16 %v427
        %v993 = vunpack.c.l.b16 %v428
        %v994 = vunpack.c.h.b16 %v428
        %v995 = vunpack.c.l.b16 %v429
        %v996 = vunpack.c.h.b16 %v429
        %v997 = vunpack.c.l.b16 %v430
        %v998 = vunpack.c.h.b16 %v430
        %v999 = vunpack.c.l.b16 %v431
        %v1000 = vunpack.c.h.b16 %v431
        %v1001 = vunpack.c.l.b16 %v432
        %v1002 = vunpack.c.h.b16 %v432
        %v1003 = vunpack.c.l.b16 %v433
        %v1004 = vunpack.c.h.b16 %v433
        %v1005 = vunpack.c.l.b16 %v434
        %v1006 = vunpack.c.h.b16 %v434
        %v1007 = vunpack.c.l.b16 %v435
        %v1008 = vunpack.c.h.b16 %v435
        %v1009 = vunpack.c.l.b16 %v436
        %v1010 = vunpack.c.h.b16 %v436
        %v1011 = vunpack.c.l.b16 %v437
        %v1012 = vunpack.c.h.b16 %v437
        %v1013 = vunpack.c.l.b16 %v438
        %v1014 = vunpack.c.h.b16 %v438
        %v1015 = vunpack.c.l.b16 %v439
        %v1016 = vunpack.c.h.b16 %v439
        %v1017 = vunpack.c.l.b16 %v440
        %v1018 = vunpack.c.h.b16 %v440
        %v1019 = vunpack.c.l.b16 %v441
        %v1020 = vunpack.c.h.b16 %v441
        %v1021 = vunpack.c.l.b16 %v442
        %v1022 = vunpack.c.h.b16 %v442
        %v1023 = vunpack.c.l.b16 %v443
        %v1024 = vunpack.c.h.b16 %v443
        %v1025 = vunpack.c.l.b16 %v444
        %v1026 = vunpack.c.h.b16 %v444
        %v1027 = vunpack.c.l.b16 %v445
        %v1028 = vunpack.c.h.b16 %v445
        %v1029 = vunpack.c.l.b16 %v446
        %v1030 = vunpack.c.h.b16 %v446
        %v1031 = vunpack.c.l.b16 %v447
        %v1032 = vunpack.c.h.b16 %v447
        %v1033 = vunpack.c.l.b16 %v448
        %v1034 = vunpack.c.h.b16 %v448
        %v1035 = vpack.c.b16 %v787, %v779
        %v1036 = vpack.c.b16 %v788, %v780
        %v1037 = vpack.c.b16 %v789, %v781
        %v1038 = vpack.c.b16 %v790, %v782
        %v1039 = vpack.c.b16 %v791, %v783
        %v1040 = vpack.c.b16 %v792, %v784
        %v1041 = vpack.c.b16 %v793, %v785
        %v1042 = vpack.c.b16 %v794, %v786
        %v1043 = vpack.c.b16 %v803, %v795
        %v1044 = vpack.c.b16 %v804, %v796
        %v1045 = vpack.c.b16 %v805, %v797
        %v1046 = vpack.c.b16 %v806, %v798
        %v1047 = vpack.c.b16 %v807, %v799
        %v1048 = vpack.c.b16 %v808, %v800
        %v1049 = vpack.c.b16 %v809, %v801
        %v1050 = vpack.c.b16 %v810, %v802
        %v1051 = vpack.c.b16 %v819, %v811
        %v1052 = vpack.c.b16 %v820, %v812
        %v1053 = vpack.c.b16 %v821, %v813
        %v1054 = vpack.c.b16 %v822, %v814
        %v1055 = vpack.c.b16 %v823, %v815
        %v1056 = vpack.c.b16 %v824, %v816
        %v1057 = vpack.c.b16 %v825, %v817
        %v1058 = vpack.c.b16 %v826, %v818
        %v1059 = vpack.c.b16 %v835, %v827
        %v1060 = vpack.c.b16 %v836, %v828
        %v1061 = vpack.c.b16 %v837, %v829
        %v1062 = vpack.c.b16 %v838, %v830
        %v1063 = vpack.c.b16 %v839, %v831
        %v1064 = vpack.c.b16 %v840, %v832
        %v1065 = vpack.c.b16 %v841, %v833
        %v1066 = vpack.c.b16 %v842, %v834
        %v1067 = vpack.c.b16 %v851, %v843
        %v1068 = vpack.c.b16 %v852, %v844
        %v1069 = vpack.c.b16 %v853, %v845
        %v1070 = vpack.c.b16 %v854, %v846
        %v1071 = vpack.c.b16 %v855, %v847
        %v1072 = vpack.c.b16 %v856, %v848
        %v1073 = vpack.c.b16 %v857, %v849
        %v1074 = vpack.c.b16 %v858, %v850
        %v1075 = vpack.c.b16 %v867, %v859
        %v1076 = vpack.c.b16 %v868, %v860
        %v1077 = vpack.c.b16 %v869, %v861
        %v1078 = vpack.c.b16 %v870, %v862
        %v1079 = vpack.c.b16 %v871, %v863
        %v1080 = vpack.c.b16 %v872, %v864
        %v1081 = vpack.c.b16 %v873, %v865
        %v1082 = vpack.c.b16 %v874, %v866
        %v1083 = vpack.c.b16 %v883, %v875
        %v1084 = vpack.c.b16 %v884, %v876
        %v1085 = vpack.c.b16 %v885, %v877
        %v1086 = vpack.c.b16 %v886, %v878
        %v1087 = vpack.c.b16 %v887, %v879
        %v1088 = vpack.c.b16 %v888, %v880
        %v1089 = vpack.c.b16 %v889, %v881
        %v1090 = vpack.c.b16 %v890, %v882
        %v1091 = vpack.c.b16 %v899, %v891
        %v1092 = vpack.c.b16 %v900, %v892
        %v1093 = vpack.c.b16 %v901, %v893
        %v1094 = vpack.c.b16 %v902, %v894
        %v1095 = vpack.c.b16 %v903, %v895
        %v1096 = vpack.c.b16 %v904, %v896
        %v1097 = vpack.c.b16 %v905, %v897
        %v1098 = vpack.c.b16 %v906, %v898
        %v1099 = vpack.c.b16 %v915, %v907
        %v1100 = vpack.c.b16 %v916, %v908
        %v1101 = vpack.c.b16 %v917, %v909
        %v1102 = vpack.c.b16 %v918, %v910
        %v1103 = vpack.c.b16 %v919, %v911
        %v1104 = vpack.c.b16 %v920, %v912
        %v1105 = vpack.c.b16 %v921, %v913
        %v1106 = vpack.c.b16 %v922, %v914
        %v1107 = vpack.c.b16 %v931, %v923
        %v1108 = vpack.c.b16 %v932, %v924
        %v1109 = vpack.c.b16 %v933, %v925
        %v1110 = vpack.c.b16 %v934, %v926
        %v1111 = vpack.c.b16 %v935, %v927
        %v1112 = vpack.c.b16 %v936, %v928
        %v1113 = vpack.c.b16 %v937, %v929
        %v1114 = vpack.c.b16 %v938, %v930
        %v1115 = vpack.c.b16 %v947, %v939
        %v1116 = vpack.c.b16 %v948, %v940
        %v1117 = vpack.c.b16 %v949, %v941
        %v1118 = vpack.c.b16 %v950, %v942
        %v1119 = vpack.c.b16 %v951, %v943
        %v1120 = vpack.c.b16 %v952, %v944
        %v1121 = vpack.c.b16 %v953, %v945
        %v1122 = vpack.c.b16 %v954, %v946
        %v1123 = vpack.c.b16 %v963, %v955
        %v1124 = vpack.c.b16 %v964, %v956
        %v1125 = vpack.c.b16 %v965, %v957
        %v1126 = vpack.c.b16 %v966, %v958
        %v1127 = vpack.c.b16 %v967, %v959
        %v1128 = vpack.c.b16 %v968, %v960
        %v1129 = vpack.c.b16 %v969, %v961
        %v1130 = vpack.c.b16 %v970, %v962
        %v1131 = vpack.c.b16 %v979, %v971
        %v1132 = vpack.c.b16 %v980, %v972
        %v1133 = vpack.c.b16 %v981, %v973
        %v1134 = vpack.c.b16 %v982, %v974
        %v1135 = vpack.c.b16 %v983, %v975
        %v1136 = vpack.c.b16 %v984, %v976
        %v1137 = vpack.c.b16 %v985, %v977
        %v1138 = vpack.c.b16 %v986, %v978
        %v1139 = vpack.c.b16 %v995, %v987
        %v1140 = vpack.c.b16 %v996, %v988
        %v1141 = vpack.c.b16 %v997, %v989
        %v1142 = vpack.c.b16 %v998, %v990
        %v1143 = vpack.c.b16 %v999, %v991
        %v1144 = vpack.c.b16 %v1000, %v992
        %v1145 = vpack.c.b16 %v1001, %v993
        %v1146 = vpack.c.b16 %v1002, %v994
        %v1147 = vpack.c.b16 %v1011, %v1003
        %v1148 = vpack.c.b16 %v1012, %v1004
        %v1149 = vpack.c.b16 %v1013, %v1005
        %v1150 = vpack.c.b16 %v1014, %v1006
        %v1151 = vpack.c.b16 %v1015, %v1007
        %v1152 = vpack.c.b16 %v1016, %v1008
        %v1153 = vpack.c.b16 %v1017, %v1009
        %v1154 = vpack.c.b16 %v1018, %v1010
        %v1155 = vpack.c.b16 %v1027, %v1019
        %v1156 = vpack.c.b16 %v1028, %v1020
        %v1157 = vpack.c.b16 %v1029, %v1021
        %v1158 = vpack.c.b16 %v1030, %v1022
        %v1159 = vpack.c.b16 %v1031, %v1023
        %v1160 = vpack.c.b16 %v1032, %v1024
        %v1161 = vpack.c.b16 %v1033, %v1025
        %v1162 = vpack.c.b16 %v1034, %v1026
        %1291 = vmatprep.subr.bf16.mxu0 %v1036
        %1292 = vmatpush1.bf16.msra.mxu0 %v1035
        %1293 = vmatprep.subr.bf16.mxu0 %v1044
        %1294 = vmatpush1.bf16.msra.mxu0 %v1043
        %1295 = vmatprep.subr.bf16.mxu0 %v1052
        %1296 = vmatpush1.bf16.msra.mxu0 %v1051
        %1297 = vmatprep.subr.bf16.mxu0 %v1060
        %1298 = vmatpush1.bf16.msra.mxu0 %v1059
        %1299 = vmatprep.subr.bf16.mxu0 %v1068
        %1300 = vmatpush1.bf16.msra.mxu0 %v1067
        %1301 = vmatprep.subr.bf16.mxu0 %v1076
        %1302 = vmatpush1.bf16.msra.mxu0 %v1075
        %1303 = vmatprep.subr.bf16.mxu0 %v1084
        %1304 = vmatpush1.bf16.msra.mxu0 %v1083
        %1305 = vmatprep.subr.bf16.mxu0 %v1092
        %1306 = vmatpush1.bf16.msra.mxu0 %v1091
        %1307 = vmatprep.subr.bf16.mxu0 %v1100
        %1308 = vmatpush1.bf16.msra.mxu0 %v1099
        %1309 = vmatprep.subr.bf16.mxu0 %v1108
        %1310 = vmatpush1.bf16.msra.mxu0 %v1107
        %1311 = vmatprep.subr.bf16.mxu0 %v1116
        %1312 = vmatpush1.bf16.msra.mxu0 %v1115
        %1313 = vmatprep.subr.bf16.mxu0 %v1124
        %1314 = vmatpush1.bf16.msra.mxu0 %v1123
        %1315 = vmatprep.subr.bf16.mxu0 %v1132
        %1316 = vmatpush1.bf16.msra.mxu0 %v1131
        %1317 = vmatprep.subr.bf16.mxu0 %v1140
        %1318 = vmatpush1.bf16.msra.mxu0 %v1139
        %1319 = vmatprep.subr.bf16.mxu0 %v1148
        %1320 = vmatpush1.bf16.msra.mxu0 %v1147
        %1321 = vmatprep.subr.bf16.mxu0 %v1156
        %1322 = vmatpush1.bf16.msra.mxu0 %v1155
        %1323 = vmatprep.mubr.bf16.mxu0 %v588
        %1324 = vmatmul.mubr.bf16.gmra.mrb[0].mxu0 %v587
        %v1325 = vpop.f32.mrb[0].mxu0
        %v1326 = vadd.f32 %v454, %v1325
        %v1327 = vpop.f32.mrb[0].mxu0
        %v1328 = vadd.f32 %v458, %v1327
        %v1329 = vpop.f32.mrb[0].mxu0
        %v1330 = vadd.f32 %v454, %v1329
        %v1331 = vpop.f32.mrb[0].mxu0
        %v1332 = vadd.f32 %v458, %v1331
        %1333 = vmatprep.mubr.bf16.mxu0 %v590
        %1334 = vmatmul.mubr.bf16.gmra.mrb[0].mxu0 %v589
        %v1335 = vpop.f32.mrb[0].mxu0
        %v1336 = vadd.f32 %v454, %v1335
        %v1337 = vpop.f32.mrb[0].mxu0
        %v1338 = vadd.f32 %v458, %v1337
        %v1339 = vpop.f32.mrb[0].mxu0
        %v1340 = vadd.f32 %v454, %v1339
        %v1341 = vpop.f32.mrb[0].mxu0
        %v1342 = vadd.f32 %v458, %v1341
        %1343 = vmatprep.mubr.bf16.mxu0 %v592
        %1344 = vmatmul.mubr.bf16.gmra.mrb[0].mxu0 %v591
        %v1345 = vpop.f32.mrb[0].mxu0
        %v1346 = vadd.f32 %v454, %v1345
        %v1347 = vpop.f32.mrb[0].mxu0
        %v1348 = vadd.f32 %v458, %v1347
        %v1349 = vpop.f32.mrb[0].mxu0
        %v1350 = vadd.f32 %v454, %v1349
        %v1351 = vpop.f32.mrb[0].mxu0
        %v1352 = vadd.f32 %v458, %v1351
        %1353 = vmatprep.mubr.bf16.mxu0 %v594
        %1354 = vmatmul.mubr.bf16.gmra.mrb[0].mxu0 %v593
        %v1355 = vpop.f32.mrb[0].mxu0
        %v1356 = vadd.f32 %v454, %v1355
        %v1357 = vpop.f32.mrb[0].mxu0
        %v1358 = vadd.f32 %v458, %v1357
        %v1359 = vpop.f32.mrb[0].mxu0
        %v1360 = vadd.f32 %v454, %v1359
        %v1361 = vpop.f32.mrb[0].mxu0
        %v1362 = vadd.f32 %v458, %v1361
        %1363 = vmatprep.mubr.bf16.mxu0 %v596
        %1364 = vmatmul.mubr.bf16.gmra.mrb[0].mxu0 %v595
        %v1365 = vpop.f32.mrb[0].mxu0
        %v1366 = vadd.f32 %v454, %v1365
        %v1367 = vpop.f32.mrb[0].mxu0
        %v1368 = vadd.f32 %v458, %v1367
        %v1369 = vpop.f32.mrb[0].mxu0
        %v1370 = vadd.f32 %v454, %v1369
        %v1371 = vpop.f32.mrb[0].mxu0
        %v1372 = vadd.f32 %v458, %v1371
        %1373 = vmatprep.mubr.bf16.mxu0 %v598
        %1374 = vmatmul.mubr.bf16.gmra.mrb[0].mxu0 %v597
        %v1375 = vpop.f32.mrb[0].mxu0
        %v1376 = vadd.f32 %v454, %v1375
        %v1377 = vpop.f32.mrb[0].mxu0
        %v1378 = vadd.f32 %v458, %v1377
        %v1379 = vpop.f32.mrb[0].mxu0
        %v1380 = vadd.f32 %v454, %v1379
        %v1381 = vpop.f32.mrb[0].mxu0
        %v1382 = vadd.f32 %v458, %v1381
        %1383 = vmatprep.mubr.bf16.mxu0 %v600
        %1384 = vmatmul.mubr.bf16.gmra.mrb[0].mxu0 %v599
        %v1385 = vpop.f32.mrb[0].mxu0
        %v1386 = vadd.f32 %v454, %v1385
        %v1387 = vpop.f32.mrb[0].mxu0
        %v1388 = vadd.f32 %v458, %v1387
        %v1389 = vpop.f32.mrb[0].mxu0
        %v1390 = vadd.f32 %v454, %v1389
        %v1391 = vpop.f32.mrb[0].mxu0
        %v1392 = vadd.f32 %v458, %v1391
        %1393 = vmatprep.mubr.bf16.mxu0 %v602
        %1394 = vmatmul.mubr.bf16.gmra.mrb[0].mxu0 %v601
        %v1395 = vpop.f32.mrb[0].mxu0
        %v1396 = vadd.f32 %v454, %v1395
        %v1397 = vpop.f32.mrb[0].mxu0
        %v1398 = vadd.f32 %v458, %v1397
        %v1399 = vpop.f32.mrb[0].mxu0
        %v1400 = vadd.f32 %v454, %v1399
        %v1401 = vpop.f32.mrb[0].mxu0
        %v1402 = vadd.f32 %v458, %v1401
        %1403 = vmatprep.mubr.bf16.mxu0 %v604
        %1404 = vmatmul.mubr.bf16.gmra.mrb[0].mxu0 %v603
        %v1405 = vpop.f32.mrb[0].mxu0
        %v1406 = vadd.f32 %v454, %v1405
        %v1407 = vpop.f32.mrb[0].mxu0
        %v1408 = vadd.f32 %v458, %v1407
        %v1409 = vpop.f32.mrb[0].mxu0
        %v1410 = vadd.f32 %v454, %v1409
        %v1411 = vpop.f32.mrb[0].mxu0
        %v1412 = vadd.f32 %v458, %v1411
        %1413 = vmatprep.mubr.bf16.mxu0 %v606
        %1414 = vmatmul.mubr.bf16.gmra.mrb[0].mxu0 %v605
        %v1415 = vpop.f32.mrb[0].mxu0
        %v1416 = vadd.f32 %v454, %v1415
        %v1417 = vpop.f32.mrb[0].mxu0
        %v1418 = vadd.f32 %v458, %v1417
        %v1419 = vpop.f32.mrb[0].mxu0
        %v1420 = vadd.f32 %v454, %v1419
        %v1421 = vpop.f32.mrb[0].mxu0
        %v1422 = vadd.f32 %v458, %v1421
        %1423 = vmatprep.mubr.bf16.mxu0 %v608
        %1424 = vmatmul.mubr.bf16.gmra.mrb[0].mxu0 %v607
        %v1425 = vpop.f32.mrb[0].mxu0
        %v1426 = vadd.f32 %v454, %v1425
        %v1427 = vpop.f32.mrb[0].mxu0
        %v1428 = vadd.f32 %v458, %v1427
        %v1429 = vpop.f32.mrb[0].mxu0
        %v1430 = vadd.f32 %v454, %v1429
        %v1431 = vpop.f32.mrb[0].mxu0
        %v1432 = vadd.f32 %v458, %v1431
        %1433 = vmatprep.mubr.bf16.mxu0 %v610
        %1434 = vmatmul.mubr.bf16.gmra.mrb[0].mxu0 %v609
        %v1435 = vpop.f32.mrb[0].mxu0
        %v1436 = vadd.f32 %v454, %v1435
        %v1437 = vpop.f32.mrb[0].mxu0
        %v1438 = vadd.f32 %v458, %v1437
        %v1439 = vpop.f32.mrb[0].mxu0
        %v1440 = vadd.f32 %v454, %v1439
        %v1441 = vpop.f32.mrb[0].mxu0
        %v1442 = vadd.f32 %v458, %v1441
        %1443 = vmatprep.mubr.bf16.mxu0 %v612
        %1444 = vmatmul.mubr.bf16.gmra.mrb[0].mxu0 %v611
        %v1445 = vpop.f32.mrb[0].mxu0
        %v1446 = vadd.f32 %v454, %v1445
        %v1447 = vpop.f32.mrb[0].mxu0
        %v1448 = vadd.f32 %v458, %v1447
        %v1449 = vpop.f32.mrb[0].mxu0
        %v1450 = vadd.f32 %v454, %v1449
        %v1451 = vpop.f32.mrb[0].mxu0
        %v1452 = vadd.f32 %v458, %v1451
        %1453 = vmatprep.mubr.bf16.mxu0 %v614
        %1454 = vmatmul.mubr.bf16.gmra.mrb[0].mxu0 %v613
        %v1455 = vpop.f32.mrb[0].mxu0
        %v1456 = vadd.f32 %v454, %v1455
        %v1457 = vpop.f32.mrb[0].mxu0
        %v1458 = vadd.f32 %v458, %v1457
        %v1459 = vpop.f32.mrb[0].mxu0
        %v1460 = vadd.f32 %v454, %v1459
        %v1461 = vpop.f32.mrb[0].mxu0
        %v1462 = vadd.f32 %v458, %v1461
        %1463 = vmatprep.mubr.bf16.mxu0 %v616
        %1464 = vmatmul.mubr.bf16.gmra.mrb[0].mxu0 %v615
        %v1465 = vpop.f32.mrb[0].mxu0
        %v1466 = vadd.f32 %v454, %v1465
        %v1467 = vpop.f32.mrb[0].mxu0
        %v1468 = vadd.f32 %v458, %v1467
        %v1469 = vpop.f32.mrb[0].mxu0
        %v1470 = vadd.f32 %v454, %v1469
        %v1471 = vpop.f32.mrb[0].mxu0
        %v1472 = vadd.f32 %v458, %v1471
        %1473 = vmatprep.mubr.bf16.mxu0 %v618
        %1474 = vmatmul.mubr.bf16.gmra.mrb[0].mxu0 %v617
        %v1475 = vpop.f32.mrb[0].mxu0
        %v1476 = vadd.f32 %v454, %v1475
        %v1477 = vpop.f32.mrb[0].mxu0
        %v1478 = vadd.f32 %v458, %v1477
        %v1479 = vpop.f32.mrb[0].mxu0
        %v1480 = vadd.f32 %v454, %v1479
        %v1481 = vpop.f32.mrb[0].mxu0
        %v1482 = vadd.f32 %v458, %v1481
        %1483 = vdwg.mxu0
        %1484 = vmatprep.subr.bf16.mxu0 %v1038
        %1485 = vmatpush1.bf16.msra.mxu0 %v1037
        %1486 = vmatprep.subr.bf16.mxu0 %v1046
        %1487 = vmatpush1.bf16.msra.mxu0 %v1045
        %1488 = vmatprep.subr.bf16.mxu0 %v1054
        %1489 = vmatpush1.bf16.msra.mxu0 %v1053
        %1490 = vmatprep.subr.bf16.mxu0 %v1062
        %1491 = vmatpush1.bf16.msra.mxu0 %v1061
        %1492 = vmatprep.subr.bf16.mxu0 %v1070
        %1493 = vmatpush1.bf16.msra.mxu0 %v1069
        %1494 = vmatprep.subr.bf16.mxu0 %v1078
        %1495 = vmatpush1.bf16.msra.mxu0 %v1077
        %1496 = vmatprep.subr.bf16.mxu0 %v1086
        %1497 = vmatpush1.bf16.msra.mxu0 %v1085
        %1498 = vmatprep.subr.bf16.mxu0 %v1094
        %1499 = vmatpush1.bf16.msra.mxu0 %v1093
        %1500 = vmatprep.subr.bf16.mxu0 %v1102
        %1501 = vmatpush1.bf16.msra.mxu0 %v1101
        %1502 = vmatprep.subr.bf16.mxu0 %v1110
        %1503 = vmatpush1.bf16.msra.mxu0 %v1109
        %1504 = vmatprep.subr.bf16.mxu0 %v1118
        %1505 = vmatpush1.bf16.msra.mxu0 %v1117
        %1506 = vmatprep.subr.bf16.mxu0 %v1126
        %1507 = vmatpush1.bf16.msra.mxu0 %v1125
        %1508 = vmatprep.subr.bf16.mxu0 %v1134
        %1509 = vmatpush1.bf16.msra.mxu0 %v1133
        %1510 = vmatprep.subr.bf16.mxu0 %v1142
        %1511 = vmatpush1.bf16.msra.mxu0 %v1141
        %1512 = vmatprep.subr.bf16.mxu0 %v1150
        %1513 = vmatpush1.bf16.msra.mxu0 %v1149
        %1514 = vmatprep.subr.bf16.mxu0 %v1158
        %1515 = vmatpush1.bf16.msra.mxu0 %v1157
        %1516 = vmatprep.mubr.bf16.mxu0 %v588
        %1517 = vmatmul.mubr.bf16.gmra.mrb[0].mxu0 %v587
        %v1518 = vpop.f32.mrb[0].mxu0
        %v1519 = vadd.f32 %v462, %v1518
        %v1520 = vpop.f32.mrb[0].mxu0
        %v1521 = vadd.f32 %v466, %v1520
        %v1522 = vpop.f32.mrb[0].mxu0
        %v1523 = vadd.f32 %v462, %v1522
        %v1524 = vpop.f32.mrb[0].mxu0
        %v1525 = vadd.f32 %v466, %v1524
        %1526 = vmatprep.mubr.bf16.mxu0 %v590
        %1527 = vmatmul.mubr.bf16.gmra.mrb[0].mxu0 %v589
        %v1528 = vpop.f32.mrb[0].mxu0
        %v1529 = vadd.f32 %v462, %v1528
        %v1530 = vpop.f32.mrb[0].mxu0
        %v1531 = vadd.f32 %v466, %v1530
        %v1532 = vpop.f32.mrb[0].mxu0
        %v1533 = vadd.f32 %v462, %v1532
        %v1534 = vpop.f32.mrb[0].mxu0
        %v1535 = vadd.f32 %v466, %v1534
        %1536 = vmatprep.mubr.bf16.mxu0 %v592
        %1537 = vmatmul.mubr.bf16.gmra.mrb[0].mxu0 %v591
        %v1538 = vpop.f32.mrb[0].mxu0
        %v1539 = vadd.f32 %v462, %v1538
        %v1540 = vpop.f32.mrb[0].mxu0
        %v1541 = vadd.f32 %v466, %v1540
        %v1542 = vpop.f32.mrb[0].mxu0
        %v1543 = vadd.f32 %v462, %v1542
        %v1544 = vpop.f32.mrb[0].mxu0
        %v1545 = vadd.f32 %v466, %v1544
        %1546 = vmatprep.mubr.bf16.mxu0 %v594
        %1547 = vmatmul.mubr.bf16.gmra.mrb[0].mxu0 %v593
        %v1548 = vpop.f32.mrb[0].mxu0
        %v1549 = vadd.f32 %v462, %v1548
        %v1550 = vpop.f32.mrb[0].mxu0
        %v1551 = vadd.f32 %v466, %v1550
        %v1552 = vpop.f32.mrb[0].mxu0
        %v1553 = vadd.f32 %v462, %v1552
        %v1554 = vpop.f32.mrb[0].mxu0
        %v1555 = vadd.f32 %v466, %v1554
        %1556 = vmatprep.mubr.bf16.mxu0 %v596
        %1557 = vmatmul.mubr.bf16.gmra.mrb[0].mxu0 %v595
        %v1558 = vpop.f32.mrb[0].mxu0
        %v1559 = vadd.f32 %v462, %v1558
        %v1560 = vpop.f32.mrb[0].mxu0
        %v1561 = vadd.f32 %v466, %v1560
        %v1562 = vpop.f32.mrb[0].mxu0
        %v1563 = vadd.f32 %v462, %v1562
        %v1564 = vpop.f32.mrb[0].mxu0
        %v1565 = vadd.f32 %v466, %v1564
        %1566 = vmatprep.mubr.bf16.mxu0 %v598
        %1567 = vmatmul.mubr.bf16.gmra.mrb[0].mxu0 %v597
        %v1568 = vpop.f32.mrb[0].mxu0
        %v1569 = vadd.f32 %v462, %v1568
        %v1570 = vpop.f32.mrb[0].mxu0
        %v1571 = vadd.f32 %v466, %v1570
        %v1572 = vpop.f32.mrb[0].mxu0
        %v1573 = vadd.f32 %v462, %v1572
        %v1574 = vpop.f32.mrb[0].mxu0
        %v1575 = vadd.f32 %v466, %v1574
        %1576 = vmatprep.mubr.bf16.mxu0 %v600
        %1577 = vmatmul.mubr.bf16.gmra.mrb[0].mxu0 %v599
        %v1578 = vpop.f32.mrb[0].mxu0
        %v1579 = vadd.f32 %v462, %v1578
        %v1580 = vpop.f32.mrb[0].mxu0
        %v1581 = vadd.f32 %v466, %v1580
        %v1582 = vpop.f32.mrb[0].mxu0
        %v1583 = vadd.f32 %v462, %v1582
        %v1584 = vpop.f32.mrb[0].mxu0
        %v1585 = vadd.f32 %v466, %v1584
        %1586 = vmatprep.mubr.bf16.mxu0 %v602
        %1587 = vmatmul.mubr.bf16.gmra.mrb[0].mxu0 %v601
        %v1588 = vpop.f32.mrb[0].mxu0
        %v1589 = vadd.f32 %v462, %v1588
        %v1590 = vpop.f32.mrb[0].mxu0
        %v1591 = vadd.f32 %v466, %v1590
        %v1592 = vpop.f32.mrb[0].mxu0
        %v1593 = vadd.f32 %v462, %v1592
        %v1594 = vpop.f32.mrb[0].mxu0
        %v1595 = vadd.f32 %v466, %v1594
        %1596 = vmatprep.mubr.bf16.mxu0 %v604
        %1597 = vmatmul.mubr.bf16.gmra.mrb[0].mxu0 %v603
        %v1598 = vpop.f32.mrb[0].mxu0
        %v1599 = vadd.f32 %v462, %v1598
        %v1600 = vpop.f32.mrb[0].mxu0
        %v1601 = vadd.f32 %v466, %v1600
        %v1602 = vpop.f32.mrb[0].mxu0
        %v1603 = vadd.f32 %v462, %v1602
        %v1604 = vpop.f32.mrb[0].mxu0
        %v1605 = vadd.f32 %v466, %v1604
        %1606 = vmatprep.mubr.bf16.mxu0 %v606
        %1607 = vmatmul.mubr.bf16.gmra.mrb[0].mxu0 %v605
        %v1608 = vpop.f32.mrb[0].mxu0
        %v1609 = vadd.f32 %v462, %v1608
        %v1610 = vpop.f32.mrb[0].mxu0
        %v1611 = vadd.f32 %v466, %v1610
        %v1612 = vpop.f32.mrb[0].mxu0
        %v1613 = vadd.f32 %v462, %v1612
        %v1614 = vpop.f32.mrb[0].mxu0
        %v1615 = vadd.f32 %v466, %v1614
        %1616 = vmatprep.mubr.bf16.mxu0 %v608
        %1617 = vmatmul.mubr.bf16.gmra.mrb[0].mxu0 %v607
        %v1618 = vpop.f32.mrb[0].mxu0
        %v1619 = vadd.f32 %v462, %v1618
        %v1620 = vpop.f32.mrb[0].mxu0
        %v1621 = vadd.f32 %v466, %v1620
        %v1622 = vpop.f32.mrb[0].mxu0
        %v1623 = vadd.f32 %v462, %v1622
        %v1624 = vpop.f32.mrb[0].mxu0
        %v1625 = vadd.f32 %v466, %v1624
        %1626 = vmatprep.mubr.bf16.mxu0 %v610
        %1627 = vmatmul.mubr.bf16.gmra.mrb[0].mxu0 %v609
        %v1628 = vpop.f32.mrb[0].mxu0
        %v1629 = vadd.f32 %v462, %v1628
        %v1630 = vpop.f32.mrb[0].mxu0
        %v1631 = vadd.f32 %v466, %v1630
        %v1632 = vpop.f32.mrb[0].mxu0
        %v1633 = vadd.f32 %v462, %v1632
        %v1634 = vpop.f32.mrb[0].mxu0
        %v1635 = vadd.f32 %v466, %v1634
        %1636 = vmatprep.mubr.bf16.mxu0 %v612
        %1637 = vmatmul.mubr.bf16.gmra.mrb[0].mxu0 %v611
        %v1638 = vpop.f32.mrb[0].mxu0
        %v1639 = vadd.f32 %v462, %v1638
        %v1640 = vpop.f32.mrb[0].mxu0
        %v1641 = vadd.f32 %v466, %v1640
        %v1642 = vpop.f32.mrb[0].mxu0
        %v1643 = vadd.f32 %v462, %v1642
        %v1644 = vpop.f32.mrb[0].mxu0
        %v1645 = vadd.f32 %v466, %v1644
        %1646 = vmatprep.mubr.bf16.mxu0 %v614
        %1647 = vmatmul.mubr.bf16.gmra.mrb[0].mxu0 %v613
        %v1648 = vpop.f32.mrb[0].mxu0
        %v1649 = vadd.f32 %v462, %v1648
        %v1650 = vpop.f32.mrb[0].mxu0
        %v1651 = vadd.f32 %v466, %v1650
        %v1652 = vpop.f32.mrb[0].mxu0
        %v1653 = vadd.f32 %v462, %v1652
        %v1654 = vpop.f32.mrb[0].mxu0
        %v1655 = vadd.f32 %v466, %v1654
        %1656 = vmatprep.mubr.bf16.mxu0 %v616
        %1657 = vmatmul.mubr.bf16.gmra.mrb[0].mxu0 %v615
        %v1658 = vpop.f32.mrb[0].mxu0
        %v1659 = vadd.f32 %v462, %v1658
        %v1660 = vpop.f32.mrb[0].mxu0
        %v1661 = vadd.f32 %v466, %v1660
        %v1662 = vpop.f32.mrb[0].mxu0
        %v1663 = vadd.f32 %v462, %v1662
        %v1664 = vpop.f32.mrb[0].mxu0
        %v1665 = vadd.f32 %v466, %v1664
        %1666 = vmatprep.mubr.bf16.mxu0 %v618
        %1667 = vmatmul.mubr.bf16.gmra.mrb[0].mxu0 %v617
        %v1668 = vpop.f32.mrb[0].mxu0
        %v1669 = vadd.f32 %v462, %v1668
        %v1670 = vpop.f32.mrb[0].mxu0
        %v1671 = vadd.f32 %v466, %v1670
        %v1672 = vpop.f32.mrb[0].mxu0
        %v1673 = vadd.f32 %v462, %v1672
        %v1674 = vpop.f32.mrb[0].mxu0
        %v1675 = vadd.f32 %v466, %v1674
        %1676 = vdwg.mxu0
        %1677 = vmatprep.subr.bf16.mxu0 %v1040
        %1678 = vmatpush1.bf16.msra.mxu0 %v1039
        %1679 = vmatprep.subr.bf16.mxu0 %v1048
        %1680 = vmatpush1.bf16.msra.mxu0 %v1047
        %1681 = vmatprep.subr.bf16.mxu0 %v1056
        %1682 = vmatpush1.bf16.msra.mxu0 %v1055
        %1683 = vmatprep.subr.bf16.mxu0 %v1064
        %1684 = vmatpush1.bf16.msra.mxu0 %v1063
        %1685 = vmatprep.subr.bf16.mxu0 %v1072
        %1686 = vmatpush1.bf16.msra.mxu0 %v1071
        %1687 = vmatprep.subr.bf16.mxu0 %v1080
        %1688 = vmatpush1.bf16.msra.mxu0 %v1079
        %1689 = vmatprep.subr.bf16.mxu0 %v1088
        %1690 = vmatpush1.bf16.msra.mxu0 %v1087
        %1691 = vmatprep.subr.bf16.mxu0 %v1096
        %1692 = vmatpush1.bf16.msra.mxu0 %v1095
        %1693 = vmatprep.subr.bf16.mxu0 %v1104
        %1694 = vmatpush1.bf16.msra.mxu0 %v1103
        %1695 = vmatprep.subr.bf16.mxu0 %v1112
        %1696 = vmatpush1.bf16.msra.mxu0 %v1111
        %1697 = vmatprep.subr.bf16.mxu0 %v1120
        %1698 = vmatpush1.bf16.msra.mxu0 %v1119
        %1699 = vmatprep.subr.bf16.mxu0 %v1128
        %1700 = vmatpush1.bf16.msra.mxu0 %v1127
        %1701 = vmatprep.subr.bf16.mxu0 %v1136
        %1702 = vmatpush1.bf16.msra.mxu0 %v1135
        %1703 = vmatprep.subr.bf16.mxu0 %v1144
        %1704 = vmatpush1.bf16.msra.mxu0 %v1143
        %1705 = vmatprep.subr.bf16.mxu0 %v1152
        %1706 = vmatpush1.bf16.msra.mxu0 %v1151
        %1707 = vmatprep.subr.bf16.mxu0 %v1160
        %1708 = vmatpush1.bf16.msra.mxu0 %v1159
        %1709 = vmatprep.mubr.bf16.mxu0 %v588
        %1710 = vmatmul.mubr.bf16.gmra.mrb[0].mxu0 %v587
        %v1711 = vpop.f32.mrb[0].mxu0
        %v1712 = vadd.f32 %v470, %v1711
        %v1713 = vpop.f32.mrb[0].mxu0
        %v1714 = vadd.f32 %v474, %v1713
        %v1715 = vpop.f32.mrb[0].mxu0
        %v1716 = vadd.f32 %v470, %v1715
        %v1717 = vpop.f32.mrb[0].mxu0
        %v1718 = vadd.f32 %v474, %v1717
        %1719 = vmatprep.mubr.bf16.mxu0 %v590
        %1720 = vmatmul.mubr.bf16.gmra.mrb[0].mxu0 %v589
        %v1721 = vpop.f32.mrb[0].mxu0
        %v1722 = vadd.f32 %v470, %v1721
        %v1723 = vpop.f32.mrb[0].mxu0
        %v1724 = vadd.f32 %v474, %v1723
        %v1725 = vpop.f32.mrb[0].mxu0
        %v1726 = vadd.f32 %v470, %v1725
        %v1727 = vpop.f32.mrb[0].mxu0
        %v1728 = vadd.f32 %v474, %v1727
        %1729 = vmatprep.mubr.bf16.mxu0 %v592
        %1730 = vmatmul.mubr.bf16.gmra.mrb[0].mxu0 %v591
        %v1731 = vpop.f32.mrb[0].mxu0
        %v1732 = vadd.f32 %v470, %v1731
        %v1733 = vpop.f32.mrb[0].mxu0
        %v1734 = vadd.f32 %v474, %v1733
        %v1735 = vpop.f32.mrb[0].mxu0
        %v1736 = vadd.f32 %v470, %v1735
        %v1737 = vpop.f32.mrb[0].mxu0
        %v1738 = vadd.f32 %v474, %v1737
        %1739 = vmatprep.mubr.bf16.mxu0 %v594
        %1740 = vmatmul.mubr.bf16.gmra.mrb[0].mxu0 %v593
        %v1741 = vpop.f32.mrb[0].mxu0
        %v1742 = vadd.f32 %v470, %v1741
        %v1743 = vpop.f32.mrb[0].mxu0
        %v1744 = vadd.f32 %v474, %v1743
        %v1745 = vpop.f32.mrb[0].mxu0
        %v1746 = vadd.f32 %v470, %v1745
        %v1747 = vpop.f32.mrb[0].mxu0
        %v1748 = vadd.f32 %v474, %v1747
        %1749 = vmatprep.mubr.bf16.mxu0 %v596
        %1750 = vmatmul.mubr.bf16.gmra.mrb[0].mxu0 %v595
        %v1751 = vpop.f32.mrb[0].mxu0
        %v1752 = vadd.f32 %v470, %v1751
        %v1753 = vpop.f32.mrb[0].mxu0
        %v1754 = vadd.f32 %v474, %v1753
        %v1755 = vpop.f32.mrb[0].mxu0
        %v1756 = vadd.f32 %v470, %v1755
        %v1757 = vpop.f32.mrb[0].mxu0
        %v1758 = vadd.f32 %v474, %v1757
        %1759 = vmatprep.mubr.bf16.mxu0 %v598
        %1760 = vmatmul.mubr.bf16.gmra.mrb[0].mxu0 %v597
        %v1761 = vpop.f32.mrb[0].mxu0
        %v1762 = vadd.f32 %v470, %v1761
        %v1763 = vpop.f32.mrb[0].mxu0
        %v1764 = vadd.f32 %v474, %v1763
        %v1765 = vpop.f32.mrb[0].mxu0
        %v1766 = vadd.f32 %v470, %v1765
        %v1767 = vpop.f32.mrb[0].mxu0
        %v1768 = vadd.f32 %v474, %v1767
        %1769 = vmatprep.mubr.bf16.mxu0 %v600
        %1770 = vmatmul.mubr.bf16.gmra.mrb[0].mxu0 %v599
        %v1771 = vpop.f32.mrb[0].mxu0
        %v1772 = vadd.f32 %v470, %v1771
        %v1773 = vpop.f32.mrb[0].mxu0
        %v1774 = vadd.f32 %v474, %v1773
        %v1775 = vpop.f32.mrb[0].mxu0
        %v1776 = vadd.f32 %v470, %v1775
        %v1777 = vpop.f32.mrb[0].mxu0
        %v1778 = vadd.f32 %v474, %v1777
        %1779 = vmatprep.mubr.bf16.mxu0 %v602
        %1780 = vmatmul.mubr.bf16.gmra.mrb[0].mxu0 %v601
        %v1781 = vpop.f32.mrb[0].mxu0
        %v1782 = vadd.f32 %v470, %v1781
        %v1783 = vpop.f32.mrb[0].mxu0
        %v1784 = vadd.f32 %v474, %v1783
        %v1785 = vpop.f32.mrb[0].mxu0
        %v1786 = vadd.f32 %v470, %v1785
        %v1787 = vpop.f32.mrb[0].mxu0
        %v1788 = vadd.f32 %v474, %v1787
        %1789 = vmatprep.mubr.bf16.mxu0 %v604
        %1790 = vmatmul.mubr.bf16.gmra.mrb[0].mxu0 %v603
        %v1791 = vpop.f32.mrb[0].mxu0
        %v1792 = vadd.f32 %v470, %v1791
        %v1793 = vpop.f32.mrb[0].mxu0
        %v1794 = vadd.f32 %v474, %v1793
        %v1795 = vpop.f32.mrb[0].mxu0
        %v1796 = vadd.f32 %v470, %v1795
        %v1797 = vpop.f32.mrb[0].mxu0
        %v1798 = vadd.f32 %v474, %v1797
        %1799 = vmatprep.mubr.bf16.mxu0 %v606
        %1800 = vmatmul.mubr.bf16.gmra.mrb[0].mxu0 %v605
        %v1801 = vpop.f32.mrb[0].mxu0
        %v1802 = vadd.f32 %v470, %v1801
        %v1803 = vpop.f32.mrb[0].mxu0
        %v1804 = vadd.f32 %v474, %v1803
        %v1805 = vpop.f32.mrb[0].mxu0
        %v1806 = vadd.f32 %v470, %v1805
        %v1807 = vpop.f32.mrb[0].mxu0
        %v1808 = vadd.f32 %v474, %v1807
        %1809 = vmatprep.mubr.bf16.mxu0 %v608
        %1810 = vmatmul.mubr.bf16.gmra.mrb[0].mxu0 %v607
        %v1811 = vpop.f32.mrb[0].mxu0
        %v1812 = vadd.f32 %v470, %v1811
        %v1813 = vpop.f32.mrb[0].mxu0
        %v1814 = vadd.f32 %v474, %v1813
        %v1815 = vpop.f32.mrb[0].mxu0
        %v1816 = vadd.f32 %v470, %v1815
        %v1817 = vpop.f32.mrb[0].mxu0
        %v1818 = vadd.f32 %v474, %v1817
        %1819 = vmatprep.mubr.bf16.mxu0 %v610
        %1820 = vmatmul.mubr.bf16.gmra.mrb[0].mxu0 %v609
        %v1821 = vpop.f32.mrb[0].mxu0
        %v1822 = vadd.f32 %v470, %v1821
        %v1823 = vpop.f32.mrb[0].mxu0
        %v1824 = vadd.f32 %v474, %v1823
        %v1825 = vpop.f32.mrb[0].mxu0
        %v1826 = vadd.f32 %v470, %v1825
        %v1827 = vpop.f32.mrb[0].mxu0
        %v1828 = vadd.f32 %v474, %v1827
        %1829 = vmatprep.mubr.bf16.mxu0 %v612
        %1830 = vmatmul.mubr.bf16.gmra.mrb[0].mxu0 %v611
        %v1831 = vpop.f32.mrb[0].mxu0
        %v1832 = vadd.f32 %v470, %v1831
        %v1833 = vpop.f32.mrb[0].mxu0
        %v1834 = vadd.f32 %v474, %v1833
        %v1835 = vpop.f32.mrb[0].mxu0
        %v1836 = vadd.f32 %v470, %v1835
        %v1837 = vpop.f32.mrb[0].mxu0
        %v1838 = vadd.f32 %v474, %v1837
        %1839 = vmatprep.mubr.bf16.mxu0 %v614
        %1840 = vmatmul.mubr.bf16.gmra.mrb[0].mxu0 %v613
        %v1841 = vpop.f32.mrb[0].mxu0
        %v1842 = vadd.f32 %v470, %v1841
        %v1843 = vpop.f32.mrb[0].mxu0
        %v1844 = vadd.f32 %v474, %v1843
        %v1845 = vpop.f32.mrb[0].mxu0
        %v1846 = vadd.f32 %v470, %v1845
        %v1847 = vpop.f32.mrb[0].mxu0
        %v1848 = vadd.f32 %v474, %v1847
        %1849 = vmatprep.mubr.bf16.mxu0 %v616
        %1850 = vmatmul.mubr.bf16.gmra.mrb[0].mxu0 %v615
        %v1851 = vpop.f32.mrb[0].mxu0
        %v1852 = vadd.f32 %v470, %v1851
        %v1853 = vpop.f32.mrb[0].mxu0
        %v1854 = vadd.f32 %v474, %v1853
        %v1855 = vpop.f32.mrb[0].mxu0
        %v1856 = vadd.f32 %v470, %v1855
        %v1857 = vpop.f32.mrb[0].mxu0
        %v1858 = vadd.f32 %v474, %v1857
        %1859 = vmatprep.mubr.bf16.mxu0 %v618
        %1860 = vmatmul.mubr.bf16.gmra.mrb[0].mxu0 %v617
        %v1861 = vpop.f32.mrb[0].mxu0
        %v1862 = vadd.f32 %v470, %v1861
        %v1863 = vpop.f32.mrb[0].mxu0
        %v1864 = vadd.f32 %v474, %v1863
        %v1865 = vpop.f32.mrb[0].mxu0
        %v1866 = vadd.f32 %v470, %v1865
        %v1867 = vpop.f32.mrb[0].mxu0
        %v1868 = vadd.f32 %v474, %v1867
        %1869 = vdwg.mxu0
        %1870 = vmatprep.subr.bf16.mxu0 %v1042
        %1871 = vmatpush1.bf16.msra.mxu0 %v1041
        %1872 = vmatprep.subr.bf16.mxu0 %v1050
        %1873 = vmatpush1.bf16.msra.mxu0 %v1049
        %1874 = vmatprep.subr.bf16.mxu0 %v1058
        %1875 = vmatpush1.bf16.msra.mxu0 %v1057
        %1876 = vmatprep.subr.bf16.mxu0 %v1066
        %1877 = vmatpush1.bf16.msra.mxu0 %v1065
        %1878 = vmatprep.subr.bf16.mxu0 %v1074
        %1879 = vmatpush1.bf16.msra.mxu0 %v1073
        %1880 = vmatprep.subr.bf16.mxu0 %v1082
        %1881 = vmatpush1.bf16.msra.mxu0 %v1081
        %1882 = vmatprep.subr.bf16.mxu0 %v1090
        %1883 = vmatpush1.bf16.msra.mxu0 %v1089
        %1884 = vmatprep.subr.bf16.mxu0 %v1098
        %1885 = vmatpush1.bf16.msra.mxu0 %v1097
        %1886 = vmatprep.subr.bf16.mxu0 %v1106
        %1887 = vmatpush1.bf16.msra.mxu0 %v1105
        %1888 = vmatprep.subr.bf16.mxu0 %v1114
        %1889 = vmatpush1.bf16.msra.mxu0 %v1113
        %1890 = vmatprep.subr.bf16.mxu0 %v1122
        %1891 = vmatpush1.bf16.msra.mxu0 %v1121
        %1892 = vmatprep.subr.bf16.mxu0 %v1130
        %1893 = vmatpush1.bf16.msra.mxu0 %v1129
        %1894 = vmatprep.subr.bf16.mxu0 %v1138
        %1895 = vmatpush1.bf16.msra.mxu0 %v1137
        %1896 = vmatprep.subr.bf16.mxu0 %v1146
        %1897 = vmatpush1.bf16.msra.mxu0 %v1145
        %1898 = vmatprep.subr.bf16.mxu0 %v1154
        %1899 = vmatpush1.bf16.msra.mxu0 %v1153
        %1900 = vmatprep.subr.bf16.mxu0 %v1162
        %1901 = vmatpush1.bf16.msra.mxu0 %v1161
        %1902 = vmatprep.mubr.bf16.mxu0 %v588
        %1903 = vmatmul.mubr.bf16.gmra.mrb[0].mxu0 %v587
        %v1904 = vpop.f32.mrb[0].mxu0
        %v1905 = vadd.f32 %v478, %v1904
        %v1906 = vpop.f32.mrb[0].mxu0
        %v1907 = vadd.f32 %v482, %v1906
        %v1908 = vpop.f32.mrb[0].mxu0
        %v1909 = vadd.f32 %v478, %v1908
        %v1910 = vpop.f32.mrb[0].mxu0
        %v1911 = vadd.f32 %v482, %v1910
        %1912 = vmatprep.mubr.bf16.mxu0 %v590
        %1913 = vmatmul.mubr.bf16.gmra.mrb[0].mxu0 %v589
        %v1914 = vpop.f32.mrb[0].mxu0
        %v1915 = vadd.f32 %v478, %v1914
        %v1916 = vpop.f32.mrb[0].mxu0
        %v1917 = vadd.f32 %v482, %v1916
        %v1918 = vpop.f32.mrb[0].mxu0
        %v1919 = vadd.f32 %v478, %v1918
        %v1920 = vpop.f32.mrb[0].mxu0
        %v1921 = vadd.f32 %v482, %v1920
        %1922 = vmatprep.mubr.bf16.mxu0 %v592
        %1923 = vmatmul.mubr.bf16.gmra.mrb[0].mxu0 %v591
        %v1924 = vpop.f32.mrb[0].mxu0
        %v1925 = vadd.f32 %v478, %v1924
        %v1926 = vpop.f32.mrb[0].mxu0
        %v1927 = vadd.f32 %v482, %v1926
        %v1928 = vpop.f32.mrb[0].mxu0
        %v1929 = vadd.f32 %v478, %v1928
        %v1930 = vpop.f32.mrb[0].mxu0
        %v1931 = vadd.f32 %v482, %v1930
        %1932 = vmatprep.mubr.bf16.mxu0 %v594
        %1933 = vmatmul.mubr.bf16.gmra.mrb[0].mxu0 %v593
        %v1934 = vpop.f32.mrb[0].mxu0
        %v1935 = vadd.f32 %v478, %v1934
        %v1936 = vpop.f32.mrb[0].mxu0
        %v1937 = vadd.f32 %v482, %v1936
        %v1938 = vpop.f32.mrb[0].mxu0
        %v1939 = vadd.f32 %v478, %v1938
        %v1940 = vpop.f32.mrb[0].mxu0
        %v1941 = vadd.f32 %v482, %v1940
        %1942 = vmatprep.mubr.bf16.mxu0 %v596
        %1943 = vmatmul.mubr.bf16.gmra.mrb[0].mxu0 %v595
        %v1944 = vpop.f32.mrb[0].mxu0
        %v1945 = vadd.f32 %v478, %v1944
        %v1946 = vpop.f32.mrb[0].mxu0
        %v1947 = vadd.f32 %v482, %v1946
        %v1948 = vpop.f32.mrb[0].mxu0
        %v1949 = vadd.f32 %v478, %v1948
        %v1950 = vpop.f32.mrb[0].mxu0
        %v1951 = vadd.f32 %v482, %v1950
        %1952 = vmatprep.mubr.bf16.mxu0 %v598
        %1953 = vmatmul.mubr.bf16.gmra.mrb[0].mxu0 %v597
        %v1954 = vpop.f32.mrb[0].mxu0
        %v1955 = vadd.f32 %v478, %v1954
        %v1956 = vpop.f32.mrb[0].mxu0
        %v1957 = vadd.f32 %v482, %v1956
        %v1958 = vpop.f32.mrb[0].mxu0
        %v1959 = vadd.f32 %v478, %v1958
        %v1960 = vpop.f32.mrb[0].mxu0
        %v1961 = vadd.f32 %v482, %v1960
        %1962 = vmatprep.mubr.bf16.mxu0 %v600
        %1963 = vmatmul.mubr.bf16.gmra.mrb[0].mxu0 %v599
        %v1964 = vpop.f32.mrb[0].mxu0
        %v1965 = vadd.f32 %v478, %v1964
        %v1966 = vpop.f32.mrb[0].mxu0
        %v1967 = vadd.f32 %v482, %v1966
        %v1968 = vpop.f32.mrb[0].mxu0
        %v1969 = vadd.f32 %v478, %v1968
        %v1970 = vpop.f32.mrb[0].mxu0
        %v1971 = vadd.f32 %v482, %v1970
        %1972 = vmatprep.mubr.bf16.mxu0 %v602
        %1973 = vmatmul.mubr.bf16.gmra.mrb[0].mxu0 %v601
        %v1974 = vpop.f32.mrb[0].mxu0
        %v1975 = vadd.f32 %v478, %v1974
        %v1976 = vpop.f32.mrb[0].mxu0
        %v1977 = vadd.f32 %v482, %v1976
        %v1978 = vpop.f32.mrb[0].mxu0
        %v1979 = vadd.f32 %v478, %v1978
        %v1980 = vpop.f32.mrb[0].mxu0
        %v1981 = vadd.f32 %v482, %v1980
        %1982 = vmatprep.mubr.bf16.mxu0 %v604
        %1983 = vmatmul.mubr.bf16.gmra.mrb[0].mxu0 %v603
        %v1984 = vpop.f32.mrb[0].mxu0
        %v1985 = vadd.f32 %v478, %v1984
        %v1986 = vpop.f32.mrb[0].mxu0
        %v1987 = vadd.f32 %v482, %v1986
        %v1988 = vpop.f32.mrb[0].mxu0
        %v1989 = vadd.f32 %v478, %v1988
        %v1990 = vpop.f32.mrb[0].mxu0
        %v1991 = vadd.f32 %v482, %v1990
        %1992 = vmatprep.mubr.bf16.mxu0 %v606
        %1993 = vmatmul.mubr.bf16.gmra.mrb[0].mxu0 %v605
        %v1994 = vpop.f32.mrb[0].mxu0
        %v1995 = vadd.f32 %v478, %v1994
        %v1996 = vpop.f32.mrb[0].mxu0
        %v1997 = vadd.f32 %v482, %v1996
        %v1998 = vpop.f32.mrb[0].mxu0
        %v1999 = vadd.f32 %v478, %v1998
        %v2000 = vpop.f32.mrb[0].mxu0
        %v2001 = vadd.f32 %v482, %v2000
        %2002 = vmatprep.mubr.bf16.mxu0 %v608
        %2003 = vmatmul.mubr.bf16.gmra.mrb[0].mxu0 %v607
        %v2004 = vpop.f32.mrb[0].mxu0
        %v2005 = vadd.f32 %v478, %v2004
        %v2006 = vpop.f32.mrb[0].mxu0
        %v2007 = vadd.f32 %v482, %v2006
        %v2008 = vpop.f32.mrb[0].mxu0
        %v2009 = vadd.f32 %v478, %v2008
        %v2010 = vpop.f32.mrb[0].mxu0
        %v2011 = vadd.f32 %v482, %v2010
        %2012 = vmatprep.mubr.bf16.mxu0 %v610
        %2013 = vmatmul.mubr.bf16.gmra.mrb[0].mxu0 %v609
        %v2014 = vpop.f32.mrb[0].mxu0
        %v2015 = vadd.f32 %v478, %v2014
        %v2016 = vpop.f32.mrb[0].mxu0
        %v2017 = vadd.f32 %v482, %v2016
        %v2018 = vpop.f32.mrb[0].mxu0
        %v2019 = vadd.f32 %v478, %v2018
        %v2020 = vpop.f32.mrb[0].mxu0
        %v2021 = vadd.f32 %v482, %v2020
        %2022 = vmatprep.mubr.bf16.mxu0 %v612
        %2023 = vmatmul.mubr.bf16.gmra.mrb[0].mxu0 %v611
        %v2024 = vpop.f32.mrb[0].mxu0
        %v2025 = vadd.f32 %v478, %v2024
        %v2026 = vpop.f32.mrb[0].mxu0
        %v2027 = vadd.f32 %v482, %v2026
        %v2028 = vpop.f32.mrb[0].mxu0
        %v2029 = vadd.f32 %v478, %v2028
        %v2030 = vpop.f32.mrb[0].mxu0
        %v2031 = vadd.f32 %v482, %v2030
        %2032 = vmatprep.mubr.bf16.mxu0 %v614
        %2033 = vmatmul.mubr.bf16.gmra.mrb[0].mxu0 %v613
        %v2034 = vpop.f32.mrb[0].mxu0
        %v2035 = vadd.f32 %v478, %v2034
        %v2036 = vpop.f32.mrb[0].mxu0
        %v2037 = vadd.f32 %v482, %v2036
        %v2038 = vpop.f32.mrb[0].mxu0
        %v2039 = vadd.f32 %v478, %v2038
        %v2040 = vpop.f32.mrb[0].mxu0
        %v2041 = vadd.f32 %v482, %v2040
        %2042 = vmatprep.mubr.bf16.mxu0 %v616
        %2043 = vmatmul.mubr.bf16.gmra.mrb[0].mxu0 %v615
        %v2044 = vpop.f32.mrb[0].mxu0
        %v2045 = vadd.f32 %v478, %v2044
        %v2046 = vpop.f32.mrb[0].mxu0
        %v2047 = vadd.f32 %v482, %v2046
        %v2048 = vpop.f32.mrb[0].mxu0
        %v2049 = vadd.f32 %v478, %v2048
        %v2050 = vpop.f32.mrb[0].mxu0
        %v2051 = vadd.f32 %v482, %v2050
        %2052 = vmatprep.mubr.bf16.mxu0 %v618
        %2053 = vmatmul.mubr.bf16.gmra.mrb[0].mxu0 %v617
        %v2054 = vpop.f32.mrb[0].mxu0
        %v2055 = vadd.f32 %v478, %v2054
        %v2056 = vpop.f32.mrb[0].mxu0
        %v2057 = vadd.f32 %v482, %v2056
        %v2058 = vpop.f32.mrb[0].mxu0
        %v2059 = vadd.f32 %v478, %v2058
        %v2060 = vpop.f32.mrb[0].mxu0
        %v2061 = vadd.f32 %v482, %v2060
        %2062 = vdwg.mxu0
        %v2063 = vmax.f32 %v1326, 0.0
        %v2064 = vmax.f32 %v1328, 0.0
        %v2065 = vmax.f32 %v1519, 0.0
        %v2066 = vmax.f32 %v1521, 0.0
        %v2067 = vmax.f32 %v1712, 0.0
        %v2068 = vmax.f32 %v1714, 0.0
        %v2069 = vmax.f32 %v1905, 0.0
        %v2070 = vmax.f32 %v1907, 0.0
        %v2071 = vmax.f32 %v1330, 0.0
        %v2072 = vmax.f32 %v1332, 0.0
        %v2073 = vmax.f32 %v1523, 0.0
        %v2074 = vmax.f32 %v1525, 0.0
        %v2075 = vmax.f32 %v1716, 0.0
        %v2076 = vmax.f32 %v1718, 0.0
        %v2077 = vmax.f32 %v1909, 0.0
        %v2078 = vmax.f32 %v1911, 0.0
        %v2079 = vmax.f32 %v1336, 0.0
        %v2080 = vmax.f32 %v1338, 0.0
        %v2081 = vmax.f32 %v1529, 0.0
        %v2082 = vmax.f32 %v1531, 0.0
        %v2083 = vmax.f32 %v1722, 0.0
        %v2084 = vmax.f32 %v1724, 0.0
        %v2085 = vmax.f32 %v1915, 0.0
        %v2086 = vmax.f32 %v1917, 0.0
        %v2087 = vmax.f32 %v1340, 0.0
        %v2088 = vmax.f32 %v1342, 0.0
        %v2089 = vmax.f32 %v1533, 0.0
        %v2090 = vmax.f32 %v1535, 0.0
        %v2091 = vmax.f32 %v1726, 0.0
        %v2092 = vmax.f32 %v1728, 0.0
        %v2093 = vmax.f32 %v1919, 0.0
        %v2094 = vmax.f32 %v1921, 0.0
        %v2095 = vmax.f32 %v1346, 0.0
        %v2096 = vmax.f32 %v1348, 0.0
        %v2097 = vmax.f32 %v1539, 0.0
        %v2098 = vmax.f32 %v1541, 0.0
        %v2099 = vmax.f32 %v1732, 0.0
        %v2100 = vmax.f32 %v1734, 0.0
        %v2101 = vmax.f32 %v1925, 0.0
        %v2102 = vmax.f32 %v1927, 0.0
        %v2103 = vmax.f32 %v1350, 0.0
        %v2104 = vmax.f32 %v1352, 0.0
        %v2105 = vmax.f32 %v1543, 0.0
        %v2106 = vmax.f32 %v1545, 0.0
        %v2107 = vmax.f32 %v1736, 0.0
        %v2108 = vmax.f32 %v1738, 0.0
        %v2109 = vmax.f32 %v1929, 0.0
        %v2110 = vmax.f32 %v1931, 0.0
        %v2111 = vmax.f32 %v1356, 0.0
        %v2112 = vmax.f32 %v1358, 0.0
        %v2113 = vmax.f32 %v1549, 0.0
        %v2114 = vmax.f32 %v1551, 0.0
        %v2115 = vmax.f32 %v1742, 0.0
        %v2116 = vmax.f32 %v1744, 0.0
        %v2117 = vmax.f32 %v1935, 0.0
        %v2118 = vmax.f32 %v1937, 0.0
        %v2119 = vmax.f32 %v1360, 0.0
        %v2120 = vmax.f32 %v1362, 0.0
        %v2121 = vmax.f32 %v1553, 0.0
        %v2122 = vmax.f32 %v1555, 0.0
        %v2123 = vmax.f32 %v1746, 0.0
        %v2124 = vmax.f32 %v1748, 0.0
        %v2125 = vmax.f32 %v1939, 0.0
        %v2126 = vmax.f32 %v1941, 0.0
        %v2127 = vmax.f32 %v1366, 0.0
        %v2128 = vmax.f32 %v1368, 0.0
        %v2129 = vmax.f32 %v1559, 0.0
        %v2130 = vmax.f32 %v1561, 0.0
        %v2131 = vmax.f32 %v1752, 0.0
        %v2132 = vmax.f32 %v1754, 0.0
        %v2133 = vmax.f32 %v1945, 0.0
        %v2134 = vmax.f32 %v1947, 0.0
        %v2135 = vmax.f32 %v1370, 0.0
        %v2136 = vmax.f32 %v1372, 0.0
        %v2137 = vmax.f32 %v1563, 0.0
        %v2138 = vmax.f32 %v1565, 0.0
        %v2139 = vmax.f32 %v1756, 0.0
        %v2140 = vmax.f32 %v1758, 0.0
        %v2141 = vmax.f32 %v1949, 0.0
        %v2142 = vmax.f32 %v1951, 0.0
        %v2143 = vmax.f32 %v1376, 0.0
        %v2144 = vmax.f32 %v1378, 0.0
        %v2145 = vmax.f32 %v1569, 0.0
        %v2146 = vmax.f32 %v1571, 0.0
        %v2147 = vmax.f32 %v1762, 0.0
        %v2148 = vmax.f32 %v1764, 0.0
        %v2149 = vmax.f32 %v1955, 0.0
        %v2150 = vmax.f32 %v1957, 0.0
        %v2151 = vmax.f32 %v1380, 0.0
        %v2152 = vmax.f32 %v1382, 0.0
        %v2153 = vmax.f32 %v1573, 0.0
        %v2154 = vmax.f32 %v1575, 0.0
        %v2155 = vmax.f32 %v1766, 0.0
        %v2156 = vmax.f32 %v1768, 0.0
        %v2157 = vmax.f32 %v1959, 0.0
        %v2158 = vmax.f32 %v1961, 0.0
        %v2159 = vmax.f32 %v1386, 0.0
        %v2160 = vmax.f32 %v1388, 0.0
        %v2161 = vmax.f32 %v1579, 0.0
        %v2162 = vmax.f32 %v1581, 0.0
        %v2163 = vmax.f32 %v1772, 0.0
        %v2164 = vmax.f32 %v1774, 0.0
        %v2165 = vmax.f32 %v1965, 0.0
        %v2166 = vmax.f32 %v1967, 0.0
        %v2167 = vmax.f32 %v1390, 0.0
        %v2168 = vmax.f32 %v1392, 0.0
        %v2169 = vmax.f32 %v1583, 0.0
        %v2170 = vmax.f32 %v1585, 0.0
        %v2171 = vmax.f32 %v1776, 0.0
        %v2172 = vmax.f32 %v1778, 0.0
        %v2173 = vmax.f32 %v1969, 0.0
        %v2174 = vmax.f32 %v1971, 0.0
        %v2175 = vmax.f32 %v1396, 0.0
        %v2176 = vmax.f32 %v1398, 0.0
        %v2177 = vmax.f32 %v1589, 0.0
        %v2178 = vmax.f32 %v1591, 0.0
        %v2179 = vmax.f32 %v1782, 0.0
        %v2180 = vmax.f32 %v1784, 0.0
        %v2181 = vmax.f32 %v1975, 0.0
        %v2182 = vmax.f32 %v1977, 0.0
        %v2183 = vmax.f32 %v1400, 0.0
        %v2184 = vmax.f32 %v1402, 0.0
        %v2185 = vmax.f32 %v1593, 0.0
        %v2186 = vmax.f32 %v1595, 0.0
        %v2187 = vmax.f32 %v1786, 0.0
        %v2188 = vmax.f32 %v1788, 0.0
        %v2189 = vmax.f32 %v1979, 0.0
        %v2190 = vmax.f32 %v1981, 0.0
        %v2191 = vmax.f32 %v1406, 0.0
        %v2192 = vmax.f32 %v1408, 0.0
        %v2193 = vmax.f32 %v1599, 0.0
        %v2194 = vmax.f32 %v1601, 0.0
        %v2195 = vmax.f32 %v1792, 0.0
        %v2196 = vmax.f32 %v1794, 0.0
        %v2197 = vmax.f32 %v1985, 0.0
        %v2198 = vmax.f32 %v1987, 0.0
        %v2199 = vmax.f32 %v1410, 0.0
        %v2200 = vmax.f32 %v1412, 0.0
        %v2201 = vmax.f32 %v1603, 0.0
        %v2202 = vmax.f32 %v1605, 0.0
        %v2203 = vmax.f32 %v1796, 0.0
        %v2204 = vmax.f32 %v1798, 0.0
        %v2205 = vmax.f32 %v1989, 0.0
        %v2206 = vmax.f32 %v1991, 0.0
        %v2207 = vmax.f32 %v1416, 0.0
        %v2208 = vmax.f32 %v1418, 0.0
        %v2209 = vmax.f32 %v1609, 0.0
        %v2210 = vmax.f32 %v1611, 0.0
        %v2211 = vmax.f32 %v1802, 0.0
        %v2212 = vmax.f32 %v1804, 0.0
        %v2213 = vmax.f32 %v1995, 0.0
        %v2214 = vmax.f32 %v1997, 0.0
        %v2215 = vmax.f32 %v1420, 0.0
        %v2216 = vmax.f32 %v1422, 0.0
        %v2217 = vmax.f32 %v1613, 0.0
        %v2218 = vmax.f32 %v1615, 0.0
        %v2219 = vmax.f32 %v1806, 0.0
        %v2220 = vmax.f32 %v1808, 0.0
        %v2221 = vmax.f32 %v1999, 0.0
        %v2222 = vmax.f32 %v2001, 0.0
        %v2223 = vmax.f32 %v1426, 0.0
        %v2224 = vmax.f32 %v1428, 0.0
        %v2225 = vmax.f32 %v1619, 0.0
        %v2226 = vmax.f32 %v1621, 0.0
        %v2227 = vmax.f32 %v1812, 0.0
        %v2228 = vmax.f32 %v1814, 0.0
        %v2229 = vmax.f32 %v2005, 0.0
        %v2230 = vmax.f32 %v2007, 0.0
        %v2231 = vmax.f32 %v1430, 0.0
        %v2232 = vmax.f32 %v1432, 0.0
        %v2233 = vmax.f32 %v1623, 0.0
        %v2234 = vmax.f32 %v1625, 0.0
        %v2235 = vmax.f32 %v1816, 0.0
        %v2236 = vmax.f32 %v1818, 0.0
        %v2237 = vmax.f32 %v2009, 0.0
        %v2238 = vmax.f32 %v2011, 0.0
        %v2239 = vmax.f32 %v1436, 0.0
        %v2240 = vmax.f32 %v1438, 0.0
        %v2241 = vmax.f32 %v1629, 0.0
        %v2242 = vmax.f32 %v1631, 0.0
        %v2243 = vmax.f32 %v1822, 0.0
        %v2244 = vmax.f32 %v1824, 0.0
        %v2245 = vmax.f32 %v2015, 0.0
        %v2246 = vmax.f32 %v2017, 0.0
        %v2247 = vmax.f32 %v1440, 0.0
        %v2248 = vmax.f32 %v1442, 0.0
        %v2249 = vmax.f32 %v1633, 0.0
        %v2250 = vmax.f32 %v1635, 0.0
        %v2251 = vmax.f32 %v1826, 0.0
        %v2252 = vmax.f32 %v1828, 0.0
        %v2253 = vmax.f32 %v2019, 0.0
        %v2254 = vmax.f32 %v2021, 0.0
        %v2255 = vmax.f32 %v1446, 0.0
        %v2256 = vmax.f32 %v1448, 0.0
        %v2257 = vmax.f32 %v1639, 0.0
        %v2258 = vmax.f32 %v1641, 0.0
        %v2259 = vmax.f32 %v1832, 0.0
        %v2260 = vmax.f32 %v1834, 0.0
        %v2261 = vmax.f32 %v2025, 0.0
        %v2262 = vmax.f32 %v2027, 0.0
        %v2263 = vmax.f32 %v1450, 0.0
        %v2264 = vmax.f32 %v1452, 0.0
        %v2265 = vmax.f32 %v1643, 0.0
        %v2266 = vmax.f32 %v1645, 0.0
        %v2267 = vmax.f32 %v1836, 0.0
        %v2268 = vmax.f32 %v1838, 0.0
        %v2269 = vmax.f32 %v2029, 0.0
        %v2270 = vmax.f32 %v2031, 0.0
        %v2271 = vmax.f32 %v1456, 0.0
        %v2272 = vmax.f32 %v1458, 0.0
        %v2273 = vmax.f32 %v1649, 0.0
        %v2274 = vmax.f32 %v1651, 0.0
        %v2275 = vmax.f32 %v1842, 0.0
        %v2276 = vmax.f32 %v1844, 0.0
        %v2277 = vmax.f32 %v2035, 0.0
        %v2278 = vmax.f32 %v2037, 0.0
        %v2279 = vmax.f32 %v1460, 0.0
        %v2280 = vmax.f32 %v1462, 0.0
        %v2281 = vmax.f32 %v1653, 0.0
        %v2282 = vmax.f32 %v1655, 0.0
        %v2283 = vmax.f32 %v1846, 0.0
        %v2284 = vmax.f32 %v1848, 0.0
        %v2285 = vmax.f32 %v2039, 0.0
        %v2286 = vmax.f32 %v2041, 0.0
        %v2287 = vmax.f32 %v1466, 0.0
        %v2288 = vmax.f32 %v1468, 0.0
        %v2289 = vmax.f32 %v1659, 0.0
        %v2290 = vmax.f32 %v1661, 0.0
        %v2291 = vmax.f32 %v1852, 0.0
        %v2292 = vmax.f32 %v1854, 0.0
        %v2293 = vmax.f32 %v2045, 0.0
        %v2294 = vmax.f32 %v2047, 0.0
        %v2295 = vmax.f32 %v1470, 0.0
        %v2296 = vmax.f32 %v1472, 0.0
        %v2297 = vmax.f32 %v1663, 0.0
        %v2298 = vmax.f32 %v1665, 0.0
        %v2299 = vmax.f32 %v1856, 0.0
        %v2300 = vmax.f32 %v1858, 0.0
        %v2301 = vmax.f32 %v2049, 0.0
        %v2302 = vmax.f32 %v2051, 0.0
        %v2303 = vmax.f32 %v1476, 0.0
        %v2304 = vmax.f32 %v1478, 0.0
        %v2305 = vmax.f32 %v1669, 0.0
        %v2306 = vmax.f32 %v1671, 0.0
        %v2307 = vmax.f32 %v1862, 0.0
        %v2308 = vmax.f32 %v1864, 0.0
        %v2309 = vmax.f32 %v2055, 0.0
        %v2310 = vmax.f32 %v2057, 0.0
        %v2311 = vmax.f32 %v1480, 0.0
        %v2312 = vmax.f32 %v1482, 0.0
        %v2313 = vmax.f32 %v1673, 0.0
        %v2314 = vmax.f32 %v1675, 0.0
        %v2315 = vmax.f32 %v1866, 0.0
        %v2316 = vmax.f32 %v1868, 0.0
        %v2317 = vmax.f32 %v2059, 0.0
        %v2318 = vmax.f32 %v2061, 0.0
        %v2319 = vpack.c.bf16 %v2071, %v2063
        %v2320 = vpack.c.bf16 %v2072, %v2064
        %v2321 = vpack.c.bf16 %v2073, %v2065
        %v2322 = vpack.c.bf16 %v2074, %v2066
        %v2323 = vpack.c.bf16 %v2075, %v2067
        %v2324 = vpack.c.bf16 %v2076, %v2068
        %v2325 = vpack.c.bf16 %v2077, %v2069
        %v2326 = vpack.c.bf16 %v2078, %v2070
        %v2327 = vpack.c.bf16 %v2087, %v2079
        %v2328 = vpack.c.bf16 %v2088, %v2080
        %v2329 = vpack.c.bf16 %v2089, %v2081
        %v2330 = vpack.c.bf16 %v2090, %v2082
        %v2331 = vpack.c.bf16 %v2091, %v2083
        %v2332 = vpack.c.bf16 %v2092, %v2084
        %v2333 = vpack.c.bf16 %v2093, %v2085
        %v2334 = vpack.c.bf16 %v2094, %v2086
        %v2335 = vpack.c.bf16 %v2103, %v2095
        %v2336 = vpack.c.bf16 %v2104, %v2096
        %v2337 = vpack.c.bf16 %v2105, %v2097
        %v2338 = vpack.c.bf16 %v2106, %v2098
        %v2339 = vpack.c.bf16 %v2107, %v2099
        %v2340 = vpack.c.bf16 %v2108, %v2100
        %v2341 = vpack.c.bf16 %v2109, %v2101
        %v2342 = vpack.c.bf16 %v2110, %v2102
        %v2343 = vpack.c.bf16 %v2119, %v2111
        %v2344 = vpack.c.bf16 %v2120, %v2112
        %v2345 = vpack.c.bf16 %v2121, %v2113
        %v2346 = vpack.c.bf16 %v2122, %v2114
        %v2347 = vpack.c.bf16 %v2123, %v2115
        %v2348 = vpack.c.bf16 %v2124, %v2116
        %v2349 = vpack.c.bf16 %v2125, %v2117
        %v2350 = vpack.c.bf16 %v2126, %v2118
        %v2351 = vpack.c.bf16 %v2135, %v2127
        %v2352 = vpack.c.bf16 %v2136, %v2128
        %v2353 = vpack.c.bf16 %v2137, %v2129
        %v2354 = vpack.c.bf16 %v2138, %v2130
        %v2355 = vpack.c.bf16 %v2139, %v2131
        %v2356 = vpack.c.bf16 %v2140, %v2132
        %v2357 = vpack.c.bf16 %v2141, %v2133
        %v2358 = vpack.c.bf16 %v2142, %v2134
        %v2359 = vpack.c.bf16 %v2151, %v2143
        %v2360 = vpack.c.bf16 %v2152, %v2144
        %v2361 = vpack.c.bf16 %v2153, %v2145
        %v2362 = vpack.c.bf16 %v2154, %v2146
        %v2363 = vpack.c.bf16 %v2155, %v2147
        %v2364 = vpack.c.bf16 %v2156, %v2148
        %v2365 = vpack.c.bf16 %v2157, %v2149
        %v2366 = vpack.c.bf16 %v2158, %v2150
        %v2367 = vpack.c.bf16 %v2167, %v2159
        %v2368 = vpack.c.bf16 %v2168, %v2160
        %v2369 = vpack.c.bf16 %v2169, %v2161
        %v2370 = vpack.c.bf16 %v2170, %v2162
        %v2371 = vpack.c.bf16 %v2171, %v2163
        %v2372 = vpack.c.bf16 %v2172, %v2164
        %v2373 = vpack.c.bf16 %v2173, %v2165
        %v2374 = vpack.c.bf16 %v2174, %v2166
        %v2375 = vpack.c.bf16 %v2183, %v2175
        %v2376 = vpack.c.bf16 %v2184, %v2176
        %v2377 = vpack.c.bf16 %v2185, %v2177
        %v2378 = vpack.c.bf16 %v2186, %v2178
        %v2379 = vpack.c.bf16 %v2187, %v2179
        %v2380 = vpack.c.bf16 %v2188, %v2180
        %v2381 = vpack.c.bf16 %v2189, %v2181
        %v2382 = vpack.c.bf16 %v2190, %v2182
        %v2383 = vpack.c.bf16 %v2199, %v2191
        %v2384 = vpack.c.bf16 %v2200, %v2192
        %v2385 = vpack.c.bf16 %v2201, %v2193
        %v2386 = vpack.c.bf16 %v2202, %v2194
        %v2387 = vpack.c.bf16 %v2203, %v2195
        %v2388 = vpack.c.bf16 %v2204, %v2196
        %v2389 = vpack.c.bf16 %v2205, %v2197
        %v2390 = vpack.c.bf16 %v2206, %v2198
        %v2391 = vpack.c.bf16 %v2215, %v2207
        %v2392 = vpack.c.bf16 %v2216, %v2208
        %v2393 = vpack.c.bf16 %v2217, %v2209
        %v2394 = vpack.c.bf16 %v2218, %v2210
        %v2395 = vpack.c.bf16 %v2219, %v2211
        %v2396 = vpack.c.bf16 %v2220, %v2212
        %v2397 = vpack.c.bf16 %v2221, %v2213
        %v2398 = vpack.c.bf16 %v2222, %v2214
        %v2399 = vpack.c.bf16 %v2231, %v2223
        %v2400 = vpack.c.bf16 %v2232, %v2224
        %v2401 = vpack.c.bf16 %v2233, %v2225
        %v2402 = vpack.c.bf16 %v2234, %v2226
        %v2403 = vpack.c.bf16 %v2235, %v2227
        %v2404 = vpack.c.bf16 %v2236, %v2228
        %v2405 = vpack.c.bf16 %v2237, %v2229
        %v2406 = vpack.c.bf16 %v2238, %v2230
        %v2407 = vpack.c.bf16 %v2247, %v2239
        %v2408 = vpack.c.bf16 %v2248, %v2240
        %v2409 = vpack.c.bf16 %v2249, %v2241
        %v2410 = vpack.c.bf16 %v2250, %v2242
        %v2411 = vpack.c.bf16 %v2251, %v2243
        %v2412 = vpack.c.bf16 %v2252, %v2244
        %v2413 = vpack.c.bf16 %v2253, %v2245
        %v2414 = vpack.c.bf16 %v2254, %v2246
        %v2415 = vpack.c.bf16 %v2263, %v2255
        %v2416 = vpack.c.bf16 %v2264, %v2256
        %v2417 = vpack.c.bf16 %v2265, %v2257
        %v2418 = vpack.c.bf16 %v2266, %v2258
        %v2419 = vpack.c.bf16 %v2267, %v2259
        %v2420 = vpack.c.bf16 %v2268, %v2260
        %v2421 = vpack.c.bf16 %v2269, %v2261
        %v2422 = vpack.c.bf16 %v2270, %v2262
        %v2423 = vpack.c.bf16 %v2279, %v2271
        %v2424 = vpack.c.bf16 %v2280, %v2272
        %v2425 = vpack.c.bf16 %v2281, %v2273
        %v2426 = vpack.c.bf16 %v2282, %v2274
        %v2427 = vpack.c.bf16 %v2283, %v2275
        %v2428 = vpack.c.bf16 %v2284, %v2276
        %v2429 = vpack.c.bf16 %v2285, %v2277
        %v2430 = vpack.c.bf16 %v2286, %v2278
        %v2431 = vpack.c.bf16 %v2295, %v2287
        %v2432 = vpack.c.bf16 %v2296, %v2288
        %v2433 = vpack.c.bf16 %v2297, %v2289
        %v2434 = vpack.c.bf16 %v2298, %v2290
        %v2435 = vpack.c.bf16 %v2299, %v2291
        %v2436 = vpack.c.bf16 %v2300, %v2292
        %v2437 = vpack.c.bf16 %v2301, %v2293
        %v2438 = vpack.c.bf16 %v2302, %v2294
        %v2439 = vpack.c.bf16 %v2311, %v2303
        %v2440 = vpack.c.bf16 %v2312, %v2304
        %v2441 = vpack.c.bf16 %v2313, %v2305
        %v2442 = vpack.c.bf16 %v2314, %v2306
        %v2443 = vpack.c.bf16 %v2315, %v2307
        %v2444 = vpack.c.bf16 %v2316, %v2308
        %v2445 = vpack.c.bf16 %v2317, %v2309
        %v2446 = vpack.c.bf16 %v2318, %v2310
        %v2447 = vld [vmem:[#allocation8] sm:$0xf]
        %v2448 = vld [vmem:[#allocation8 + $0x4] sm:$0xf]
        %v2449 = vld [vmem:[#allocation8 + $0x8] sm:$0xf]
        %v2450 = vld [vmem:[#allocation8 + $0xc] sm:$0xf]
        %v2451 = vld [vmem:[#allocation8 + $0x10] sm:$0xf]
        %v2452 = vld [vmem:[#allocation8 + $0x14] sm:$0xf]
        %v2453 = vld [vmem:[#allocation8 + $0x18] sm:$0xf]
        %v2454 = vld [vmem:[#allocation8 + $0x1c] sm:$0xf]
        %v2455 = vld [vmem:[#allocation8 + $0x20] sm:$0xf]
        %v2456 = vld [vmem:[#allocation8 + $0x24] sm:$0xf]
        %v2457 = vld [vmem:[#allocation8 + $0x28] sm:$0xf]
        %v2458 = vld [vmem:[#allocation8 + $0x2c] sm:$0xf]
        %v2459 = vld [vmem:[#allocation8 + $0x30] sm:$0xf]
        %v2460 = vld [vmem:[#allocation8 + $0x34] sm:$0xf]
        %v2461 = vld [vmem:[#allocation8 + $0x38] sm:$0xf]
        %v2462 = vld [vmem:[#allocation8 + $0x3c] sm:$0xf]
        %v2463 = vld [vmem:[#allocation8 + $0x40] sm:$0xf]
        %v2464 = vld [vmem:[#allocation8 + $0x44] sm:$0xf]
        %v2465 = vld [vmem:[#allocation8 + $0x48] sm:$0xf]
        %v2466 = vld [vmem:[#allocation8 + $0x4c] sm:$0xf]
        %v2467 = vld [vmem:[#allocation8 + $0x50] sm:$0xf]
        %v2468 = vld [vmem:[#allocation8 + $0x54] sm:$0xf]
        %v2469 = vld [vmem:[#allocation8 + $0x58] sm:$0xf]
        %v2470 = vld [vmem:[#allocation8 + $0x5c] sm:$0xf]
        %v2471 = vld [vmem:[#allocation8 + $0x60] sm:$0xf]
        %v2472 = vld [vmem:[#allocation8 + $0x64] sm:$0xf]
        %v2473 = vld [vmem:[#allocation8 + $0x68] sm:$0xf]
        %v2474 = vld [vmem:[#allocation8 + $0x6c] sm:$0xf]
        %v2475 = vld [vmem:[#allocation8 + $0x70] sm:$0xf]
        %v2476 = vld [vmem:[#allocation8 + $0x74] sm:$0xf]
        %v2477 = vld [vmem:[#allocation8 + $0x78] sm:$0xf]
        %v2478 = vld [vmem:[#allocation8 + $0x7c] sm:$0xf]
        %v2479 = vld [vmem:[#allocation8 + $0x80] sm:$0xf]
        %v2480 = vld [vmem:[#allocation8 + $0x84] sm:$0xf]
        %v2481 = vld [vmem:[#allocation8 + $0x88] sm:$0xf]
        %v2482 = vld [vmem:[#allocation8 + $0x8c] sm:$0xf]
        %v2483 = vld [vmem:[#allocation8 + $0x90] sm:$0xf]
        %v2484 = vld [vmem:[#allocation8 + $0x94] sm:$0xf]
        %v2485 = vld [vmem:[#allocation8 + $0x98] sm:$0xf]
        %v2486 = vld [vmem:[#allocation8 + $0x9c] sm:$0xf]
        %v2487 = vld [vmem:[#allocation8 + $0xa0] sm:$0xf]
        %v2488 = vld [vmem:[#allocation8 + $0xa4] sm:$0xf]
        %v2489 = vld [vmem:[#allocation8 + $0xa8] sm:$0xf]
        %v2490 = vld [vmem:[#allocation8 + $0xac] sm:$0xf]
        %v2491 = vld [vmem:[#allocation8 + $0xb0] sm:$0xf]
        %v2492 = vld [vmem:[#allocation8 + $0xb4] sm:$0xf]
        %v2493 = vld [vmem:[#allocation8 + $0xb8] sm:$0xf]
        %v2494 = vld [vmem:[#allocation8 + $0xbc] sm:$0xf]
        %v2495 = vld [vmem:[#allocation8 + $0xc0] sm:$0xf]
        %v2496 = vld [vmem:[#allocation8 + $0xc4] sm:$0xf]
        %v2497 = vld [vmem:[#allocation8 + $0xc8] sm:$0xf]
        %v2498 = vld [vmem:[#allocation8 + $0xcc] sm:$0xf]
        %v2499 = vld [vmem:[#allocation8 + $0xd0] sm:$0xf]
        %v2500 = vld [vmem:[#allocation8 + $0xd4] sm:$0xf]
        %v2501 = vld [vmem:[#allocation8 + $0xd8] sm:$0xf]
        %v2502 = vld [vmem:[#allocation8 + $0xdc] sm:$0xf]
        %v2503 = vld [vmem:[#allocation8 + $0xe0] sm:$0xf]
        %v2504 = vld [vmem:[#allocation8 + $0xe4] sm:$0xf]
        %v2505 = vld [vmem:[#allocation8 + $0xe8] sm:$0xf]
        %v2506 = vld [vmem:[#allocation8 + $0xec] sm:$0xf]
        %v2507 = vld [vmem:[#allocation8 + $0xf0] sm:$0xf]
        %v2508 = vld [vmem:[#allocation8 + $0xf4] sm:$0xf]
        %v2509 = vld [vmem:[#allocation8 + $0xf8] sm:$0xf]
        %v2510 = vld [vmem:[#allocation8 + $0xfc] sm:$0xf]
        %v2511 = vld [vmem:[#allocation8 + $0x100] sm:$0xf]
        %v2512 = vld [vmem:[#allocation8 + $0x104] sm:$0xf]
        %v2513 = vld [vmem:[#allocation8 + $0x108] sm:$0xf]
        %v2514 = vld [vmem:[#allocation8 + $0x10c] sm:$0xf]
        %v2515 = vld [vmem:[#allocation8 + $0x110] sm:$0xf]
        %v2516 = vld [vmem:[#allocation8 + $0x114] sm:$0xf]
        %v2517 = vld [vmem:[#allocation8 + $0x118] sm:$0xf]
        %v2518 = vld [vmem:[#allocation8 + $0x11c] sm:$0xf]
        %v2519 = vld [vmem:[#allocation8 + $0x120] sm:$0xf]
        %v2520 = vld [vmem:[#allocation8 + $0x124] sm:$0xf]
        %v2521 = vld [vmem:[#allocation8 + $0x128] sm:$0xf]
        %v2522 = vld [vmem:[#allocation8 + $0x12c] sm:$0xf]
        %v2523 = vld [vmem:[#allocation8 + $0x130] sm:$0xf]
        %v2524 = vld [vmem:[#allocation8 + $0x134] sm:$0xf]
        %v2525 = vld [vmem:[#allocation8 + $0x138] sm:$0xf]
        %v2526 = vld [vmem:[#allocation8 + $0x13c] sm:$0xf]
        %v2527 = vld [vmem:[#allocation8 + $0x140] sm:$0xf]
        %v2528 = vld [vmem:[#allocation8 + $0x144] sm:$0xf]
        %v2529 = vld [vmem:[#allocation8 + $0x148] sm:$0xf]
        %v2530 = vld [vmem:[#allocation8 + $0x14c] sm:$0xf]
        %v2531 = vld [vmem:[#allocation8 + $0x150] sm:$0xf]
        %v2532 = vld [vmem:[#allocation8 + $0x154] sm:$0xf]
        %v2533 = vld [vmem:[#allocation8 + $0x158] sm:$0xf]
        %v2534 = vld [vmem:[#allocation8 + $0x15c] sm:$0xf]
        %v2535 = vld [vmem:[#allocation8 + $0x160] sm:$0xf]
        %v2536 = vld [vmem:[#allocation8 + $0x164] sm:$0xf]
        %v2537 = vld [vmem:[#allocation8 + $0x168] sm:$0xf]
        %v2538 = vld [vmem:[#allocation8 + $0x16c] sm:$0xf]
        %v2539 = vld [vmem:[#allocation8 + $0x170] sm:$0xf]
        %v2540 = vld [vmem:[#allocation8 + $0x174] sm:$0xf]
        %v2541 = vld [vmem:[#allocation8 + $0x178] sm:$0xf]
        %v2542 = vld [vmem:[#allocation8 + $0x17c] sm:$0xf]
        %v2543 = vld [vmem:[#allocation8 + $0x180] sm:$0xf]
        %v2544 = vld [vmem:[#allocation8 + $0x184] sm:$0xf]
        %v2545 = vld [vmem:[#allocation8 + $0x188] sm:$0xf]
        %v2546 = vld [vmem:[#allocation8 + $0x18c] sm:$0xf]
        %v2547 = vld [vmem:[#allocation8 + $0x190] sm:$0xf]
        %v2548 = vld [vmem:[#allocation8 + $0x194] sm:$0xf]
        %v2549 = vld [vmem:[#allocation8 + $0x198] sm:$0xf]
        %v2550 = vld [vmem:[#allocation8 + $0x19c] sm:$0xf]
        %v2551 = vld [vmem:[#allocation8 + $0x1a0] sm:$0xf]
        %v2552 = vld [vmem:[#allocation8 + $0x1a4] sm:$0xf]
        %v2553 = vld [vmem:[#allocation8 + $0x1a8] sm:$0xf]
        %v2554 = vld [vmem:[#allocation8 + $0x1ac] sm:$0xf]
        %v2555 = vld [vmem:[#allocation8 + $0x1b0] sm:$0xf]
        %v2556 = vld [vmem:[#allocation8 + $0x1b4] sm:$0xf]
        %v2557 = vld [vmem:[#allocation8 + $0x1b8] sm:$0xf]
        %v2558 = vld [vmem:[#allocation8 + $0x1bc] sm:$0xf]
        %v2559 = vld [vmem:[#allocation8 + $0x1c0] sm:$0xf]
        %v2560 = vld [vmem:[#allocation8 + $0x1c4] sm:$0xf]
        %v2561 = vld [vmem:[#allocation8 + $0x1c8] sm:$0xf]
        %v2562 = vld [vmem:[#allocation8 + $0x1cc] sm:$0xf]
        %v2563 = vld [vmem:[#allocation8 + $0x1d0] sm:$0xf]
        %v2564 = vld [vmem:[#allocation8 + $0x1d4] sm:$0xf]
        %v2565 = vld [vmem:[#allocation8 + $0x1d8] sm:$0xf]
        %v2566 = vld [vmem:[#allocation8 + $0x1dc] sm:$0xf]
        %v2567 = vld [vmem:[#allocation8 + $0x1e0] sm:$0xf]
        %v2568 = vld [vmem:[#allocation8 + $0x1e4] sm:$0xf]
        %v2569 = vld [vmem:[#allocation8 + $0x1e8] sm:$0xf]
        %v2570 = vld [vmem:[#allocation8 + $0x1ec] sm:$0xf]
        %v2571 = vld [vmem:[#allocation8 + $0x1f0] sm:$0xf]
        %v2572 = vld [vmem:[#allocation8 + $0x1f4] sm:$0xf]
        %v2573 = vld [vmem:[#allocation8 + $0x1f8] sm:$0xf]
        %v2574 = vld [vmem:[#allocation8 + $0x1fc] sm:$0xf]
        %v2575 = vld [vmem:[%s4] sm:$0x1]
        %v2577 = vlaneseq
        %v2578 = vshrl.u32 %v2577, 7
        %v2579 = vsub.s32 0, %v2578
        %v2580 = vrot.slane %v2575, %v2579
        %v2710 = vunpack.c.l.b16 %v2447
        %v2711 = vunpack.c.l.b16 %v2448
        %v2712 = vunpack.c.l.b16 %v2449
        %v2713 = vunpack.c.l.b16 %v2450
        %v2714 = vunpack.c.l.b16 %v2451
        %v2715 = vunpack.c.l.b16 %v2452
        %v2716 = vunpack.c.l.b16 %v2453
        %v2717 = vunpack.c.l.b16 %v2454
        %v2718 = vunpack.c.l.b16 %v2455
        %v2719 = vunpack.c.l.b16 %v2456
        %v2720 = vunpack.c.l.b16 %v2457
        %v2721 = vunpack.c.l.b16 %v2458
        %v2722 = vunpack.c.l.b16 %v2459
        %v2723 = vunpack.c.l.b16 %v2460
        %v2724 = vunpack.c.l.b16 %v2461
        %v2725 = vunpack.c.l.b16 %v2462
        %v2726 = vunpack.c.l.b16 %v2463
        %v2727 = vunpack.c.l.b16 %v2464
        %v2728 = vunpack.c.l.b16 %v2465
        %v2729 = vunpack.c.l.b16 %v2466
        %v2730 = vunpack.c.l.b16 %v2467
        %v2731 = vunpack.c.l.b16 %v2468
        %v2732 = vunpack.c.l.b16 %v2469
        %v2733 = vunpack.c.l.b16 %v2470
        %v2734 = vunpack.c.l.b16 %v2471
        %v2735 = vunpack.c.l.b16 %v2472
        %v2736 = vunpack.c.l.b16 %v2473
        %v2737 = vunpack.c.l.b16 %v2474
        %v2738 = vunpack.c.l.b16 %v2475
        %v2739 = vunpack.c.l.b16 %v2476
        %v2740 = vunpack.c.l.b16 %v2477
        %v2741 = vunpack.c.l.b16 %v2478
        %v2742 = vunpack.c.l.b16 %v2479
        %v2743 = vunpack.c.l.b16 %v2480
        %v2744 = vunpack.c.l.b16 %v2481
        %v2745 = vunpack.c.l.b16 %v2482
        %v2746 = vunpack.c.l.b16 %v2483
        %v2747 = vunpack.c.l.b16 %v2484
        %v2748 = vunpack.c.l.b16 %v2485
        %v2749 = vunpack.c.l.b16 %v2486
        %v2750 = vunpack.c.l.b16 %v2487
        %v2751 = vunpack.c.l.b16 %v2488
        %v2752 = vunpack.c.l.b16 %v2489
        %v2753 = vunpack.c.l.b16 %v2490
        %v2754 = vunpack.c.l.b16 %v2491
        %v2755 = vunpack.c.l.b16 %v2492
        %v2756 = vunpack.c.l.b16 %v2493
        %v2757 = vunpack.c.l.b16 %v2494
        %v2758 = vunpack.c.l.b16 %v2495
        %v2759 = vunpack.c.l.b16 %v2496
        %v2760 = vunpack.c.l.b16 %v2497
        %v2761 = vunpack.c.l.b16 %v2498
        %v2762 = vunpack.c.l.b16 %v2499
        %v2763 = vunpack.c.l.b16 %v2500
        %v2764 = vunpack.c.l.b16 %v2501
        %v2765 = vunpack.c.l.b16 %v2502
        %v2766 = vunpack.c.l.b16 %v2503
        %v2767 = vunpack.c.l.b16 %v2504
        %v2768 = vunpack.c.l.b16 %v2505
        %v2769 = vunpack.c.l.b16 %v2506
        %v2770 = vunpack.c.l.b16 %v2507
        %v2771 = vunpack.c.l.b16 %v2508
        %v2772 = vunpack.c.l.b16 %v2509
        %v2773 = vunpack.c.l.b16 %v2510
        %v2774 = vunpack.c.l.b16 %v2511
        %v2775 = vunpack.c.l.b16 %v2512
        %v2776 = vunpack.c.l.b16 %v2513
        %v2777 = vunpack.c.l.b16 %v2514
        %v2778 = vunpack.c.l.b16 %v2515
        %v2779 = vunpack.c.l.b16 %v2516
        %v2780 = vunpack.c.l.b16 %v2517
        %v2781 = vunpack.c.l.b16 %v2518
        %v2782 = vunpack.c.l.b16 %v2519
        %v2783 = vunpack.c.l.b16 %v2520
        %v2784 = vunpack.c.l.b16 %v2521
        %v2785 = vunpack.c.l.b16 %v2522
        %v2786 = vunpack.c.l.b16 %v2523
        %v2787 = vunpack.c.l.b16 %v2524
        %v2788 = vunpack.c.l.b16 %v2525
        %v2789 = vunpack.c.l.b16 %v2526
        %v2790 = vunpack.c.l.b16 %v2527
        %v2791 = vunpack.c.l.b16 %v2528
        %v2792 = vunpack.c.l.b16 %v2529
        %v2793 = vunpack.c.l.b16 %v2530
        %v2794 = vunpack.c.l.b16 %v2531
        %v2795 = vunpack.c.l.b16 %v2532
        %v2796 = vunpack.c.l.b16 %v2533
        %v2797 = vunpack.c.l.b16 %v2534
        %v2798 = vunpack.c.l.b16 %v2535
        %v2799 = vunpack.c.l.b16 %v2536
        %v2800 = vunpack.c.l.b16 %v2537
        %v2801 = vunpack.c.l.b16 %v2538
        %v2802 = vunpack.c.l.b16 %v2539
        %v2803 = vunpack.c.l.b16 %v2540
        %v2804 = vunpack.c.l.b16 %v2541
        %v2805 = vunpack.c.l.b16 %v2542
        %v2806 = vunpack.c.l.b16 %v2543
        %v2807 = vunpack.c.l.b16 %v2544
        %v2808 = vunpack.c.l.b16 %v2545
        %v2809 = vunpack.c.l.b16 %v2546
        %v2810 = vunpack.c.l.b16 %v2547
        %v2811 = vunpack.c.l.b16 %v2548
        %v2812 = vunpack.c.l.b16 %v2549
        %v2813 = vunpack.c.l.b16 %v2550
        %v2814 = vunpack.c.l.b16 %v2551
        %v2815 = vunpack.c.l.b16 %v2552
        %v2816 = vunpack.c.l.b16 %v2553
        %v2817 = vunpack.c.l.b16 %v2554
        %v2818 = vunpack.c.l.b16 %v2555
        %v2819 = vunpack.c.l.b16 %v2556
        %v2820 = vunpack.c.l.b16 %v2557
        %v2821 = vunpack.c.l.b16 %v2558
        %v2822 = vunpack.c.l.b16 %v2559
        %v2823 = vunpack.c.l.b16 %v2560
        %v2824 = vunpack.c.l.b16 %v2561
        %v2825 = vunpack.c.l.b16 %v2562
        %v2826 = vunpack.c.l.b16 %v2563
        %v2827 = vunpack.c.l.b16 %v2564
        %v2828 = vunpack.c.l.b16 %v2565
        %v2829 = vunpack.c.l.b16 %v2566
        %v2830 = vunpack.c.l.b16 %v2567
        %v2831 = vunpack.c.l.b16 %v2568
        %v2832 = vunpack.c.l.b16 %v2569
        %v2833 = vunpack.c.l.b16 %v2570
        %v2834 = vunpack.c.l.b16 %v2571
        %v2835 = vunpack.c.l.b16 %v2572
        %v2836 = vunpack.c.l.b16 %v2573
        %v2837 = vunpack.c.l.b16 %v2574
        %v2838 = vpack.c.b16 %v2711, %v2710
        %v2839 = vpack.c.b16 %v2713, %v2712
        %v2840 = vpack.c.b16 %v2715, %v2714
        %v2841 = vpack.c.b16 %v2717, %v2716
        %v2842 = vpack.c.b16 %v2719, %v2718
        %v2843 = vpack.c.b16 %v2721, %v2720
        %v2844 = vpack.c.b16 %v2723, %v2722
        %v2845 = vpack.c.b16 %v2725, %v2724
        %v2846 = vpack.c.b16 %v2727, %v2726
        %v2847 = vpack.c.b16 %v2729, %v2728
        %v2848 = vpack.c.b16 %v2731, %v2730
        %v2849 = vpack.c.b16 %v2733, %v2732
        %v2850 = vpack.c.b16 %v2735, %v2734
        %v2851 = vpack.c.b16 %v2737, %v2736
        %v2852 = vpack.c.b16 %v2739, %v2738
        %v2853 = vpack.c.b16 %v2741, %v2740
        %v2854 = vpack.c.b16 %v2743, %v2742
        %v2855 = vpack.c.b16 %v2745, %v2744
        %v2856 = vpack.c.b16 %v2747, %v2746
        %v2857 = vpack.c.b16 %v2749, %v2748
        %v2858 = vpack.c.b16 %v2751, %v2750
        %v2859 = vpack.c.b16 %v2753, %v2752
        %v2860 = vpack.c.b16 %v2755, %v2754
        %v2861 = vpack.c.b16 %v2757, %v2756
        %v2862 = vpack.c.b16 %v2759, %v2758
        %v2863 = vpack.c.b16 %v2761, %v2760
        %v2864 = vpack.c.b16 %v2763, %v2762
        %v2865 = vpack.c.b16 %v2765, %v2764
        %v2866 = vpack.c.b16 %v2767, %v2766
        %v2867 = vpack.c.b16 %v2769, %v2768
        %v2868 = vpack.c.b16 %v2771, %v2770
        %v2869 = vpack.c.b16 %v2773, %v2772
        %v2870 = vpack.c.b16 %v2775, %v2774
        %v2871 = vpack.c.b16 %v2777, %v2776
        %v2872 = vpack.c.b16 %v2779, %v2778
        %v2873 = vpack.c.b16 %v2781, %v2780
        %v2874 = vpack.c.b16 %v2783, %v2782
        %v2875 = vpack.c.b16 %v2785, %v2784
        %v2876 = vpack.c.b16 %v2787, %v2786
        %v2877 = vpack.c.b16 %v2789, %v2788
        %v2878 = vpack.c.b16 %v2791, %v2790
        %v2879 = vpack.c.b16 %v2793, %v2792
        %v2880 = vpack.c.b16 %v2795, %v2794
        %v2881 = vpack.c.b16 %v2797, %v2796
        %v2882 = vpack.c.b16 %v2799, %v2798
        %v2883 = vpack.c.b16 %v2801, %v2800
        %v2884 = vpack.c.b16 %v2803, %v2802
        %v2885 = vpack.c.b16 %v2805, %v2804
        %v2886 = vpack.c.b16 %v2807, %v2806
        %v2887 = vpack.c.b16 %v2809, %v2808
        %v2888 = vpack.c.b16 %v2811, %v2810
        %v2889 = vpack.c.b16 %v2813, %v2812
        %v2890 = vpack.c.b16 %v2815, %v2814
        %v2891 = vpack.c.b16 %v2817, %v2816
        %v2892 = vpack.c.b16 %v2819, %v2818
        %v2893 = vpack.c.b16 %v2821, %v2820
        %v2894 = vpack.c.b16 %v2823, %v2822
        %v2895 = vpack.c.b16 %v2825, %v2824
        %v2896 = vpack.c.b16 %v2827, %v2826
        %v2897 = vpack.c.b16 %v2829, %v2828
        %v2898 = vpack.c.b16 %v2831, %v2830
        %v2899 = vpack.c.b16 %v2833, %v2832
        %v2900 = vpack.c.b16 %v2835, %v2834
        %v2901 = vpack.c.b16 %v2837, %v2836
        %2966 = vmatprep.subr.bf16.mxu0 0
        %2967 = vmatpush1.bf16.msra.mxu0 %v2838
        %2968 = vmatprep.subr.bf16.mxu0 0
        %2969 = vmatpush1.bf16.msra.mxu0 %v2839
        %2970 = vmatprep.subr.bf16.mxu0 0
        %2971 = vmatpush1.bf16.msra.mxu0 %v2840
        %2972 = vmatprep.subr.bf16.mxu0 0
        %2973 = vmatpush1.bf16.msra.mxu0 %v2841
        %2974 = vmatprep.subr.bf16.mxu0 0
        %2975 = vmatpush1.bf16.msra.mxu0 %v2842
        %2976 = vmatprep.subr.bf16.mxu0 0
        %2977 = vmatpush1.bf16.msra.mxu0 %v2843
        %2978 = vmatprep.subr.bf16.mxu0 0
        %2979 = vmatpush1.bf16.msra.mxu0 %v2844
        %2980 = vmatprep.subr.bf16.mxu0 0
        %2981 = vmatpush1.bf16.msra.mxu0 %v2845
        %2982 = vmatprep.subr.bf16.mxu0 0
        %2983 = vmatpush1.bf16.msra.mxu0 %v2846
        %2984 = vmatprep.subr.bf16.mxu0 0
        %2985 = vmatpush1.bf16.msra.mxu0 %v2847
        %2986 = vmatprep.subr.bf16.mxu0 0
        %2987 = vmatpush1.bf16.msra.mxu0 %v2848
        %2988 = vmatprep.subr.bf16.mxu0 0
        %2989 = vmatpush1.bf16.msra.mxu0 %v2849
        %2990 = vmatprep.subr.bf16.mxu0 0
        %2991 = vmatpush1.bf16.msra.mxu0 %v2850
        %2992 = vmatprep.subr.bf16.mxu0 0
        %2993 = vmatpush1.bf16.msra.mxu0 %v2851
        %2994 = vmatprep.subr.bf16.mxu0 0
        %2995 = vmatpush1.bf16.msra.mxu0 %v2852
        %2996 = vmatprep.subr.bf16.mxu0 0
        %2997 = vmatpush1.bf16.msra.mxu0 %v2853
        %2998 = vmatprep.mubr.bf16.mxu0 %v2320
        %2999 = vmatmul.mubr.bf16.gmra.mrb[0].mxu0 %v2319
        %v3000 = vpop.f32.mrb[0].mxu0
        %v3001 = vadd.f32 %v2580, %v3000
        %v3002 = vpop.f32.mrb[0].mxu0
        %v3003 = vpop.f32.mrb[0].mxu0
        %v3004 = vadd.f32 %v2580, %v3003
        %v3005 = vpop.f32.mrb[0].mxu0
        %3006 = vmatprep.mubr.bf16.mxu0 %v2328
        %3007 = vmatmul.mubr.bf16.gmra.mrb[0].mxu0 %v2327
        %v3008 = vpop.f32.mrb[0].mxu0
        %v3009 = vadd.f32 %v2580, %v3008
        %v3010 = vpop.f32.mrb[0].mxu0
        %v3011 = vpop.f32.mrb[0].mxu0
        %v3012 = vadd.f32 %v2580, %v3011
        %v3013 = vpop.f32.mrb[0].mxu0
        %3014 = vmatprep.mubr.bf16.mxu0 %v2336
        %3015 = vmatmul.mubr.bf16.gmra.mrb[0].mxu0 %v2335
        %v3016 = vpop.f32.mrb[0].mxu0
        %v3017 = vadd.f32 %v2580, %v3016
        %v3018 = vpop.f32.mrb[0].mxu0
        %v3019 = vpop.f32.mrb[0].mxu0
        %v3020 = vadd.f32 %v2580, %v3019
        %v3021 = vpop.f32.mrb[0].mxu0
        %3022 = vmatprep.mubr.bf16.mxu0 %v2344
        %3023 = vmatmul.mubr.bf16.gmra.mrb[0].mxu0 %v2343
        %v3024 = vpop.f32.mrb[0].mxu0
        %v3025 = vadd.f32 %v2580, %v3024
        %v3026 = vpop.f32.mrb[0].mxu0
        %v3027 = vpop.f32.mrb[0].mxu0
        %v3028 = vadd.f32 %v2580, %v3027
        %v3029 = vpop.f32.mrb[0].mxu0
        %3030 = vmatprep.mubr.bf16.mxu0 %v2352
        %3031 = vmatmul.mubr.bf16.gmra.mrb[0].mxu0 %v2351
        %v3032 = vpop.f32.mrb[0].mxu0
        %v3033 = vadd.f32 %v2580, %v3032
        %v3034 = vpop.f32.mrb[0].mxu0
        %v3035 = vpop.f32.mrb[0].mxu0
        %v3036 = vadd.f32 %v2580, %v3035
        %v3037 = vpop.f32.mrb[0].mxu0
        %3038 = vmatprep.mubr.bf16.mxu0 %v2360
        %3039 = vmatmul.mubr.bf16.gmra.mrb[0].mxu0 %v2359
        %v3040 = vpop.f32.mrb[0].mxu0
        %v3041 = vadd.f32 %v2580, %v3040
        %v3042 = vpop.f32.mrb[0].mxu0
        %v3043 = vpop.f32.mrb[0].mxu0
        %v3044 = vadd.f32 %v2580, %v3043
        %v3045 = vpop.f32.mrb[0].mxu0
        %3046 = vmatprep.mubr.bf16.mxu0 %v2368
        %3047 = vmatmul.mubr.bf16.gmra.mrb[0].mxu0 %v2367
        %v3048 = vpop.f32.mrb[0].mxu0
        %v3049 = vadd.f32 %v2580, %v3048
        %v3050 = vpop.f32.mrb[0].mxu0
        %v3051 = vpop.f32.mrb[0].mxu0
        %v3052 = vadd.f32 %v2580, %v3051
        %v3053 = vpop.f32.mrb[0].mxu0
        %3054 = vmatprep.mubr.bf16.mxu0 %v2376
        %3055 = vmatmul.mubr.bf16.gmra.mrb[0].mxu0 %v2375
        %v3056 = vpop.f32.mrb[0].mxu0
        %v3057 = vadd.f32 %v2580, %v3056
        %v3058 = vpop.f32.mrb[0].mxu0
        %v3059 = vpop.f32.mrb[0].mxu0
        %v3060 = vadd.f32 %v2580, %v3059
        %v3061 = vpop.f32.mrb[0].mxu0
        %3062 = vmatprep.mubr.bf16.mxu0 %v2384
        %3063 = vmatmul.mubr.bf16.gmra.mrb[0].mxu0 %v2383
        %v3064 = vpop.f32.mrb[0].mxu0
        %v3065 = vadd.f32 %v2580, %v3064
        %v3066 = vpop.f32.mrb[0].mxu0
        %v3067 = vpop.f32.mrb[0].mxu0
        %v3068 = vadd.f32 %v2580, %v3067
        %v3069 = vpop.f32.mrb[0].mxu0
        %3070 = vmatprep.mubr.bf16.mxu0 %v2392
        %3071 = vmatmul.mubr.bf16.gmra.mrb[0].mxu0 %v2391
        %v3072 = vpop.f32.mrb[0].mxu0
        %v3073 = vadd.f32 %v2580, %v3072
        %v3074 = vpop.f32.mrb[0].mxu0
        %v3075 = vpop.f32.mrb[0].mxu0
        %v3076 = vadd.f32 %v2580, %v3075
        %v3077 = vpop.f32.mrb[0].mxu0
        %3078 = vmatprep.mubr.bf16.mxu0 %v2400
        %3079 = vmatmul.mubr.bf16.gmra.mrb[0].mxu0 %v2399
        %v3080 = vpop.f32.mrb[0].mxu0
        %v3081 = vadd.f32 %v2580, %v3080
        %v3082 = vpop.f32.mrb[0].mxu0
        %v3083 = vpop.f32.mrb[0].mxu0
        %v3084 = vadd.f32 %v2580, %v3083
        %v3085 = vpop.f32.mrb[0].mxu0
        %3086 = vmatprep.mubr.bf16.mxu0 %v2408
        %3087 = vmatmul.mubr.bf16.gmra.mrb[0].mxu0 %v2407
        %v3088 = vpop.f32.mrb[0].mxu0
        %v3089 = vadd.f32 %v2580, %v3088
        %v3090 = vpop.f32.mrb[0].mxu0
        %v3091 = vpop.f32.mrb[0].mxu0
        %v3092 = vadd.f32 %v2580, %v3091
        %v3093 = vpop.f32.mrb[0].mxu0
        %3094 = vmatprep.mubr.bf16.mxu0 %v2416
        %3095 = vmatmul.mubr.bf16.gmra.mrb[0].mxu0 %v2415
        %v3096 = vpop.f32.mrb[0].mxu0
        %v3097 = vadd.f32 %v2580, %v3096
        %v3098 = vpop.f32.mrb[0].mxu0
        %v3099 = vpop.f32.mrb[0].mxu0
        %v3100 = vadd.f32 %v2580, %v3099
        %v3101 = vpop.f32.mrb[0].mxu0
        %3102 = vmatprep.mubr.bf16.mxu0 %v2424
        %3103 = vmatmul.mubr.bf16.gmra.mrb[0].mxu0 %v2423
        %v3104 = vpop.f32.mrb[0].mxu0
        %v3105 = vadd.f32 %v2580, %v3104
        %v3106 = vpop.f32.mrb[0].mxu0
        %v3107 = vpop.f32.mrb[0].mxu0
        %v3108 = vadd.f32 %v2580, %v3107
        %v3109 = vpop.f32.mrb[0].mxu0
        %3110 = vmatprep.mubr.bf16.mxu0 %v2432
        %3111 = vmatmul.mubr.bf16.gmra.mrb[0].mxu0 %v2431
        %v3112 = vpop.f32.mrb[0].mxu0
        %v3113 = vadd.f32 %v2580, %v3112
        %v3114 = vpop.f32.mrb[0].mxu0
        %v3115 = vpop.f32.mrb[0].mxu0
        %v3116 = vadd.f32 %v2580, %v3115
        %v3117 = vpop.f32.mrb[0].mxu0
        %3118 = vmatprep.mubr.bf16.mxu0 %v2440
        %3119 = vmatmul.mubr.bf16.gmra.mrb[0].mxu0 %v2439
        %v3120 = vpop.f32.mrb[0].mxu0
        %v3121 = vadd.f32 %v2580, %v3120
        %v3122 = vpop.f32.mrb[0].mxu0
        %v3123 = vpop.f32.mrb[0].mxu0
        %v3124 = vadd.f32 %v2580, %v3123
        %v3125 = vpop.f32.mrb[0].mxu0
        %3126 = vdwg.mxu0
        %3127 = vmatprep.subr.bf16.mxu0 0
        %3128 = vmatpush1.bf16.msra.mxu0 %v2854
        %3129 = vmatprep.subr.bf16.mxu0 0
        %3130 = vmatpush1.bf16.msra.mxu0 %v2855
        %3131 = vmatprep.subr.bf16.mxu0 0
        %3132 = vmatpush1.bf16.msra.mxu0 %v2856
        %3133 = vmatprep.subr.bf16.mxu0 0
        %3134 = vmatpush1.bf16.msra.mxu0 %v2857
        %3135 = vmatprep.subr.bf16.mxu0 0
        %3136 = vmatpush1.bf16.msra.mxu0 %v2858
        %3137 = vmatprep.subr.bf16.mxu0 0
        %3138 = vmatpush1.bf16.msra.mxu0 %v2859
        %3139 = vmatprep.subr.bf16.mxu0 0
        %3140 = vmatpush1.bf16.msra.mxu0 %v2860
        %3141 = vmatprep.subr.bf16.mxu0 0
        %3142 = vmatpush1.bf16.msra.mxu0 %v2861
        %3143 = vmatprep.subr.bf16.mxu0 0
        %3144 = vmatpush1.bf16.msra.mxu0 %v2862
        %3145 = vmatprep.subr.bf16.mxu0 0
        %3146 = vmatpush1.bf16.msra.mxu0 %v2863
        %3147 = vmatprep.subr.bf16.mxu0 0
        %3148 = vmatpush1.bf16.msra.mxu0 %v2864
        %3149 = vmatprep.subr.bf16.mxu0 0
        %3150 = vmatpush1.bf16.msra.mxu0 %v2865
        %3151 = vmatprep.subr.bf16.mxu0 0
        %3152 = vmatpush1.bf16.msra.mxu0 %v2866
        %3153 = vmatprep.subr.bf16.mxu0 0
        %3154 = vmatpush1.bf16.msra.mxu0 %v2867
        %3155 = vmatprep.subr.bf16.mxu0 0
        %3156 = vmatpush1.bf16.msra.mxu0 %v2868
        %3157 = vmatprep.subr.bf16.mxu0 0
        %3158 = vmatpush1.bf16.msra.mxu0 %v2869
        %3159 = vmatprep.mubr.bf16.mxu0 %v2322
        %3160 = vmatmul.mubr.bf16.gmra.mrb[0].mxu0 %v2321
        %v3161 = vpop.f32.mrb[0].mxu0
        %v3162 = vadd.f32 %v3001, %v3161
        %v3163 = vpop.f32.mrb[0].mxu0
        %v3164 = vpop.f32.mrb[0].mxu0
        %v3165 = vadd.f32 %v3004, %v3164
        %v3166 = vpop.f32.mrb[0].mxu0
        %3167 = vmatprep.mubr.bf16.mxu0 %v2330
        %3168 = vmatmul.mubr.bf16.gmra.mrb[0].mxu0 %v2329
        %v3169 = vpop.f32.mrb[0].mxu0
        %v3170 = vadd.f32 %v3009, %v3169
        %v3171 = vpop.f32.mrb[0].mxu0
        %v3172 = vpop.f32.mrb[0].mxu0
        %v3173 = vadd.f32 %v3012, %v3172
        %v3174 = vpop.f32.mrb[0].mxu0
        %3175 = vmatprep.mubr.bf16.mxu0 %v2338
        %3176 = vmatmul.mubr.bf16.gmra.mrb[0].mxu0 %v2337
        %v3177 = vpop.f32.mrb[0].mxu0
        %v3178 = vadd.f32 %v3017, %v3177
        %v3179 = vpop.f32.mrb[0].mxu0
        %v3180 = vpop.f32.mrb[0].mxu0
        %v3181 = vadd.f32 %v3020, %v3180
        %v3182 = vpop.f32.mrb[0].mxu0
        %3183 = vmatprep.mubr.bf16.mxu0 %v2346
        %3184 = vmatmul.mubr.bf16.gmra.mrb[0].mxu0 %v2345
        %v3185 = vpop.f32.mrb[0].mxu0
        %v3186 = vadd.f32 %v3025, %v3185
        %v3187 = vpop.f32.mrb[0].mxu0
        %v3188 = vpop.f32.mrb[0].mxu0
        %v3189 = vadd.f32 %v3028, %v3188
        %v3190 = vpop.f32.mrb[0].mxu0
        %3191 = vmatprep.mubr.bf16.mxu0 %v2354
        %3192 = vmatmul.mubr.bf16.gmra.mrb[0].mxu0 %v2353
        %v3193 = vpop.f32.mrb[0].mxu0
        %v3194 = vadd.f32 %v3033, %v3193
        %v3195 = vpop.f32.mrb[0].mxu0
        %v3196 = vpop.f32.mrb[0].mxu0
        %v3197 = vadd.f32 %v3036, %v3196
        %v3198 = vpop.f32.mrb[0].mxu0
        %3199 = vmatprep.mubr.bf16.mxu0 %v2362
        %3200 = vmatmul.mubr.bf16.gmra.mrb[0].mxu0 %v2361
        %v3201 = vpop.f32.mrb[0].mxu0
        %v3202 = vadd.f32 %v3041, %v3201
        %v3203 = vpop.f32.mrb[0].mxu0
        %v3204 = vpop.f32.mrb[0].mxu0
        %v3205 = vadd.f32 %v3044, %v3204
        %v3206 = vpop.f32.mrb[0].mxu0
        %3207 = vmatprep.mubr.bf16.mxu0 %v2370
        %3208 = vmatmul.mubr.bf16.gmra.mrb[0].mxu0 %v2369
        %v3209 = vpop.f32.mrb[0].mxu0
        %v3210 = vadd.f32 %v3049, %v3209
        %v3211 = vpop.f32.mrb[0].mxu0
        %v3212 = vpop.f32.mrb[0].mxu0
        %v3213 = vadd.f32 %v3052, %v3212
        %v3214 = vpop.f32.mrb[0].mxu0
        %3215 = vmatprep.mubr.bf16.mxu0 %v2378
        %3216 = vmatmul.mubr.bf16.gmra.mrb[0].mxu0 %v2377
        %v3217 = vpop.f32.mrb[0].mxu0
        %v3218 = vadd.f32 %v3057, %v3217
        %v3219 = vpop.f32.mrb[0].mxu0
        %v3220 = vpop.f32.mrb[0].mxu0
        %v3221 = vadd.f32 %v3060, %v3220
        %v3222 = vpop.f32.mrb[0].mxu0
        %3223 = vmatprep.mubr.bf16.mxu0 %v2386
        %3224 = vmatmul.mubr.bf16.gmra.mrb[0].mxu0 %v2385
        %v3225 = vpop.f32.mrb[0].mxu0
        %v3226 = vadd.f32 %v3065, %v3225
        %v3227 = vpop.f32.mrb[0].mxu0
        %v3228 = vpop.f32.mrb[0].mxu0
        %v3229 = vadd.f32 %v3068, %v3228
        %v3230 = vpop.f32.mrb[0].mxu0
        %3231 = vmatprep.mubr.bf16.mxu0 %v2394
        %3232 = vmatmul.mubr.bf16.gmra.mrb[0].mxu0 %v2393
        %v3233 = vpop.f32.mrb[0].mxu0
        %v3234 = vadd.f32 %v3073, %v3233
        %v3235 = vpop.f32.mrb[0].mxu0
        %v3236 = vpop.f32.mrb[0].mxu0
        %v3237 = vadd.f32 %v3076, %v3236
        %v3238 = vpop.f32.mrb[0].mxu0
        %3239 = vmatprep.mubr.bf16.mxu0 %v2402
        %3240 = vmatmul.mubr.bf16.gmra.mrb[0].mxu0 %v2401
        %v3241 = vpop.f32.mrb[0].mxu0
        %v3242 = vadd.f32 %v3081, %v3241
        %v3243 = vpop.f32.mrb[0].mxu0
        %v3244 = vpop.f32.mrb[0].mxu0
        %v3245 = vadd.f32 %v3084, %v3244
        %v3246 = vpop.f32.mrb[0].mxu0
        %3247 = vmatprep.mubr.bf16.mxu0 %v2410
        %3248 = vmatmul.mubr.bf16.gmra.mrb[0].mxu0 %v2409
        %v3249 = vpop.f32.mrb[0].mxu0
        %v3250 = vadd.f32 %v3089, %v3249
        %v3251 = vpop.f32.mrb[0].mxu0
        %v3252 = vpop.f32.mrb[0].mxu0
        %v3253 = vadd.f32 %v3092, %v3252
        %v3254 = vpop.f32.mrb[0].mxu0
        %3255 = vmatprep.mubr.bf16.mxu0 %v2418
        %3256 = vmatmul.mubr.bf16.gmra.mrb[0].mxu0 %v2417
        %v3257 = vpop.f32.mrb[0].mxu0
        %v3258 = vadd.f32 %v3097, %v3257
        %v3259 = vpop.f32.mrb[0].mxu0
        %v3260 = vpop.f32.mrb[0].mxu0
        %v3261 = vadd.f32 %v3100, %v3260
        %v3262 = vpop.f32.mrb[0].mxu0
        %3263 = vmatprep.mubr.bf16.mxu0 %v2426
        %3264 = vmatmul.mubr.bf16.gmra.mrb[0].mxu0 %v2425
        %v3265 = vpop.f32.mrb[0].mxu0
        %v3266 = vadd.f32 %v3105, %v3265
        %v3267 = vpop.f32.mrb[0].mxu0
        %v3268 = vpop.f32.mrb[0].mxu0
        %v3269 = vadd.f32 %v3108, %v3268
        %v3270 = vpop.f32.mrb[0].mxu0
        %3271 = vmatprep.mubr.bf16.mxu0 %v2434
        %3272 = vmatmul.mubr.bf16.gmra.mrb[0].mxu0 %v2433
        %v3273 = vpop.f32.mrb[0].mxu0
        %v3274 = vadd.f32 %v3113, %v3273
        %v3275 = vpop.f32.mrb[0].mxu0
        %v3276 = vpop.f32.mrb[0].mxu0
        %v3277 = vadd.f32 %v3116, %v3276
        %v3278 = vpop.f32.mrb[0].mxu0
        %3279 = vmatprep.mubr.bf16.mxu0 %v2442
        %3280 = vmatmul.mubr.bf16.gmra.mrb[0].mxu0 %v2441
        %v3281 = vpop.f32.mrb[0].mxu0
        %v3282 = vadd.f32 %v3121, %v3281
        %v3283 = vpop.f32.mrb[0].mxu0
        %v3284 = vpop.f32.mrb[0].mxu0
        %v3285 = vadd.f32 %v3124, %v3284
        %v3286 = vpop.f32.mrb[0].mxu0
        %3287 = vdwg.mxu0
        %3288 = vmatprep.subr.bf16.mxu0 0
        %3289 = vmatpush1.bf16.msra.mxu0 %v2870
        %3290 = vmatprep.subr.bf16.mxu0 0
        %3291 = vmatpush1.bf16.msra.mxu0 %v2871
        %3292 = vmatprep.subr.bf16.mxu0 0
        %3293 = vmatpush1.bf16.msra.mxu0 %v2872
        %3294 = vmatprep.subr.bf16.mxu0 0
        %3295 = vmatpush1.bf16.msra.mxu0 %v2873
        %3296 = vmatprep.subr.bf16.mxu0 0
        %3297 = vmatpush1.bf16.msra.mxu0 %v2874
        %3298 = vmatprep.subr.bf16.mxu0 0
        %3299 = vmatpush1.bf16.msra.mxu0 %v2875
        %3300 = vmatprep.subr.bf16.mxu0 0
        %3301 = vmatpush1.bf16.msra.mxu0 %v2876
        %3302 = vmatprep.subr.bf16.mxu0 0
        %3303 = vmatpush1.bf16.msra.mxu0 %v2877
        %3304 = vmatprep.subr.bf16.mxu0 0
        %3305 = vmatpush1.bf16.msra.mxu0 %v2878
        %3306 = vmatprep.subr.bf16.mxu0 0
        %3307 = vmatpush1.bf16.msra.mxu0 %v2879
        %3308 = vmatprep.subr.bf16.mxu0 0
        %3309 = vmatpush1.bf16.msra.mxu0 %v2880
        %3310 = vmatprep.subr.bf16.mxu0 0
        %3311 = vmatpush1.bf16.msra.mxu0 %v2881
        %3312 = vmatprep.subr.bf16.mxu0 0
        %3313 = vmatpush1.bf16.msra.mxu0 %v2882
        %3314 = vmatprep.subr.bf16.mxu0 0
        %3315 = vmatpush1.bf16.msra.mxu0 %v2883
        %3316 = vmatprep.subr.bf16.mxu0 0
        %3317 = vmatpush1.bf16.msra.mxu0 %v2884
        %3318 = vmatprep.subr.bf16.mxu0 0
        %3319 = vmatpush1.bf16.msra.mxu0 %v2885
        %3320 = vmatprep.mubr.bf16.mxu0 %v2324
        %3321 = vmatmul.mubr.bf16.gmra.mrb[0].mxu0 %v2323
        %v3322 = vpop.f32.mrb[0].mxu0
        %v3323 = vadd.f32 %v3162, %v3322
        %v3324 = vpop.f32.mrb[0].mxu0
        %v3325 = vpop.f32.mrb[0].mxu0
        %v3326 = vadd.f32 %v3165, %v3325
        %v3327 = vpop.f32.mrb[0].mxu0
        %3328 = vmatprep.mubr.bf16.mxu0 %v2332
        %3329 = vmatmul.mubr.bf16.gmra.mrb[0].mxu0 %v2331
        %v3330 = vpop.f32.mrb[0].mxu0
        %v3331 = vadd.f32 %v3170, %v3330
        %v3332 = vpop.f32.mrb[0].mxu0
        %v3333 = vpop.f32.mrb[0].mxu0
        %v3334 = vadd.f32 %v3173, %v3333
        %v3335 = vpop.f32.mrb[0].mxu0
        %3336 = vmatprep.mubr.bf16.mxu0 %v2340
        %3337 = vmatmul.mubr.bf16.gmra.mrb[0].mxu0 %v2339
        %v3338 = vpop.f32.mrb[0].mxu0
        %v3339 = vadd.f32 %v3178, %v3338
        %v3340 = vpop.f32.mrb[0].mxu0
        %v3341 = vpop.f32.mrb[0].mxu0
        %v3342 = vadd.f32 %v3181, %v3341
        %v3343 = vpop.f32.mrb[0].mxu0
        %3344 = vmatprep.mubr.bf16.mxu0 %v2348
        %3345 = vmatmul.mubr.bf16.gmra.mrb[0].mxu0 %v2347
        %v3346 = vpop.f32.mrb[0].mxu0
        %v3347 = vadd.f32 %v3186, %v3346
        %v3348 = vpop.f32.mrb[0].mxu0
        %v3349 = vpop.f32.mrb[0].mxu0
        %v3350 = vadd.f32 %v3189, %v3349
        %v3351 = vpop.f32.mrb[0].mxu0
        %3352 = vmatprep.mubr.bf16.mxu0 %v2356
        %3353 = vmatmul.mubr.bf16.gmra.mrb[0].mxu0 %v2355
        %v3354 = vpop.f32.mrb[0].mxu0
        %v3355 = vadd.f32 %v3194, %v3354
        %v3356 = vpop.f32.mrb[0].mxu0
        %v3357 = vpop.f32.mrb[0].mxu0
        %v3358 = vadd.f32 %v3197, %v3357
        %v3359 = vpop.f32.mrb[0].mxu0
        %3360 = vmatprep.mubr.bf16.mxu0 %v2364
        %3361 = vmatmul.mubr.bf16.gmra.mrb[0].mxu0 %v2363
        %v3362 = vpop.f32.mrb[0].mxu0
        %v3363 = vadd.f32 %v3202, %v3362
        %v3364 = vpop.f32.mrb[0].mxu0
        %v3365 = vpop.f32.mrb[0].mxu0
        %v3366 = vadd.f32 %v3205, %v3365
        %v3367 = vpop.f32.mrb[0].mxu0
        %3368 = vmatprep.mubr.bf16.mxu0 %v2372
        %3369 = vmatmul.mubr.bf16.gmra.mrb[0].mxu0 %v2371
        %v3370 = vpop.f32.mrb[0].mxu0
        %v3371 = vadd.f32 %v3210, %v3370
        %v3372 = vpop.f32.mrb[0].mxu0
        %v3373 = vpop.f32.mrb[0].mxu0
        %v3374 = vadd.f32 %v3213, %v3373
        %v3375 = vpop.f32.mrb[0].mxu0
        %3376 = vmatprep.mubr.bf16.mxu0 %v2380
        %3377 = vmatmul.mubr.bf16.gmra.mrb[0].mxu0 %v2379
        %v3378 = vpop.f32.mrb[0].mxu0
        %v3379 = vadd.f32 %v3218, %v3378
        %v3380 = vpop.f32.mrb[0].mxu0
        %v3381 = vpop.f32.mrb[0].mxu0
        %v3382 = vadd.f32 %v3221, %v3381
        %v3383 = vpop.f32.mrb[0].mxu0
        %3384 = vmatprep.mubr.bf16.mxu0 %v2388
        %3385 = vmatmul.mubr.bf16.gmra.mrb[0].mxu0 %v2387
        %v3386 = vpop.f32.mrb[0].mxu0
        %v3387 = vadd.f32 %v3226, %v3386
        %v3388 = vpop.f32.mrb[0].mxu0
        %v3389 = vpop.f32.mrb[0].mxu0
        %v3390 = vadd.f32 %v3229, %v3389
        %v3391 = vpop.f32.mrb[0].mxu0
        %3392 = vmatprep.mubr.bf16.mxu0 %v2396
        %3393 = vmatmul.mubr.bf16.gmra.mrb[0].mxu0 %v2395
        %v3394 = vpop.f32.mrb[0].mxu0
        %v3395 = vadd.f32 %v3234, %v3394
        %v3396 = vpop.f32.mrb[0].mxu0
        %v3397 = vpop.f32.mrb[0].mxu0
        %v3398 = vadd.f32 %v3237, %v3397
        %v3399 = vpop.f32.mrb[0].mxu0
        %3400 = vmatprep.mubr.bf16.mxu0 %v2404
        %3401 = vmatmul.mubr.bf16.gmra.mrb[0].mxu0 %v2403
        %v3402 = vpop.f32.mrb[0].mxu0
        %v3403 = vadd.f32 %v3242, %v3402
        %v3404 = vpop.f32.mrb[0].mxu0
        %v3405 = vpop.f32.mrb[0].mxu0
        %v3406 = vadd.f32 %v3245, %v3405
        %v3407 = vpop.f32.mrb[0].mxu0
        %3408 = vmatprep.mubr.bf16.mxu0 %v2412
        %3409 = vmatmul.mubr.bf16.gmra.mrb[0].mxu0 %v2411
        %v3410 = vpop.f32.mrb[0].mxu0
        %v3411 = vadd.f32 %v3250, %v3410
        %v3412 = vpop.f32.mrb[0].mxu0
        %v3413 = vpop.f32.mrb[0].mxu0
        %v3414 = vadd.f32 %v3253, %v3413
        %v3415 = vpop.f32.mrb[0].mxu0
        %3416 = vmatprep.mubr.bf16.mxu0 %v2420
        %3417 = vmatmul.mubr.bf16.gmra.mrb[0].mxu0 %v2419
        %v3418 = vpop.f32.mrb[0].mxu0
        %v3419 = vadd.f32 %v3258, %v3418
        %v3420 = vpop.f32.mrb[0].mxu0
        %v3421 = vpop.f32.mrb[0].mxu0
        %v3422 = vadd.f32 %v3261, %v3421
        %v3423 = vpop.f32.mrb[0].mxu0
        %3424 = vmatprep.mubr.bf16.mxu0 %v2428
        %3425 = vmatmul.mubr.bf16.gmra.mrb[0].mxu0 %v2427
        %v3426 = vpop.f32.mrb[0].mxu0
        %v3427 = vadd.f32 %v3266, %v3426
        %v3428 = vpop.f32.mrb[0].mxu0
        %v3429 = vpop.f32.mrb[0].mxu0
        %v3430 = vadd.f32 %v3269, %v3429
        %v3431 = vpop.f32.mrb[0].mxu0
        %3432 = vmatprep.mubr.bf16.mxu0 %v2436
        %3433 = vmatmul.mubr.bf16.gmra.mrb[0].mxu0 %v2435
        %v3434 = vpop.f32.mrb[0].mxu0
        %v3435 = vadd.f32 %v3274, %v3434
        %v3436 = vpop.f32.mrb[0].mxu0
        %v3437 = vpop.f32.mrb[0].mxu0
        %v3438 = vadd.f32 %v3277, %v3437
        %v3439 = vpop.f32.mrb[0].mxu0
        %3440 = vmatprep.mubr.bf16.mxu0 %v2444
        %3441 = vmatmul.mubr.bf16.gmra.mrb[0].mxu0 %v2443
        %v3442 = vpop.f32.mrb[0].mxu0
        %v3443 = vadd.f32 %v3282, %v3442
        %v3444 = vpop.f32.mrb[0].mxu0
        %v3445 = vpop.f32.mrb[0].mxu0
        %v3446 = vadd.f32 %v3285, %v3445
        %v3447 = vpop.f32.mrb[0].mxu0
        %3448 = vdwg.mxu0
        %3449 = vmatprep.subr.bf16.mxu0 0
        %3450 = vmatpush1.bf16.msra.mxu0 %v2886
        %3451 = vmatprep.subr.bf16.mxu0 0
        %3452 = vmatpush1.bf16.msra.mxu0 %v2887
        %3453 = vmatprep.subr.bf16.mxu0 0
        %3454 = vmatpush1.bf16.msra.mxu0 %v2888
        %3455 = vmatprep.subr.bf16.mxu0 0
        %3456 = vmatpush1.bf16.msra.mxu0 %v2889
        %3457 = vmatprep.subr.bf16.mxu0 0
        %3458 = vmatpush1.bf16.msra.mxu0 %v2890
        %3459 = vmatprep.subr.bf16.mxu0 0
        %3460 = vmatpush1.bf16.msra.mxu0 %v2891
        %3461 = vmatprep.subr.bf16.mxu0 0
        %3462 = vmatpush1.bf16.msra.mxu0 %v2892
        %3463 = vmatprep.subr.bf16.mxu0 0
        %3464 = vmatpush1.bf16.msra.mxu0 %v2893
        %3465 = vmatprep.subr.bf16.mxu0 0
        %3466 = vmatpush1.bf16.msra.mxu0 %v2894
        %3467 = vmatprep.subr.bf16.mxu0 0
        %3468 = vmatpush1.bf16.msra.mxu0 %v2895
        %3469 = vmatprep.subr.bf16.mxu0 0
        %3470 = vmatpush1.bf16.msra.mxu0 %v2896
        %3471 = vmatprep.subr.bf16.mxu0 0
        %3472 = vmatpush1.bf16.msra.mxu0 %v2897
        %3473 = vmatprep.subr.bf16.mxu0 0
        %3474 = vmatpush1.bf16.msra.mxu0 %v2898
        %3475 = vmatprep.subr.bf16.mxu0 0
        %3476 = vmatpush1.bf16.msra.mxu0 %v2899
        %3477 = vmatprep.subr.bf16.mxu0 0
        %3478 = vmatpush1.bf16.msra.mxu0 %v2900
        %3479 = vmatprep.subr.bf16.mxu0 0
        %3480 = vmatpush1.bf16.msra.mxu0 %v2901
        %3481 = vmatprep.mubr.bf16.mxu0 %v2326
        %3482 = vmatmul.mubr.bf16.gmra.mrb[0].mxu0 %v2325
        %v3483 = vpop.f32.mrb[0].mxu0
        %v3484 = vadd.f32 %v3323, %v3483
        %v3485 = vpop.f32.mrb[0].mxu0
        %v3486 = vpop.f32.mrb[0].mxu0
        %v3487 = vadd.f32 %v3326, %v3486
        %v3488 = vpop.f32.mrb[0].mxu0
        %3489 = vmatprep.mubr.bf16.mxu0 %v2334
        %3490 = vmatmul.mubr.bf16.gmra.mrb[0].mxu0 %v2333
        %v3491 = vpop.f32.mrb[0].mxu0
        %v3492 = vadd.f32 %v3331, %v3491
        %v3493 = vpop.f32.mrb[0].mxu0
        %v3494 = vpop.f32.mrb[0].mxu0
        %v3495 = vadd.f32 %v3334, %v3494
        %v3496 = vpop.f32.mrb[0].mxu0
        %3497 = vmatprep.mubr.bf16.mxu0 %v2342
        %3498 = vmatmul.mubr.bf16.gmra.mrb[0].mxu0 %v2341
        %v3499 = vpop.f32.mrb[0].mxu0
        %v3500 = vadd.f32 %v3339, %v3499
        %v3501 = vpop.f32.mrb[0].mxu0
        %v3502 = vpop.f32.mrb[0].mxu0
        %v3503 = vadd.f32 %v3342, %v3502
        %v3504 = vpop.f32.mrb[0].mxu0
        %3505 = vmatprep.mubr.bf16.mxu0 %v2350
        %3506 = vmatmul.mubr.bf16.gmra.mrb[0].mxu0 %v2349
        %v3507 = vpop.f32.mrb[0].mxu0
        %v3508 = vadd.f32 %v3347, %v3507
        %v3509 = vpop.f32.mrb[0].mxu0
        %v3510 = vpop.f32.mrb[0].mxu0
        %v3511 = vadd.f32 %v3350, %v3510
        %v3512 = vpop.f32.mrb[0].mxu0
        %3513 = vmatprep.mubr.bf16.mxu0 %v2358
        %3514 = vmatmul.mubr.bf16.gmra.mrb[0].mxu0 %v2357
        %v3515 = vpop.f32.mrb[0].mxu0
        %v3516 = vadd.f32 %v3355, %v3515
        %v3517 = vpop.f32.mrb[0].mxu0
        %v3518 = vpop.f32.mrb[0].mxu0
        %v3519 = vadd.f32 %v3358, %v3518
        %v3520 = vpop.f32.mrb[0].mxu0
        %3521 = vmatprep.mubr.bf16.mxu0 %v2366
        %3522 = vmatmul.mubr.bf16.gmra.mrb[0].mxu0 %v2365
        %v3523 = vpop.f32.mrb[0].mxu0
        %v3524 = vadd.f32 %v3363, %v3523
        %v3525 = vpop.f32.mrb[0].mxu0
        %v3526 = vpop.f32.mrb[0].mxu0
        %v3527 = vadd.f32 %v3366, %v3526
        %v3528 = vpop.f32.mrb[0].mxu0
        %3529 = vmatprep.mubr.bf16.mxu0 %v2374
        %3530 = vmatmul.mubr.bf16.gmra.mrb[0].mxu0 %v2373
        %v3531 = vpop.f32.mrb[0].mxu0
        %v3532 = vadd.f32 %v3371, %v3531
        %v3533 = vpop.f32.mrb[0].mxu0
        %v3534 = vpop.f32.mrb[0].mxu0
        %v3535 = vadd.f32 %v3374, %v3534
        %v3536 = vpop.f32.mrb[0].mxu0
        %3537 = vmatprep.mubr.bf16.mxu0 %v2382
        %3538 = vmatmul.mubr.bf16.gmra.mrb[0].mxu0 %v2381
        %v3539 = vpop.f32.mrb[0].mxu0
        %v3540 = vadd.f32 %v3379, %v3539
        %v3541 = vpop.f32.mrb[0].mxu0
        %v3542 = vpop.f32.mrb[0].mxu0
        %v3543 = vadd.f32 %v3382, %v3542
        %v3544 = vpop.f32.mrb[0].mxu0
        %3545 = vmatprep.mubr.bf16.mxu0 %v2390
        %3546 = vmatmul.mubr.bf16.gmra.mrb[0].mxu0 %v2389
        %v3547 = vpop.f32.mrb[0].mxu0
        %v3548 = vadd.f32 %v3387, %v3547
        %v3549 = vpop.f32.mrb[0].mxu0
        %v3550 = vpop.f32.mrb[0].mxu0
        %v3551 = vadd.f32 %v3390, %v3550
        %v3552 = vpop.f32.mrb[0].mxu0
        %3553 = vmatprep.mubr.bf16.mxu0 %v2398
        %3554 = vmatmul.mubr.bf16.gmra.mrb[0].mxu0 %v2397
        %v3555 = vpop.f32.mrb[0].mxu0
        %v3556 = vadd.f32 %v3395, %v3555
        %v3557 = vpop.f32.mrb[0].mxu0
        %v3558 = vpop.f32.mrb[0].mxu0
        %v3559 = vadd.f32 %v3398, %v3558
        %v3560 = vpop.f32.mrb[0].mxu0
        %3561 = vmatprep.mubr.bf16.mxu0 %v2406
        %3562 = vmatmul.mubr.bf16.gmra.mrb[0].mxu0 %v2405
        %v3563 = vpop.f32.mrb[0].mxu0
        %v3564 = vadd.f32 %v3403, %v3563
        %v3565 = vpop.f32.mrb[0].mxu0
        %v3566 = vpop.f32.mrb[0].mxu0
        %v3567 = vadd.f32 %v3406, %v3566
        %v3568 = vpop.f32.mrb[0].mxu0
        %3569 = vmatprep.mubr.bf16.mxu0 %v2414
        %3570 = vmatmul.mubr.bf16.gmra.mrb[0].mxu0 %v2413
        %v3571 = vpop.f32.mrb[0].mxu0
        %v3572 = vadd.f32 %v3411, %v3571
        %v3573 = vpop.f32.mrb[0].mxu0
        %v3574 = vpop.f32.mrb[0].mxu0
        %v3575 = vadd.f32 %v3414, %v3574
        %v3576 = vpop.f32.mrb[0].mxu0
        %3577 = vmatprep.mubr.bf16.mxu0 %v2422
        %3578 = vmatmul.mubr.bf16.gmra.mrb[0].mxu0 %v2421
        %v3579 = vpop.f32.mrb[0].mxu0
        %v3580 = vadd.f32 %v3419, %v3579
        %v3581 = vpop.f32.mrb[0].mxu0
        %v3582 = vpop.f32.mrb[0].mxu0
        %v3583 = vadd.f32 %v3422, %v3582
        %v3584 = vpop.f32.mrb[0].mxu0
        %3585 = vmatprep.mubr.bf16.mxu0 %v2430
        %3586 = vmatmul.mubr.bf16.gmra.mrb[0].mxu0 %v2429
        %v3587 = vpop.f32.mrb[0].mxu0
        %v3588 = vadd.f32 %v3427, %v3587
        %v3589 = vpop.f32.mrb[0].mxu0
        %v3590 = vpop.f32.mrb[0].mxu0
        %v3591 = vadd.f32 %v3430, %v3590
        %v3592 = vpop.f32.mrb[0].mxu0
        %3593 = vmatprep.mubr.bf16.mxu0 %v2438
        %3594 = vmatmul.mubr.bf16.gmra.mrb[0].mxu0 %v2437
        %v3595 = vpop.f32.mrb[0].mxu0
        %v3596 = vadd.f32 %v3435, %v3595
        %v3597 = vpop.f32.mrb[0].mxu0
        %v3598 = vpop.f32.mrb[0].mxu0
        %v3599 = vadd.f32 %v3438, %v3598
        %v3600 = vpop.f32.mrb[0].mxu0
        %3601 = vmatprep.mubr.bf16.mxu0 %v2446
        %3602 = vmatmul.mubr.bf16.gmra.mrb[0].mxu0 %v2445
        %v3603 = vpop.f32.mrb[0].mxu0
        %v3604 = vadd.f32 %v3443, %v3603
        %v3605 = vpop.f32.mrb[0].mxu0
        %v3606 = vpop.f32.mrb[0].mxu0
        %v3607 = vadd.f32 %v3446, %v3606
        %v3608 = vpop.f32.mrb[0].mxu0
        %3609 = vdwg.mxu0
        %3610 = vst [vmem:[%s285] sm:$0xff] %v3484
        %3611 = vst [vmem:[%s285 + $0x8] sm:$0xff] %v3487
        %3612 = vst [vmem:[%s285 + $0x10] sm:$0xff] %v3492
        %3613 = vst [vmem:[%s285 + $0x18] sm:$0xff] %v3495
        %3614 = vst [vmem:[%s285 + $0x20] sm:$0xff] %v3500
        %3615 = vst [vmem:[%s285 + $0x28] sm:$0xff] %v3503
        %3616 = vst [vmem:[%s285 + $0x30] sm:$0xff] %v3508
        %3617 = vst [vmem:[%s285 + $0x38] sm:$0xff] %v3511
        %3618 = vst [vmem:[%s285 + $0x40] sm:$0xff] %v3516
        %3619 = vst [vmem:[%s285 + $0x48] sm:$0xff] %v3519
        %3620 = vst [vmem:[%s285 + $0x50] sm:$0xff] %v3524
        %3621 = vst [vmem:[%s285 + $0x58] sm:$0xff] %v3527
        %3622 = vst [vmem:[%s285 + $0x60] sm:$0xff] %v3532
        %3623 = vst [vmem:[%s285 + $0x68] sm:$0xff] %v3535
        %3624 = vst [vmem:[%s285 + $0x70] sm:$0xff] %v3540
        %3625 = vst [vmem:[%s285 + $0x78] sm:$0xff] %v3543
        %3626 = vst [vmem:[%s285 + $0x80] sm:$0xff] %v3548
        %3627 = vst [vmem:[%s285 + $0x88] sm:$0xff] %v3551
        %3628 = vst [vmem:[%s285 + $0x90] sm:$0xff] %v3556
        %3629 = vst [vmem:[%s285 + $0x98] sm:$0xff] %v3559
        %3630 = vst [vmem:[%s285 + $0xa0] sm:$0xff] %v3564
        %3631 = vst [vmem:[%s285 + $0xa8] sm:$0xff] %v3567
        %3632 = vst [vmem:[%s285 + $0xb0] sm:$0xff] %v3572
        %3633 = vst [vmem:[%s285 + $0xb8] sm:$0xff] %v3575
        %3634 = vst [vmem:[%s285 + $0xc0] sm:$0xff] %v3580
        %3635 = vst [vmem:[%s285 + $0xc8] sm:$0xff] %v3583
        %3636 = vst [vmem:[%s285 + $0xd0] sm:$0xff] %v3588
        %3637 = vst [vmem:[%s285 + $0xd8] sm:$0xff] %v3591
        %3638 = vst [vmem:[%s285 + $0xe0] sm:$0xff] %v3596
        %3639 = vst [vmem:[%s285 + $0xe8] sm:$0xff] %v3599
        %3640 = vst [vmem:[%s285 + $0xf0] sm:$0xff] %v3604
        %3641 = vst [vmem:[%s285 + $0xf8] sm:$0xff] %v3607
        %s3642 = sand.u32 %s142, 1
        %s3643 = scalar_lea.sflag [#allocation4], %s3642
        %s3644 = sand.u32 %s142, 1
        %s3645 = smul.addr %s3644, 256
        %s3646 = scalar_lea.vmem [#allocation10], %s3645
        // Predicated region
        $region57: #{tpu_custom_call.1} parent=39 // pred_check
          %p3647 = pneg %p152
        $region58: #{tpu_custom_call.1} parent=39 // pred_check_branch
          %3649 = sbr.rel (%p3647) target = $region60
        $region59: #{tpu_custom_call.1} parent=39 // pred_region
          %s3650 = smul.u32 32, %s24
          %s3652 = ssub.s32 4096, 4096
          %3653 = vsyncadd %s3643, %s3652
          %s3654 = smul.addr %s3650, 128
          %s3655 = scalar_lea.hbm %s5, %s3654
          %s3656 = sshll.u32 %s3646, 4
          %s3657 = int_to_ptr.vmem [resolvable:$true] %s3656
          %3662 = dma.vmem_to_hbm [thread:$0]  %s3657, 4096, %s3655, %s3643, 128, 128, 8
        $region60: #{tpu_custom_call.1} parent=39 // pred_fallthru
          _
      $region40: #{tpu_custom_call.1} parent=5 // pred_fallthru
        _
      %p3663 = scmp.le.s32.totalorder 2, %s19
      // Predicated region
      $region61: #{tpu_custom_call.1} parent=5 // pred_check
        %p3664 = pneg %p3663
      $region62: #{tpu_custom_call.1} parent=5 // pred_check_branch
        %3666 = sbr.rel (%p3664) target = $region64
      $region63: #{tpu_custom_call.1} parent=5 // pred_region
        %s3667 = ssub.s32 %s19, 2
        // Predicated region
        $region65: #{tpu_custom_call.1} parent=63 // pred_check
          %p3668 = pneg %p158
        $region66: #{tpu_custom_call.1} parent=63 // pred_check_branch
          %3670 = sbr.rel (%p3668) target = $region68
        $region67: #{tpu_custom_call.1} parent=63 // pred_region
          %s3671 = sand.u32 %s143, 1
          %s3672 = scalar_lea.sflag [#allocation4], %s3671
          %s3673 = sand.u32 %s143, 1
          %s3674 = smul.addr %s3673, 256
          %s3675 = scalar_lea.vmem [#allocation10], %s3674
          %3676 = dma.done %s3672, 4096
        $region68: #{tpu_custom_call.1} parent=63 // pred_fallthru
          _
      $region64: #{tpu_custom_call.1} parent=5 // pred_fallthru
        _
    $region6: #{tpu_custom_call.1} parent=1 // loop_footer
      %s23 = sadd.s32 1, %s19
    $region7: #{tpu_custom_call.1} parent=1 // loop_footer_branch
      %18 = sbr.rel target = $region3
    $region8: #{tpu_custom_call.1} parent=1 // loop_exit
      _
    %3677 = vsyncpa [#allocation3], 1
    %s3678 = scalar_lea.sflag [#allocation3], 1
    %3679 = vsyncpa %s3678, 1
    %3680 = vsyncpa [#allocation6], 1
    %3681 = vsyncpa [#allocation9], 1
    %3682 = vsyncpa [#allocation4], 1
    %s3683 = scalar_lea.sflag [#allocation4], 1
    %3684 = vsyncpa %s3683, 1

</llo_original>
